<compile_context>
chip_gen: v6e
topology: v6e:2x2x1
jax: 0.10.0
libtpu: 0.0.40
codegen_flags: <defaults>
</compile_context>

<pallas_src>
import functools

import jax
import jax.numpy as jnp
from jax.experimental import pallas as pl
from jax.experimental.pallas import tpu as pltpu

LANE = 128
_VMEM_LIMIT = 32 * 1024 * 1024
_CONV_ROW_CAP = 256   # pooled output rows per grid step for the conv kernels
_FC_ROW_CAP = 256     # batch rows per grid step for the fc kernels


# ---------------------------------------------------------------------------
# small helpers
# ---------------------------------------------------------------------------
def _round_up(x, m):
    return (x + m - 1) // m * m


def _pick_row_tile(m, cap):
    """Split m rows into nb near-equal tiles of size tm (multiple of 8)."""
    nb = -(-m // cap)
    tm = _round_up(-(-m // nb), 8)
    return tm, tm * nb, nb


def _compiler_params():
    return pltpu.CompilerParams(
        dimension_semantics=("parallel",),
        vmem_limit_bytes=_VMEM_LIMIT,
    )


def _cost(flops, arrays, out_bytes):
    bytes_accessed = out_bytes + sum(int(a.size) * a.dtype.itemsize for a in arrays)
    return pl.CostEstimate(flops=flops, transcendentals=0,
                           bytes_accessed=bytes_accessed)


# ---------------------------------------------------------------------------
# Pallas kernels
# ---------------------------------------------------------------------------
def _conv_bn_pool_kernel(a_ref, w_ref, b_ref, scale_ref, shift_ref, o_ref):
    """Fused pool(bn(relu(conv(x)))) for one tile of pooled output rows.

    a_ref : (4, TM, K) bf16  im2col patches; leading axis = 2x2 pool quadrant.
    w_ref : (K, N)     bf16  conv weight as GEMM matrix (N padded to 128).
    b/scale/shift : (1, N) f32  conv bias and folded inference-BN affine.
    o_ref : (TM, N)    bf16  pooled output rows.
    """
    w = w_ref[...]
    b = b_ref[...]
    scale = scale_ref[...]
    shift = shift_ref[...]
    pooled = None
    for q in range(4):  # unrolled: 4 MXU dots, f32 epilogue, elementwise max
        y = jnp.dot(a_ref[q], w, preferred_element_type=jnp.float32)
        y = jnp.maximum(y + b, 0.0) * scale + shift
        pooled = y if pooled is None else jnp.maximum(pooled, y)
    o_ref[...] = pooled.astype(o_ref.dtype)


def _gemm_bias_kernel(a_ref, w_ref, b_ref, o_ref, *, relu):
    y = jnp.dot(a_ref[...], w_ref[...], preferred_element_type=jnp.float32)
    y = y + b_ref[...]
    if relu:
        y = jnp.maximum(y, 0.0)
    o_ref[...] = y.astype(o_ref.dtype)


# ---------------------------------------------------------------------------
# layer wrappers (tiled pallas_calls)
# ---------------------------------------------------------------------------
def _conv_relu_bn_pool(x, w_mat, b, scale, shift, *, k=5, row_cap=_CONV_ROW_CAP):
    """pool2x2(bn(relu(conv_kxk_valid(x)))) -> (B, PH, PW, 128) bf16."""
    cin = w_mat.shape[0] // (k * k)
    x = x[..., :cin]                       # drop padded input channels (fused
    B, H, W, C = x.shape                   # by XLA into the patch gather)
    OH, OW = H - k + 1, W - k + 1
    PH, PW = OH // 2, OW // 2
    K = k * k * C

    # im2col with the 2x2 pooling quadrant hoisted to a leading axis so the
    # kernel can fuse the max-pool into the GEMM epilogue.
    cols = [x[:, i:i + OH, j:j + OW, :] for i in range(k) for j in range(k)]
    a = jnp.stack(cols, axis=3).reshape(B, OH, OW, K)
    a = a.reshape(B, PH, 2, PW, 2, K)
    a = jnp.transpose(a, (2, 4, 0, 1, 3, 5)).reshape(4, B * PH * PW, K)

    M = B * PH * PW
    TM, Mpad, nb = _pick_row_tile(M, row_cap)
    if Mpad != M:
        a = jnp.pad(a, ((0, 0), (0, Mpad - M), (0, 0)))
    N = w_mat.shape[1]

    out = pl.pallas_call(
        _conv_bn_pool_kernel,
        out_shape=jax.ShapeDtypeStruct((Mpad, N), jnp.bfloat16),
        grid=(nb,),
        in_specs=[
            pl.BlockSpec((4, TM, K), lambda i: (0, i, 0)),
            pl.BlockSpec((K, N), lambda i: (0, 0)),
            pl.BlockSpec((1, N), lambda i: (0, 0)),
            pl.BlockSpec((1, N), lambda i: (0, 0)),
            pl.BlockSpec((1, N), lambda i: (0, 0)),
        ],
        out_specs=pl.BlockSpec((TM, N), lambda i: (i, 0)),
        compiler_params=_compiler_params(),
        cost_estimate=_cost(2 * 4 * Mpad * K * N,
                            (a, w_mat, b, scale, shift),
                            out_bytes=Mpad * N * 2),
    )(a, w_mat, b, scale, shift)
    return out[:M].reshape(B, PH, PW, N)


def _fc(x, w_mat, b, *, relu, out_dtype, row_cap=_FC_ROW_CAP):
    """bias(+relu)(x @ w_mat), M-tiled; weight pre-transposed to (in, out)."""
    M, K = x.shape
    N = w_mat.shape[1]
    TM, Mpad, nb = _pick_row_tile(M, row_cap)
    if Mpad != M:
        x = jnp.pad(x, ((0, Mpad - M), (0, 0)))

    out = pl.pallas_call(
        functools.partial(_gemm_bias_kernel, relu=relu),
        out_shape=jax.ShapeDtypeStruct((Mpad, N), out_dtype),
        grid=(nb,),
        in_specs=[
            pl.BlockSpec((TM, K), lambda i: (i, 0)),
            pl.BlockSpec((K, N), lambda i: (0, 0)),
            pl.BlockSpec((1, N), lambda i: (0, 0)),
        ],
        out_specs=pl.BlockSpec((TM, N), lambda i: (i, 0)),
        compiler_params=_compiler_params(),
        cost_estimate=_cost(2 * Mpad * K * N,
                            (x, w_mat, b),
                            out_bytes=Mpad * N * jnp.dtype(out_dtype).itemsize),
    )(x, w_mat, b)
    return out[:M]


# ---------------------------------------------------------------------------
# one-time weight preprocessing (outside jit)
# ---------------------------------------------------------------------------
def prepare_params(p, eps=1e-5):
    """Convert PyTorch-layout params into kernel-ready operands, once."""

    def conv_prep(w, b, gamma, beta, mean, var):
        cout, cin, kh, kw = w.shape
        n = _round_up(cout, LANE)
        # patch feature order is (kh, kw, cin) -> matching GEMM weight (K, N)
        wm = jnp.transpose(w, (2, 3, 1, 0)).reshape(kh * kw * cin, cout)
        wm = jnp.pad(wm, ((0, 0), (0, n - cout))).astype(jnp.bfloat16)
        scale = gamma / jnp.sqrt(var + eps)
        shift = beta - mean * scale

        def pad_vec(v, cval):
            return jnp.pad(v, (0, n - cout),
                           constant_values=cval).reshape(1, n).astype(jnp.float32)

        return dict(w=wm, b=pad_vec(b, 0.0),
                    scale=pad_vec(scale, 1.0), shift=pad_vec(shift, 0.0))

    q = {}
    q["conv1"] = conv_prep(p["conv1_w"], p["conv1_b"], p["bn1_gamma"],
                           p["bn1_beta"], p["bn1_mean"], p["bn1_var"])
    q["conv2"] = conv_prep(p["conv2_w"], p["conv2_b"], p["bn2_gamma"],
                           p["bn2_beta"], p["bn2_mean"], p["bn2_var"])

    # fc1: PyTorch flattens NCHW (c, h, w); our conv2 output flattens NHWC
    # (h, w, c_padded). Permute + pad fc1's input dim once here, so the
    # forward needs no transpose and no channel un-padding at all.
    c2, hw, hid = 96, 4, p["fc1_w"].shape[0]
    cpad = _round_up(c2, LANE)
    w1 = p["fc1_w"].reshape(hid, c2, hw, hw)                 # (out, c, h, w)
    w1 = jnp.pad(w1, ((0, 0), (0, cpad - c2), (0, 0), (0, 0)))
    w1 = jnp.transpose(w1, (2, 3, 1, 0)).reshape(hw * hw * cpad, hid)
    q["fc1_w"] = w1.astype(jnp.bfloat16)                     # (2048, 1024)
    q["fc1_b"] = p["fc1_b"].reshape(1, -1).astype(jnp.float32)

    nout = _round_up(p["fc2_w"].shape[0], LANE)              # 10 -> 128
    w2 = jnp.pad(p["fc2_w"].T, ((0, 0), (0, nout - p["fc2_w"].shape[0])))
    q["fc2_w"] = w2.astype(jnp.bfloat16)                     # (1024, 128)
    q["fc2_b"] = jnp.pad(p["fc2_b"], (0, nout - p["fc2_b"].shape[0])
                         ).reshape(1, nout).astype(jnp.float32)
    return q


# ---------------------------------------------------------------------------
# forward pass
# ---------------------------------------------------------------------------
def conv_model_forward(x, q):
    # x: (B, 28, 28)  (PyTorch forward does x.unsqueeze(1) -> (B, 1, 28, 28))
    # TODO(synk): candle.GroupPruneContext stochastic pruning wrappers have no
    # Pallas equivalent; they are passthrough in the unpruned forward.
    x = x[..., None].astype(jnp.bfloat16)                    # NHWC, C=1
    c1, c2 = q["conv1"], q["conv2"]
    x = _conv_relu_bn_pool(x, c1["w"], c1["b"], c1["scale"], c1["shift"])
    x = _conv_relu_bn_pool(x, c2["w"], c2["b"], c2["scale"], c2["shift"])
    B = x.shape[0]
    # NHWC flatten (free reshape); fc1's weight rows were pre-permuted to this
    # (h, w, c_padded) ordering, so no NCHW transpose / slice is needed here.
    x = x.reshape(B, -1)                                     # (B, 4*4*128)
    # TODO(synk): Dropout(0.6) is identity in eval mode; training-mode
    # stochastic masking is not implemented.
    h = _fc(x, q["fc1_w"], q["fc1_b"], relu=True, out_dtype=jnp.bfloat16)
    logits = _fc(h, q["fc2_w"], q["fc2_b"], relu=False, out_dtype=jnp.float32)
    return logits[:, :10]


# ---------------------------------------------------------------------------
# deterministic parameter init (shapes from ConvModel.__init__, PyTorch layout)
# ---------------------------------------------------------------------------
def init_params(key):
    ks = jax.random.split(key, 12)

    def u(k, shape, fan_in):
        bound = 1.0 / jnp.sqrt(float(fan_in))
        return jax.random.uniform(k, shape, jnp.float32, -bound, bound)

    p = {}
    p["conv1_w"] = u(ks[0], (64, 1, 5, 5), 1 * 5 * 5)
    p["conv1_b"] = u(ks[1], (64,), 1 * 5 * 5)
    p["bn1_gamma"] = jnp.ones((64,), jnp.float32)
    p["bn1_beta"] = jnp.zeros((64,), jnp.float32)
    p["bn1_mean"] = 0.1 * jax.random.normal(ks[2], (64,), jnp.float32)
    p["bn1_var"] = 1.0 + 0.1 * jax.random.uniform(ks[3], (64,), jnp.float32)

    p["conv2_w"] = u(ks[4], (96, 64, 5, 5), 64 * 5 * 5)
    p["conv2_b"] = u(ks[5], (96,), 64 * 5 * 5)
    p["bn2_gamma"] = jnp.ones((96,), jnp.float32)
    p["bn2_beta"] = jnp.zeros((96,), jnp.float32)
    p["bn2_mean"] = 0.1 * jax.random.normal(ks[6], (96,), jnp.float32)
    p["bn2_var"] = 1.0 + 0.1 * jax.random.uniform(ks[7], (96,), jnp.float32)

    p["fc1_w"] = u(ks[8], (1024, 16 * 96), 16 * 96)   # PyTorch Linear: (out, in)
    p["fc1_b"] = u(ks[9], (1024,), 16 * 96)
    p["fc2_w"] = u(ks[10], (10, 1024), 1024)
    p["fc2_b"] = u(ks[11], (10,), 1024)
    return p


if __name__ == "__main__":
    key = jax.random.PRNGKey(0)
    pkey, xkey = jax.random.split(key)
    params = init_params(pkey)
    prep = prepare_params(params)          # one-time weight prep, outside jit
    # fc1 expects 16*96 features after encode -> spatial must be 28x28 (MNIST).
    x = jax.random.normal(xkey, (2, 28, 28), jnp.float32)
    out = jax.jit(conv_model_forward)(x, prep)
    jax.block_until_ready(out)
    assert out.shape == (2, 10) and out.dtype == jnp.float32
    print("KERNEL_OK")
</pallas_src>

<mosaic_0001>
module attributes {stable_mosaic.version = 11 : i64} {
  func.func @_conv_bn_pool_kernel(%arg0: i32, %arg1: memref<4x144x25xbf16, #tpu.memory_space<vmem>>, %arg2: memref<25x128xbf16, #tpu.memory_space<vmem>>, %arg3: memref<1x128xf32, #tpu.memory_space<vmem>>, %arg4: memref<1x128xf32, #tpu.memory_space<vmem>>, %arg5: memref<1x128xf32, #tpu.memory_space<vmem>>, %arg6: memref<144x128xbf16, #tpu.memory_space<vmem>>) attributes {dimension_semantics = [#tpu.dimension_semantics<parallel>], iteration_bounds = array<i64: 2>, scalar_prefetch = 0 : i64, scratch_operands = 0 : i64, tpu.core_type = #tpu.core_type<tc>, window_params = [{transform_indices = @transform_0, window_bounds = array<i64: 4, 144, 25>}, {pipeline_mode = #tpu.pipeline_mode<synchronous>, transform_indices = @transform_1, window_bounds = array<i64: 25, 128>}, {pipeline_mode = #tpu.pipeline_mode<synchronous>, transform_indices = @transform_2, window_bounds = array<i64: 1, 128>}, {pipeline_mode = #tpu.pipeline_mode<synchronous>, transform_indices = @transform_3, window_bounds = array<i64: 1, 128>}, {pipeline_mode = #tpu.pipeline_mode<synchronous>, transform_indices = @transform_4, window_bounds = array<i64: 1, 128>}, {transform_indices = @transform_5, window_bounds = array<i64: 144, 128>}]} {
    %c0 = arith.constant 0 : index
    %c0_0 = arith.constant 0 : index
    %0 = vector.load %arg2[%c0, %c0_0] : memref<25x128xbf16, #tpu.memory_space<vmem>>, vector<25x128xbf16>
    %c0_1 = arith.constant 0 : index
    %c0_2 = arith.constant 0 : index
    %1 = vector.load %arg3[%c0_1, %c0_2] : memref<1x128xf32, #tpu.memory_space<vmem>>, vector<1x128xf32>
    %c0_3 = arith.constant 0 : index
    %c0_4 = arith.constant 0 : index
    %2 = vector.load %arg4[%c0_3, %c0_4] : memref<1x128xf32, #tpu.memory_space<vmem>>, vector<1x128xf32>
    %c0_5 = arith.constant 0 : index
    %c0_6 = arith.constant 0 : index
    %3 = vector.load %arg5[%c0_5, %c0_6] : memref<1x128xf32, #tpu.memory_space<vmem>>, vector<1x128xf32>
    %c0_7 = arith.constant 0 : index
    %c0_8 = arith.constant 0 : index
    %c0_9 = arith.constant 0 : index
    %4 = vector.load %arg1[%c0_7, %c0_8, %c0_9] : memref<4x144x25xbf16, #tpu.memory_space<vmem>>, vector<1x144x25xbf16>
    %5 = vector.shape_cast %4 : vector<1x144x25xbf16> to vector<144x25xbf16>
    %cst = arith.constant dense<0.000000e+00> : vector<144x128xf32>
    %6 = tpu.matmul %5, %0, %cst {dimension_numbers = #tpu.dot_dimension_numbers<[1], [0], [0], [1], [0, 0, 1, 1], [], []>} : vector<144x25xbf16>, vector<25x128xbf16>, vector<144x128xf32> -> vector<144x128xf32>
    %7 = vector.broadcast %1 : vector<1x128xf32> to vector<144x128xf32>
    %8 = arith.addf %6, %7 : vector<144x128xf32>
    %cst_10 = arith.constant 0.000000e+00 : f32
    %9 = vector.broadcast %cst_10 : f32 to vector<144x128xf32>
    %10 = arith.maximumf %8, %9 : vector<144x128xf32>
    %11 = vector.broadcast %2 : vector<1x128xf32> to vector<144x128xf32>
    %12 = arith.mulf %10, %11 : vector<144x128xf32>
    %13 = vector.broadcast %3 : vector<1x128xf32> to vector<144x128xf32>
    %14 = arith.addf %12, %13 : vector<144x128xf32>
    %c1 = arith.constant 1 : index
    %c0_11 = arith.constant 0 : index
    %c0_12 = arith.constant 0 : index
    %15 = vector.load %arg1[%c1, %c0_11, %c0_12] : memref<4x144x25xbf16, #tpu.memory_space<vmem>>, vector<1x144x25xbf16>
    %16 = vector.shape_cast %15 : vector<1x144x25xbf16> to vector<144x25xbf16>
    %cst_13 = arith.constant dense<0.000000e+00> : vector<144x128xf32>
    %17 = tpu.matmul %16, %0, %cst_13 {dimension_numbers = #tpu.dot_dimension_numbers<[1], [0], [0], [1], [0, 0, 1, 1], [], []>} : vector<144x25xbf16>, vector<25x128xbf16>, vector<144x128xf32> -> vector<144x128xf32>
    %18 = vector.broadcast %1 : vector<1x128xf32> to vector<144x128xf32>
    %19 = arith.addf %17, %18 : vector<144x128xf32>
    %cst_14 = arith.constant 0.000000e+00 : f32
    %20 = vector.broadcast %cst_14 : f32 to vector<144x128xf32>
    %21 = arith.maximumf %19, %20 : vector<144x128xf32>
    %22 = vector.broadcast %2 : vector<1x128xf32> to vector<144x128xf32>
    %23 = arith.mulf %21, %22 : vector<144x128xf32>
    %24 = vector.broadcast %3 : vector<1x128xf32> to vector<144x128xf32>
    %25 = arith.addf %23, %24 : vector<144x128xf32>
    %26 = arith.maximumf %14, %25 : vector<144x128xf32>
    %c2 = arith.constant 2 : index
    %c0_15 = arith.constant 0 : index
    %c0_16 = arith.constant 0 : index
    %27 = vector.load %arg1[%c2, %c0_15, %c0_16] : memref<4x144x25xbf16, #tpu.memory_space<vmem>>, vector<1x144x25xbf16>
    %28 = vector.shape_cast %27 : vector<1x144x25xbf16> to vector<144x25xbf16>
    %cst_17 = arith.constant dense<0.000000e+00> : vector<144x128xf32>
    %29 = tpu.matmul %28, %0, %cst_17 {dimension_numbers = #tpu.dot_dimension_numbers<[1], [0], [0], [1], [0, 0, 1, 1], [], []>} : vector<144x25xbf16>, vector<25x128xbf16>, vector<144x128xf32> -> vector<144x128xf32>
    %30 = vector.broadcast %1 : vector<1x128xf32> to vector<144x128xf32>
    %31 = arith.addf %29, %30 : vector<144x128xf32>
    %cst_18 = arith.constant 0.000000e+00 : f32
    %32 = vector.broadcast %cst_18 : f32 to vector<144x128xf32>
    %33 = arith.maximumf %31, %32 : vector<144x128xf32>
    %34 = vector.broadcast %2 : vector<1x128xf32> to vector<144x128xf32>
    %35 = arith.mulf %33, %34 : vector<144x128xf32>
    %36 = vector.broadcast %3 : vector<1x128xf32> to vector<144x128xf32>
    %37 = arith.addf %35, %36 : vector<144x128xf32>
    %38 = arith.maximumf %26, %37 : vector<144x128xf32>
    %c3 = arith.constant 3 : index
    %c0_19 = arith.constant 0 : index
    %c0_20 = arith.constant 0 : index
    %39 = vector.load %arg1[%c3, %c0_19, %c0_20] : memref<4x144x25xbf16, #tpu.memory_space<vmem>>, vector<1x144x25xbf16>
    %40 = vector.shape_cast %39 : vector<1x144x25xbf16> to vector<144x25xbf16>
    %cst_21 = arith.constant dense<0.000000e+00> : vector<144x128xf32>
    %41 = tpu.matmul %40, %0, %cst_21 {dimension_numbers = #tpu.dot_dimension_numbers<[1], [0], [0], [1], [0, 0, 1, 1], [], []>} : vector<144x25xbf16>, vector<25x128xbf16>, vector<144x128xf32> -> vector<144x128xf32>
    %42 = vector.broadcast %1 : vector<1x128xf32> to vector<144x128xf32>
    %43 = arith.addf %41, %42 : vector<144x128xf32>
    %cst_22 = arith.constant 0.000000e+00 : f32
    %44 = vector.broadcast %cst_22 : f32 to vector<144x128xf32>
    %45 = arith.maximumf %43, %44 : vector<144x128xf32>
    %46 = vector.broadcast %2 : vector<1x128xf32> to vector<144x128xf32>
    %47 = arith.mulf %45, %46 : vector<144x128xf32>
    %48 = vector.broadcast %3 : vector<1x128xf32> to vector<144x128xf32>
    %49 = arith.addf %47, %48 : vector<144x128xf32>
    %50 = arith.maximumf %38, %49 : vector<144x128xf32>
    %51 = arith.truncf %50 : vector<144x128xf32> to vector<144x128xbf16>
    %c0_23 = arith.constant 0 : index
    %c0_24 = arith.constant 0 : index
    %52 = vector.load %arg6[%c0_23, %c0_24] : memref<144x128xbf16, #tpu.memory_space<vmem>>, vector<144x128xbf16>
    tpu.vector_store %arg6[%c0_23, %c0_24], %51 {strides = array<i32>} : memref<144x128xbf16, #tpu.memory_space<vmem>>, vector<144x128xbf16>,
    return
  }
  func.func @transform_0(%arg0: i32) -> (i32, i32, i32) {
    %c0_i32 = arith.constant 0 : i32
    %c0_i32_0 = arith.constant 0 : i32
    %c0_i32_1 = arith.constant 0 : i32
    return %c0_i32, %arg0, %c0_i32_0 : i32, i32, i32
  }
  func.func @transform_1(%arg0: i32) -> (i32, i32) {
    %c0_i32 = arith.constant 0 : i32
    %c0_i32_0 = arith.constant 0 : i32
    %c0_i32_1 = arith.constant 0 : i32
    return %c0_i32, %c0_i32_0 : i32, i32
  }
  func.func @transform_2(%arg0: i32) -> (i32, i32) {
    %c0_i32 = arith.constant 0 : i32
    %c0_i32_0 = arith.constant 0 : i32
    %c0_i32_1 = arith.constant 0 : i32
    return %c0_i32, %c0_i32_0 : i32, i32
  }
  func.func @transform_3(%arg0: i32) -> (i32, i32) {
    %c0_i32 = arith.constant 0 : i32
    %c0_i32_0 = arith.constant 0 : i32
    %c0_i32_1 = arith.constant 0 : i32
    return %c0_i32, %c0_i32_0 : i32, i32
  }
  func.func @transform_4(%arg0: i32) -> (i32, i32) {
    %c0_i32 = arith.constant 0 : i32
    %c0_i32_0 = arith.constant 0 : i32
    %c0_i32_1 = arith.constant 0 : i32
    return %c0_i32, %c0_i32_0 : i32, i32
  }
  func.func @transform_5(%arg0: i32) -> (i32, i32) {
    %c0_i32 = arith.constant 0 : i32
    %c0_i32_0 = arith.constant 0 : i32
    return %arg0, %c0_i32 : i32, i32
  }
}

module attributes {stable_mosaic.version = 11 : i64} {
  func.func @_conv_bn_pool_kernel(%arg0: i32, %arg1: memref<4x32x1600xbf16, #tpu.memory_space<vmem>>, %arg2: memref<1600x128xbf16, #tpu.memory_space<vmem>>, %arg3: memref<1x128xf32, #tpu.memory_space<vmem>>, %arg4: memref<1x128xf32, #tpu.memory_space<vmem>>, %arg5: memref<1x128xf32, #tpu.memory_space<vmem>>, %arg6: memref<32x128xbf16, #tpu.memory_space<vmem>>) attributes {dimension_semantics = [#tpu.dimension_semantics<parallel>], iteration_bounds = array<i64: 1>, scalar_prefetch = 0 : i64, scratch_operands = 0 : i64, tpu.core_type = #tpu.core_type<tc>, window_params = [{transform_indices = @transform_0, window_bounds = array<i64: 4, 32, 1600>}, {pipeline_mode = #tpu.pipeline_mode<synchronous>, transform_indices = @transform_1, window_bounds = array<i64: 1600, 128>}, {pipeline_mode = #tpu.pipeline_mode<synchronous>, transform_indices = @transform_2, window_bounds = array<i64: 1, 128>}, {pipeline_mode = #tpu.pipeline_mode<synchronous>, transform_indices = @transform_3, window_bounds = array<i64: 1, 128>}, {pipeline_mode = #tpu.pipeline_mode<synchronous>, transform_indices = @transform_4, window_bounds = array<i64: 1, 128>}, {transform_indices = @transform_5, window_bounds = array<i64: 32, 128>}]} {
    %c0 = arith.constant 0 : index
    %c0_0 = arith.constant 0 : index
    %0 = vector.load %arg2[%c0, %c0_0] : memref<1600x128xbf16, #tpu.memory_space<vmem>>, vector<1600x128xbf16>
    %c0_1 = arith.constant 0 : index
    %c0_2 = arith.constant 0 : index
    %1 = vector.load %arg3[%c0_1, %c0_2] : memref<1x128xf32, #tpu.memory_space<vmem>>, vector<1x128xf32>
    %c0_3 = arith.constant 0 : index
    %c0_4 = arith.constant 0 : index
    %2 = vector.load %arg4[%c0_3, %c0_4] : memref<1x128xf32, #tpu.memory_space<vmem>>, vector<1x128xf32>
    %c0_5 = arith.constant 0 : index
    %c0_6 = arith.constant 0 : index
    %3 = vector.load %arg5[%c0_5, %c0_6] : memref<1x128xf32, #tpu.memory_space<vmem>>, vector<1x128xf32>
    %c0_7 = arith.constant 0 : index
    %c0_8 = arith.constant 0 : index
    %c0_9 = arith.constant 0 : index
    %4 = vector.load %arg1[%c0_7, %c0_8, %c0_9] : memref<4x32x1600xbf16, #tpu.memory_space<vmem>>, vector<1x32x1600xbf16>
    %5 = vector.shape_cast %4 : vector<1x32x1600xbf16> to vector<32x1600xbf16>
    %cst = arith.constant dense<0.000000e+00> : vector<32x128xf32>
    %6 = tpu.matmul %5, %0, %cst {dimension_numbers = #tpu.dot_dimension_numbers<[1], [0], [0], [1], [0, 0, 1, 1], [], []>} : vector<32x1600xbf16>, vector<1600x128xbf16>, vector<32x128xf32> -> vector<32x128xf32>
    %7 = vector.broadcast %1 : vector<1x128xf32> to vector<32x128xf32>
    %8 = arith.addf %6, %7 : vector<32x128xf32>
    %cst_10 = arith.constant 0.000000e+00 : f32
    %9 = vector.broadcast %cst_10 : f32 to vector<32x128xf32>
    %10 = arith.maximumf %8, %9 : vector<32x128xf32>
    %11 = vector.broadcast %2 : vector<1x128xf32> to vector<32x128xf32>
    %12 = arith.mulf %10, %11 : vector<32x128xf32>
    %13 = vector.broadcast %3 : vector<1x128xf32> to vector<32x128xf32>
    %14 = arith.addf %12, %13 : vector<32x128xf32>
    %c1 = arith.constant 1 : index
    %c0_11 = arith.constant 0 : index
    %c0_12 = arith.constant 0 : index
    %15 = vector.load %arg1[%c1, %c0_11, %c0_12] : memref<4x32x1600xbf16, #tpu.memory_space<vmem>>, vector<1x32x1600xbf16>
    %16 = vector.shape_cast %15 : vector<1x32x1600xbf16> to vector<32x1600xbf16>
    %cst_13 = arith.constant dense<0.000000e+00> : vector<32x128xf32>
    %17 = tpu.matmul %16, %0, %cst_13 {dimension_numbers = #tpu.dot_dimension_numbers<[1], [0], [0], [1], [0, 0, 1, 1], [], []>} : vector<32x1600xbf16>, vector<1600x128xbf16>, vector<32x128xf32> -> vector<32x128xf32>
    %18 = vector.broadcast %1 : vector<1x128xf32> to vector<32x128xf32>
    %19 = arith.addf %17, %18 : vector<32x128xf32>
    %cst_14 = arith.constant 0.000000e+00 : f32
    %20 = vector.broadcast %cst_14 : f32 to vector<32x128xf32>
    %21 = arith.maximumf %19, %20 : vector<32x128xf32>
    %22 = vector.broadcast %2 : vector<1x128xf32> to vector<32x128xf32>
    %23 = arith.mulf %21, %22 : vector<32x128xf32>
    %24 = vector.broadcast %3 : vector<1x128xf32> to vector<32x128xf32>
    %25 = arith.addf %23, %24 : vector<32x128xf32>
    %26 = arith.maximumf %14, %25 : vector<32x128xf32>
    %c2 = arith.constant 2 : index
    %c0_15 = arith.constant 0 : index
    %c0_16 = arith.constant 0 : index
    %27 = vector.load %arg1[%c2, %c0_15, %c0_16] : memref<4x32x1600xbf16, #tpu.memory_space<vmem>>, vector<1x32x1600xbf16>
    %28 = vector.shape_cast %27 : vector<1x32x1600xbf16> to vector<32x1600xbf16>
    %cst_17 = arith.constant dense<0.000000e+00> : vector<32x128xf32>
    %29 = tpu.matmul %28, %0, %cst_17 {dimension_numbers = #tpu.dot_dimension_numbers<[1], [0], [0], [1], [0, 0, 1, 1], [], []>} : vector<32x1600xbf16>, vector<1600x128xbf16>, vector<32x128xf32> -> vector<32x128xf32>
    %30 = vector.broadcast %1 : vector<1x128xf32> to vector<32x128xf32>
    %31 = arith.addf %29, %30 : vector<32x128xf32>
    %cst_18 = arith.constant 0.000000e+00 : f32
    %32 = vector.broadcast %cst_18 : f32 to vector<32x128xf32>
    %33 = arith.maximumf %31, %32 : vector<32x128xf32>
    %34 = vector.broadcast %2 : vector<1x128xf32> to vector<32x128xf32>
    %35 = arith.mulf %33, %34 : vector<32x128xf32>
    %36 = vector.broadcast %3 : vector<1x128xf32> to vector<32x128xf32>
    %37 = arith.addf %35, %36 : vector<32x128xf32>
    %38 = arith.maximumf %26, %37 : vector<32x128xf32>
    %c3 = arith.constant 3 : index
    %c0_19 = arith.constant 0 : index
    %c0_20 = arith.constant 0 : index
    %39 = vector.load %arg1[%c3, %c0_19, %c0_20] : memref<4x32x1600xbf16, #tpu.memory_space<vmem>>, vector<1x32x1600xbf16>
    %40 = vector.shape_cast %39 : vector<1x32x1600xbf16> to vector<32x1600xbf16>
    %cst_21 = arith.constant dense<0.000000e+00> : vector<32x128xf32>
    %41 = tpu.matmul %40, %0, %cst_21 {dimension_numbers = #tpu.dot_dimension_numbers<[1], [0], [0], [1], [0, 0, 1, 1], [], []>} : vector<32x1600xbf16>, vector<1600x128xbf16>, vector<32x128xf32> -> vector<32x128xf32>
    %42 = vector.broadcast %1 : vector<1x128xf32> to vector<32x128xf32>
    %43 = arith.addf %41, %42 : vector<32x128xf32>
    %cst_22 = arith.constant 0.000000e+00 : f32
    %44 = vector.broadcast %cst_22 : f32 to vector<32x128xf32>
    %45 = arith.maximumf %43, %44 : vector<32x128xf32>
    %46 = vector.broadcast %2 : vector<1x128xf32> to vector<32x128xf32>
    %47 = arith.mulf %45, %46 : vector<32x128xf32>
    %48 = vector.broadcast %3 : vector<1x128xf32> to vector<32x128xf32>
    %49 = arith.addf %47, %48 : vector<32x128xf32>
    %50 = arith.maximumf %38, %49 : vector<32x128xf32>
    %51 = arith.truncf %50 : vector<32x128xf32> to vector<32x128xbf16>
    %c0_23 = arith.constant 0 : index
    %c0_24 = arith.constant 0 : index
    %52 = vector.load %arg6[%c0_23, %c0_24] : memref<32x128xbf16, #tpu.memory_space<vmem>>, vector<32x128xbf16>
    tpu.vector_store %arg6[%c0_23, %c0_24], %51 {strides = array<i32>} : memref<32x128xbf16, #tpu.memory_space<vmem>>, vector<32x128xbf16>,
    return
  }
  func.func @transform_0(%arg0: i32) -> (i32, i32, i32) {
    %c0_i32 = arith.constant 0 : i32
    %c0_i32_0 = arith.constant 0 : i32
    %c0_i32_1 = arith.constant 0 : i32
    return %c0_i32, %arg0, %c0_i32_0 : i32, i32, i32
  }
  func.func @transform_1(%arg0: i32) -> (i32, i32) {
    %c0_i32 = arith.constant 0 : i32
    %c0_i32_0 = arith.constant 0 : i32
    %c0_i32_1 = arith.constant 0 : i32
    return %c0_i32, %c0_i32_0 : i32, i32
  }
  func.func @transform_2(%arg0: i32) -> (i32, i32) {
    %c0_i32 = arith.constant 0 : i32
    %c0_i32_0 = arith.constant 0 : i32
    %c0_i32_1 = arith.constant 0 : i32
    return %c0_i32, %c0_i32_0 : i32, i32
  }
  func.func @transform_3(%arg0: i32) -> (i32, i32) {
    %c0_i32 = arith.constant 0 : i32
    %c0_i32_0 = arith.constant 0 : i32
    %c0_i32_1 = arith.constant 0 : i32
    return %c0_i32, %c0_i32_0 : i32, i32
  }
  func.func @transform_4(%arg0: i32) -> (i32, i32) {
    %c0_i32 = arith.constant 0 : i32
    %c0_i32_0 = arith.constant 0 : i32
    %c0_i32_1 = arith.constant 0 : i32
    return %c0_i32, %c0_i32_0 : i32, i32
  }
  func.func @transform_5(%arg0: i32) -> (i32, i32) {
    %c0_i32 = arith.constant 0 : i32
    %c0_i32_0 = arith.constant 0 : i32
    return %arg0, %c0_i32 : i32, i32
  }
}

module attributes {stable_mosaic.version = 11 : i64} {
  func.func @_gemm_bias_kernel(%arg0: i32, %arg1: memref<8x2048xbf16, #tpu.memory_space<vmem>>, %arg2: memref<2048x1024xbf16, #tpu.memory_space<vmem>>, %arg3: memref<1x1024xf32, #tpu.memory_space<vmem>>, %arg4: memref<8x1024xbf16, #tpu.memory_space<vmem>>) attributes {dimension_semantics = [#tpu.dimension_semantics<parallel>], iteration_bounds = array<i64: 1>, scalar_prefetch = 0 : i64, scratch_operands = 0 : i64, tpu.core_type = #tpu.core_type<tc>, window_params = [{transform_indices = @transform_0, window_bounds = array<i64: 8, 2048>}, {pipeline_mode = #tpu.pipeline_mode<synchronous>, transform_indices = @transform_1, window_bounds = array<i64: 2048, 1024>}, {pipeline_mode = #tpu.pipeline_mode<synchronous>, transform_indices = @transform_2, window_bounds = array<i64: 1, 1024>}, {transform_indices = @transform_3, window_bounds = array<i64: 8, 1024>}]} {
    %c0 = arith.constant 0 : index
    %c0_0 = arith.constant 0 : index
    %0 = vector.load %arg1[%c0, %c0_0] : memref<8x2048xbf16, #tpu.memory_space<vmem>>, vector<8x2048xbf16>
    %c0_1 = arith.constant 0 : index
    %c0_2 = arith.constant 0 : index
    %1 = vector.load %arg2[%c0_1, %c0_2] : memref<2048x1024xbf16, #tpu.memory_space<vmem>>, vector<2048x1024xbf16>
    %cst = arith.constant dense<0.000000e+00> : vector<8x1024xf32>
    %2 = tpu.matmul %0, %1, %cst {dimension_numbers = #tpu.dot_dimension_numbers<[1], [0], [0], [1], [0, 0, 1, 1], [], []>} : vector<8x2048xbf16>, vector<2048x1024xbf16>, vector<8x1024xf32> -> vector<8x1024xf32>
    %c0_3 = arith.constant 0 : index
    %c0_4 = arith.constant 0 : index
    %3 = vector.load %arg3[%c0_3, %c0_4] : memref<1x1024xf32, #tpu.memory_space<vmem>>, vector<1x1024xf32>
    %4 = vector.broadcast %3 : vector<1x1024xf32> to vector<8x1024xf32>
    %5 = arith.addf %2, %4 : vector<8x1024xf32>
    %cst_5 = arith.constant 0.000000e+00 : f32
    %6 = vector.broadcast %cst_5 : f32 to vector<8x1024xf32>
    %7 = arith.maximumf %5, %6 : vector<8x1024xf32>
    %8 = arith.truncf %7 : vector<8x1024xf32> to vector<8x1024xbf16>
    %c0_6 = arith.constant 0 : index
    %c0_7 = arith.constant 0 : index
    %9 = vector.load %arg4[%c0_6, %c0_7] : memref<8x1024xbf16, #tpu.memory_space<vmem>>, vector<8x1024xbf16>
    tpu.vector_store %arg4[%c0_6, %c0_7], %8 {strides = array<i32>} : memref<8x1024xbf16, #tpu.memory_space<vmem>>, vector<8x1024xbf16>,
    return
  }
  func.func @transform_0(%arg0: i32) -> (i32, i32) {
    %c0_i32 = arith.constant 0 : i32
    %c0_i32_0 = arith.constant 0 : i32
    return %arg0, %c0_i32 : i32, i32
  }
  func.func @transform_1(%arg0: i32) -> (i32, i32) {
    %c0_i32 = arith.constant 0 : i32
    %c0_i32_0 = arith.constant 0 : i32
    %c0_i32_1 = arith.constant 0 : i32
    return %c0_i32, %c0_i32_0 : i32, i32
  }
  func.func @transform_2(%arg0: i32) -> (i32, i32) {
    %c0_i32 = arith.constant 0 : i32
    %c0_i32_0 = arith.constant 0 : i32
    %c0_i32_1 = arith.constant 0 : i32
    return %c0_i32, %c0_i32_0 : i32, i32
  }
  func.func @transform_3(%arg0: i32) -> (i32, i32) {
    %c0_i32 = arith.constant 0 : i32
    %c0_i32_0 = arith.constant 0 : i32
    return %arg0, %c0_i32 : i32, i32
  }
}

module attributes {stable_mosaic.version = 11 : i64} {
  func.func @_gemm_bias_kernel(%arg0: i32, %arg1: memref<8x1024xbf16, #tpu.memory_space<vmem>>, %arg2: memref<1024x128xbf16, #tpu.memory_space<vmem>>, %arg3: memref<1x128xf32, #tpu.memory_space<vmem>>, %arg4: memref<8x128xf32, #tpu.memory_space<vmem>>) attributes {dimension_semantics = [#tpu.dimension_semantics<parallel>], iteration_bounds = array<i64: 1>, scalar_prefetch = 0 : i64, scratch_operands = 0 : i64, tpu.core_type = #tpu.core_type<tc>, window_params = [{transform_indices = @transform_0, window_bounds = array<i64: 8, 1024>}, {pipeline_mode = #tpu.pipeline_mode<synchronous>, transform_indices = @transform_1, window_bounds = array<i64: 1024, 128>}, {pipeline_mode = #tpu.pipeline_mode<synchronous>, transform_indices = @transform_2, window_bounds = array<i64: 1, 128>}, {transform_indices = @transform_3, window_bounds = array<i64: 8, 128>}]} {
    %c0 = arith.constant 0 : index
    %c0_0 = arith.constant 0 : index
    %0 = vector.load %arg1[%c0, %c0_0] : memref<8x1024xbf16, #tpu.memory_space<vmem>>, vector<8x1024xbf16>
    %c0_1 = arith.constant 0 : index
    %c0_2 = arith.constant 0 : index
    %1 = vector.load %arg2[%c0_1, %c0_2] : memref<1024x128xbf16, #tpu.memory_space<vmem>>, vector<1024x128xbf16>
    %cst = arith.constant dense<0.000000e+00> : vector<8x128xf32>
    %2 = tpu.matmul %0, %1, %cst {dimension_numbers = #tpu.dot_dimension_numbers<[1], [0], [0], [1], [0, 0, 1, 1], [], []>} : vector<8x1024xbf16>, vector<1024x128xbf16>, vector<8x128xf32> -> vector<8x128xf32>
    %c0_3 = arith.constant 0 : index
    %c0_4 = arith.constant 0 : index
    %3 = vector.load %arg3[%c0_3, %c0_4] : memref<1x128xf32, #tpu.memory_space<vmem>>, vector<1x128xf32>
    %4 = vector.broadcast %3 : vector<1x128xf32> to vector<8x128xf32>
    %5 = arith.addf %2, %4 : vector<8x128xf32>
    %c0_5 = arith.constant 0 : index
    %c0_6 = arith.constant 0 : index
    %6 = vector.load %arg4[%c0_5, %c0_6] : memref<8x128xf32, #tpu.memory_space<vmem>>, vector<8x128xf32>
    tpu.vector_store %arg4[%c0_5, %c0_6], %5 {strides = array<i32>} : memref<8x128xf32, #tpu.memory_space<vmem>>, vector<8x128xf32>,
    return
  }
  func.func @transform_0(%arg0: i32) -> (i32, i32) {
    %c0_i32 = arith.constant 0 : i32
    %c0_i32_0 = arith.constant 0 : i32
    return %arg0, %c0_i32 : i32, i32
  }
  func.func @transform_1(%arg0: i32) -> (i32, i32) {
    %c0_i32 = arith.constant 0 : i32
    %c0_i32_0 = arith.constant 0 : i32
    %c0_i32_1 = arith.constant 0 : i32
    return %c0_i32, %c0_i32_0 : i32, i32
  }
  func.func @transform_2(%arg0: i32) -> (i32, i32) {
    %c0_i32 = arith.constant 0 : i32
    %c0_i32_0 = arith.constant 0 : i32
    %c0_i32_1 = arith.constant 0 : i32
    return %c0_i32, %c0_i32_0 : i32, i32
  }
  func.func @transform_3(%arg0: i32) -> (i32, i32) {
    %c0_i32 = arith.constant 0 : i32
    %c0_i32_0 = arith.constant 0 : i32
    return %arg0, %c0_i32 : i32, i32
  }
}

</mosaic_0001>

<llo_original>
// kernel: conv_model_forward.4
$region0: #{conv_model_forward.4}
  #allocation0 [shape = 'u32[]', space=smem, size = 0x4, offset = 0x4, fixed_abs, tag = 'smem constant byte address 0x4 - core index']
  #allocation1 [shape = 'u32[144,128]{1,0:T(1,128)}', space=vmem, size = 0x12000, scoped, tag = 'internal scratch']
  %s0 = inlined_call_operand.vmem [shape: bf16[4,288,25], index: 0, kind: input, shape index: {}]
  %s1 = inlined_call_operand.vmem [shape: bf16[25,128], index: 1, kind: input, shape index: {}]
  %s2 = inlined_call_operand.vmem [shape: f32[1,128], index: 2, kind: input, shape index: {}]
  %s3 = inlined_call_operand.vmem [shape: f32[1,128], index: 3, kind: input, shape index: {}]
  %s4 = inlined_call_operand.vmem [shape: f32[1,128], index: 4, kind: input, shape index: {}]
  %s5 = inlined_call_operand.vmem [shape: bf16[288,128], index: 5, kind: output, shape index: {}]
  %s6 = sld [smem:[#allocation0]]
  $region94: #{conv_model_forward.4} parent=0
    _
  %s8 = ssub.s32 1, %s6
  %s9 = scalar_select 0, %s8, %s6
  $region1: #{conv_model_forward.4} parent=0
    #allocation2 [shape = 'u8[294912]{0}', space=vmem, size = 0x48000, scoped, tag = 'input window, operand 0']
    loop: start=0, step=1, limit=4
    $region2: #{conv_model_forward.4} parent=1 // loop_pre_header
      _
    $region3: #{conv_model_forward.4} parent=1 // loop_header
      %s11 = sphi 0, %s15
      %p12 = scmp.ge.s32.totalorder %s11, 4
      %s21 = sphi 0, %s23
      %s24 = sphi 0, %s21
      %s25 = sphi 0, %s24
      %s41 = sphi 0, %s25
      %s45 = sphi 0, %s45
      %s47 = sphi 0, %s45
      %s48 = sphi 0, %s47
      %s62 = sphi 0, %s48
      %s66 = sphi 0, %s66
      %s68 = sphi 0, %s66
      %s69 = sphi 0, %s68
      %s83 = sphi 0, %s69
      %s87 = sphi 0, %s87
      %s89 = sphi 0, %s87
      %s90 = sphi 0, %s89
      %s104 = sphi 0, %s90
      %s108 = sphi 0, %s108
      %s110 = sphi 0, %s108
      %s111 = sphi 0, %s110
      %s125 = sphi 0, %s111
      %s131 = sphi 0, %s133
      %s134 = sphi 0, %s131
      %s135 = sphi 0, %s134
      %s151 = sphi 0, %s135
    $region4: #{conv_model_forward.4} parent=1 // loop_header_branch
      %14 = sbr.rel (%p12) target = $region8
    $region5: #{conv_model_forward.4} parent=1 // loop_body
      %s16 = ssub.s32 %s11, 1
      %s17 = ssub.s32 %s11, 2
      %s18 = sadd.s32 %s11, 1
      %s19 = ssub.s32 %s11, %s18
      %p20 = scmp.eq.s32.totalorder %s19, 0
      %s22 = sadd.s32 %s21, 1
      %s23 = scalar_select %p20, %s21, %s22
      %p26 = pneg %p20
      %p27 = scmp.eq.s32.totalorder %s11, 1
      %p28 = por %p26, %p27
      %p29 = scmp.ne.s32.totalorder %s21, %s24
      %p30 = scmp.eq.s32.totalorder %s11, 0
      %p31 = por %p29, %p30
      %p32 = scmp.ne.s32.totalorder %s21, %s24
      %p33 = scmp.eq.s32.totalorder %s16, 1
      %p34 = por %p32, %p33
      %p35 = scmp.ne.s32.totalorder %s24, %s25
      %p36 = scmp.eq.s32.totalorder %s16, 0
      %p37 = por %p35, %p36
      %p38 = scmp.ne.s32.totalorder %s24, %s25
      %p39 = scmp.eq.s32.totalorder %s17, 1
      %p40 = por %p38, %p39
      %p42 = scmp.ne.s32.totalorder %s25, %s41
      %p43 = scmp.eq.s32.totalorder %s17, 0
      %p44 = por %p42, %p43
      %s46 = sadd.s32 %s45, 1
      %p49 = scmp.eq.s32.totalorder %s11, 1
      %p50 = scmp.ne.s32.totalorder %s45, %s47
      %p51 = scmp.eq.s32.totalorder %s11, 0
      %p52 = por %p50, %p51
      %p53 = scmp.ne.s32.totalorder %s45, %s47
      %p54 = scmp.eq.s32.totalorder %s16, 1
      %p55 = por %p53, %p54
      %p56 = scmp.ne.s32.totalorder %s47, %s48
      %p57 = scmp.eq.s32.totalorder %s16, 0
      %p58 = por %p56, %p57
      %p59 = scmp.ne.s32.totalorder %s47, %s48
      %p60 = scmp.eq.s32.totalorder %s17, 1
      %p61 = por %p59, %p60
      %p63 = scmp.ne.s32.totalorder %s48, %s62
      %p64 = scmp.eq.s32.totalorder %s17, 0
      %p65 = por %p63, %p64
      %s67 = sadd.s32 %s66, 1
      %p70 = scmp.eq.s32.totalorder %s11, 1
      %p71 = scmp.ne.s32.totalorder %s66, %s68
      %p72 = scmp.eq.s32.totalorder %s11, 0
      %p73 = por %p71, %p72
      %p74 = scmp.ne.s32.totalorder %s66, %s68
      %p75 = scmp.eq.s32.totalorder %s16, 1
      %p76 = por %p74, %p75
      %p77 = scmp.ne.s32.totalorder %s68, %s69
      %p78 = scmp.eq.s32.totalorder %s16, 0
      %p79 = por %p77, %p78
      %p80 = scmp.ne.s32.totalorder %s68, %s69
      %p81 = scmp.eq.s32.totalorder %s17, 1
      %p82 = por %p80, %p81
      %p84 = scmp.ne.s32.totalorder %s69, %s83
      %p85 = scmp.eq.s32.totalorder %s17, 0
      %p86 = por %p84, %p85
      %s88 = sadd.s32 %s87, 1
      %p91 = scmp.eq.s32.totalorder %s11, 1
      %p92 = scmp.ne.s32.totalorder %s87, %s89
      %p93 = scmp.eq.s32.totalorder %s11, 0
      %p94 = por %p92, %p93
      %p95 = scmp.ne.s32.totalorder %s87, %s89
      %p96 = scmp.eq.s32.totalorder %s16, 1
      %p97 = por %p95, %p96
      %p98 = scmp.ne.s32.totalorder %s89, %s90
      %p99 = scmp.eq.s32.totalorder %s16, 0
      %p100 = por %p98, %p99
      %p101 = scmp.ne.s32.totalorder %s89, %s90
      %p102 = scmp.eq.s32.totalorder %s17, 1
      %p103 = por %p101, %p102
      %p105 = scmp.ne.s32.totalorder %s90, %s104
      %p106 = scmp.eq.s32.totalorder %s17, 0
      %p107 = por %p105, %p106
      %s109 = sadd.s32 %s108, 1
      %p112 = scmp.eq.s32.totalorder %s11, 1
      %p113 = scmp.ne.s32.totalorder %s108, %s110
      %p114 = scmp.eq.s32.totalorder %s11, 0
      %p115 = por %p113, %p114
      %p116 = scmp.ne.s32.totalorder %s108, %s110
      %p117 = scmp.eq.s32.totalorder %s16, 1
      %p118 = por %p116, %p117
      %p119 = scmp.ne.s32.totalorder %s110, %s111
      %p120 = scmp.eq.s32.totalorder %s16, 0
      %p121 = por %p119, %p120
      %p122 = scmp.ne.s32.totalorder %s110, %s111
      %p123 = scmp.eq.s32.totalorder %s17, 1
      %p124 = por %p122, %p123
      %p126 = scmp.ne.s32.totalorder %s111, %s125
      %p127 = scmp.eq.s32.totalorder %s17, 0
      %p128 = por %p126, %p127
      %s129 = ssub.s32 %s11, %s18
      %p130 = scmp.eq.s32.totalorder %s129, 0
      %s132 = sadd.s32 %s131, 1
      %s133 = scalar_select %p130, %s131, %s132
      %p136 = pneg %p130
      %p137 = scmp.eq.s32.totalorder %s11, 1
      %p138 = por %p136, %p137
      %p139 = scmp.ne.s32.totalorder %s131, %s134
      %p140 = scmp.eq.s32.totalorder %s11, 0
      %p141 = por %p139, %p140
      %p142 = scmp.ne.s32.totalorder %s131, %s134
      %p143 = scmp.eq.s32.totalorder %s16, 1
      %p144 = por %p142, %p143
      %p145 = scmp.ne.s32.totalorder %s134, %s135
      %p146 = scmp.eq.s32.totalorder %s16, 0
      %p147 = por %p145, %p146
      %p148 = scmp.ne.s32.totalorder %s134, %s135
      %p149 = scmp.eq.s32.totalorder %s17, 1
      %p150 = por %p148, %p149
      %p152 = scmp.ne.s32.totalorder %s135, %s151
      %p153 = scmp.eq.s32.totalorder %s17, 0
      %p154 = por %p152, %p153
      %p155 = scmp.le.s32.totalorder 1, %s11
      %p156 = scmp.lt.s32.totalorder %s11, 3
      %p157 = pnand %p155, %p156
      %p158 = pneg %p157
      // Predicated region
      $region9: #{conv_model_forward.4} parent=5 // pred_check
        _
      $region10: #{conv_model_forward.4} parent=5 // pred_check_branch
        %160 = sbr.rel (%p157) target = $region12
      $region11: #{conv_model_forward.4} parent=5 // pred_region
        %s161 = ssub.s32 %s11, 1
        // Predicated region
        $region13: #{conv_model_forward.4} parent=11 // pred_check
          %p162 = pneg %p58
        $region14: #{conv_model_forward.4} parent=11 // pred_check_branch
          %164 = sbr.rel (%p162) target = $region16
        $region15: #{conv_model_forward.4} parent=11 // pred_region
          _
        $region16: #{conv_model_forward.4} parent=11 // pred_fallthru
          _
        // Predicated region
        $region17: #{conv_model_forward.4} parent=11 // pred_check
          %p165 = pneg %p79
        $region18: #{conv_model_forward.4} parent=11 // pred_check_branch
          %167 = sbr.rel (%p165) target = $region20
        $region19: #{conv_model_forward.4} parent=11 // pred_region
          _
        $region20: #{conv_model_forward.4} parent=11 // pred_fallthru
          _
        // Predicated region
        $region21: #{conv_model_forward.4} parent=11 // pred_check
          %p168 = pneg %p100
        $region22: #{conv_model_forward.4} parent=11 // pred_check_branch
          %170 = sbr.rel (%p168) target = $region24
        $region23: #{conv_model_forward.4} parent=11 // pred_region
          _
        $region24: #{conv_model_forward.4} parent=11 // pred_fallthru
          _
        // Predicated region
        $region25: #{conv_model_forward.4} parent=11 // pred_check
          %p171 = pneg %p121
        $region26: #{conv_model_forward.4} parent=11 // pred_check_branch
          %173 = sbr.rel (%p171) target = $region28
        $region27: #{conv_model_forward.4} parent=11 // pred_region
          _
        $region28: #{conv_model_forward.4} parent=11 // pred_fallthru
          _
      $region12: #{conv_model_forward.4} parent=5 // pred_fallthru
        _
      %p174 = scmp.lt.s32.totalorder %s11, 2
      // Predicated region
      $region29: #{conv_model_forward.4} parent=5 // pred_check
        %p175 = pneg %p174
      $region30: #{conv_model_forward.4} parent=5 // pred_check_branch
        %177 = sbr.rel (%p175) target = $region32
      $region31: #{conv_model_forward.4} parent=5 // pred_region
        // Predicated region
        $region33: #{conv_model_forward.4} parent=31 // pred_check
          %p178 = pneg %p31
        $region34: #{conv_model_forward.4} parent=31 // pred_check_branch
          %180 = sbr.rel (%p178) target = $region36
        $region35: #{conv_model_forward.4} parent=31 // pred_region
          %s181 = sand.u32 %s21, 1
          %s182 = sand.u32 %s21, 1
          %s183 = smul.addr %s182, 288
          %s184 = scalar_lea.vmem [#allocation2], %s183
          %s185 = smul.u32 18, %s11
          %s186 = smul.addr %s185, 4
          %s187 = scalar_lea.vmem %s0, %s186
          // Predicated region
          $region37: #{conv_model_forward.4} parent=35 // pred_check
            _
          $region38: #{conv_model_forward.4} parent=35 // pred_check_branch
            %189 = sbr.rel (0) target = $region40
          $region39: #{conv_model_forward.4} parent=35 // pred_region
            // Predicated region
            $region41: #{conv_model_forward.4} parent=39 // pred_check
              _
            $region42: #{conv_model_forward.4} parent=39 // pred_check_branch
              %191 = sbr.rel target = $region44
            $region43: #{conv_model_forward.4} parent=39 // pred_region
              // Predicated region
              $region56: #{conv_model_forward.4} parent=43 // pred_check
                _
              $region57: #{conv_model_forward.4} parent=43 // pred_check_branch
                %349 = sbr.rel (0) target = $region59
              $region58: #{conv_model_forward.4} parent=43 // pred_region
                loop: start=0, step=1, limit=1
                $region60: #{conv_model_forward.4} parent=58 // loop_pre_header
                  _
                $region61: #{conv_model_forward.4} parent=58 // loop_header
                  %s351 = sphi 0, %s355
                  %p352 = scmp.ge.s32.totalorder %s351, 1
                  %s356 = sphi %s187, %s187
                  %s357 = sphi %s184, %s184
                $region62: #{conv_model_forward.4} parent=58 // loop_header_branch
                  %354 = sbr.rel (%p352) target = $region66
                $region63: #{conv_model_forward.4} parent=58 // loop_body
                  _
                $region64: #{conv_model_forward.4} parent=58 // loop_footer
                  %s355 = sadd.s32 1, %s351
                $region65: #{conv_model_forward.4} parent=58 // loop_footer_branch
                  %350 = sbr.rel target = $region61
                $region66: #{conv_model_forward.4} parent=58 // loop_exit
                  _
                %s359 = ssub.s32 16, 1
                loop: start=0, step=1, limit=1
                $region67: #{conv_model_forward.4} parent=58 // loop_pre_header
                  _
                $region68: #{conv_model_forward.4} parent=58 // loop_header
                  %s361 = sphi 0, %s365
                  %p362 = scmp.ge.s32.totalorder %s361, 1
                  %s366 = sphi %s187, %s187
                  %s367 = sphi %s184, %s184
                $region69: #{conv_model_forward.4} parent=58 // loop_header_branch
                  %364 = sbr.rel (%p362) target = $region73
                $region70: #{conv_model_forward.4} parent=58 // loop_body
                  %v368 = vld [vmem:[%s366] sm:%s359]
                  %369 = vst [vmem:[%s367] sm:%s359] %v368
                  %v370 = vld [vmem:[%s366 + $0x4] sm:%s359]
                  %371 = vst [vmem:[%s367 + $0x4] sm:%s359] %v370
                  %v372 = vld [vmem:[%s366 + $0x8] sm:%s359]
                  %373 = vst [vmem:[%s367 + $0x8] sm:%s359] %v372
                  %v374 = vld [vmem:[%s366 + $0xc] sm:%s359]
                  %375 = vst [vmem:[%s367 + $0xc] sm:%s359] %v374
                  %v376 = vld [vmem:[%s366 + $0x10] sm:%s359]
                  %377 = vst [vmem:[%s367 + $0x10] sm:%s359] %v376
                  %v378 = vld [vmem:[%s366 + $0x14] sm:%s359]
                  %379 = vst [vmem:[%s367 + $0x14] sm:%s359] %v378
                  %v380 = vld [vmem:[%s366 + $0x18] sm:%s359]
                  %381 = vst [vmem:[%s367 + $0x18] sm:%s359] %v380
                  %v382 = vld [vmem:[%s366 + $0x1c] sm:%s359]
                  %383 = vst [vmem:[%s367 + $0x1c] sm:%s359] %v382
                  %v384 = vld [vmem:[%s366 + $0x20] sm:%s359]
                  %385 = vst [vmem:[%s367 + $0x20] sm:%s359] %v384
                  %v386 = vld [vmem:[%s366 + $0x24] sm:%s359]
                  %387 = vst [vmem:[%s367 + $0x24] sm:%s359] %v386
                  %v388 = vld [vmem:[%s366 + $0x28] sm:%s359]
                  %389 = vst [vmem:[%s367 + $0x28] sm:%s359] %v388
                  %v390 = vld [vmem:[%s366 + $0x2c] sm:%s359]
                  %391 = vst [vmem:[%s367 + $0x2c] sm:%s359] %v390
                  %v392 = vld [vmem:[%s366 + $0x30] sm:%s359]
                  %393 = vst [vmem:[%s367 + $0x30] sm:%s359] %v392
                  %v394 = vld [vmem:[%s366 + $0x34] sm:%s359]
                  %395 = vst [vmem:[%s367 + $0x34] sm:%s359] %v394
                  %v396 = vld [vmem:[%s366 + $0x38] sm:%s359]
                  %397 = vst [vmem:[%s367 + $0x38] sm:%s359] %v396
                  %v398 = vld [vmem:[%s366 + $0x3c] sm:%s359]
                  %399 = vst [vmem:[%s367 + $0x3c] sm:%s359] %v398
                  %v400 = vld [vmem:[%s366 + $0x40] sm:%s359]
                  %401 = vst [vmem:[%s367 + $0x40] sm:%s359] %v400
                  %v402 = vld [vmem:[%s366 + $0x44] sm:%s359]
                  %403 = vst [vmem:[%s367 + $0x44] sm:%s359] %v402
                  %v404 = vld [vmem:[%s366 + $0x90] sm:%s359]
                  %405 = vst [vmem:[%s367 + $0x48] sm:%s359] %v404
                  %v406 = vld [vmem:[%s366 + $0x94] sm:%s359]
                  %407 = vst [vmem:[%s367 + $0x4c] sm:%s359] %v406
                  %v408 = vld [vmem:[%s366 + $0x98] sm:%s359]
                  %409 = vst [vmem:[%s367 + $0x50] sm:%s359] %v408
                  %v410 = vld [vmem:[%s366 + $0x9c] sm:%s359]
                  %411 = vst [vmem:[%s367 + $0x54] sm:%s359] %v410
                  %v412 = vld [vmem:[%s366 + $0xa0] sm:%s359]
                  %413 = vst [vmem:[%s367 + $0x58] sm:%s359] %v412
                  %v414 = vld [vmem:[%s366 + $0xa4] sm:%s359]
                  %415 = vst [vmem:[%s367 + $0x5c] sm:%s359] %v414
                  %v416 = vld [vmem:[%s366 + $0xa8] sm:%s359]
                  %417 = vst [vmem:[%s367 + $0x60] sm:%s359] %v416
                  %v418 = vld [vmem:[%s366 + $0xac] sm:%s359]
                  %419 = vst [vmem:[%s367 + $0x64] sm:%s359] %v418
                  %v420 = vld [vmem:[%s366 + $0xb0] sm:%s359]
                  %421 = vst [vmem:[%s367 + $0x68] sm:%s359] %v420
                  %v422 = vld [vmem:[%s366 + $0xb4] sm:%s359]
                  %423 = vst [vmem:[%s367 + $0x6c] sm:%s359] %v422
                  %v424 = vld [vmem:[%s366 + $0xb8] sm:%s359]
                  %425 = vst [vmem:[%s367 + $0x70] sm:%s359] %v424
                  %v426 = vld [vmem:[%s366 + $0xbc] sm:%s359]
                  %427 = vst [vmem:[%s367 + $0x74] sm:%s359] %v426
                  %v428 = vld [vmem:[%s366 + $0xc0] sm:%s359]
                  %429 = vst [vmem:[%s367 + $0x78] sm:%s359] %v428
                  %v430 = vld [vmem:[%s366 + $0xc4] sm:%s359]
                  %431 = vst [vmem:[%s367 + $0x7c] sm:%s359] %v430
                  %v432 = vld [vmem:[%s366 + $0xc8] sm:%s359]
                  %433 = vst [vmem:[%s367 + $0x80] sm:%s359] %v432
                  %v434 = vld [vmem:[%s366 + $0xcc] sm:%s359]
                  %435 = vst [vmem:[%s367 + $0x84] sm:%s359] %v434
                  %v436 = vld [vmem:[%s366 + $0xd0] sm:%s359]
                  %437 = vst [vmem:[%s367 + $0x88] sm:%s359] %v436
                  %v438 = vld [vmem:[%s366 + $0xd4] sm:%s359]
                  %439 = vst [vmem:[%s367 + $0x8c] sm:%s359] %v438
                  %v440 = vld [vmem:[%s366 + $0x120] sm:%s359]
                  %441 = vst [vmem:[%s367 + $0x90] sm:%s359] %v440
                  %v442 = vld [vmem:[%s366 + $0x124] sm:%s359]
                  %443 = vst [vmem:[%s367 + $0x94] sm:%s359] %v442
                  %v444 = vld [vmem:[%s366 + $0x128] sm:%s359]
                  %445 = vst [vmem:[%s367 + $0x98] sm:%s359] %v444
                  %v446 = vld [vmem:[%s366 + $0x12c] sm:%s359]
                  %447 = vst [vmem:[%s367 + $0x9c] sm:%s359] %v446
                  %v448 = vld [vmem:[%s366 + $0x130] sm:%s359]
                  %449 = vst [vmem:[%s367 + $0xa0] sm:%s359] %v448
                  %v450 = vld [vmem:[%s366 + $0x134] sm:%s359]
                  %451 = vst [vmem:[%s367 + $0xa4] sm:%s359] %v450
                  %v452 = vld [vmem:[%s366 + $0x138] sm:%s359]
                  %453 = vst [vmem:[%s367 + $0xa8] sm:%s359] %v452
                  %v454 = vld [vmem:[%s366 + $0x13c] sm:%s359]
                  %455 = vst [vmem:[%s367 + $0xac] sm:%s359] %v454
                  %v456 = vld [vmem:[%s366 + $0x140] sm:%s359]
                  %457 = vst [vmem:[%s367 + $0xb0] sm:%s359] %v456
                  %v458 = vld [vmem:[%s366 + $0x144] sm:%s359]
                  %459 = vst [vmem:[%s367 + $0xb4] sm:%s359] %v458
                  %v460 = vld [vmem:[%s366 + $0x148] sm:%s359]
                  %461 = vst [vmem:[%s367 + $0xb8] sm:%s359] %v460
                  %v462 = vld [vmem:[%s366 + $0x14c] sm:%s359]
                  %463 = vst [vmem:[%s367 + $0xbc] sm:%s359] %v462
                  %v464 = vld [vmem:[%s366 + $0x150] sm:%s359]
                  %465 = vst [vmem:[%s367 + $0xc0] sm:%s359] %v464
                  %v466 = vld [vmem:[%s366 + $0x154] sm:%s359]
                  %467 = vst [vmem:[%s367 + $0xc4] sm:%s359] %v466
                  %v468 = vld [vmem:[%s366 + $0x158] sm:%s359]
                  %469 = vst [vmem:[%s367 + $0xc8] sm:%s359] %v468
                  %v470 = vld [vmem:[%s366 + $0x15c] sm:%s359]
                  %471 = vst [vmem:[%s367 + $0xcc] sm:%s359] %v470
                  %v472 = vld [vmem:[%s366 + $0x160] sm:%s359]
                  %473 = vst [vmem:[%s367 + $0xd0] sm:%s359] %v472
                  %v474 = vld [vmem:[%s366 + $0x164] sm:%s359]
                  %475 = vst [vmem:[%s367 + $0xd4] sm:%s359] %v474
                  %v476 = vld [vmem:[%s366 + $0x1b0] sm:%s359]
                  %477 = vst [vmem:[%s367 + $0xd8] sm:%s359] %v476
                  %v478 = vld [vmem:[%s366 + $0x1b4] sm:%s359]
                  %479 = vst [vmem:[%s367 + $0xdc] sm:%s359] %v478
                  %v480 = vld [vmem:[%s366 + $0x1b8] sm:%s359]
                  %481 = vst [vmem:[%s367 + $0xe0] sm:%s359] %v480
                  %v482 = vld [vmem:[%s366 + $0x1bc] sm:%s359]
                  %483 = vst [vmem:[%s367 + $0xe4] sm:%s359] %v482
                  %v484 = vld [vmem:[%s366 + $0x1c0] sm:%s359]
                  %485 = vst [vmem:[%s367 + $0xe8] sm:%s359] %v484
                  %v486 = vld [vmem:[%s366 + $0x1c4] sm:%s359]
                  %487 = vst [vmem:[%s367 + $0xec] sm:%s359] %v486
                  %v488 = vld [vmem:[%s366 + $0x1c8] sm:%s359]
                  %489 = vst [vmem:[%s367 + $0xf0] sm:%s359] %v488
                  %v490 = vld [vmem:[%s366 + $0x1cc] sm:%s359]
                  %491 = vst [vmem:[%s367 + $0xf4] sm:%s359] %v490
                  %v492 = vld [vmem:[%s366 + $0x1d0] sm:%s359]
                  %493 = vst [vmem:[%s367 + $0xf8] sm:%s359] %v492
                  %v494 = vld [vmem:[%s366 + $0x1d4] sm:%s359]
                  %495 = vst [vmem:[%s367 + $0xfc] sm:%s359] %v494
                  %v496 = vld [vmem:[%s366 + $0x1d8] sm:%s359]
                  %497 = vst [vmem:[%s367 + $0x100] sm:%s359] %v496
                  %v498 = vld [vmem:[%s366 + $0x1dc] sm:%s359]
                  %499 = vst [vmem:[%s367 + $0x104] sm:%s359] %v498
                  %v500 = vld [vmem:[%s366 + $0x1e0] sm:%s359]
                  %501 = vst [vmem:[%s367 + $0x108] sm:%s359] %v500
                  %v502 = vld [vmem:[%s366 + $0x1e4] sm:%s359]
                  %503 = vst [vmem:[%s367 + $0x10c] sm:%s359] %v502
                  %v504 = vld [vmem:[%s366 + $0x1e8] sm:%s359]
                  %505 = vst [vmem:[%s367 + $0x110] sm:%s359] %v504
                  %v506 = vld [vmem:[%s366 + $0x1ec] sm:%s359]
                  %507 = vst [vmem:[%s367 + $0x114] sm:%s359] %v506
                  %v508 = vld [vmem:[%s366 + $0x1f0] sm:%s359]
                  %509 = vst [vmem:[%s367 + $0x118] sm:%s359] %v508
                  %v510 = vld [vmem:[%s366 + $0x1f4] sm:%s359]
                  %511 = vst [vmem:[%s367 + $0x11c] sm:%s359] %v510
                $region71: #{conv_model_forward.4} parent=58 // loop_footer
                  %s365 = sadd.s32 1, %s361
                $region72: #{conv_model_forward.4} parent=58 // loop_footer_branch
                  %360 = sbr.rel target = $region68
                $region73: #{conv_model_forward.4} parent=58 // loop_exit
                  _
              $region59: #{conv_model_forward.4} parent=43 // pred_fallthru
                _
            $region44: #{conv_model_forward.4} parent=39 // pred_fallthru
              _
            // Predicated region
            $region45: #{conv_model_forward.4} parent=39 // pred_check
              _
            $region46: #{conv_model_forward.4} parent=39 // pred_check_branch
              %193 = sbr.rel (0) target = $region48
            $region47: #{conv_model_forward.4} parent=39 // pred_region
              %s195 = ssub.s32 16, 1
              loop: start=0, step=1, limit=1
              $region49: #{conv_model_forward.4} parent=47 // loop_pre_header
                _
              $region50: #{conv_model_forward.4} parent=47 // loop_header
                %s197 = sphi 0, %s201
                %p198 = scmp.ge.s32.totalorder %s197, 1
                %s202 = sphi %s187, %s187
                %s203 = sphi %s184, %s184
              $region51: #{conv_model_forward.4} parent=47 // loop_header_branch
                %200 = sbr.rel (%p198) target = $region55
              $region52: #{conv_model_forward.4} parent=47 // loop_body
                %v204 = vld [vmem:[%s202] sm:%s195]
                %205 = vst [vmem:[%s203] sm:%s195] %v204
                %v206 = vld [vmem:[%s202 + $0x4] sm:%s195]
                %207 = vst [vmem:[%s203 + $0x4] sm:%s195] %v206
                %v208 = vld [vmem:[%s202 + $0x8] sm:%s195]
                %209 = vst [vmem:[%s203 + $0x8] sm:%s195] %v208
                %v210 = vld [vmem:[%s202 + $0xc] sm:%s195]
                %211 = vst [vmem:[%s203 + $0xc] sm:%s195] %v210
                %v212 = vld [vmem:[%s202 + $0x10] sm:%s195]
                %213 = vst [vmem:[%s203 + $0x10] sm:%s195] %v212
                %v214 = vld [vmem:[%s202 + $0x14] sm:%s195]
                %215 = vst [vmem:[%s203 + $0x14] sm:%s195] %v214
                %v216 = vld [vmem:[%s202 + $0x18] sm:%s195]
                %217 = vst [vmem:[%s203 + $0x18] sm:%s195] %v216
                %v218 = vld [vmem:[%s202 + $0x1c] sm:%s195]
                %219 = vst [vmem:[%s203 + $0x1c] sm:%s195] %v218
                %v220 = vld [vmem:[%s202 + $0x20] sm:%s195]
                %221 = vst [vmem:[%s203 + $0x20] sm:%s195] %v220
                %v222 = vld [vmem:[%s202 + $0x24] sm:%s195]
                %223 = vst [vmem:[%s203 + $0x24] sm:%s195] %v222
                %v224 = vld [vmem:[%s202 + $0x28] sm:%s195]
                %225 = vst [vmem:[%s203 + $0x28] sm:%s195] %v224
                %v226 = vld [vmem:[%s202 + $0x2c] sm:%s195]
                %227 = vst [vmem:[%s203 + $0x2c] sm:%s195] %v226
                %v228 = vld [vmem:[%s202 + $0x30] sm:%s195]
                %229 = vst [vmem:[%s203 + $0x30] sm:%s195] %v228
                %v230 = vld [vmem:[%s202 + $0x34] sm:%s195]
                %231 = vst [vmem:[%s203 + $0x34] sm:%s195] %v230
                %v232 = vld [vmem:[%s202 + $0x38] sm:%s195]
                %233 = vst [vmem:[%s203 + $0x38] sm:%s195] %v232
                %v234 = vld [vmem:[%s202 + $0x3c] sm:%s195]
                %235 = vst [vmem:[%s203 + $0x3c] sm:%s195] %v234
                %v236 = vld [vmem:[%s202 + $0x40] sm:%s195]
                %237 = vst [vmem:[%s203 + $0x40] sm:%s195] %v236
                %v238 = vld [vmem:[%s202 + $0x44] sm:%s195]
                %239 = vst [vmem:[%s203 + $0x44] sm:%s195] %v238
                %v240 = vld [vmem:[%s202 + $0x90] sm:%s195]
                %241 = vst [vmem:[%s203 + $0x48] sm:%s195] %v240
                %v242 = vld [vmem:[%s202 + $0x94] sm:%s195]
                %243 = vst [vmem:[%s203 + $0x4c] sm:%s195] %v242
                %v244 = vld [vmem:[%s202 + $0x98] sm:%s195]
                %245 = vst [vmem:[%s203 + $0x50] sm:%s195] %v244
                %v246 = vld [vmem:[%s202 + $0x9c] sm:%s195]
                %247 = vst [vmem:[%s203 + $0x54] sm:%s195] %v246
                %v248 = vld [vmem:[%s202 + $0xa0] sm:%s195]
                %249 = vst [vmem:[%s203 + $0x58] sm:%s195] %v248
                %v250 = vld [vmem:[%s202 + $0xa4] sm:%s195]
                %251 = vst [vmem:[%s203 + $0x5c] sm:%s195] %v250
                %v252 = vld [vmem:[%s202 + $0xa8] sm:%s195]
                %253 = vst [vmem:[%s203 + $0x60] sm:%s195] %v252
                %v254 = vld [vmem:[%s202 + $0xac] sm:%s195]
                %255 = vst [vmem:[%s203 + $0x64] sm:%s195] %v254
                %v256 = vld [vmem:[%s202 + $0xb0] sm:%s195]
                %257 = vst [vmem:[%s203 + $0x68] sm:%s195] %v256
                %v258 = vld [vmem:[%s202 + $0xb4] sm:%s195]
                %259 = vst [vmem:[%s203 + $0x6c] sm:%s195] %v258
                %v260 = vld [vmem:[%s202 + $0xb8] sm:%s195]
                %261 = vst [vmem:[%s203 + $0x70] sm:%s195] %v260
                %v262 = vld [vmem:[%s202 + $0xbc] sm:%s195]
                %263 = vst [vmem:[%s203 + $0x74] sm:%s195] %v262
                %v264 = vld [vmem:[%s202 + $0xc0] sm:%s195]
                %265 = vst [vmem:[%s203 + $0x78] sm:%s195] %v264
                %v266 = vld [vmem:[%s202 + $0xc4] sm:%s195]
                %267 = vst [vmem:[%s203 + $0x7c] sm:%s195] %v266
                %v268 = vld [vmem:[%s202 + $0xc8] sm:%s195]
                %269 = vst [vmem:[%s203 + $0x80] sm:%s195] %v268
                %v270 = vld [vmem:[%s202 + $0xcc] sm:%s195]
                %271 = vst [vmem:[%s203 + $0x84] sm:%s195] %v270
                %v272 = vld [vmem:[%s202 + $0xd0] sm:%s195]
                %273 = vst [vmem:[%s203 + $0x88] sm:%s195] %v272
                %v274 = vld [vmem:[%s202 + $0xd4] sm:%s195]
                %275 = vst [vmem:[%s203 + $0x8c] sm:%s195] %v274
                %v276 = vld [vmem:[%s202 + $0x120] sm:%s195]
                %277 = vst [vmem:[%s203 + $0x90] sm:%s195] %v276
                %v278 = vld [vmem:[%s202 + $0x124] sm:%s195]
                %279 = vst [vmem:[%s203 + $0x94] sm:%s195] %v278
                %v280 = vld [vmem:[%s202 + $0x128] sm:%s195]
                %281 = vst [vmem:[%s203 + $0x98] sm:%s195] %v280
                %v282 = vld [vmem:[%s202 + $0x12c] sm:%s195]
                %283 = vst [vmem:[%s203 + $0x9c] sm:%s195] %v282
                %v284 = vld [vmem:[%s202 + $0x130] sm:%s195]
                %285 = vst [vmem:[%s203 + $0xa0] sm:%s195] %v284
                %v286 = vld [vmem:[%s202 + $0x134] sm:%s195]
                %287 = vst [vmem:[%s203 + $0xa4] sm:%s195] %v286
                %v288 = vld [vmem:[%s202 + $0x138] sm:%s195]
                %289 = vst [vmem:[%s203 + $0xa8] sm:%s195] %v288
                %v290 = vld [vmem:[%s202 + $0x13c] sm:%s195]
                %291 = vst [vmem:[%s203 + $0xac] sm:%s195] %v290
                %v292 = vld [vmem:[%s202 + $0x140] sm:%s195]
                %293 = vst [vmem:[%s203 + $0xb0] sm:%s195] %v292
                %v294 = vld [vmem:[%s202 + $0x144] sm:%s195]
                %295 = vst [vmem:[%s203 + $0xb4] sm:%s195] %v294
                %v296 = vld [vmem:[%s202 + $0x148] sm:%s195]
                %297 = vst [vmem:[%s203 + $0xb8] sm:%s195] %v296
                %v298 = vld [vmem:[%s202 + $0x14c] sm:%s195]
                %299 = vst [vmem:[%s203 + $0xbc] sm:%s195] %v298
                %v300 = vld [vmem:[%s202 + $0x150] sm:%s195]
                %301 = vst [vmem:[%s203 + $0xc0] sm:%s195] %v300
                %v302 = vld [vmem:[%s202 + $0x154] sm:%s195]
                %303 = vst [vmem:[%s203 + $0xc4] sm:%s195] %v302
                %v304 = vld [vmem:[%s202 + $0x158] sm:%s195]
                %305 = vst [vmem:[%s203 + $0xc8] sm:%s195] %v304
                %v306 = vld [vmem:[%s202 + $0x15c] sm:%s195]
                %307 = vst [vmem:[%s203 + $0xcc] sm:%s195] %v306
                %v308 = vld [vmem:[%s202 + $0x160] sm:%s195]
                %309 = vst [vmem:[%s203 + $0xd0] sm:%s195] %v308
                %v310 = vld [vmem:[%s202 + $0x164] sm:%s195]
                %311 = vst [vmem:[%s203 + $0xd4] sm:%s195] %v310
                %v312 = vld [vmem:[%s202 + $0x1b0] sm:%s195]
                %313 = vst [vmem:[%s203 + $0xd8] sm:%s195] %v312
                %v314 = vld [vmem:[%s202 + $0x1b4] sm:%s195]
                %315 = vst [vmem:[%s203 + $0xdc] sm:%s195] %v314
                %v316 = vld [vmem:[%s202 + $0x1b8] sm:%s195]
                %317 = vst [vmem:[%s203 + $0xe0] sm:%s195] %v316
                %v318 = vld [vmem:[%s202 + $0x1bc] sm:%s195]
                %319 = vst [vmem:[%s203 + $0xe4] sm:%s195] %v318
                %v320 = vld [vmem:[%s202 + $0x1c0] sm:%s195]
                %321 = vst [vmem:[%s203 + $0xe8] sm:%s195] %v320
                %v322 = vld [vmem:[%s202 + $0x1c4] sm:%s195]
                %323 = vst [vmem:[%s203 + $0xec] sm:%s195] %v322
                %v324 = vld [vmem:[%s202 + $0x1c8] sm:%s195]
                %325 = vst [vmem:[%s203 + $0xf0] sm:%s195] %v324
                %v326 = vld [vmem:[%s202 + $0x1cc] sm:%s195]
                %327 = vst [vmem:[%s203 + $0xf4] sm:%s195] %v326
                %v328 = vld [vmem:[%s202 + $0x1d0] sm:%s195]
                %329 = vst [vmem:[%s203 + $0xf8] sm:%s195] %v328
                %v330 = vld [vmem:[%s202 + $0x1d4] sm:%s195]
                %331 = vst [vmem:[%s203 + $0xfc] sm:%s195] %v330
                %v332 = vld [vmem:[%s202 + $0x1d8] sm:%s195]
                %333 = vst [vmem:[%s203 + $0x100] sm:%s195] %v332
                %v334 = vld [vmem:[%s202 + $0x1dc] sm:%s195]
                %335 = vst [vmem:[%s203 + $0x104] sm:%s195] %v334
                %v336 = vld [vmem:[%s202 + $0x1e0] sm:%s195]
                %337 = vst [vmem:[%s203 + $0x108] sm:%s195] %v336
                %v338 = vld [vmem:[%s202 + $0x1e4] sm:%s195]
                %339 = vst [vmem:[%s203 + $0x10c] sm:%s195] %v338
                %v340 = vld [vmem:[%s202 + $0x1e8] sm:%s195]
                %341 = vst [vmem:[%s203 + $0x110] sm:%s195] %v340
                %v342 = vld [vmem:[%s202 + $0x1ec] sm:%s195]
                %343 = vst [vmem:[%s203 + $0x114] sm:%s195] %v342
                %v344 = vld [vmem:[%s202 + $0x1f0] sm:%s195]
                %345 = vst [vmem:[%s203 + $0x118] sm:%s195] %v344
                %v346 = vld [vmem:[%s202 + $0x1f4] sm:%s195]
                %347 = vst [vmem:[%s203 + $0x11c] sm:%s195] %v346
              $region53: #{conv_model_forward.4} parent=47 // loop_footer
                %s201 = sadd.s32 1, %s197
              $region54: #{conv_model_forward.4} parent=47 // loop_footer_branch
                %196 = sbr.rel target = $region50
              $region55: #{conv_model_forward.4} parent=47 // loop_exit
                _
            $region48: #{conv_model_forward.4} parent=39 // pred_fallthru
              _
          $region40: #{conv_model_forward.4} parent=35 // pred_fallthru
            _
          %512 = vnop
        $region36: #{conv_model_forward.4} parent=31 // pred_fallthru
          _
      $region32: #{conv_model_forward.4} parent=5 // pred_fallthru
        _
      %p513 = scmp.le.s32.totalorder 1, %s11
      %p514 = scmp.lt.s32.totalorder %s11, 3
      %p515 = pnand %p513, %p514
      %p516 = pneg %p515
      // Predicated region
      $region74: #{conv_model_forward.4} parent=5 // pred_check
        _
      $region75: #{conv_model_forward.4} parent=5 // pred_check_branch
        %518 = sbr.rel (%p515) target = $region77
      $region76: #{conv_model_forward.4} parent=5 // pred_region
        %s519 = ssub.s32 %s11, 1
        %s520 = sand.u32 %s24, 1
        %s521 = sand.u32 %s24, 1
        %s522 = smul.addr %s521, 288
        %s523 = scalar_lea.vmem [#allocation2], %s522
        // Predicated region
        $region78: #{conv_model_forward.4} parent=76 // pred_check
          %p524 = pneg %p37
        $region79: #{conv_model_forward.4} parent=76 // pred_check_branch
          %526 = sbr.rel (%p524) target = $region81
        $region80: #{conv_model_forward.4} parent=76 // pred_region
          _
        $region81: #{conv_model_forward.4} parent=76 // pred_fallthru
          _
        %s527 = sand.u32 %s24, 1
        %s528 = sand.u32 %s24, 1
        %s529 = smul.addr %s528, 288
        %s530 = scalar_lea.vmem [#allocation2], %s529
        %p531 = pneg %p37
        %p532 = pneg %p34
        %p533 = pneg %p58
        %p534 = pneg %p55
        %p535 = pneg %p79
        %p536 = pneg %p76
        %p537 = pneg %p100
        %p538 = pneg %p97
        %p539 = pneg %p121
        %p540 = pneg %p118
        %p541 = pneg %p147
        %p542 = pneg %p144
        %s543 = smul.u32 18, %s16
        %p544 = scmp.lt.s32.totalorder %s543, 35
        %s545 = scalar_select %p544, %s543, 35
        %s546 = smul.addr %s545, 4
        %s547 = scalar_lea.vmem %s5, %s546
        %s548 = smul.u32 18, %s16
        %s549 = smul.u32 18, %s16
        %p550 = scmp.lt.s32.totalorder %s549, 35
        %s551 = scalar_select %p550, %s549, 35
        %s552 = smul.addr %s551, 4
        %s553 = scalar_lea.vmem %s5, %s552
        %s554 = smul.u32 18, %s16
        %v556 = vld [vmem:[%s1] sm:$0xf]
        %v557 = vld [vmem:[%s1 + $0x4] sm:$0xf]
        %v558 = vld [vmem:[%s1 + $0x8] sm:$0xf]
        %v559 = vld [vmem:[%s1 + $0xc] sm:$0x1]
        %v560 = vld [vmem:[%s2] sm:$0x1]
        %v561 = vld [vmem:[%s3] sm:$0x1]
        %v562 = vld [vmem:[%s4] sm:$0x1]
        %v563 = vld [vmem:[%s523] sm:$0xf]
        %v564 = vld [vmem:[%s523 + $0x4] sm:$0xf]
        %v565 = vld [vmem:[%s523 + $0x8] sm:$0xf]
        %v566 = vld [vmem:[%s523 + $0xc] sm:$0xf]
        %v567 = vld [vmem:[%s523 + $0x10] sm:$0xf]
        %v568 = vld [vmem:[%s523 + $0x14] sm:$0xf]
        %v569 = vld [vmem:[%s523 + $0x18] sm:$0xf]
        %v570 = vld [vmem:[%s523 + $0x1c] sm:$0xf]
        %v571 = vld [vmem:[%s523 + $0x20] sm:$0xf]
        %v572 = vld [vmem:[%s523 + $0x24] sm:$0xf]
        %v573 = vld [vmem:[%s523 + $0x28] sm:$0xf]
        %v574 = vld [vmem:[%s523 + $0x2c] sm:$0xf]
        %v575 = vld [vmem:[%s523 + $0x30] sm:$0xf]
        %v576 = vld [vmem:[%s523 + $0x34] sm:$0xf]
        %v577 = vld [vmem:[%s523 + $0x38] sm:$0xf]
        %v578 = vld [vmem:[%s523 + $0x3c] sm:$0xf]
        %v579 = vld [vmem:[%s523 + $0x40] sm:$0xf]
        %v580 = vld [vmem:[%s523 + $0x44] sm:$0xf]
        %v582 = vlaneseq
        %v583 = vshrl.u32 %v582, 7
        %v584 = vsub.s32 0, %v583
        %v585 = vrot.slane %v560, %v584
        %v605 = vunpack.c.l.b16 %v563
        %v606 = vunpack.c.l.b16 %v564
        %v607 = vunpack.c.l.b16 %v565
        %v608 = vunpack.c.l.b16 %v566
        %v609 = vunpack.c.l.b16 %v567
        %v610 = vunpack.c.l.b16 %v568
        %v611 = vunpack.c.l.b16 %v569
        %v612 = vunpack.c.l.b16 %v570
        %v613 = vunpack.c.l.b16 %v571
        %v614 = vunpack.c.l.b16 %v572
        %v615 = vunpack.c.l.b16 %v573
        %v616 = vunpack.c.l.b16 %v574
        %v617 = vunpack.c.l.b16 %v575
        %v618 = vunpack.c.l.b16 %v576
        %v619 = vunpack.c.l.b16 %v577
        %v620 = vunpack.c.l.b16 %v578
        %v621 = vunpack.c.l.b16 %v579
        %v622 = vunpack.c.l.b16 %v580
        %v623 = vpack.c.b16 %v606, %v605
        %v624 = vpack.c.b16 %v608, %v607
        %v625 = vpack.c.b16 %v610, %v609
        %v626 = vpack.c.b16 %v612, %v611
        %v627 = vpack.c.b16 %v614, %v613
        %v628 = vpack.c.b16 %v616, %v615
        %v629 = vpack.c.b16 %v618, %v617
        %v630 = vpack.c.b16 %v620, %v619
        %v631 = vpack.c.b16 %v622, %v621
        %v636 = vunpack.c.l.b16 %v556
        %v637 = vunpack.c.l.b16 %v557
        %v638 = vunpack.c.l.b16 %v558
        %v639 = vunpack.c.l.b16 %v559
        %v640 = vpack.c.b16 %v637, %v636
        %v641 = vpack.c.b16 %v639, %v638
        %vm643 = vcmask 203776
        %v645 = vsel %vm643, %v623, 0
        %v648 = vsel %vm643, %v624, 0
        %v651 = vsel %vm643, %v625, 0
        %v654 = vsel %vm643, %v626, 0
        %v657 = vsel %vm643, %v627, 0
        %v660 = vsel %vm643, %v628, 0
        %v663 = vsel %vm643, %v629, 0
        %v666 = vsel %vm643, %v630, 0
        %v669 = vsel %vm643, %v631, 0
        %vm671 = vcmask 1043456
        %vm672 = vcmask 1044480
        %v673 = vsel %vm671, 4294967295, 65535
        %v674 = vsel %vm672, %v673, 0
        %v676 = vand.u32 %v641, %v674
        %678 = vmatprep.subr.bf16.mxu0 0
        %679 = vmatpush1.bf16.msra.mxu0 0
        %680 = vmatprep.subr.bf16.mxu0 0
        %681 = vmatpush1.bf16.msra.mxu0 0
        %682 = vmatprep.subr.bf16.mxu0 0
        %683 = vmatpush1.bf16.msra.mxu0 0
        %684 = vmatprep.subr.bf16.mxu0 0
        %685 = vmatpush1.bf16.msra.mxu0 0
        %686 = vmatprep.subr.bf16.mxu0 0
        %687 = vmatpush1.bf16.msra.mxu0 0
        %688 = vmatprep.subr.bf16.mxu0 0
        %689 = vmatpush1.bf16.msra.mxu0 0
        %690 = vmatprep.subr.bf16.mxu0 0
        %691 = vmatpush1.bf16.msra.mxu0 %v676
        %692 = vmatprep.subr.bf16.mxu0 0
        %693 = vmatpush1.bf16.msra.mxu0 %v640
        %694 = vmatprep.subr.bf16.mxu0 0
        %695 = vmatpush2.bf16.msra.mxu0 0
        %696 = vmatprep.subr.bf16.mxu0 0
        %697 = vmatpush2.bf16.msra.mxu0 0
        %698 = vmatprep.subr.bf16.mxu0 0
        %699 = vmatpush2.bf16.msra.mxu0 0
        %700 = vmatprep.subr.bf16.mxu0 0
        %701 = vmatpush2.bf16.msra.mxu0 0
        %702 = vmatprep.subr.bf16.mxu0 0
        %703 = vmatpush2.bf16.msra.mxu0 0
        %704 = vmatprep.subr.bf16.mxu0 0
        %705 = vmatpush2.bf16.msra.mxu0 0
        %706 = vmatprep.subr.bf16.mxu0 0
        %707 = vmatpush2.bf16.msra.mxu0 0
        %708 = vmatprep.subr.bf16.mxu0 0
        %709 = vmatpush2.bf16.msra.mxu0 0
        %710 = vmatprep.mubr.bf16.mxu0 0
        %711 = vmatmul.mubr.bf16.gmra.mxu0 %v645
        %v712 = vpop.f32.mrf.mxu0
        %v713 = vadd.f32 %v585, %v712
        %v714 = vpop.f32.mrf.mxu0
        %v715 = vpop.f32.mrf.mxu0
        %v716 = vadd.f32 %v585, %v715
        %v717 = vpop.f32.mrf.mxu0
        %718 = vmatprep.mubr.bf16.mxu0 0
        %719 = vmatmul.mubr.bf16.gmra.mxu0 %v648
        %v720 = vpop.f32.mrf.mxu0
        %v721 = vadd.f32 %v585, %v720
        %v722 = vpop.f32.mrf.mxu0
        %v723 = vpop.f32.mrf.mxu0
        %v724 = vadd.f32 %v585, %v723
        %v725 = vpop.f32.mrf.mxu0
        %726 = vmatprep.mubr.bf16.mxu0 0
        %727 = vmatmul.mubr.bf16.gmra.mxu0 %v651
        %v728 = vpop.f32.mrf.mxu0
        %v729 = vadd.f32 %v585, %v728
        %v730 = vpop.f32.mrf.mxu0
        %v731 = vpop.f32.mrf.mxu0
        %v732 = vadd.f32 %v585, %v731
        %v733 = vpop.f32.mrf.mxu0
        %734 = vmatprep.mubr.bf16.mxu0 0
        %735 = vmatmul.mubr.bf16.gmra.mxu0 %v654
        %v736 = vpop.f32.mrf.mxu0
        %v737 = vadd.f32 %v585, %v736
        %v738 = vpop.f32.mrf.mxu0
        %v739 = vpop.f32.mrf.mxu0
        %v740 = vadd.f32 %v585, %v739
        %v741 = vpop.f32.mrf.mxu0
        %742 = vmatprep.mubr.bf16.mxu0 0
        %743 = vmatmul.mubr.bf16.gmra.mxu0 %v657
        %v744 = vpop.f32.mrf.mxu0
        %v745 = vadd.f32 %v585, %v744
        %v746 = vpop.f32.mrf.mxu0
        %v747 = vpop.f32.mrf.mxu0
        %v748 = vadd.f32 %v585, %v747
        %v749 = vpop.f32.mrf.mxu0
        %750 = vmatprep.mubr.bf16.mxu0 0
        %751 = vmatmul.mubr.bf16.gmra.mxu0 %v660
        %v752 = vpop.f32.mrf.mxu0
        %v753 = vadd.f32 %v585, %v752
        %v754 = vpop.f32.mrf.mxu0
        %v755 = vpop.f32.mrf.mxu0
        %v756 = vadd.f32 %v585, %v755
        %v757 = vpop.f32.mrf.mxu0
        %758 = vmatprep.mubr.bf16.mxu0 0
        %759 = vmatmul.mubr.bf16.gmra.mxu0 %v663
        %v760 = vpop.f32.mrf.mxu0
        %v761 = vadd.f32 %v585, %v760
        %v762 = vpop.f32.mrf.mxu0
        %v763 = vpop.f32.mrf.mxu0
        %v764 = vadd.f32 %v585, %v763
        %v765 = vpop.f32.mrf.mxu0
        %766 = vmatprep.mubr.bf16.mxu0 0
        %767 = vmatmul.mubr.bf16.gmra.mxu0 %v666
        %v768 = vpop.f32.mrf.mxu0
        %v769 = vadd.f32 %v585, %v768
        %v770 = vpop.f32.mrf.mxu0
        %v771 = vpop.f32.mrf.mxu0
        %v772 = vadd.f32 %v585, %v771
        %v773 = vpop.f32.mrf.mxu0
        %774 = vmatprep.mubr.bf16.mxu0 0
        %775 = vmatmul.mubr.bf16.gmra.mxu0 %v669
        %v776 = vpop.f32.mrf.mxu0
        %v777 = vadd.f32 %v585, %v776
        %v778 = vpop.f32.mrf.mxu0
        %v779 = vpop.f32.mrf.mxu0
        %v780 = vadd.f32 %v585, %v779
        %v781 = vpop.f32.mrf.mxu0
        %782 = vdwg.mxu0
        %v783 = vmax.f32 %v713, 0.0
        %v784 = vmax.f32 %v716, 0.0
        %v785 = vmax.f32 %v721, 0.0
        %v786 = vmax.f32 %v724, 0.0
        %v787 = vmax.f32 %v729, 0.0
        %v788 = vmax.f32 %v732, 0.0
        %v789 = vmax.f32 %v737, 0.0
        %v790 = vmax.f32 %v740, 0.0
        %v791 = vmax.f32 %v745, 0.0
        %v792 = vmax.f32 %v748, 0.0
        %v793 = vmax.f32 %v753, 0.0
        %v794 = vmax.f32 %v756, 0.0
        %v795 = vmax.f32 %v761, 0.0
        %v796 = vmax.f32 %v764, 0.0
        %v797 = vmax.f32 %v769, 0.0
        %v798 = vmax.f32 %v772, 0.0
        %v799 = vmax.f32 %v777, 0.0
        %v800 = vmax.f32 %v780, 0.0
        %v802 = vlaneseq
        %v803 = vshrl.u32 %v802, 7
        %v804 = vsub.s32 0, %v803
        %v805 = vrot.slane %v561, %v804
        %v807 = vmul.f32 %v783, %v805
        %v808 = vmul.f32 %v784, %v805
        %v809 = vmul.f32 %v785, %v805
        %v810 = vmul.f32 %v786, %v805
        %v811 = vmul.f32 %v787, %v805
        %v812 = vmul.f32 %v788, %v805
        %v813 = vmul.f32 %v789, %v805
        %v814 = vmul.f32 %v790, %v805
        %v815 = vmul.f32 %v791, %v805
        %v816 = vmul.f32 %v792, %v805
        %v817 = vmul.f32 %v793, %v805
        %v818 = vmul.f32 %v794, %v805
        %v819 = vmul.f32 %v795, %v805
        %v820 = vmul.f32 %v796, %v805
        %v821 = vmul.f32 %v797, %v805
        %v822 = vmul.f32 %v798, %v805
        %v823 = vmul.f32 %v799, %v805
        %v824 = vmul.f32 %v800, %v805
        %v826 = vlaneseq
        %v827 = vshrl.u32 %v826, 7
        %v828 = vsub.s32 0, %v827
        %v829 = vrot.slane %v562, %v828
        %v831 = vadd.f32 %v807, %v829
        %v832 = vadd.f32 %v808, %v829
        %v833 = vadd.f32 %v809, %v829
        %v834 = vadd.f32 %v810, %v829
        %v835 = vadd.f32 %v811, %v829
        %v836 = vadd.f32 %v812, %v829
        %v837 = vadd.f32 %v813, %v829
        %v838 = vadd.f32 %v814, %v829
        %v839 = vadd.f32 %v815, %v829
        %v840 = vadd.f32 %v816, %v829
        %v841 = vadd.f32 %v817, %v829
        %v842 = vadd.f32 %v818, %v829
        %v843 = vadd.f32 %v819, %v829
        %v844 = vadd.f32 %v820, %v829
        %v845 = vadd.f32 %v821, %v829
        %v846 = vadd.f32 %v822, %v829
        %v847 = vadd.f32 %v823, %v829
        %v848 = vadd.f32 %v824, %v829
        %s849 = scalar_lea.vmem %s523, 72 [#allocation2]
        %v850 = vld [vmem:[%s849] sm:$0xf]
        %v851 = vld [vmem:[%s849 + $0x4] sm:$0xf]
        %v852 = vld [vmem:[%s849 + $0x8] sm:$0xf]
        %v853 = vld [vmem:[%s849 + $0xc] sm:$0xf]
        %v854 = vld [vmem:[%s849 + $0x10] sm:$0xf]
        %v855 = vld [vmem:[%s849 + $0x14] sm:$0xf]
        %v856 = vld [vmem:[%s849 + $0x18] sm:$0xf]
        %v857 = vld [vmem:[%s849 + $0x1c] sm:$0xf]
        %v858 = vld [vmem:[%s849 + $0x20] sm:$0xf]
        %v859 = vld [vmem:[%s849 + $0x24] sm:$0xf]
        %v860 = vld [vmem:[%s849 + $0x28] sm:$0xf]
        %v861 = vld [vmem:[%s849 + $0x2c] sm:$0xf]
        %v862 = vld [vmem:[%s849 + $0x30] sm:$0xf]
        %v863 = vld [vmem:[%s849 + $0x34] sm:$0xf]
        %v864 = vld [vmem:[%s849 + $0x38] sm:$0xf]
        %v865 = vld [vmem:[%s849 + $0x3c] sm:$0xf]
        %v866 = vld [vmem:[%s849 + $0x40] sm:$0xf]
        %v867 = vld [vmem:[%s849 + $0x44] sm:$0xf]
        %v886 = vunpack.c.l.b16 %v850
        %v887 = vunpack.c.l.b16 %v851
        %v888 = vunpack.c.l.b16 %v852
        %v889 = vunpack.c.l.b16 %v853
        %v890 = vunpack.c.l.b16 %v854
        %v891 = vunpack.c.l.b16 %v855
        %v892 = vunpack.c.l.b16 %v856
        %v893 = vunpack.c.l.b16 %v857
        %v894 = vunpack.c.l.b16 %v858
        %v895 = vunpack.c.l.b16 %v859
        %v896 = vunpack.c.l.b16 %v860
        %v897 = vunpack.c.l.b16 %v861
        %v898 = vunpack.c.l.b16 %v862
        %v899 = vunpack.c.l.b16 %v863
        %v900 = vunpack.c.l.b16 %v864
        %v901 = vunpack.c.l.b16 %v865
        %v902 = vunpack.c.l.b16 %v866
        %v903 = vunpack.c.l.b16 %v867
        %v904 = vpack.c.b16 %v887, %v886
        %v905 = vpack.c.b16 %v889, %v888
        %v906 = vpack.c.b16 %v891, %v890
        %v907 = vpack.c.b16 %v893, %v892
        %v908 = vpack.c.b16 %v895, %v894
        %v909 = vpack.c.b16 %v897, %v896
        %v910 = vpack.c.b16 %v899, %v898
        %v911 = vpack.c.b16 %v901, %v900
        %v912 = vpack.c.b16 %v903, %v902
        %v914 = vsel %vm643, %v904, 0
        %v917 = vsel %vm643, %v905, 0
        %v920 = vsel %vm643, %v906, 0
        %v923 = vsel %vm643, %v907, 0
        %v926 = vsel %vm643, %v908, 0
        %v929 = vsel %vm643, %v909, 0
        %v932 = vsel %vm643, %v910, 0
        %v935 = vsel %vm643, %v911, 0
        %v938 = vsel %vm643, %v912, 0
        %940 = vmatprep.subr.bf16.mxu0 0
        %941 = vmatpush1.bf16.msra.mxu0 0
        %942 = vmatprep.subr.bf16.mxu0 0
        %943 = vmatpush1.bf16.msra.mxu0 0
        %944 = vmatprep.subr.bf16.mxu0 0
        %945 = vmatpush1.bf16.msra.mxu0 0
        %946 = vmatprep.subr.bf16.mxu0 0
        %947 = vmatpush1.bf16.msra.mxu0 0
        %948 = vmatprep.subr.bf16.mxu0 0
        %949 = vmatpush1.bf16.msra.mxu0 0
        %950 = vmatprep.subr.bf16.mxu0 0
        %951 = vmatpush1.bf16.msra.mxu0 0
        %952 = vmatprep.subr.bf16.mxu0 0
        %953 = vmatpush1.bf16.msra.mxu0 %v676
        %954 = vmatprep.subr.bf16.mxu0 0
        %955 = vmatpush1.bf16.msra.mxu0 %v640
        %956 = vmatprep.subr.bf16.mxu0 0
        %957 = vmatpush2.bf16.msra.mxu0 0
        %958 = vmatprep.subr.bf16.mxu0 0
        %959 = vmatpush2.bf16.msra.mxu0 0
        %960 = vmatprep.subr.bf16.mxu0 0
        %961 = vmatpush2.bf16.msra.mxu0 0
        %962 = vmatprep.subr.bf16.mxu0 0
        %963 = vmatpush2.bf16.msra.mxu0 0
        %964 = vmatprep.subr.bf16.mxu0 0
        %965 = vmatpush2.bf16.msra.mxu0 0
        %966 = vmatprep.subr.bf16.mxu0 0
        %967 = vmatpush2.bf16.msra.mxu0 0
        %968 = vmatprep.subr.bf16.mxu0 0
        %969 = vmatpush2.bf16.msra.mxu0 0
        %970 = vmatprep.subr.bf16.mxu0 0
        %971 = vmatpush2.bf16.msra.mxu0 0
        %972 = vmatprep.mubr.bf16.mxu0 0
        %973 = vmatmul.mubr.bf16.gmra.mxu0 %v914
        %v974 = vpop.f32.mrf.mxu0
        %v975 = vadd.f32 %v585, %v974
        %v976 = vpop.f32.mrf.mxu0
        %v977 = vpop.f32.mrf.mxu0
        %v978 = vadd.f32 %v585, %v977
        %v979 = vpop.f32.mrf.mxu0
        %980 = vmatprep.mubr.bf16.mxu0 0
        %981 = vmatmul.mubr.bf16.gmra.mxu0 %v917
        %v982 = vpop.f32.mrf.mxu0
        %v983 = vadd.f32 %v585, %v982
        %v984 = vpop.f32.mrf.mxu0
        %v985 = vpop.f32.mrf.mxu0
        %v986 = vadd.f32 %v585, %v985
        %v987 = vpop.f32.mrf.mxu0
        %988 = vmatprep.mubr.bf16.mxu0 0
        %989 = vmatmul.mubr.bf16.gmra.mxu0 %v920
        %v990 = vpop.f32.mrf.mxu0
        %v991 = vadd.f32 %v585, %v990
        %v992 = vpop.f32.mrf.mxu0
        %v993 = vpop.f32.mrf.mxu0
        %v994 = vadd.f32 %v585, %v993
        %v995 = vpop.f32.mrf.mxu0
        %996 = vmatprep.mubr.bf16.mxu0 0
        %997 = vmatmul.mubr.bf16.gmra.mxu0 %v923
        %v998 = vpop.f32.mrf.mxu0
        %v999 = vadd.f32 %v585, %v998
        %v1000 = vpop.f32.mrf.mxu0
        %v1001 = vpop.f32.mrf.mxu0
        %v1002 = vadd.f32 %v585, %v1001
        %v1003 = vpop.f32.mrf.mxu0
        %1004 = vmatprep.mubr.bf16.mxu0 0
        %1005 = vmatmul.mubr.bf16.gmra.mxu0 %v926
        %v1006 = vpop.f32.mrf.mxu0
        %v1007 = vadd.f32 %v585, %v1006
        %v1008 = vpop.f32.mrf.mxu0
        %v1009 = vpop.f32.mrf.mxu0
        %v1010 = vadd.f32 %v585, %v1009
        %v1011 = vpop.f32.mrf.mxu0
        %1012 = vmatprep.mubr.bf16.mxu0 0
        %1013 = vmatmul.mubr.bf16.gmra.mxu0 %v929
        %v1014 = vpop.f32.mrf.mxu0
        %v1015 = vadd.f32 %v585, %v1014
        %v1016 = vpop.f32.mrf.mxu0
        %v1017 = vpop.f32.mrf.mxu0
        %v1018 = vadd.f32 %v585, %v1017
        %v1019 = vpop.f32.mrf.mxu0
        %1020 = vmatprep.mubr.bf16.mxu0 0
        %1021 = vmatmul.mubr.bf16.gmra.mxu0 %v932
        %v1022 = vpop.f32.mrf.mxu0
        %v1023 = vadd.f32 %v585, %v1022
        %v1024 = vpop.f32.mrf.mxu0
        %v1025 = vpop.f32.mrf.mxu0
        %v1026 = vadd.f32 %v585, %v1025
        %v1027 = vpop.f32.mrf.mxu0
        %1028 = vmatprep.mubr.bf16.mxu0 0
        %1029 = vmatmul.mubr.bf16.gmra.mxu0 %v935
        %v1030 = vpop.f32.mrf.mxu0
        %v1031 = vadd.f32 %v585, %v1030
        %v1032 = vpop.f32.mrf.mxu0
        %v1033 = vpop.f32.mrf.mxu0
        %v1034 = vadd.f32 %v585, %v1033
        %v1035 = vpop.f32.mrf.mxu0
        %1036 = vmatprep.mubr.bf16.mxu0 0
        %1037 = vmatmul.mubr.bf16.gmra.mxu0 %v938
        %v1038 = vpop.f32.mrf.mxu0
        %v1039 = vadd.f32 %v585, %v1038
        %v1040 = vpop.f32.mrf.mxu0
        %v1041 = vpop.f32.mrf.mxu0
        %v1042 = vadd.f32 %v585, %v1041
        %v1043 = vpop.f32.mrf.mxu0
        %1044 = vdwg.mxu0
        %v1045 = vmax.f32 %v975, 0.0
        %v1046 = vmax.f32 %v978, 0.0
        %v1047 = vmax.f32 %v983, 0.0
        %v1048 = vmax.f32 %v986, 0.0
        %v1049 = vmax.f32 %v991, 0.0
        %v1050 = vmax.f32 %v994, 0.0
        %v1051 = vmax.f32 %v999, 0.0
        %v1052 = vmax.f32 %v1002, 0.0
        %v1053 = vmax.f32 %v1007, 0.0
        %v1054 = vmax.f32 %v1010, 0.0
        %v1055 = vmax.f32 %v1015, 0.0
        %v1056 = vmax.f32 %v1018, 0.0
        %v1057 = vmax.f32 %v1023, 0.0
        %v1058 = vmax.f32 %v1026, 0.0
        %v1059 = vmax.f32 %v1031, 0.0
        %v1060 = vmax.f32 %v1034, 0.0
        %v1061 = vmax.f32 %v1039, 0.0
        %v1062 = vmax.f32 %v1042, 0.0
        %v1063 = vmul.f32 %v1045, %v805
        %v1064 = vmul.f32 %v1046, %v805
        %v1065 = vmul.f32 %v1047, %v805
        %v1066 = vmul.f32 %v1048, %v805
        %v1067 = vmul.f32 %v1049, %v805
        %v1068 = vmul.f32 %v1050, %v805
        %v1069 = vmul.f32 %v1051, %v805
        %v1070 = vmul.f32 %v1052, %v805
        %v1071 = vmul.f32 %v1053, %v805
        %v1072 = vmul.f32 %v1054, %v805
        %v1073 = vmul.f32 %v1055, %v805
        %v1074 = vmul.f32 %v1056, %v805
        %v1075 = vmul.f32 %v1057, %v805
        %v1076 = vmul.f32 %v1058, %v805
        %v1077 = vmul.f32 %v1059, %v805
        %v1078 = vmul.f32 %v1060, %v805
        %v1079 = vmul.f32 %v1061, %v805
        %v1080 = vmul.f32 %v1062, %v805
        %v1081 = vadd.f32 %v1063, %v829
        %v1082 = vadd.f32 %v1064, %v829
        %v1083 = vadd.f32 %v1065, %v829
        %v1084 = vadd.f32 %v1066, %v829
        %v1085 = vadd.f32 %v1067, %v829
        %v1086 = vadd.f32 %v1068, %v829
        %v1087 = vadd.f32 %v1069, %v829
        %v1088 = vadd.f32 %v1070, %v829
        %v1089 = vadd.f32 %v1071, %v829
        %v1090 = vadd.f32 %v1072, %v829
        %v1091 = vadd.f32 %v1073, %v829
        %v1092 = vadd.f32 %v1074, %v829
        %v1093 = vadd.f32 %v1075, %v829
        %v1094 = vadd.f32 %v1076, %v829
        %v1095 = vadd.f32 %v1077, %v829
        %v1096 = vadd.f32 %v1078, %v829
        %v1097 = vadd.f32 %v1079, %v829
        %v1098 = vadd.f32 %v1080, %v829
        %v1099 = vmax.f32 %v831, %v1081
        %v1100 = vmax.f32 %v832, %v1082
        %v1101 = vmax.f32 %v833, %v1083
        %v1102 = vmax.f32 %v834, %v1084
        %v1103 = vmax.f32 %v835, %v1085
        %v1104 = vmax.f32 %v836, %v1086
        %v1105 = vmax.f32 %v837, %v1087
        %v1106 = vmax.f32 %v838, %v1088
        %v1107 = vmax.f32 %v839, %v1089
        %v1108 = vmax.f32 %v840, %v1090
        %v1109 = vmax.f32 %v841, %v1091
        %v1110 = vmax.f32 %v842, %v1092
        %v1111 = vmax.f32 %v843, %v1093
        %v1112 = vmax.f32 %v844, %v1094
        %v1113 = vmax.f32 %v845, %v1095
        %v1114 = vmax.f32 %v846, %v1096
        %v1115 = vmax.f32 %v847, %v1097
        %v1116 = vmax.f32 %v848, %v1098
        %s1117 = scalar_lea.vmem %s523, 144 [#allocation2]
        %v1118 = vld [vmem:[%s1117] sm:$0xf]
        %v1119 = vld [vmem:[%s1117 + $0x4] sm:$0xf]
        %v1120 = vld [vmem:[%s1117 + $0x8] sm:$0xf]
        %v1121 = vld [vmem:[%s1117 + $0xc] sm:$0xf]
        %v1122 = vld [vmem:[%s1117 + $0x10] sm:$0xf]
        %v1123 = vld [vmem:[%s1117 + $0x14] sm:$0xf]
        %v1124 = vld [vmem:[%s1117 + $0x18] sm:$0xf]
        %v1125 = vld [vmem:[%s1117 + $0x1c] sm:$0xf]
        %v1126 = vld [vmem:[%s1117 + $0x20] sm:$0xf]
        %v1127 = vld [vmem:[%s1117 + $0x24] sm:$0xf]
        %v1128 = vld [vmem:[%s1117 + $0x28] sm:$0xf]
        %v1129 = vld [vmem:[%s1117 + $0x2c] sm:$0xf]
        %v1130 = vld [vmem:[%s1117 + $0x30] sm:$0xf]
        %v1131 = vld [vmem:[%s1117 + $0x34] sm:$0xf]
        %v1132 = vld [vmem:[%s1117 + $0x38] sm:$0xf]
        %v1133 = vld [vmem:[%s1117 + $0x3c] sm:$0xf]
        %v1134 = vld [vmem:[%s1117 + $0x40] sm:$0xf]
        %v1135 = vld [vmem:[%s1117 + $0x44] sm:$0xf]
        %v1154 = vunpack.c.l.b16 %v1118
        %v1155 = vunpack.c.l.b16 %v1119
        %v1156 = vunpack.c.l.b16 %v1120
        %v1157 = vunpack.c.l.b16 %v1121
        %v1158 = vunpack.c.l.b16 %v1122
        %v1159 = vunpack.c.l.b16 %v1123
        %v1160 = vunpack.c.l.b16 %v1124
        %v1161 = vunpack.c.l.b16 %v1125
        %v1162 = vunpack.c.l.b16 %v1126
        %v1163 = vunpack.c.l.b16 %v1127
        %v1164 = vunpack.c.l.b16 %v1128
        %v1165 = vunpack.c.l.b16 %v1129
        %v1166 = vunpack.c.l.b16 %v1130
        %v1167 = vunpack.c.l.b16 %v1131
        %v1168 = vunpack.c.l.b16 %v1132
        %v1169 = vunpack.c.l.b16 %v1133
        %v1170 = vunpack.c.l.b16 %v1134
        %v1171 = vunpack.c.l.b16 %v1135
        %v1172 = vpack.c.b16 %v1155, %v1154
        %v1173 = vpack.c.b16 %v1157, %v1156
        %v1174 = vpack.c.b16 %v1159, %v1158
        %v1175 = vpack.c.b16 %v1161, %v1160
        %v1176 = vpack.c.b16 %v1163, %v1162
        %v1177 = vpack.c.b16 %v1165, %v1164
        %v1178 = vpack.c.b16 %v1167, %v1166
        %v1179 = vpack.c.b16 %v1169, %v1168
        %v1180 = vpack.c.b16 %v1171, %v1170
        %v1182 = vsel %vm643, %v1172, 0
        %v1185 = vsel %vm643, %v1173, 0
        %v1188 = vsel %vm643, %v1174, 0
        %v1191 = vsel %vm643, %v1175, 0
        %v1194 = vsel %vm643, %v1176, 0
        %v1197 = vsel %vm643, %v1177, 0
        %v1200 = vsel %vm643, %v1178, 0
        %v1203 = vsel %vm643, %v1179, 0
        %v1206 = vsel %vm643, %v1180, 0
        %1208 = vmatprep.subr.bf16.mxu0 0
        %1209 = vmatpush1.bf16.msra.mxu0 0
        %1210 = vmatprep.subr.bf16.mxu0 0
        %1211 = vmatpush1.bf16.msra.mxu0 0
        %1212 = vmatprep.subr.bf16.mxu0 0
        %1213 = vmatpush1.bf16.msra.mxu0 0
        %1214 = vmatprep.subr.bf16.mxu0 0
        %1215 = vmatpush1.bf16.msra.mxu0 0
        %1216 = vmatprep.subr.bf16.mxu0 0
        %1217 = vmatpush1.bf16.msra.mxu0 0
        %1218 = vmatprep.subr.bf16.mxu0 0
        %1219 = vmatpush1.bf16.msra.mxu0 0
        %1220 = vmatprep.subr.bf16.mxu0 0
        %1221 = vmatpush1.bf16.msra.mxu0 %v676
        %1222 = vmatprep.subr.bf16.mxu0 0
        %1223 = vmatpush1.bf16.msra.mxu0 %v640
        %1224 = vmatprep.subr.bf16.mxu0 0
        %1225 = vmatpush2.bf16.msra.mxu0 0
        %1226 = vmatprep.subr.bf16.mxu0 0
        %1227 = vmatpush2.bf16.msra.mxu0 0
        %1228 = vmatprep.subr.bf16.mxu0 0
        %1229 = vmatpush2.bf16.msra.mxu0 0
        %1230 = vmatprep.subr.bf16.mxu0 0
        %1231 = vmatpush2.bf16.msra.mxu0 0
        %1232 = vmatprep.subr.bf16.mxu0 0
        %1233 = vmatpush2.bf16.msra.mxu0 0
        %1234 = vmatprep.subr.bf16.mxu0 0
        %1235 = vmatpush2.bf16.msra.mxu0 0
        %1236 = vmatprep.subr.bf16.mxu0 0
        %1237 = vmatpush2.bf16.msra.mxu0 0
        %1238 = vmatprep.subr.bf16.mxu0 0
        %1239 = vmatpush2.bf16.msra.mxu0 0
        %1240 = vmatprep.mubr.bf16.mxu0 0
        %1241 = vmatmul.mubr.bf16.gmra.mxu0 %v1182
        %v1242 = vpop.f32.mrf.mxu0
        %v1243 = vadd.f32 %v585, %v1242
        %v1244 = vpop.f32.mrf.mxu0
        %v1245 = vpop.f32.mrf.mxu0
        %v1246 = vadd.f32 %v585, %v1245
        %v1247 = vpop.f32.mrf.mxu0
        %1248 = vmatprep.mubr.bf16.mxu0 0
        %1249 = vmatmul.mubr.bf16.gmra.mxu0 %v1185
        %v1250 = vpop.f32.mrf.mxu0
        %v1251 = vadd.f32 %v585, %v1250
        %v1252 = vpop.f32.mrf.mxu0
        %v1253 = vpop.f32.mrf.mxu0
        %v1254 = vadd.f32 %v585, %v1253
        %v1255 = vpop.f32.mrf.mxu0
        %1256 = vmatprep.mubr.bf16.mxu0 0
        %1257 = vmatmul.mubr.bf16.gmra.mxu0 %v1188
        %v1258 = vpop.f32.mrf.mxu0
        %v1259 = vadd.f32 %v585, %v1258
        %v1260 = vpop.f32.mrf.mxu0
        %v1261 = vpop.f32.mrf.mxu0
        %v1262 = vadd.f32 %v585, %v1261
        %v1263 = vpop.f32.mrf.mxu0
        %1264 = vmatprep.mubr.bf16.mxu0 0
        %1265 = vmatmul.mubr.bf16.gmra.mxu0 %v1191
        %v1266 = vpop.f32.mrf.mxu0
        %v1267 = vadd.f32 %v585, %v1266
        %v1268 = vpop.f32.mrf.mxu0
        %v1269 = vpop.f32.mrf.mxu0
        %v1270 = vadd.f32 %v585, %v1269
        %v1271 = vpop.f32.mrf.mxu0
        %1272 = vmatprep.mubr.bf16.mxu0 0
        %1273 = vmatmul.mubr.bf16.gmra.mxu0 %v1194
        %v1274 = vpop.f32.mrf.mxu0
        %v1275 = vadd.f32 %v585, %v1274
        %v1276 = vpop.f32.mrf.mxu0
        %v1277 = vpop.f32.mrf.mxu0
        %v1278 = vadd.f32 %v585, %v1277
        %v1279 = vpop.f32.mrf.mxu0
        %1280 = vmatprep.mubr.bf16.mxu0 0
        %1281 = vmatmul.mubr.bf16.gmra.mxu0 %v1197
        %v1282 = vpop.f32.mrf.mxu0
        %v1283 = vadd.f32 %v585, %v1282
        %v1284 = vpop.f32.mrf.mxu0
        %v1285 = vpop.f32.mrf.mxu0
        %v1286 = vadd.f32 %v585, %v1285
        %v1287 = vpop.f32.mrf.mxu0
        %1288 = vmatprep.mubr.bf16.mxu0 0
        %1289 = vmatmul.mubr.bf16.gmra.mxu0 %v1200
        %v1290 = vpop.f32.mrf.mxu0
        %v1291 = vadd.f32 %v585, %v1290
        %v1292 = vpop.f32.mrf.mxu0
        %v1293 = vpop.f32.mrf.mxu0
        %v1294 = vadd.f32 %v585, %v1293
        %v1295 = vpop.f32.mrf.mxu0
        %1296 = vmatprep.mubr.bf16.mxu0 0
        %1297 = vmatmul.mubr.bf16.gmra.mxu0 %v1203
        %v1298 = vpop.f32.mrf.mxu0
        %v1299 = vadd.f32 %v585, %v1298
        %v1300 = vpop.f32.mrf.mxu0
        %v1301 = vpop.f32.mrf.mxu0
        %v1302 = vadd.f32 %v585, %v1301
        %v1303 = vpop.f32.mrf.mxu0
        %1304 = vmatprep.mubr.bf16.mxu0 0
        %1305 = vmatmul.mubr.bf16.gmra.mxu0 %v1206
        %v1306 = vpop.f32.mrf.mxu0
        %v1307 = vadd.f32 %v585, %v1306
        %v1308 = vpop.f32.mrf.mxu0
        %v1309 = vpop.f32.mrf.mxu0
        %v1310 = vadd.f32 %v585, %v1309
        %v1311 = vpop.f32.mrf.mxu0
        %1312 = vdwg.mxu0
        %v1313 = vmax.f32 %v1243, 0.0
        %v1314 = vmax.f32 %v1246, 0.0
        %v1315 = vmax.f32 %v1251, 0.0
        %v1316 = vmax.f32 %v1254, 0.0
        %v1317 = vmax.f32 %v1259, 0.0
        %v1318 = vmax.f32 %v1262, 0.0
        %v1319 = vmax.f32 %v1267, 0.0
        %v1320 = vmax.f32 %v1270, 0.0
        %v1321 = vmax.f32 %v1275, 0.0
        %v1322 = vmax.f32 %v1278, 0.0
        %v1323 = vmax.f32 %v1283, 0.0
        %v1324 = vmax.f32 %v1286, 0.0
        %v1325 = vmax.f32 %v1291, 0.0
        %v1326 = vmax.f32 %v1294, 0.0
        %v1327 = vmax.f32 %v1299, 0.0
        %v1328 = vmax.f32 %v1302, 0.0
        %v1329 = vmax.f32 %v1307, 0.0
        %v1330 = vmax.f32 %v1310, 0.0
        %v1331 = vmul.f32 %v1313, %v805
        %v1332 = vmul.f32 %v1314, %v805
        %v1333 = vmul.f32 %v1315, %v805
        %v1334 = vmul.f32 %v1316, %v805
        %v1335 = vmul.f32 %v1317, %v805
        %v1336 = vmul.f32 %v1318, %v805
        %v1337 = vmul.f32 %v1319, %v805
        %v1338 = vmul.f32 %v1320, %v805
        %v1339 = vmul.f32 %v1321, %v805
        %v1340 = vmul.f32 %v1322, %v805
        %v1341 = vmul.f32 %v1323, %v805
        %v1342 = vmul.f32 %v1324, %v805
        %v1343 = vmul.f32 %v1325, %v805
        %v1344 = vmul.f32 %v1326, %v805
        %v1345 = vmul.f32 %v1327, %v805
        %v1346 = vmul.f32 %v1328, %v805
        %v1347 = vmul.f32 %v1329, %v805
        %v1348 = vmul.f32 %v1330, %v805
        %v1349 = vadd.f32 %v1331, %v829
        %v1350 = vadd.f32 %v1332, %v829
        %v1351 = vadd.f32 %v1333, %v829
        %v1352 = vadd.f32 %v1334, %v829
        %v1353 = vadd.f32 %v1335, %v829
        %v1354 = vadd.f32 %v1336, %v829
        %v1355 = vadd.f32 %v1337, %v829
        %v1356 = vadd.f32 %v1338, %v829
        %v1357 = vadd.f32 %v1339, %v829
        %v1358 = vadd.f32 %v1340, %v829
        %v1359 = vadd.f32 %v1341, %v829
        %v1360 = vadd.f32 %v1342, %v829
        %v1361 = vadd.f32 %v1343, %v829
        %v1362 = vadd.f32 %v1344, %v829
        %v1363 = vadd.f32 %v1345, %v829
        %v1364 = vadd.f32 %v1346, %v829
        %v1365 = vadd.f32 %v1347, %v829
        %v1366 = vadd.f32 %v1348, %v829
        %v1367 = vmax.f32 %v1099, %v1349
        %v1368 = vmax.f32 %v1100, %v1350
        %v1369 = vmax.f32 %v1101, %v1351
        %v1370 = vmax.f32 %v1102, %v1352
        %v1371 = vmax.f32 %v1103, %v1353
        %v1372 = vmax.f32 %v1104, %v1354
        %v1373 = vmax.f32 %v1105, %v1355
        %v1374 = vmax.f32 %v1106, %v1356
        %v1375 = vmax.f32 %v1107, %v1357
        %v1376 = vmax.f32 %v1108, %v1358
        %v1377 = vmax.f32 %v1109, %v1359
        %v1378 = vmax.f32 %v1110, %v1360
        %v1379 = vmax.f32 %v1111, %v1361
        %v1380 = vmax.f32 %v1112, %v1362
        %v1381 = vmax.f32 %v1113, %v1363
        %v1382 = vmax.f32 %v1114, %v1364
        %v1383 = vmax.f32 %v1115, %v1365
        %v1384 = vmax.f32 %v1116, %v1366
        %s1385 = scalar_lea.vmem %s523, 216 [#allocation2]
        %v1386 = vld [vmem:[%s1385] sm:$0xf]
        %v1387 = vld [vmem:[%s1385 + $0x4] sm:$0xf]
        %v1388 = vld [vmem:[%s1385 + $0x8] sm:$0xf]
        %v1389 = vld [vmem:[%s1385 + $0xc] sm:$0xf]
        %v1390 = vld [vmem:[%s1385 + $0x10] sm:$0xf]
        %v1391 = vld [vmem:[%s1385 + $0x14] sm:$0xf]
        %v1392 = vld [vmem:[%s1385 + $0x18] sm:$0xf]
        %v1393 = vld [vmem:[%s1385 + $0x1c] sm:$0xf]
        %v1394 = vld [vmem:[%s1385 + $0x20] sm:$0xf]
        %v1395 = vld [vmem:[%s1385 + $0x24] sm:$0xf]
        %v1396 = vld [vmem:[%s1385 + $0x28] sm:$0xf]
        %v1397 = vld [vmem:[%s1385 + $0x2c] sm:$0xf]
        %v1398 = vld [vmem:[%s1385 + $0x30] sm:$0xf]
        %v1399 = vld [vmem:[%s1385 + $0x34] sm:$0xf]
        %v1400 = vld [vmem:[%s1385 + $0x38] sm:$0xf]
        %v1401 = vld [vmem:[%s1385 + $0x3c] sm:$0xf]
        %v1402 = vld [vmem:[%s1385 + $0x40] sm:$0xf]
        %v1403 = vld [vmem:[%s1385 + $0x44] sm:$0xf]
        %v1422 = vunpack.c.l.b16 %v1386
        %v1423 = vunpack.c.l.b16 %v1387
        %v1424 = vunpack.c.l.b16 %v1388
        %v1425 = vunpack.c.l.b16 %v1389
        %v1426 = vunpack.c.l.b16 %v1390
        %v1427 = vunpack.c.l.b16 %v1391
        %v1428 = vunpack.c.l.b16 %v1392
        %v1429 = vunpack.c.l.b16 %v1393
        %v1430 = vunpack.c.l.b16 %v1394
        %v1431 = vunpack.c.l.b16 %v1395
        %v1432 = vunpack.c.l.b16 %v1396
        %v1433 = vunpack.c.l.b16 %v1397
        %v1434 = vunpack.c.l.b16 %v1398
        %v1435 = vunpack.c.l.b16 %v1399
        %v1436 = vunpack.c.l.b16 %v1400
        %v1437 = vunpack.c.l.b16 %v1401
        %v1438 = vunpack.c.l.b16 %v1402
        %v1439 = vunpack.c.l.b16 %v1403
        %v1440 = vpack.c.b16 %v1423, %v1422
        %v1441 = vpack.c.b16 %v1425, %v1424
        %v1442 = vpack.c.b16 %v1427, %v1426
        %v1443 = vpack.c.b16 %v1429, %v1428
        %v1444 = vpack.c.b16 %v1431, %v1430
        %v1445 = vpack.c.b16 %v1433, %v1432
        %v1446 = vpack.c.b16 %v1435, %v1434
        %v1447 = vpack.c.b16 %v1437, %v1436
        %v1448 = vpack.c.b16 %v1439, %v1438
        %v1450 = vsel %vm643, %v1440, 0
        %v1453 = vsel %vm643, %v1441, 0
        %v1456 = vsel %vm643, %v1442, 0
        %v1459 = vsel %vm643, %v1443, 0
        %v1462 = vsel %vm643, %v1444, 0
        %v1465 = vsel %vm643, %v1445, 0
        %v1468 = vsel %vm643, %v1446, 0
        %v1471 = vsel %vm643, %v1447, 0
        %v1474 = vsel %vm643, %v1448, 0
        %1476 = vmatprep.subr.bf16.mxu0 0
        %1477 = vmatpush1.bf16.msra.mxu0 0
        %1478 = vmatprep.subr.bf16.mxu0 0
        %1479 = vmatpush1.bf16.msra.mxu0 0
        %1480 = vmatprep.subr.bf16.mxu0 0
        %1481 = vmatpush1.bf16.msra.mxu0 0
        %1482 = vmatprep.subr.bf16.mxu0 0
        %1483 = vmatpush1.bf16.msra.mxu0 0
        %1484 = vmatprep.subr.bf16.mxu0 0
        %1485 = vmatpush1.bf16.msra.mxu0 0
        %1486 = vmatprep.subr.bf16.mxu0 0
        %1487 = vmatpush1.bf16.msra.mxu0 0
        %1488 = vmatprep.subr.bf16.mxu0 0
        %1489 = vmatpush1.bf16.msra.mxu0 %v676
        %1490 = vmatprep.subr.bf16.mxu0 0
        %1491 = vmatpush1.bf16.msra.mxu0 %v640
        %1492 = vmatprep.subr.bf16.mxu0 0
        %1493 = vmatpush2.bf16.msra.mxu0 0
        %1494 = vmatprep.subr.bf16.mxu0 0
        %1495 = vmatpush2.bf16.msra.mxu0 0
        %1496 = vmatprep.subr.bf16.mxu0 0
        %1497 = vmatpush2.bf16.msra.mxu0 0
        %1498 = vmatprep.subr.bf16.mxu0 0
        %1499 = vmatpush2.bf16.msra.mxu0 0
        %1500 = vmatprep.subr.bf16.mxu0 0
        %1501 = vmatpush2.bf16.msra.mxu0 0
        %1502 = vmatprep.subr.bf16.mxu0 0
        %1503 = vmatpush2.bf16.msra.mxu0 0
        %1504 = vmatprep.subr.bf16.mxu0 0
        %1505 = vmatpush2.bf16.msra.mxu0 0
        %1506 = vmatprep.subr.bf16.mxu0 0
        %1507 = vmatpush2.bf16.msra.mxu0 0
        %1508 = vmatprep.mubr.bf16.mxu0 0
        %1509 = vmatmul.mubr.bf16.gmra.mxu0 %v1450
        %v1510 = vpop.f32.mrf.mxu0
        %v1511 = vadd.f32 %v585, %v1510
        %v1512 = vpop.f32.mrf.mxu0
        %v1513 = vpop.f32.mrf.mxu0
        %v1514 = vadd.f32 %v585, %v1513
        %v1515 = vpop.f32.mrf.mxu0
        %1516 = vmatprep.mubr.bf16.mxu0 0
        %1517 = vmatmul.mubr.bf16.gmra.mxu0 %v1453
        %v1518 = vpop.f32.mrf.mxu0
        %v1519 = vadd.f32 %v585, %v1518
        %v1520 = vpop.f32.mrf.mxu0
        %v1521 = vpop.f32.mrf.mxu0
        %v1522 = vadd.f32 %v585, %v1521
        %v1523 = vpop.f32.mrf.mxu0
        %1524 = vmatprep.mubr.bf16.mxu0 0
        %1525 = vmatmul.mubr.bf16.gmra.mxu0 %v1456
        %v1526 = vpop.f32.mrf.mxu0
        %v1527 = vadd.f32 %v585, %v1526
        %v1528 = vpop.f32.mrf.mxu0
        %v1529 = vpop.f32.mrf.mxu0
        %v1530 = vadd.f32 %v585, %v1529
        %v1531 = vpop.f32.mrf.mxu0
        %1532 = vmatprep.mubr.bf16.mxu0 0
        %1533 = vmatmul.mubr.bf16.gmra.mxu0 %v1459
        %v1534 = vpop.f32.mrf.mxu0
        %v1535 = vadd.f32 %v585, %v1534
        %v1536 = vpop.f32.mrf.mxu0
        %v1537 = vpop.f32.mrf.mxu0
        %v1538 = vadd.f32 %v585, %v1537
        %v1539 = vpop.f32.mrf.mxu0
        %1540 = vmatprep.mubr.bf16.mxu0 0
        %1541 = vmatmul.mubr.bf16.gmra.mxu0 %v1462
        %v1542 = vpop.f32.mrf.mxu0
        %v1543 = vadd.f32 %v585, %v1542
        %v1544 = vpop.f32.mrf.mxu0
        %v1545 = vpop.f32.mrf.mxu0
        %v1546 = vadd.f32 %v585, %v1545
        %v1547 = vpop.f32.mrf.mxu0
        %1548 = vmatprep.mubr.bf16.mxu0 0
        %1549 = vmatmul.mubr.bf16.gmra.mxu0 %v1465
        %v1550 = vpop.f32.mrf.mxu0
        %v1551 = vadd.f32 %v585, %v1550
        %v1552 = vpop.f32.mrf.mxu0
        %v1553 = vpop.f32.mrf.mxu0
        %v1554 = vadd.f32 %v585, %v1553
        %v1555 = vpop.f32.mrf.mxu0
        %1556 = vmatprep.mubr.bf16.mxu0 0
        %1557 = vmatmul.mubr.bf16.gmra.mxu0 %v1468
        %v1558 = vpop.f32.mrf.mxu0
        %v1559 = vadd.f32 %v585, %v1558
        %v1560 = vpop.f32.mrf.mxu0
        %v1561 = vpop.f32.mrf.mxu0
        %v1562 = vadd.f32 %v585, %v1561
        %v1563 = vpop.f32.mrf.mxu0
        %1564 = vmatprep.mubr.bf16.mxu0 0
        %1565 = vmatmul.mubr.bf16.gmra.mxu0 %v1471
        %v1566 = vpop.f32.mrf.mxu0
        %v1567 = vadd.f32 %v585, %v1566
        %v1568 = vpop.f32.mrf.mxu0
        %v1569 = vpop.f32.mrf.mxu0
        %v1570 = vadd.f32 %v585, %v1569
        %v1571 = vpop.f32.mrf.mxu0
        %1572 = vmatprep.mubr.bf16.mxu0 0
        %1573 = vmatmul.mubr.bf16.gmra.mxu0 %v1474
        %v1574 = vpop.f32.mrf.mxu0
        %v1575 = vadd.f32 %v585, %v1574
        %v1576 = vpop.f32.mrf.mxu0
        %v1577 = vpop.f32.mrf.mxu0
        %v1578 = vadd.f32 %v585, %v1577
        %v1579 = vpop.f32.mrf.mxu0
        %1580 = vdwg.mxu0
        %v1581 = vmax.f32 %v1511, 0.0
        %v1582 = vmax.f32 %v1514, 0.0
        %v1583 = vmax.f32 %v1519, 0.0
        %v1584 = vmax.f32 %v1522, 0.0
        %v1585 = vmax.f32 %v1527, 0.0
        %v1586 = vmax.f32 %v1530, 0.0
        %v1587 = vmax.f32 %v1535, 0.0
        %v1588 = vmax.f32 %v1538, 0.0
        %v1589 = vmax.f32 %v1543, 0.0
        %v1590 = vmax.f32 %v1546, 0.0
        %v1591 = vmax.f32 %v1551, 0.0
        %v1592 = vmax.f32 %v1554, 0.0
        %v1593 = vmax.f32 %v1559, 0.0
        %v1594 = vmax.f32 %v1562, 0.0
        %v1595 = vmax.f32 %v1567, 0.0
        %v1596 = vmax.f32 %v1570, 0.0
        %v1597 = vmax.f32 %v1575, 0.0
        %v1598 = vmax.f32 %v1578, 0.0
        %v1599 = vmul.f32 %v1581, %v805
        %v1600 = vmul.f32 %v1582, %v805
        %v1601 = vmul.f32 %v1583, %v805
        %v1602 = vmul.f32 %v1584, %v805
        %v1603 = vmul.f32 %v1585, %v805
        %v1604 = vmul.f32 %v1586, %v805
        %v1605 = vmul.f32 %v1587, %v805
        %v1606 = vmul.f32 %v1588, %v805
        %v1607 = vmul.f32 %v1589, %v805
        %v1608 = vmul.f32 %v1590, %v805
        %v1609 = vmul.f32 %v1591, %v805
        %v1610 = vmul.f32 %v1592, %v805
        %v1611 = vmul.f32 %v1593, %v805
        %v1612 = vmul.f32 %v1594, %v805
        %v1613 = vmul.f32 %v1595, %v805
        %v1614 = vmul.f32 %v1596, %v805
        %v1615 = vmul.f32 %v1597, %v805
        %v1616 = vmul.f32 %v1598, %v805
        %v1617 = vadd.f32 %v1599, %v829
        %v1618 = vadd.f32 %v1600, %v829
        %v1619 = vadd.f32 %v1601, %v829
        %v1620 = vadd.f32 %v1602, %v829
        %v1621 = vadd.f32 %v1603, %v829
        %v1622 = vadd.f32 %v1604, %v829
        %v1623 = vadd.f32 %v1605, %v829
        %v1624 = vadd.f32 %v1606, %v829
        %v1625 = vadd.f32 %v1607, %v829
        %v1626 = vadd.f32 %v1608, %v829
        %v1627 = vadd.f32 %v1609, %v829
        %v1628 = vadd.f32 %v1610, %v829
        %v1629 = vadd.f32 %v1611, %v829
        %v1630 = vadd.f32 %v1612, %v829
        %v1631 = vadd.f32 %v1613, %v829
        %v1632 = vadd.f32 %v1614, %v829
        %v1633 = vadd.f32 %v1615, %v829
        %v1634 = vadd.f32 %v1616, %v829
        %v1635 = vmax.f32 %v1367, %v1617
        %v1636 = vmax.f32 %v1368, %v1618
        %v1637 = vmax.f32 %v1369, %v1619
        %v1638 = vmax.f32 %v1370, %v1620
        %v1639 = vmax.f32 %v1371, %v1621
        %v1640 = vmax.f32 %v1372, %v1622
        %v1641 = vmax.f32 %v1373, %v1623
        %v1642 = vmax.f32 %v1374, %v1624
        %v1643 = vmax.f32 %v1375, %v1625
        %v1644 = vmax.f32 %v1376, %v1626
        %v1645 = vmax.f32 %v1377, %v1627
        %v1646 = vmax.f32 %v1378, %v1628
        %v1647 = vmax.f32 %v1379, %v1629
        %v1648 = vmax.f32 %v1380, %v1630
        %v1649 = vmax.f32 %v1381, %v1631
        %v1650 = vmax.f32 %v1382, %v1632
        %v1651 = vmax.f32 %v1383, %v1633
        %v1652 = vmax.f32 %v1384, %v1634
        %v1653 = vpack.c.bf16 %v1636, %v1635
        %v1654 = vpack.c.bf16 %v1638, %v1637
        %v1655 = vpack.c.bf16 %v1640, %v1639
        %v1656 = vpack.c.bf16 %v1642, %v1641
        %v1657 = vpack.c.bf16 %v1644, %v1643
        %v1658 = vpack.c.bf16 %v1646, %v1645
        %v1659 = vpack.c.bf16 %v1648, %v1647
        %v1660 = vpack.c.bf16 %v1650, %v1649
        %v1661 = vpack.c.bf16 %v1652, %v1651
        %v1671 = vunpack.c.l.b16 %v1653
        %v1672 = vunpack.c.h.b16 %v1653
        %v1673 = vunpack.c.l.b16 %v1654
        %v1674 = vunpack.c.h.b16 %v1654
        %v1675 = vunpack.c.l.b16 %v1655
        %v1676 = vunpack.c.h.b16 %v1655
        %v1677 = vunpack.c.l.b16 %v1656
        %v1678 = vunpack.c.h.b16 %v1656
        %v1679 = vunpack.c.l.b16 %v1657
        %v1680 = vunpack.c.h.b16 %v1657
        %v1681 = vunpack.c.l.b16 %v1658
        %v1682 = vunpack.c.h.b16 %v1658
        %v1683 = vunpack.c.l.b16 %v1659
        %v1684 = vunpack.c.h.b16 %v1659
        %v1685 = vunpack.c.l.b16 %v1660
        %v1686 = vunpack.c.h.b16 %v1660
        %v1687 = vunpack.c.l.b16 %v1661
        %v1688 = vunpack.c.h.b16 %v1661
        %v1689 = vpack.c.b16 %v1671, %v1671
        %v1690 = vpack.c.b16 %v1672, %v1672
        %v1691 = vpack.c.b16 %v1673, %v1673
        %v1692 = vpack.c.b16 %v1674, %v1674
        %v1693 = vpack.c.b16 %v1675, %v1675
        %v1694 = vpack.c.b16 %v1676, %v1676
        %v1695 = vpack.c.b16 %v1677, %v1677
        %v1696 = vpack.c.b16 %v1678, %v1678
        %v1697 = vpack.c.b16 %v1679, %v1679
        %v1698 = vpack.c.b16 %v1680, %v1680
        %v1699 = vpack.c.b16 %v1681, %v1681
        %v1700 = vpack.c.b16 %v1682, %v1682
        %v1701 = vpack.c.b16 %v1683, %v1683
        %v1702 = vpack.c.b16 %v1684, %v1684
        %v1703 = vpack.c.b16 %v1685, %v1685
        %v1704 = vpack.c.b16 %v1686, %v1686
        %v1705 = vpack.c.b16 %v1687, %v1687
        %v1706 = vpack.c.b16 %v1688, %v1688
        %1725 = vst [vmem:[%s553] sm:$0xf] %v1689
        %1726 = vst [vmem:[%s553 + $0x4] sm:$0xf] %v1690
        %1727 = vst [vmem:[%s553 + $0x8] sm:$0xf] %v1691
        %1728 = vst [vmem:[%s553 + $0xc] sm:$0xf] %v1692
        %1729 = vst [vmem:[%s553 + $0x10] sm:$0xf] %v1693
        %1730 = vst [vmem:[%s553 + $0x14] sm:$0xf] %v1694
        %1731 = vst [vmem:[%s553 + $0x18] sm:$0xf] %v1695
        %1732 = vst [vmem:[%s553 + $0x1c] sm:$0xf] %v1696
        %1733 = vst [vmem:[%s553 + $0x20] sm:$0xf] %v1697
        %1734 = vst [vmem:[%s553 + $0x24] sm:$0xf] %v1698
        %1735 = vst [vmem:[%s553 + $0x28] sm:$0xf] %v1699
        %1736 = vst [vmem:[%s553 + $0x2c] sm:$0xf] %v1700
        %1737 = vst [vmem:[%s553 + $0x30] sm:$0xf] %v1701
        %1738 = vst [vmem:[%s553 + $0x34] sm:$0xf] %v1702
        %1739 = vst [vmem:[%s553 + $0x38] sm:$0xf] %v1703
        %1740 = vst [vmem:[%s553 + $0x3c] sm:$0xf] %v1704
        %1741 = vst [vmem:[%s553 + $0x40] sm:$0xf] %v1705
        %1742 = vst [vmem:[%s553 + $0x44] sm:$0xf] %v1706
        %s1743 = smul.u32 18, %s16
        %p1744 = scmp.lt.s32.totalorder %s1743, 35
        %s1745 = scalar_select %p1744, %s1743, 35
        %s1746 = smul.addr %s1745, 4
        %s1747 = scalar_lea.vmem %s5, %s1746
        // Predicated region
        $region82: #{conv_model_forward.4} parent=76 // pred_check
          %p1748 = pneg %p144
        $region83: #{conv_model_forward.4} parent=76 // pred_check_branch
          %1750 = sbr.rel (%p1748) target = $region85
        $region84: #{conv_model_forward.4} parent=76 // pred_region
          %s1751 = smul.u32 18, %s16
        $region85: #{conv_model_forward.4} parent=76 // pred_fallthru
          _
      $region77: #{conv_model_forward.4} parent=5 // pred_fallthru
        _
      %p1752 = scmp.le.s32.totalorder 2, %s11
      // Predicated region
      $region86: #{conv_model_forward.4} parent=5 // pred_check
        %p1753 = pneg %p1752
      $region87: #{conv_model_forward.4} parent=5 // pred_check_branch
        %1755 = sbr.rel (%p1753) target = $region89
      $region88: #{conv_model_forward.4} parent=5 // pred_region
        %s1756 = ssub.s32 %s11, 2
        // Predicated region
        $region90: #{conv_model_forward.4} parent=88 // pred_check
          %p1757 = pneg %p150
        $region91: #{conv_model_forward.4} parent=88 // pred_check_branch
          %1759 = sbr.rel (%p1757) target = $region93
        $region92: #{conv_model_forward.4} parent=88 // pred_region
          %s1760 = smul.u32 18, %s17
          %p1761 = scmp.lt.s32.totalorder %s1760, 35
          %s1762 = scalar_select %p1761, %s1760, 35
          %s1763 = smul.addr %s1762, 4
          %s1764 = scalar_lea.vmem %s5, %s1763
        $region93: #{conv_model_forward.4} parent=88 // pred_fallthru
          _
      $region89: #{conv_model_forward.4} parent=5 // pred_fallthru
        _
    $region6: #{conv_model_forward.4} parent=1 // loop_footer
      %s15 = sadd.s32 1, %s11
    $region7: #{conv_model_forward.4} parent=1 // loop_footer_branch
      %10 = sbr.rel target = $region3
    $region8: #{conv_model_forward.4} parent=1 // loop_exit
      _

// kernel: conv_model_forward.5
$region0: #{conv_model_forward.5}
  #allocation0 [shape = 'u32[]', space=smem, size = 0x4, offset = 0x4, fixed_abs, tag = 'smem constant byte address 0x4 - core index']
  #allocation1 [shape = 'u32[144,128]{1,0:T(1,128)}', space=vmem, size = 0x12000, scoped, tag = 'internal scratch']
  %s0 = inlined_call_operand.vmem [shape: bf16[4,32,1600], index: 0, kind: input, shape index: {}]
  %s1 = inlined_call_operand.vmem [shape: bf16[1600,128], index: 1, kind: input, shape index: {}]
  %s2 = inlined_call_operand.vmem [shape: f32[1,128], index: 2, kind: input, shape index: {}]
  %s3 = inlined_call_operand.vmem [shape: f32[1,128], index: 3, kind: input, shape index: {}]
  %s4 = inlined_call_operand.vmem [shape: f32[1,128], index: 4, kind: input, shape index: {}]
  %s5 = inlined_call_operand.vmem [shape: bf16[32,128], index: 5, kind: output, shape index: {}]
  %s6 = sld [smem:[#allocation0]]
  $region30: #{conv_model_forward.5} parent=0
    _
  %s8 = ssub.s32 1, %s6
  %s9 = scalar_select 0, %s8, %s6
  // Predicated region
  $region2: #{conv_model_forward.5} parent=0 // pred_check
    _
  $region3: #{conv_model_forward.5} parent=0 // pred_check_branch
    %11 = sbr.rel (0) target = $region5
  $region4: #{conv_model_forward.5} parent=0 // pred_region
    _
  $region5: #{conv_model_forward.5} parent=0 // pred_fallthru
    _
  // Predicated region
  $region6: #{conv_model_forward.5} parent=0 // pred_check
    _
  $region7: #{conv_model_forward.5} parent=0 // pred_check_branch
    %13 = sbr.rel (0) target = $region9
  $region8: #{conv_model_forward.5} parent=0 // pred_region
    _
  $region9: #{conv_model_forward.5} parent=0 // pred_fallthru
    _
  // Predicated region
  $region10: #{conv_model_forward.5} parent=0 // pred_check
    _
  $region11: #{conv_model_forward.5} parent=0 // pred_check_branch
    %15 = sbr.rel (0) target = $region13
  $region12: #{conv_model_forward.5} parent=0 // pred_region
    _
  $region13: #{conv_model_forward.5} parent=0 // pred_fallthru
    _
  // Predicated region
  $region14: #{conv_model_forward.5} parent=0 // pred_check
    _
  $region15: #{conv_model_forward.5} parent=0 // pred_check_branch
    %17 = sbr.rel (0) target = $region17
  $region16: #{conv_model_forward.5} parent=0 // pred_region
    _
  $region17: #{conv_model_forward.5} parent=0 // pred_fallthru
    _
  // Predicated region
  $region18: #{conv_model_forward.5} parent=0 // pred_check
    _
  $region19: #{conv_model_forward.5} parent=0 // pred_check_branch
    %19 = sbr.rel (0) target = $region21
  $region20: #{conv_model_forward.5} parent=0 // pred_region
    _
  $region21: #{conv_model_forward.5} parent=0 // pred_fallthru
    _
  %v21 = vld [vmem:[%s1] sm:$0xf]
  %v22 = vld [vmem:[%s1 + $0x4] sm:$0xf]
  %v23 = vld [vmem:[%s1 + $0x8] sm:$0xf]
  %v24 = vld [vmem:[%s1 + $0xc] sm:$0xf]
  %v25 = vld [vmem:[%s1 + $0x10] sm:$0xf]
  %v26 = vld [vmem:[%s1 + $0x14] sm:$0xf]
  %v27 = vld [vmem:[%s1 + $0x18] sm:$0xf]
  %v28 = vld [vmem:[%s1 + $0x1c] sm:$0xf]
  %v29 = vld [vmem:[%s1 + $0x20] sm:$0xf]
  %v30 = vld [vmem:[%s1 + $0x24] sm:$0xf]
  %v31 = vld [vmem:[%s1 + $0x28] sm:$0xf]
  %v32 = vld [vmem:[%s1 + $0x2c] sm:$0xf]
  %v33 = vld [vmem:[%s1 + $0x30] sm:$0xf]
  %v34 = vld [vmem:[%s1 + $0x34] sm:$0xf]
  %v35 = vld [vmem:[%s1 + $0x38] sm:$0xf]
  %v36 = vld [vmem:[%s1 + $0x3c] sm:$0xf]
  %v37 = vld [vmem:[%s1 + $0x40] sm:$0xf]
  %v38 = vld [vmem:[%s1 + $0x44] sm:$0xf]
  %v39 = vld [vmem:[%s1 + $0x48] sm:$0xf]
  %v40 = vld [vmem:[%s1 + $0x4c] sm:$0xf]
  %v41 = vld [vmem:[%s1 + $0x50] sm:$0xf]
  %v42 = vld [vmem:[%s1 + $0x54] sm:$0xf]
  %v43 = vld [vmem:[%s1 + $0x58] sm:$0xf]
  %v44 = vld [vmem:[%s1 + $0x5c] sm:$0xf]
  %v45 = vld [vmem:[%s1 + $0x60] sm:$0xf]
  %v46 = vld [vmem:[%s1 + $0x64] sm:$0xf]
  %v47 = vld [vmem:[%s1 + $0x68] sm:$0xf]
  %v48 = vld [vmem:[%s1 + $0x6c] sm:$0xf]
  %v49 = vld [vmem:[%s1 + $0x70] sm:$0xf]
  %v50 = vld [vmem:[%s1 + $0x74] sm:$0xf]
  %v51 = vld [vmem:[%s1 + $0x78] sm:$0xf]
  %v52 = vld [vmem:[%s1 + $0x7c] sm:$0xf]
  %v53 = vld [vmem:[%s1 + $0x80] sm:$0xf]
  %v54 = vld [vmem:[%s1 + $0x84] sm:$0xf]
  %v55 = vld [vmem:[%s1 + $0x88] sm:$0xf]
  %v56 = vld [vmem:[%s1 + $0x8c] sm:$0xf]
  %v57 = vld [vmem:[%s1 + $0x90] sm:$0xf]
  %v58 = vld [vmem:[%s1 + $0x94] sm:$0xf]
  %v59 = vld [vmem:[%s1 + $0x98] sm:$0xf]
  %v60 = vld [vmem:[%s1 + $0x9c] sm:$0xf]
  %v61 = vld [vmem:[%s1 + $0xa0] sm:$0xf]
  %v62 = vld [vmem:[%s1 + $0xa4] sm:$0xf]
  %v63 = vld [vmem:[%s1 + $0xa8] sm:$0xf]
  %v64 = vld [vmem:[%s1 + $0xac] sm:$0xf]
  %v65 = vld [vmem:[%s1 + $0xb0] sm:$0xf]
  %v66 = vld [vmem:[%s1 + $0xb4] sm:$0xf]
  %v67 = vld [vmem:[%s1 + $0xb8] sm:$0xf]
  %v68 = vld [vmem:[%s1 + $0xbc] sm:$0xf]
  %v69 = vld [vmem:[%s1 + $0xc0] sm:$0xf]
  %v70 = vld [vmem:[%s1 + $0xc4] sm:$0xf]
  %v71 = vld [vmem:[%s1 + $0xc8] sm:$0xf]
  %v72 = vld [vmem:[%s1 + $0xcc] sm:$0xf]
  %v73 = vld [vmem:[%s1 + $0xd0] sm:$0xf]
  %v74 = vld [vmem:[%s1 + $0xd4] sm:$0xf]
  %v75 = vld [vmem:[%s1 + $0xd8] sm:$0xf]
  %v76 = vld [vmem:[%s1 + $0xdc] sm:$0xf]
  %v77 = vld [vmem:[%s1 + $0xe0] sm:$0xf]
  %v78 = vld [vmem:[%s1 + $0xe4] sm:$0xf]
  %v79 = vld [vmem:[%s1 + $0xe8] sm:$0xf]
  %v80 = vld [vmem:[%s1 + $0xec] sm:$0xf]
  %v81 = vld [vmem:[%s1 + $0xf0] sm:$0xf]
  %v82 = vld [vmem:[%s1 + $0xf4] sm:$0xf]
  %v83 = vld [vmem:[%s1 + $0xf8] sm:$0xf]
  %v84 = vld [vmem:[%s1 + $0xfc] sm:$0xf]
  %v85 = vld [vmem:[%s1 + $0x100] sm:$0xf]
  %v86 = vld [vmem:[%s1 + $0x104] sm:$0xf]
  %v87 = vld [vmem:[%s1 + $0x108] sm:$0xf]
  %v88 = vld [vmem:[%s1 + $0x10c] sm:$0xf]
  %v89 = vld [vmem:[%s1 + $0x110] sm:$0xf]
  %v90 = vld [vmem:[%s1 + $0x114] sm:$0xf]
  %v91 = vld [vmem:[%s1 + $0x118] sm:$0xf]
  %v92 = vld [vmem:[%s1 + $0x11c] sm:$0xf]
  %v93 = vld [vmem:[%s1 + $0x120] sm:$0xf]
  %v94 = vld [vmem:[%s1 + $0x124] sm:$0xf]
  %v95 = vld [vmem:[%s1 + $0x128] sm:$0xf]
  %v96 = vld [vmem:[%s1 + $0x12c] sm:$0xf]
  %v97 = vld [vmem:[%s1 + $0x130] sm:$0xf]
  %v98 = vld [vmem:[%s1 + $0x134] sm:$0xf]
  %v99 = vld [vmem:[%s1 + $0x138] sm:$0xf]
  %v100 = vld [vmem:[%s1 + $0x13c] sm:$0xf]
  %v101 = vld [vmem:[%s1 + $0x140] sm:$0xf]
  %v102 = vld [vmem:[%s1 + $0x144] sm:$0xf]
  %v103 = vld [vmem:[%s1 + $0x148] sm:$0xf]
  %v104 = vld [vmem:[%s1 + $0x14c] sm:$0xf]
  %v105 = vld [vmem:[%s1 + $0x150] sm:$0xf]
  %v106 = vld [vmem:[%s1 + $0x154] sm:$0xf]
  %v107 = vld [vmem:[%s1 + $0x158] sm:$0xf]
  %v108 = vld [vmem:[%s1 + $0x15c] sm:$0xf]
  %v109 = vld [vmem:[%s1 + $0x160] sm:$0xf]
  %v110 = vld [vmem:[%s1 + $0x164] sm:$0xf]
  %v111 = vld [vmem:[%s1 + $0x168] sm:$0xf]
  %v112 = vld [vmem:[%s1 + $0x16c] sm:$0xf]
  %v113 = vld [vmem:[%s1 + $0x170] sm:$0xf]
  %v114 = vld [vmem:[%s1 + $0x174] sm:$0xf]
  %v115 = vld [vmem:[%s1 + $0x178] sm:$0xf]
  %v116 = vld [vmem:[%s1 + $0x17c] sm:$0xf]
  %v117 = vld [vmem:[%s1 + $0x180] sm:$0xf]
  %v118 = vld [vmem:[%s1 + $0x184] sm:$0xf]
  %v119 = vld [vmem:[%s1 + $0x188] sm:$0xf]
  %v120 = vld [vmem:[%s1 + $0x18c] sm:$0xf]
  %v121 = vld [vmem:[%s1 + $0x190] sm:$0xf]
  %v122 = vld [vmem:[%s1 + $0x194] sm:$0xf]
  %v123 = vld [vmem:[%s1 + $0x198] sm:$0xf]
  %v124 = vld [vmem:[%s1 + $0x19c] sm:$0xf]
  %v125 = vld [vmem:[%s1 + $0x1a0] sm:$0xf]
  %v126 = vld [vmem:[%s1 + $0x1a4] sm:$0xf]
  %v127 = vld [vmem:[%s1 + $0x1a8] sm:$0xf]
  %v128 = vld [vmem:[%s1 + $0x1ac] sm:$0xf]
  %v129 = vld [vmem:[%s1 + $0x1b0] sm:$0xf]
  %v130 = vld [vmem:[%s1 + $0x1b4] sm:$0xf]
  %v131 = vld [vmem:[%s1 + $0x1b8] sm:$0xf]
  %v132 = vld [vmem:[%s1 + $0x1bc] sm:$0xf]
  %v133 = vld [vmem:[%s1 + $0x1c0] sm:$0xf]
  %v134 = vld [vmem:[%s1 + $0x1c4] sm:$0xf]
  %v135 = vld [vmem:[%s1 + $0x1c8] sm:$0xf]
  %v136 = vld [vmem:[%s1 + $0x1cc] sm:$0xf]
  %v137 = vld [vmem:[%s1 + $0x1d0] sm:$0xf]
  %v138 = vld [vmem:[%s1 + $0x1d4] sm:$0xf]
  %v139 = vld [vmem:[%s1 + $0x1d8] sm:$0xf]
  %v140 = vld [vmem:[%s1 + $0x1dc] sm:$0xf]
  %v141 = vld [vmem:[%s1 + $0x1e0] sm:$0xf]
  %v142 = vld [vmem:[%s1 + $0x1e4] sm:$0xf]
  %v143 = vld [vmem:[%s1 + $0x1e8] sm:$0xf]
  %v144 = vld [vmem:[%s1 + $0x1ec] sm:$0xf]
  %v145 = vld [vmem:[%s1 + $0x1f0] sm:$0xf]
  %v146 = vld [vmem:[%s1 + $0x1f4] sm:$0xf]
  %v147 = vld [vmem:[%s1 + $0x1f8] sm:$0xf]
  %v148 = vld [vmem:[%s1 + $0x1fc] sm:$0xf]
  %v149 = vld [vmem:[%s1 + $0x200] sm:$0xf]
  %v150 = vld [vmem:[%s1 + $0x204] sm:$0xf]
  %v151 = vld [vmem:[%s1 + $0x208] sm:$0xf]
  %v152 = vld [vmem:[%s1 + $0x20c] sm:$0xf]
  %v153 = vld [vmem:[%s1 + $0x210] sm:$0xf]
  %v154 = vld [vmem:[%s1 + $0x214] sm:$0xf]
  %v155 = vld [vmem:[%s1 + $0x218] sm:$0xf]
  %v156 = vld [vmem:[%s1 + $0x21c] sm:$0xf]
  %v157 = vld [vmem:[%s1 + $0x220] sm:$0xf]
  %v158 = vld [vmem:[%s1 + $0x224] sm:$0xf]
  %v159 = vld [vmem:[%s1 + $0x228] sm:$0xf]
  %v160 = vld [vmem:[%s1 + $0x22c] sm:$0xf]
  %v161 = vld [vmem:[%s1 + $0x230] sm:$0xf]
  %v162 = vld [vmem:[%s1 + $0x234] sm:$0xf]
  %v163 = vld [vmem:[%s1 + $0x238] sm:$0xf]
  %v164 = vld [vmem:[%s1 + $0x23c] sm:$0xf]
  %v165 = vld [vmem:[%s1 + $0x240] sm:$0xf]
  %v166 = vld [vmem:[%s1 + $0x244] sm:$0xf]
  %v167 = vld [vmem:[%s1 + $0x248] sm:$0xf]
  %v168 = vld [vmem:[%s1 + $0x24c] sm:$0xf]
  %v169 = vld [vmem:[%s1 + $0x250] sm:$0xf]
  %v170 = vld [vmem:[%s1 + $0x254] sm:$0xf]
  %v171 = vld [vmem:[%s1 + $0x258] sm:$0xf]
  %v172 = vld [vmem:[%s1 + $0x25c] sm:$0xf]
  %v173 = vld [vmem:[%s1 + $0x260] sm:$0xf]
  %v174 = vld [vmem:[%s1 + $0x264] sm:$0xf]
  %v175 = vld [vmem:[%s1 + $0x268] sm:$0xf]
  %v176 = vld [vmem:[%s1 + $0x26c] sm:$0xf]
  %v177 = vld [vmem:[%s1 + $0x270] sm:$0xf]
  %v178 = vld [vmem:[%s1 + $0x274] sm:$0xf]
  %v179 = vld [vmem:[%s1 + $0x278] sm:$0xf]
  %v180 = vld [vmem:[%s1 + $0x27c] sm:$0xf]
  %v181 = vld [vmem:[%s1 + $0x280] sm:$0xf]
  %v182 = vld [vmem:[%s1 + $0x284] sm:$0xf]
  %v183 = vld [vmem:[%s1 + $0x288] sm:$0xf]
  %v184 = vld [vmem:[%s1 + $0x28c] sm:$0xf]
  %v185 = vld [vmem:[%s1 + $0x290] sm:$0xf]
  %v186 = vld [vmem:[%s1 + $0x294] sm:$0xf]
  %v187 = vld [vmem:[%s1 + $0x298] sm:$0xf]
  %v188 = vld [vmem:[%s1 + $0x29c] sm:$0xf]
  %v189 = vld [vmem:[%s1 + $0x2a0] sm:$0xf]
  %v190 = vld [vmem:[%s1 + $0x2a4] sm:$0xf]
  %v191 = vld [vmem:[%s1 + $0x2a8] sm:$0xf]
  %v192 = vld [vmem:[%s1 + $0x2ac] sm:$0xf]
  %v193 = vld [vmem:[%s1 + $0x2b0] sm:$0xf]
  %v194 = vld [vmem:[%s1 + $0x2b4] sm:$0xf]
  %v195 = vld [vmem:[%s1 + $0x2b8] sm:$0xf]
  %v196 = vld [vmem:[%s1 + $0x2bc] sm:$0xf]
  %v197 = vld [vmem:[%s1 + $0x2c0] sm:$0xf]
  %v198 = vld [vmem:[%s1 + $0x2c4] sm:$0xf]
  %v199 = vld [vmem:[%s1 + $0x2c8] sm:$0xf]
  %v200 = vld [vmem:[%s1 + $0x2cc] sm:$0xf]
  %v201 = vld [vmem:[%s1 + $0x2d0] sm:$0xf]
  %v202 = vld [vmem:[%s1 + $0x2d4] sm:$0xf]
  %v203 = vld [vmem:[%s1 + $0x2d8] sm:$0xf]
  %v204 = vld [vmem:[%s1 + $0x2dc] sm:$0xf]
  %v205 = vld [vmem:[%s1 + $0x2e0] sm:$0xf]
  %v206 = vld [vmem:[%s1 + $0x2e4] sm:$0xf]
  %v207 = vld [vmem:[%s1 + $0x2e8] sm:$0xf]
  %v208 = vld [vmem:[%s1 + $0x2ec] sm:$0xf]
  %v209 = vld [vmem:[%s1 + $0x2f0] sm:$0xf]
  %v210 = vld [vmem:[%s1 + $0x2f4] sm:$0xf]
  %v211 = vld [vmem:[%s1 + $0x2f8] sm:$0xf]
  %v212 = vld [vmem:[%s1 + $0x2fc] sm:$0xf]
  %v213 = vld [vmem:[%s1 + $0x300] sm:$0xf]
  %v214 = vld [vmem:[%s1 + $0x304] sm:$0xf]
  %v215 = vld [vmem:[%s1 + $0x308] sm:$0xf]
  %v216 = vld [vmem:[%s1 + $0x30c] sm:$0xf]
  %v217 = vld [vmem:[%s1 + $0x310] sm:$0xf]
  %v218 = vld [vmem:[%s1 + $0x314] sm:$0xf]
  %v219 = vld [vmem:[%s1 + $0x318] sm:$0xf]
  %v220 = vld [vmem:[%s1 + $0x31c] sm:$0xf]
  %v221 = vld [vmem:[%s2] sm:$0x1]
  %v222 = vld [vmem:[%s3] sm:$0x1]
  %v223 = vld [vmem:[%s4] sm:$0x1]
  %v224 = vld [vmem:[%s0] sm:$0xff]
  %v225 = vld [vmem:[%s0 + $0x8] sm:$0xff]
  %v226 = vld [vmem:[%s0 + $0x10] sm:$0xff]
  %v227 = vld [vmem:[%s0 + $0x18] sm:$0xff]
  %v228 = vld [vmem:[%s0 + $0x20] sm:$0xff]
  %v229 = vld [vmem:[%s0 + $0x28] sm:$0xff]
  %v230 = vld [vmem:[%s0 + $0x30] sm:$0xf]
  %v231 = vld [vmem:[%s0 + $0x34] sm:$0xff]
  %v232 = vld [vmem:[%s0 + $0x3c] sm:$0xff]
  %v233 = vld [vmem:[%s0 + $0x44] sm:$0xff]
  %v234 = vld [vmem:[%s0 + $0x4c] sm:$0xff]
  %v235 = vld [vmem:[%s0 + $0x54] sm:$0xff]
  %v236 = vld [vmem:[%s0 + $0x5c] sm:$0xff]
  %v237 = vld [vmem:[%s0 + $0x64] sm:$0xf]
  %v238 = vld [vmem:[%s0 + $0x68] sm:$0xff]
  %v239 = vld [vmem:[%s0 + $0x70] sm:$0xff]
  %v240 = vld [vmem:[%s0 + $0x78] sm:$0xff]
  %v241 = vld [vmem:[%s0 + $0x80] sm:$0xff]
  %v242 = vld [vmem:[%s0 + $0x88] sm:$0xff]
  %v243 = vld [vmem:[%s0 + $0x90] sm:$0xff]
  %v244 = vld [vmem:[%s0 + $0x98] sm:$0xf]
  %v245 = vld [vmem:[%s0 + $0x9c] sm:$0xff]
  %v246 = vld [vmem:[%s0 + $0xa4] sm:$0xff]
  %v247 = vld [vmem:[%s0 + $0xac] sm:$0xff]
  %v248 = vld [vmem:[%s0 + $0xb4] sm:$0xff]
  %v249 = vld [vmem:[%s0 + $0xbc] sm:$0xff]
  %v250 = vld [vmem:[%s0 + $0xc4] sm:$0xff]
  %v251 = vld [vmem:[%s0 + $0xcc] sm:$0xf]
  %v253 = vlaneseq
  %v254 = vshrl.u32 %v253, 7
  %v255 = vsub.s32 0, %v254
  %v256 = vrot.slane %v221, %v255
  %v286 = vunpack.c.l.b16 %v224
  %v287 = vunpack.c.h.b16 %v224
  %v288 = vunpack.c.l.b16 %v225
  %v289 = vunpack.c.h.b16 %v225
  %v290 = vunpack.c.l.b16 %v226
  %v291 = vunpack.c.h.b16 %v226
  %v292 = vunpack.c.l.b16 %v227
  %v293 = vunpack.c.h.b16 %v227
  %v294 = vunpack.c.l.b16 %v228
  %v295 = vunpack.c.h.b16 %v228
  %v296 = vunpack.c.l.b16 %v229
  %v297 = vunpack.c.h.b16 %v229
  %v298 = vunpack.c.l.b16 %v230
  %v299 = vunpack.c.l.b16 %v231
  %v300 = vunpack.c.h.b16 %v231
  %v301 = vunpack.c.l.b16 %v232
  %v302 = vunpack.c.h.b16 %v232
  %v303 = vunpack.c.l.b16 %v233
  %v304 = vunpack.c.h.b16 %v233
  %v305 = vunpack.c.l.b16 %v234
  %v306 = vunpack.c.h.b16 %v234
  %v307 = vunpack.c.l.b16 %v235
  %v308 = vunpack.c.h.b16 %v235
  %v309 = vunpack.c.l.b16 %v236
  %v310 = vunpack.c.h.b16 %v236
  %v311 = vunpack.c.l.b16 %v237
  %v312 = vunpack.c.l.b16 %v238
  %v313 = vunpack.c.h.b16 %v238
  %v314 = vunpack.c.l.b16 %v239
  %v315 = vunpack.c.h.b16 %v239
  %v316 = vunpack.c.l.b16 %v240
  %v317 = vunpack.c.h.b16 %v240
  %v318 = vunpack.c.l.b16 %v241
  %v319 = vunpack.c.h.b16 %v241
  %v320 = vunpack.c.l.b16 %v242
  %v321 = vunpack.c.h.b16 %v242
  %v322 = vunpack.c.l.b16 %v243
  %v323 = vunpack.c.h.b16 %v243
  %v324 = vunpack.c.l.b16 %v244
  %v325 = vunpack.c.l.b16 %v245
  %v326 = vunpack.c.h.b16 %v245
  %v327 = vunpack.c.l.b16 %v246
  %v328 = vunpack.c.h.b16 %v246
  %v329 = vunpack.c.l.b16 %v247
  %v330 = vunpack.c.h.b16 %v247
  %v331 = vunpack.c.l.b16 %v248
  %v332 = vunpack.c.h.b16 %v248
  %v333 = vunpack.c.l.b16 %v249
  %v334 = vunpack.c.h.b16 %v249
  %v335 = vunpack.c.l.b16 %v250
  %v336 = vunpack.c.h.b16 %v250
  %v337 = vunpack.c.l.b16 %v251
  %v338 = vpack.c.b16 %v299, %v286
  %v339 = vpack.c.b16 %v300, %v287
  %v340 = vpack.c.b16 %v301, %v288
  %v341 = vpack.c.b16 %v302, %v289
  %v342 = vpack.c.b16 %v303, %v290
  %v343 = vpack.c.b16 %v304, %v291
  %v344 = vpack.c.b16 %v305, %v292
  %v345 = vpack.c.b16 %v306, %v293
  %v346 = vpack.c.b16 %v307, %v294
  %v347 = vpack.c.b16 %v308, %v295
  %v348 = vpack.c.b16 %v309, %v296
  %v349 = vpack.c.b16 %v310, %v297
  %v350 = vpack.c.b16 %v311, %v298
  %v351 = vpack.c.b16 %v325, %v312
  %v352 = vpack.c.b16 %v326, %v313
  %v353 = vpack.c.b16 %v327, %v314
  %v354 = vpack.c.b16 %v328, %v315
  %v355 = vpack.c.b16 %v329, %v316
  %v356 = vpack.c.b16 %v330, %v317
  %v357 = vpack.c.b16 %v331, %v318
  %v358 = vpack.c.b16 %v332, %v319
  %v359 = vpack.c.b16 %v333, %v320
  %v360 = vpack.c.b16 %v334, %v321
  %v361 = vpack.c.b16 %v335, %v322
  %v362 = vpack.c.b16 %v336, %v323
  %v363 = vpack.c.b16 %v337, %v324
  %v588 = vunpack.c.l.b16 %v21
  %v589 = vunpack.c.l.b16 %v22
  %v590 = vunpack.c.l.b16 %v23
  %v591 = vunpack.c.l.b16 %v24
  %v592 = vunpack.c.l.b16 %v25
  %v593 = vunpack.c.l.b16 %v26
  %v594 = vunpack.c.l.b16 %v27
  %v595 = vunpack.c.l.b16 %v28
  %v596 = vunpack.c.l.b16 %v29
  %v597 = vunpack.c.l.b16 %v30
  %v598 = vunpack.c.l.b16 %v31
  %v599 = vunpack.c.l.b16 %v32
  %v600 = vunpack.c.l.b16 %v33
  %v601 = vunpack.c.l.b16 %v34
  %v602 = vunpack.c.l.b16 %v35
  %v603 = vunpack.c.l.b16 %v36
  %v604 = vunpack.c.l.b16 %v37
  %v605 = vunpack.c.l.b16 %v38
  %v606 = vunpack.c.l.b16 %v39
  %v607 = vunpack.c.l.b16 %v40
  %v608 = vunpack.c.l.b16 %v41
  %v609 = vunpack.c.l.b16 %v42
  %v610 = vunpack.c.l.b16 %v43
  %v611 = vunpack.c.l.b16 %v44
  %v612 = vunpack.c.l.b16 %v45
  %v613 = vunpack.c.l.b16 %v46
  %v614 = vunpack.c.l.b16 %v47
  %v615 = vunpack.c.l.b16 %v48
  %v616 = vunpack.c.l.b16 %v49
  %v617 = vunpack.c.l.b16 %v50
  %v618 = vunpack.c.l.b16 %v51
  %v619 = vunpack.c.l.b16 %v52
  %v620 = vunpack.c.l.b16 %v53
  %v621 = vunpack.c.l.b16 %v54
  %v622 = vunpack.c.l.b16 %v55
  %v623 = vunpack.c.l.b16 %v56
  %v624 = vunpack.c.l.b16 %v57
  %v625 = vunpack.c.l.b16 %v58
  %v626 = vunpack.c.l.b16 %v59
  %v627 = vunpack.c.l.b16 %v60
  %v628 = vunpack.c.l.b16 %v61
  %v629 = vunpack.c.l.b16 %v62
  %v630 = vunpack.c.l.b16 %v63
  %v631 = vunpack.c.l.b16 %v64
  %v632 = vunpack.c.l.b16 %v65
  %v633 = vunpack.c.l.b16 %v66
  %v634 = vunpack.c.l.b16 %v67
  %v635 = vunpack.c.l.b16 %v68
  %v636 = vunpack.c.l.b16 %v69
  %v637 = vunpack.c.l.b16 %v70
  %v638 = vunpack.c.l.b16 %v71
  %v639 = vunpack.c.l.b16 %v72
  %v640 = vunpack.c.l.b16 %v73
  %v641 = vunpack.c.l.b16 %v74
  %v642 = vunpack.c.l.b16 %v75
  %v643 = vunpack.c.l.b16 %v76
  %v644 = vunpack.c.l.b16 %v77
  %v645 = vunpack.c.l.b16 %v78
  %v646 = vunpack.c.l.b16 %v79
  %v647 = vunpack.c.l.b16 %v80
  %v648 = vunpack.c.l.b16 %v81
  %v649 = vunpack.c.l.b16 %v82
  %v650 = vunpack.c.l.b16 %v83
  %v651 = vunpack.c.l.b16 %v84
  %v652 = vunpack.c.l.b16 %v85
  %v653 = vunpack.c.l.b16 %v86
  %v654 = vunpack.c.l.b16 %v87
  %v655 = vunpack.c.l.b16 %v88
  %v656 = vunpack.c.l.b16 %v89
  %v657 = vunpack.c.l.b16 %v90
  %v658 = vunpack.c.l.b16 %v91
  %v659 = vunpack.c.l.b16 %v92
  %v660 = vunpack.c.l.b16 %v93
  %v661 = vunpack.c.l.b16 %v94
  %v662 = vunpack.c.l.b16 %v95
  %v663 = vunpack.c.l.b16 %v96
  %v664 = vunpack.c.l.b16 %v97
  %v665 = vunpack.c.l.b16 %v98
  %v666 = vunpack.c.l.b16 %v99
  %v667 = vunpack.c.l.b16 %v100
  %v668 = vunpack.c.l.b16 %v101
  %v669 = vunpack.c.l.b16 %v102
  %v670 = vunpack.c.l.b16 %v103
  %v671 = vunpack.c.l.b16 %v104
  %v672 = vunpack.c.l.b16 %v105
  %v673 = vunpack.c.l.b16 %v106
  %v674 = vunpack.c.l.b16 %v107
  %v675 = vunpack.c.l.b16 %v108
  %v676 = vunpack.c.l.b16 %v109
  %v677 = vunpack.c.l.b16 %v110
  %v678 = vunpack.c.l.b16 %v111
  %v679 = vunpack.c.l.b16 %v112
  %v680 = vunpack.c.l.b16 %v113
  %v681 = vunpack.c.l.b16 %v114
  %v682 = vunpack.c.l.b16 %v115
  %v683 = vunpack.c.l.b16 %v116
  %v684 = vunpack.c.l.b16 %v117
  %v685 = vunpack.c.l.b16 %v118
  %v686 = vunpack.c.l.b16 %v119
  %v687 = vunpack.c.l.b16 %v120
  %v688 = vunpack.c.l.b16 %v121
  %v689 = vunpack.c.l.b16 %v122
  %v690 = vunpack.c.l.b16 %v123
  %v691 = vunpack.c.l.b16 %v124
  %v692 = vunpack.c.l.b16 %v125
  %v693 = vunpack.c.l.b16 %v126
  %v694 = vunpack.c.l.b16 %v127
  %v695 = vunpack.c.l.b16 %v128
  %v696 = vunpack.c.l.b16 %v129
  %v697 = vunpack.c.l.b16 %v130
  %v698 = vunpack.c.l.b16 %v131
  %v699 = vunpack.c.l.b16 %v132
  %v700 = vunpack.c.l.b16 %v133
  %v701 = vunpack.c.l.b16 %v134
  %v702 = vunpack.c.l.b16 %v135
  %v703 = vunpack.c.l.b16 %v136
  %v704 = vunpack.c.l.b16 %v137
  %v705 = vunpack.c.l.b16 %v138
  %v706 = vunpack.c.l.b16 %v139
  %v707 = vunpack.c.l.b16 %v140
  %v708 = vunpack.c.l.b16 %v141
  %v709 = vunpack.c.l.b16 %v142
  %v710 = vunpack.c.l.b16 %v143
  %v711 = vunpack.c.l.b16 %v144
  %v712 = vunpack.c.l.b16 %v145
  %v713 = vunpack.c.l.b16 %v146
  %v714 = vunpack.c.l.b16 %v147
  %v715 = vunpack.c.l.b16 %v148
  %v716 = vunpack.c.l.b16 %v149
  %v717 = vunpack.c.l.b16 %v150
  %v718 = vunpack.c.l.b16 %v151
  %v719 = vunpack.c.l.b16 %v152
  %v720 = vunpack.c.l.b16 %v153
  %v721 = vunpack.c.l.b16 %v154
  %v722 = vunpack.c.l.b16 %v155
  %v723 = vunpack.c.l.b16 %v156
  %v724 = vunpack.c.l.b16 %v157
  %v725 = vunpack.c.l.b16 %v158
  %v726 = vunpack.c.l.b16 %v159
  %v727 = vunpack.c.l.b16 %v160
  %v728 = vunpack.c.l.b16 %v161
  %v729 = vunpack.c.l.b16 %v162
  %v730 = vunpack.c.l.b16 %v163
  %v731 = vunpack.c.l.b16 %v164
  %v732 = vunpack.c.l.b16 %v165
  %v733 = vunpack.c.l.b16 %v166
  %v734 = vunpack.c.l.b16 %v167
  %v735 = vunpack.c.l.b16 %v168
  %v736 = vunpack.c.l.b16 %v169
  %v737 = vunpack.c.l.b16 %v170
  %v738 = vunpack.c.l.b16 %v171
  %v739 = vunpack.c.l.b16 %v172
  %v740 = vunpack.c.l.b16 %v173
  %v741 = vunpack.c.l.b16 %v174
  %v742 = vunpack.c.l.b16 %v175
  %v743 = vunpack.c.l.b16 %v176
  %v744 = vunpack.c.l.b16 %v177
  %v745 = vunpack.c.l.b16 %v178
  %v746 = vunpack.c.l.b16 %v179
  %v747 = vunpack.c.l.b16 %v180
  %v748 = vunpack.c.l.b16 %v181
  %v749 = vunpack.c.l.b16 %v182
  %v750 = vunpack.c.l.b16 %v183
  %v751 = vunpack.c.l.b16 %v184
  %v752 = vunpack.c.l.b16 %v185
  %v753 = vunpack.c.l.b16 %v186
  %v754 = vunpack.c.l.b16 %v187
  %v755 = vunpack.c.l.b16 %v188
  %v756 = vunpack.c.l.b16 %v189
  %v757 = vunpack.c.l.b16 %v190
  %v758 = vunpack.c.l.b16 %v191
  %v759 = vunpack.c.l.b16 %v192
  %v760 = vunpack.c.l.b16 %v193
  %v761 = vunpack.c.l.b16 %v194
  %v762 = vunpack.c.l.b16 %v195
  %v763 = vunpack.c.l.b16 %v196
  %v764 = vunpack.c.l.b16 %v197
  %v765 = vunpack.c.l.b16 %v198
  %v766 = vunpack.c.l.b16 %v199
  %v767 = vunpack.c.l.b16 %v200
  %v768 = vunpack.c.l.b16 %v201
  %v769 = vunpack.c.l.b16 %v202
  %v770 = vunpack.c.l.b16 %v203
  %v771 = vunpack.c.l.b16 %v204
  %v772 = vunpack.c.l.b16 %v205
  %v773 = vunpack.c.l.b16 %v206
  %v774 = vunpack.c.l.b16 %v207
  %v775 = vunpack.c.l.b16 %v208
  %v776 = vunpack.c.l.b16 %v209
  %v777 = vunpack.c.l.b16 %v210
  %v778 = vunpack.c.l.b16 %v211
  %v779 = vunpack.c.l.b16 %v212
  %v780 = vunpack.c.l.b16 %v213
  %v781 = vunpack.c.l.b16 %v214
  %v782 = vunpack.c.l.b16 %v215
  %v783 = vunpack.c.l.b16 %v216
  %v784 = vunpack.c.l.b16 %v217
  %v785 = vunpack.c.l.b16 %v218
  %v786 = vunpack.c.l.b16 %v219
  %v787 = vunpack.c.l.b16 %v220
  %v788 = vpack.c.b16 %v589, %v588
  %v789 = vpack.c.b16 %v591, %v590
  %v790 = vpack.c.b16 %v593, %v592
  %v791 = vpack.c.b16 %v595, %v594
  %v792 = vpack.c.b16 %v597, %v596
  %v793 = vpack.c.b16 %v599, %v598
  %v794 = vpack.c.b16 %v601, %v600
  %v795 = vpack.c.b16 %v603, %v602
  %v796 = vpack.c.b16 %v605, %v604
  %v797 = vpack.c.b16 %v607, %v606
  %v798 = vpack.c.b16 %v609, %v608
  %v799 = vpack.c.b16 %v611, %v610
  %v800 = vpack.c.b16 %v613, %v612
  %v801 = vpack.c.b16 %v615, %v614
  %v802 = vpack.c.b16 %v617, %v616
  %v803 = vpack.c.b16 %v619, %v618
  %v804 = vpack.c.b16 %v621, %v620
  %v805 = vpack.c.b16 %v623, %v622
  %v806 = vpack.c.b16 %v625, %v624
  %v807 = vpack.c.b16 %v627, %v626
  %v808 = vpack.c.b16 %v629, %v628
  %v809 = vpack.c.b16 %v631, %v630
  %v810 = vpack.c.b16 %v633, %v632
  %v811 = vpack.c.b16 %v635, %v634
  %v812 = vpack.c.b16 %v637, %v636
  %v813 = vpack.c.b16 %v639, %v638
  %v814 = vpack.c.b16 %v641, %v640
  %v815 = vpack.c.b16 %v643, %v642
  %v816 = vpack.c.b16 %v645, %v644
  %v817 = vpack.c.b16 %v647, %v646
  %v818 = vpack.c.b16 %v649, %v648
  %v819 = vpack.c.b16 %v651, %v650
  %v820 = vpack.c.b16 %v653, %v652
  %v821 = vpack.c.b16 %v655, %v654
  %v822 = vpack.c.b16 %v657, %v656
  %v823 = vpack.c.b16 %v659, %v658
  %v824 = vpack.c.b16 %v661, %v660
  %v825 = vpack.c.b16 %v663, %v662
  %v826 = vpack.c.b16 %v665, %v664
  %v827 = vpack.c.b16 %v667, %v666
  %v828 = vpack.c.b16 %v669, %v668
  %v829 = vpack.c.b16 %v671, %v670
  %v830 = vpack.c.b16 %v673, %v672
  %v831 = vpack.c.b16 %v675, %v674
  %v832 = vpack.c.b16 %v677, %v676
  %v833 = vpack.c.b16 %v679, %v678
  %v834 = vpack.c.b16 %v681, %v680
  %v835 = vpack.c.b16 %v683, %v682
  %v836 = vpack.c.b16 %v685, %v684
  %v837 = vpack.c.b16 %v687, %v686
  %v838 = vpack.c.b16 %v689, %v688
  %v839 = vpack.c.b16 %v691, %v690
  %v840 = vpack.c.b16 %v693, %v692
  %v841 = vpack.c.b16 %v695, %v694
  %v842 = vpack.c.b16 %v697, %v696
  %v843 = vpack.c.b16 %v699, %v698
  %v844 = vpack.c.b16 %v701, %v700
  %v845 = vpack.c.b16 %v703, %v702
  %v846 = vpack.c.b16 %v705, %v704
  %v847 = vpack.c.b16 %v707, %v706
  %v848 = vpack.c.b16 %v709, %v708
  %v849 = vpack.c.b16 %v711, %v710
  %v850 = vpack.c.b16 %v713, %v712
  %v851 = vpack.c.b16 %v715, %v714
  %v852 = vpack.c.b16 %v717, %v716
  %v853 = vpack.c.b16 %v719, %v718
  %v854 = vpack.c.b16 %v721, %v720
  %v855 = vpack.c.b16 %v723, %v722
  %v856 = vpack.c.b16 %v725, %v724
  %v857 = vpack.c.b16 %v727, %v726
  %v858 = vpack.c.b16 %v729, %v728
  %v859 = vpack.c.b16 %v731, %v730
  %v860 = vpack.c.b16 %v733, %v732
  %v861 = vpack.c.b16 %v735, %v734
  %v862 = vpack.c.b16 %v737, %v736
  %v863 = vpack.c.b16 %v739, %v738
  %v864 = vpack.c.b16 %v741, %v740
  %v865 = vpack.c.b16 %v743, %v742
  %v866 = vpack.c.b16 %v745, %v744
  %v867 = vpack.c.b16 %v747, %v746
  %v868 = vpack.c.b16 %v749, %v748
  %v869 = vpack.c.b16 %v751, %v750
  %v870 = vpack.c.b16 %v753, %v752
  %v871 = vpack.c.b16 %v755, %v754
  %v872 = vpack.c.b16 %v757, %v756
  %v873 = vpack.c.b16 %v759, %v758
  %v874 = vpack.c.b16 %v761, %v760
  %v875 = vpack.c.b16 %v763, %v762
  %v876 = vpack.c.b16 %v765, %v764
  %v877 = vpack.c.b16 %v767, %v766
  %v878 = vpack.c.b16 %v769, %v768
  %v879 = vpack.c.b16 %v771, %v770
  %v880 = vpack.c.b16 %v773, %v772
  %v881 = vpack.c.b16 %v775, %v774
  %v882 = vpack.c.b16 %v777, %v776
  %v883 = vpack.c.b16 %v779, %v778
  %v884 = vpack.c.b16 %v781, %v780
  %v885 = vpack.c.b16 %v783, %v782
  %v886 = vpack.c.b16 %v785, %v784
  %v887 = vpack.c.b16 %v787, %v786
  %vm988 = vcmask 523264
  %v990 = vsel %vm988, %v350, 0
  %v993 = vsel %vm988, %v363, 0
  %995 = vmatprep.subr.bf16.mxu0 0
  %996 = vmatpush1.bf16.msra.mxu0 %v795
  %997 = vmatprep.subr.bf16.mxu0 0
  %998 = vmatpush1.bf16.msra.mxu0 %v794
  %999 = vmatprep.subr.bf16.mxu0 0
  %1000 = vmatpush1.bf16.msra.mxu0 %v793
  %1001 = vmatprep.subr.bf16.mxu0 0
  %1002 = vmatpush1.bf16.msra.mxu0 %v792
  %1003 = vmatprep.subr.bf16.mxu0 0
  %1004 = vmatpush1.bf16.msra.mxu0 %v791
  %1005 = vmatprep.subr.bf16.mxu0 0
  %1006 = vmatpush1.bf16.msra.mxu0 %v790
  %1007 = vmatprep.subr.bf16.mxu0 0
  %1008 = vmatpush1.bf16.msra.mxu0 %v789
  %1009 = vmatprep.subr.bf16.mxu0 0
  %1010 = vmatpush1.bf16.msra.mxu0 %v788
  %1011 = vmatprep.subr.bf16.mxu0 0
  %1012 = vmatpush2.bf16.msra.mxu0 %v803
  %1013 = vmatprep.subr.bf16.mxu0 0
  %1014 = vmatpush2.bf16.msra.mxu0 %v802
  %1015 = vmatprep.subr.bf16.mxu0 0
  %1016 = vmatpush2.bf16.msra.mxu0 %v801
  %1017 = vmatprep.subr.bf16.mxu0 0
  %1018 = vmatpush2.bf16.msra.mxu0 %v800
  %1019 = vmatprep.subr.bf16.mxu0 0
  %1020 = vmatpush2.bf16.msra.mxu0 %v799
  %1021 = vmatprep.subr.bf16.mxu0 0
  %1022 = vmatpush2.bf16.msra.mxu0 %v798
  %1023 = vmatprep.subr.bf16.mxu0 0
  %1024 = vmatpush2.bf16.msra.mxu0 %v797
  %1025 = vmatprep.subr.bf16.mxu0 0
  %1026 = vmatpush2.bf16.msra.mxu0 %v796
  %1027 = vmatprep.mubr.bf16.mxu0 %v339
  %1028 = vmatmul.mubr.bf16.gmra.mxu0 %v338
  %v1029 = vpop.f32.mrf.mxu0
  %v1030 = vadd.f32 %v256, %v1029
  %v1031 = vpop.f32.mrf.mxu0
  %v1032 = vpop.f32.mrf.mxu0
  %v1033 = vadd.f32 %v256, %v1032
  %v1034 = vpop.f32.mrf.mxu0
  %1035 = vmatprep.mubr.bf16.mxu0 %v352
  %1036 = vmatmul.mubr.bf16.gmra.mxu0 %v351
  %v1037 = vpop.f32.mrf.mxu0
  %v1038 = vadd.f32 %v256, %v1037
  %v1039 = vpop.f32.mrf.mxu0
  %v1040 = vpop.f32.mrf.mxu0
  %v1041 = vadd.f32 %v256, %v1040
  %v1042 = vpop.f32.mrf.mxu0
  %1043 = vdwg.mxu0
  %1044 = vmatprep.subr.bf16.mxu0 0
  %1045 = vmatpush1.bf16.msra.mxu0 %v811
  %1046 = vmatprep.subr.bf16.mxu0 0
  %1047 = vmatpush1.bf16.msra.mxu0 %v810
  %1048 = vmatprep.subr.bf16.mxu0 0
  %1049 = vmatpush1.bf16.msra.mxu0 %v809
  %1050 = vmatprep.subr.bf16.mxu0 0
  %1051 = vmatpush1.bf16.msra.mxu0 %v808
  %1052 = vmatprep.subr.bf16.mxu0 0
  %1053 = vmatpush1.bf16.msra.mxu0 %v807
  %1054 = vmatprep.subr.bf16.mxu0 0
  %1055 = vmatpush1.bf16.msra.mxu0 %v806
  %1056 = vmatprep.subr.bf16.mxu0 0
  %1057 = vmatpush1.bf16.msra.mxu0 %v805
  %1058 = vmatprep.subr.bf16.mxu0 0
  %1059 = vmatpush1.bf16.msra.mxu0 %v804
  %1060 = vmatprep.subr.bf16.mxu0 0
  %1061 = vmatpush2.bf16.msra.mxu0 %v819
  %1062 = vmatprep.subr.bf16.mxu0 0
  %1063 = vmatpush2.bf16.msra.mxu0 %v818
  %1064 = vmatprep.subr.bf16.mxu0 0
  %1065 = vmatpush2.bf16.msra.mxu0 %v817
  %1066 = vmatprep.subr.bf16.mxu0 0
  %1067 = vmatpush2.bf16.msra.mxu0 %v816
  %1068 = vmatprep.subr.bf16.mxu0 0
  %1069 = vmatpush2.bf16.msra.mxu0 %v815
  %1070 = vmatprep.subr.bf16.mxu0 0
  %1071 = vmatpush2.bf16.msra.mxu0 %v814
  %1072 = vmatprep.subr.bf16.mxu0 0
  %1073 = vmatpush2.bf16.msra.mxu0 %v813
  %1074 = vmatprep.subr.bf16.mxu0 0
  %1075 = vmatpush2.bf16.msra.mxu0 %v812
  %1076 = vmatprep.mubr.bf16.mxu0 %v341
  %1077 = vmatmul.mubr.bf16.gmra.mxu0 %v340
  %v1078 = vpop.f32.mrf.mxu0
  %v1079 = vadd.f32 %v1030, %v1078
  %v1080 = vpop.f32.mrf.mxu0
  %v1081 = vpop.f32.mrf.mxu0
  %v1082 = vadd.f32 %v1033, %v1081
  %v1083 = vpop.f32.mrf.mxu0
  %1084 = vmatprep.mubr.bf16.mxu0 %v354
  %1085 = vmatmul.mubr.bf16.gmra.mxu0 %v353
  %v1086 = vpop.f32.mrf.mxu0
  %v1087 = vadd.f32 %v1038, %v1086
  %v1088 = vpop.f32.mrf.mxu0
  %v1089 = vpop.f32.mrf.mxu0
  %v1090 = vadd.f32 %v1041, %v1089
  %v1091 = vpop.f32.mrf.mxu0
  %1092 = vdwg.mxu0
  %1093 = vmatprep.subr.bf16.mxu0 0
  %1094 = vmatpush1.bf16.msra.mxu0 %v827
  %1095 = vmatprep.subr.bf16.mxu0 0
  %1096 = vmatpush1.bf16.msra.mxu0 %v826
  %1097 = vmatprep.subr.bf16.mxu0 0
  %1098 = vmatpush1.bf16.msra.mxu0 %v825
  %1099 = vmatprep.subr.bf16.mxu0 0
  %1100 = vmatpush1.bf16.msra.mxu0 %v824
  %1101 = vmatprep.subr.bf16.mxu0 0
  %1102 = vmatpush1.bf16.msra.mxu0 %v823
  %1103 = vmatprep.subr.bf16.mxu0 0
  %1104 = vmatpush1.bf16.msra.mxu0 %v822
  %1105 = vmatprep.subr.bf16.mxu0 0
  %1106 = vmatpush1.bf16.msra.mxu0 %v821
  %1107 = vmatprep.subr.bf16.mxu0 0
  %1108 = vmatpush1.bf16.msra.mxu0 %v820
  %1109 = vmatprep.subr.bf16.mxu0 0
  %1110 = vmatpush2.bf16.msra.mxu0 %v835
  %1111 = vmatprep.subr.bf16.mxu0 0
  %1112 = vmatpush2.bf16.msra.mxu0 %v834
  %1113 = vmatprep.subr.bf16.mxu0 0
  %1114 = vmatpush2.bf16.msra.mxu0 %v833
  %1115 = vmatprep.subr.bf16.mxu0 0
  %1116 = vmatpush2.bf16.msra.mxu0 %v832
  %1117 = vmatprep.subr.bf16.mxu0 0
  %1118 = vmatpush2.bf16.msra.mxu0 %v831
  %1119 = vmatprep.subr.bf16.mxu0 0
  %1120 = vmatpush2.bf16.msra.mxu0 %v830
  %1121 = vmatprep.subr.bf16.mxu0 0
  %1122 = vmatpush2.bf16.msra.mxu0 %v829
  %1123 = vmatprep.subr.bf16.mxu0 0
  %1124 = vmatpush2.bf16.msra.mxu0 %v828
  %1125 = vmatprep.mubr.bf16.mxu0 %v343
  %1126 = vmatmul.mubr.bf16.gmra.mxu0 %v342
  %v1127 = vpop.f32.mrf.mxu0
  %v1128 = vadd.f32 %v1079, %v1127
  %v1129 = vpop.f32.mrf.mxu0
  %v1130 = vpop.f32.mrf.mxu0
  %v1131 = vadd.f32 %v1082, %v1130
  %v1132 = vpop.f32.mrf.mxu0
  %1133 = vmatprep.mubr.bf16.mxu0 %v356
  %1134 = vmatmul.mubr.bf16.gmra.mxu0 %v355
  %v1135 = vpop.f32.mrf.mxu0
  %v1136 = vadd.f32 %v1087, %v1135
  %v1137 = vpop.f32.mrf.mxu0
  %v1138 = vpop.f32.mrf.mxu0
  %v1139 = vadd.f32 %v1090, %v1138
  %v1140 = vpop.f32.mrf.mxu0
  %1141 = vdwg.mxu0
  %1142 = vmatprep.subr.bf16.mxu0 0
  %1143 = vmatpush1.bf16.msra.mxu0 %v843
  %1144 = vmatprep.subr.bf16.mxu0 0
  %1145 = vmatpush1.bf16.msra.mxu0 %v842
  %1146 = vmatprep.subr.bf16.mxu0 0
  %1147 = vmatpush1.bf16.msra.mxu0 %v841
  %1148 = vmatprep.subr.bf16.mxu0 0
  %1149 = vmatpush1.bf16.msra.mxu0 %v840
  %1150 = vmatprep.subr.bf16.mxu0 0
  %1151 = vmatpush1.bf16.msra.mxu0 %v839
  %1152 = vmatprep.subr.bf16.mxu0 0
  %1153 = vmatpush1.bf16.msra.mxu0 %v838
  %1154 = vmatprep.subr.bf16.mxu0 0
  %1155 = vmatpush1.bf16.msra.mxu0 %v837
  %1156 = vmatprep.subr.bf16.mxu0 0
  %1157 = vmatpush1.bf16.msra.mxu0 %v836
  %1158 = vmatprep.subr.bf16.mxu0 0
  %1159 = vmatpush2.bf16.msra.mxu0 %v851
  %1160 = vmatprep.subr.bf16.mxu0 0
  %1161 = vmatpush2.bf16.msra.mxu0 %v850
  %1162 = vmatprep.subr.bf16.mxu0 0
  %1163 = vmatpush2.bf16.msra.mxu0 %v849
  %1164 = vmatprep.subr.bf16.mxu0 0
  %1165 = vmatpush2.bf16.msra.mxu0 %v848
  %1166 = vmatprep.subr.bf16.mxu0 0
  %1167 = vmatpush2.bf16.msra.mxu0 %v847
  %1168 = vmatprep.subr.bf16.mxu0 0
  %1169 = vmatpush2.bf16.msra.mxu0 %v846
  %1170 = vmatprep.subr.bf16.mxu0 0
  %1171 = vmatpush2.bf16.msra.mxu0 %v845
  %1172 = vmatprep.subr.bf16.mxu0 0
  %1173 = vmatpush2.bf16.msra.mxu0 %v844
  %1174 = vmatprep.mubr.bf16.mxu0 %v345
  %1175 = vmatmul.mubr.bf16.gmra.mxu0 %v344
  %v1176 = vpop.f32.mrf.mxu0
  %v1177 = vadd.f32 %v1128, %v1176
  %v1178 = vpop.f32.mrf.mxu0
  %v1179 = vpop.f32.mrf.mxu0
  %v1180 = vadd.f32 %v1131, %v1179
  %v1181 = vpop.f32.mrf.mxu0
  %1182 = vmatprep.mubr.bf16.mxu0 %v358
  %1183 = vmatmul.mubr.bf16.gmra.mxu0 %v357
  %v1184 = vpop.f32.mrf.mxu0
  %v1185 = vadd.f32 %v1136, %v1184
  %v1186 = vpop.f32.mrf.mxu0
  %v1187 = vpop.f32.mrf.mxu0
  %v1188 = vadd.f32 %v1139, %v1187
  %v1189 = vpop.f32.mrf.mxu0
  %1190 = vdwg.mxu0
  %1191 = vmatprep.subr.bf16.mxu0 0
  %1192 = vmatpush1.bf16.msra.mxu0 %v859
  %1193 = vmatprep.subr.bf16.mxu0 0
  %1194 = vmatpush1.bf16.msra.mxu0 %v858
  %1195 = vmatprep.subr.bf16.mxu0 0
  %1196 = vmatpush1.bf16.msra.mxu0 %v857
  %1197 = vmatprep.subr.bf16.mxu0 0
  %1198 = vmatpush1.bf16.msra.mxu0 %v856
  %1199 = vmatprep.subr.bf16.mxu0 0
  %1200 = vmatpush1.bf16.msra.mxu0 %v855
  %1201 = vmatprep.subr.bf16.mxu0 0
  %1202 = vmatpush1.bf16.msra.mxu0 %v854
  %1203 = vmatprep.subr.bf16.mxu0 0
  %1204 = vmatpush1.bf16.msra.mxu0 %v853
  %1205 = vmatprep.subr.bf16.mxu0 0
  %1206 = vmatpush1.bf16.msra.mxu0 %v852
  %1207 = vmatprep.subr.bf16.mxu0 0
  %1208 = vmatpush2.bf16.msra.mxu0 %v867
  %1209 = vmatprep.subr.bf16.mxu0 0
  %1210 = vmatpush2.bf16.msra.mxu0 %v866
  %1211 = vmatprep.subr.bf16.mxu0 0
  %1212 = vmatpush2.bf16.msra.mxu0 %v865
  %1213 = vmatprep.subr.bf16.mxu0 0
  %1214 = vmatpush2.bf16.msra.mxu0 %v864
  %1215 = vmatprep.subr.bf16.mxu0 0
  %1216 = vmatpush2.bf16.msra.mxu0 %v863
  %1217 = vmatprep.subr.bf16.mxu0 0
  %1218 = vmatpush2.bf16.msra.mxu0 %v862
  %1219 = vmatprep.subr.bf16.mxu0 0
  %1220 = vmatpush2.bf16.msra.mxu0 %v861
  %1221 = vmatprep.subr.bf16.mxu0 0
  %1222 = vmatpush2.bf16.msra.mxu0 %v860
  %1223 = vmatprep.mubr.bf16.mxu0 %v347
  %1224 = vmatmul.mubr.bf16.gmra.mxu0 %v346
  %v1225 = vpop.f32.mrf.mxu0
  %v1226 = vadd.f32 %v1177, %v1225
  %v1227 = vpop.f32.mrf.mxu0
  %v1228 = vpop.f32.mrf.mxu0
  %v1229 = vadd.f32 %v1180, %v1228
  %v1230 = vpop.f32.mrf.mxu0
  %1231 = vmatprep.mubr.bf16.mxu0 %v360
  %1232 = vmatmul.mubr.bf16.gmra.mxu0 %v359
  %v1233 = vpop.f32.mrf.mxu0
  %v1234 = vadd.f32 %v1185, %v1233
  %v1235 = vpop.f32.mrf.mxu0
  %v1236 = vpop.f32.mrf.mxu0
  %v1237 = vadd.f32 %v1188, %v1236
  %v1238 = vpop.f32.mrf.mxu0
  %1239 = vdwg.mxu0
  %1240 = vmatprep.subr.bf16.mxu0 0
  %1241 = vmatpush1.bf16.msra.mxu0 %v875
  %1242 = vmatprep.subr.bf16.mxu0 0
  %1243 = vmatpush1.bf16.msra.mxu0 %v874
  %1244 = vmatprep.subr.bf16.mxu0 0
  %1245 = vmatpush1.bf16.msra.mxu0 %v873
  %1246 = vmatprep.subr.bf16.mxu0 0
  %1247 = vmatpush1.bf16.msra.mxu0 %v872
  %1248 = vmatprep.subr.bf16.mxu0 0
  %1249 = vmatpush1.bf16.msra.mxu0 %v871
  %1250 = vmatprep.subr.bf16.mxu0 0
  %1251 = vmatpush1.bf16.msra.mxu0 %v870
  %1252 = vmatprep.subr.bf16.mxu0 0
  %1253 = vmatpush1.bf16.msra.mxu0 %v869
  %1254 = vmatprep.subr.bf16.mxu0 0
  %1255 = vmatpush1.bf16.msra.mxu0 %v868
  %1256 = vmatprep.subr.bf16.mxu0 0
  %1257 = vmatpush2.bf16.msra.mxu0 %v883
  %1258 = vmatprep.subr.bf16.mxu0 0
  %1259 = vmatpush2.bf16.msra.mxu0 %v882
  %1260 = vmatprep.subr.bf16.mxu0 0
  %1261 = vmatpush2.bf16.msra.mxu0 %v881
  %1262 = vmatprep.subr.bf16.mxu0 0
  %1263 = vmatpush2.bf16.msra.mxu0 %v880
  %1264 = vmatprep.subr.bf16.mxu0 0
  %1265 = vmatpush2.bf16.msra.mxu0 %v879
  %1266 = vmatprep.subr.bf16.mxu0 0
  %1267 = vmatpush2.bf16.msra.mxu0 %v878
  %1268 = vmatprep.subr.bf16.mxu0 0
  %1269 = vmatpush2.bf16.msra.mxu0 %v877
  %1270 = vmatprep.subr.bf16.mxu0 0
  %1271 = vmatpush2.bf16.msra.mxu0 %v876
  %1272 = vmatprep.mubr.bf16.mxu0 %v349
  %1273 = vmatmul.mubr.bf16.gmra.mxu0 %v348
  %v1274 = vpop.f32.mrf.mxu0
  %v1275 = vadd.f32 %v1226, %v1274
  %v1276 = vpop.f32.mrf.mxu0
  %v1277 = vpop.f32.mrf.mxu0
  %v1278 = vadd.f32 %v1229, %v1277
  %v1279 = vpop.f32.mrf.mxu0
  %1280 = vmatprep.mubr.bf16.mxu0 %v362
  %1281 = vmatmul.mubr.bf16.gmra.mxu0 %v361
  %v1282 = vpop.f32.mrf.mxu0
  %v1283 = vadd.f32 %v1234, %v1282
  %v1284 = vpop.f32.mrf.mxu0
  %v1285 = vpop.f32.mrf.mxu0
  %v1286 = vadd.f32 %v1237, %v1285
  %v1287 = vpop.f32.mrf.mxu0
  %1288 = vdwg.mxu0
  %1289 = vmatprep.subr.bf16.mxu0 0
  %1290 = vmatpush1.bf16.msra.mxu0 0
  %1291 = vmatprep.subr.bf16.mxu0 0
  %1292 = vmatpush1.bf16.msra.mxu0 0
  %1293 = vmatprep.subr.bf16.mxu0 0
  %1294 = vmatpush1.bf16.msra.mxu0 0
  %1295 = vmatprep.subr.bf16.mxu0 0
  %1296 = vmatpush1.bf16.msra.mxu0 0
  %1297 = vmatprep.subr.bf16.mxu0 0
  %1298 = vmatpush1.bf16.msra.mxu0 %v887
  %1299 = vmatprep.subr.bf16.mxu0 0
  %1300 = vmatpush1.bf16.msra.mxu0 %v886
  %1301 = vmatprep.subr.bf16.mxu0 0
  %1302 = vmatpush1.bf16.msra.mxu0 %v885
  %1303 = vmatprep.subr.bf16.mxu0 0
  %1304 = vmatpush1.bf16.msra.mxu0 %v884
  %1305 = vmatprep.subr.bf16.mxu0 0
  %1306 = vmatpush2.bf16.msra.mxu0 0
  %1307 = vmatprep.subr.bf16.mxu0 0
  %1308 = vmatpush2.bf16.msra.mxu0 0
  %1309 = vmatprep.subr.bf16.mxu0 0
  %1310 = vmatpush2.bf16.msra.mxu0 0
  %1311 = vmatprep.subr.bf16.mxu0 0
  %1312 = vmatpush2.bf16.msra.mxu0 0
  %1313 = vmatprep.subr.bf16.mxu0 0
  %1314 = vmatpush2.bf16.msra.mxu0 0
  %1315 = vmatprep.subr.bf16.mxu0 0
  %1316 = vmatpush2.bf16.msra.mxu0 0
  %1317 = vmatprep.subr.bf16.mxu0 0
  %1318 = vmatpush2.bf16.msra.mxu0 0
  %1319 = vmatprep.subr.bf16.mxu0 0
  %1320 = vmatpush2.bf16.msra.mxu0 0
  %1321 = vmatprep.mubr.bf16.mxu0 0
  %1322 = vmatmul.mubr.bf16.gmra.mxu0 %v990
  %v1323 = vpop.f32.mrf.mxu0
  %v1324 = vadd.f32 %v1275, %v1323
  %v1325 = vpop.f32.mrf.mxu0
  %v1326 = vpop.f32.mrf.mxu0
  %v1327 = vadd.f32 %v1278, %v1326
  %v1328 = vpop.f32.mrf.mxu0
  %1329 = vmatprep.mubr.bf16.mxu0 0
  %1330 = vmatmul.mubr.bf16.gmra.mxu0 %v993
  %v1331 = vpop.f32.mrf.mxu0
  %v1332 = vadd.f32 %v1283, %v1331
  %v1333 = vpop.f32.mrf.mxu0
  %v1334 = vpop.f32.mrf.mxu0
  %v1335 = vadd.f32 %v1286, %v1334
  %v1336 = vpop.f32.mrf.mxu0
  %1337 = vdwg.mxu0
  %v1338 = vmax.f32 %v1324, 0.0
  %v1339 = vmax.f32 %v1327, 0.0
  %v1340 = vmax.f32 %v1332, 0.0
  %v1341 = vmax.f32 %v1335, 0.0
  %v1343 = vlaneseq
  %v1344 = vshrl.u32 %v1343, 7
  %v1345 = vsub.s32 0, %v1344
  %v1346 = vrot.slane %v222, %v1345
  %v1348 = vmul.f32 %v1338, %v1346
  %v1349 = vmul.f32 %v1339, %v1346
  %v1350 = vmul.f32 %v1340, %v1346
  %v1351 = vmul.f32 %v1341, %v1346
  %v1353 = vlaneseq
  %v1354 = vshrl.u32 %v1353, 7
  %v1355 = vsub.s32 0, %v1354
  %v1356 = vrot.slane %v223, %v1355
  %v1358 = vadd.f32 %v1348, %v1356
  %v1359 = vadd.f32 %v1349, %v1356
  %v1360 = vadd.f32 %v1350, %v1356
  %v1361 = vadd.f32 %v1351, %v1356
  %s1362 = scalar_lea.vmem %s0, 208
  %v1363 = vld [vmem:[%s1362] sm:$0xff]
  %v1364 = vld [vmem:[%s1362 + $0x8] sm:$0xff]
  %v1365 = vld [vmem:[%s1362 + $0x10] sm:$0xff]
  %v1366 = vld [vmem:[%s1362 + $0x18] sm:$0xff]
  %v1367 = vld [vmem:[%s1362 + $0x20] sm:$0xff]
  %v1368 = vld [vmem:[%s1362 + $0x28] sm:$0xff]
  %v1369 = vld [vmem:[%s1362 + $0x30] sm:$0xf]
  %v1370 = vld [vmem:[%s1362 + $0x34] sm:$0xff]
  %v1371 = vld [vmem:[%s1362 + $0x3c] sm:$0xff]
  %v1372 = vld [vmem:[%s1362 + $0x44] sm:$0xff]
  %v1373 = vld [vmem:[%s1362 + $0x4c] sm:$0xff]
  %v1374 = vld [vmem:[%s1362 + $0x54] sm:$0xff]
  %v1375 = vld [vmem:[%s1362 + $0x5c] sm:$0xff]
  %v1376 = vld [vmem:[%s1362 + $0x64] sm:$0xf]
  %v1377 = vld [vmem:[%s1362 + $0x68] sm:$0xff]
  %v1378 = vld [vmem:[%s1362 + $0x70] sm:$0xff]
  %v1379 = vld [vmem:[%s1362 + $0x78] sm:$0xff]
  %v1380 = vld [vmem:[%s1362 + $0x80] sm:$0xff]
  %v1381 = vld [vmem:[%s1362 + $0x88] sm:$0xff]
  %v1382 = vld [vmem:[%s1362 + $0x90] sm:$0xff]
  %v1383 = vld [vmem:[%s1362 + $0x98] sm:$0xf]
  %v1384 = vld [vmem:[%s1362 + $0x9c] sm:$0xff]
  %v1385 = vld [vmem:[%s1362 + $0xa4] sm:$0xff]
  %v1386 = vld [vmem:[%s1362 + $0xac] sm:$0xff]
  %v1387 = vld [vmem:[%s1362 + $0xb4] sm:$0xff]
  %v1388 = vld [vmem:[%s1362 + $0xbc] sm:$0xff]
  %v1389 = vld [vmem:[%s1362 + $0xc4] sm:$0xff]
  %v1390 = vld [vmem:[%s1362 + $0xcc] sm:$0xf]
  %v1419 = vunpack.c.l.b16 %v1363
  %v1420 = vunpack.c.h.b16 %v1363
  %v1421 = vunpack.c.l.b16 %v1364
  %v1422 = vunpack.c.h.b16 %v1364
  %v1423 = vunpack.c.l.b16 %v1365
  %v1424 = vunpack.c.h.b16 %v1365
  %v1425 = vunpack.c.l.b16 %v1366
  %v1426 = vunpack.c.h.b16 %v1366
  %v1427 = vunpack.c.l.b16 %v1367
  %v1428 = vunpack.c.h.b16 %v1367
  %v1429 = vunpack.c.l.b16 %v1368
  %v1430 = vunpack.c.h.b16 %v1368
  %v1431 = vunpack.c.l.b16 %v1369
  %v1432 = vunpack.c.l.b16 %v1370
  %v1433 = vunpack.c.h.b16 %v1370
  %v1434 = vunpack.c.l.b16 %v1371
  %v1435 = vunpack.c.h.b16 %v1371
  %v1436 = vunpack.c.l.b16 %v1372
  %v1437 = vunpack.c.h.b16 %v1372
  %v1438 = vunpack.c.l.b16 %v1373
  %v1439 = vunpack.c.h.b16 %v1373
  %v1440 = vunpack.c.l.b16 %v1374
  %v1441 = vunpack.c.h.b16 %v1374
  %v1442 = vunpack.c.l.b16 %v1375
  %v1443 = vunpack.c.h.b16 %v1375
  %v1444 = vunpack.c.l.b16 %v1376
  %v1445 = vunpack.c.l.b16 %v1377
  %v1446 = vunpack.c.h.b16 %v1377
  %v1447 = vunpack.c.l.b16 %v1378
  %v1448 = vunpack.c.h.b16 %v1378
  %v1449 = vunpack.c.l.b16 %v1379
  %v1450 = vunpack.c.h.b16 %v1379
  %v1451 = vunpack.c.l.b16 %v1380
  %v1452 = vunpack.c.h.b16 %v1380
  %v1453 = vunpack.c.l.b16 %v1381
  %v1454 = vunpack.c.h.b16 %v1381
  %v1455 = vunpack.c.l.b16 %v1382
  %v1456 = vunpack.c.h.b16 %v1382
  %v1457 = vunpack.c.l.b16 %v1383
  %v1458 = vunpack.c.l.b16 %v1384
  %v1459 = vunpack.c.h.b16 %v1384
  %v1460 = vunpack.c.l.b16 %v1385
  %v1461 = vunpack.c.h.b16 %v1385
  %v1462 = vunpack.c.l.b16 %v1386
  %v1463 = vunpack.c.h.b16 %v1386
  %v1464 = vunpack.c.l.b16 %v1387
  %v1465 = vunpack.c.h.b16 %v1387
  %v1466 = vunpack.c.l.b16 %v1388
  %v1467 = vunpack.c.h.b16 %v1388
  %v1468 = vunpack.c.l.b16 %v1389
  %v1469 = vunpack.c.h.b16 %v1389
  %v1470 = vunpack.c.l.b16 %v1390
  %v1471 = vpack.c.b16 %v1432, %v1419
  %v1472 = vpack.c.b16 %v1433, %v1420
  %v1473 = vpack.c.b16 %v1434, %v1421
  %v1474 = vpack.c.b16 %v1435, %v1422
  %v1475 = vpack.c.b16 %v1436, %v1423
  %v1476 = vpack.c.b16 %v1437, %v1424
  %v1477 = vpack.c.b16 %v1438, %v1425
  %v1478 = vpack.c.b16 %v1439, %v1426
  %v1479 = vpack.c.b16 %v1440, %v1427
  %v1480 = vpack.c.b16 %v1441, %v1428
  %v1481 = vpack.c.b16 %v1442, %v1429
  %v1482 = vpack.c.b16 %v1443, %v1430
  %v1483 = vpack.c.b16 %v1444, %v1431
  %v1484 = vpack.c.b16 %v1458, %v1445
  %v1485 = vpack.c.b16 %v1459, %v1446
  %v1486 = vpack.c.b16 %v1460, %v1447
  %v1487 = vpack.c.b16 %v1461, %v1448
  %v1488 = vpack.c.b16 %v1462, %v1449
  %v1489 = vpack.c.b16 %v1463, %v1450
  %v1490 = vpack.c.b16 %v1464, %v1451
  %v1491 = vpack.c.b16 %v1465, %v1452
  %v1492 = vpack.c.b16 %v1466, %v1453
  %v1493 = vpack.c.b16 %v1467, %v1454
  %v1494 = vpack.c.b16 %v1468, %v1455
  %v1495 = vpack.c.b16 %v1469, %v1456
  %v1496 = vpack.c.b16 %v1470, %v1457
  %v1522 = vsel %vm988, %v1483, 0
  %v1525 = vsel %vm988, %v1496, 0
  %1527 = vmatprep.subr.bf16.mxu0 0
  %1528 = vmatpush1.bf16.msra.mxu0 %v795
  %1529 = vmatprep.subr.bf16.mxu0 0
  %1530 = vmatpush1.bf16.msra.mxu0 %v794
  %1531 = vmatprep.subr.bf16.mxu0 0
  %1532 = vmatpush1.bf16.msra.mxu0 %v793
  %1533 = vmatprep.subr.bf16.mxu0 0
  %1534 = vmatpush1.bf16.msra.mxu0 %v792
  %1535 = vmatprep.subr.bf16.mxu0 0
  %1536 = vmatpush1.bf16.msra.mxu0 %v791
  %1537 = vmatprep.subr.bf16.mxu0 0
  %1538 = vmatpush1.bf16.msra.mxu0 %v790
  %1539 = vmatprep.subr.bf16.mxu0 0
  %1540 = vmatpush1.bf16.msra.mxu0 %v789
  %1541 = vmatprep.subr.bf16.mxu0 0
  %1542 = vmatpush1.bf16.msra.mxu0 %v788
  %1543 = vmatprep.subr.bf16.mxu0 0
  %1544 = vmatpush2.bf16.msra.mxu0 %v803
  %1545 = vmatprep.subr.bf16.mxu0 0
  %1546 = vmatpush2.bf16.msra.mxu0 %v802
  %1547 = vmatprep.subr.bf16.mxu0 0
  %1548 = vmatpush2.bf16.msra.mxu0 %v801
  %1549 = vmatprep.subr.bf16.mxu0 0
  %1550 = vmatpush2.bf16.msra.mxu0 %v800
  %1551 = vmatprep.subr.bf16.mxu0 0
  %1552 = vmatpush2.bf16.msra.mxu0 %v799
  %1553 = vmatprep.subr.bf16.mxu0 0
  %1554 = vmatpush2.bf16.msra.mxu0 %v798
  %1555 = vmatprep.subr.bf16.mxu0 0
  %1556 = vmatpush2.bf16.msra.mxu0 %v797
  %1557 = vmatprep.subr.bf16.mxu0 0
  %1558 = vmatpush2.bf16.msra.mxu0 %v796
  %1559 = vmatprep.mubr.bf16.mxu0 %v1472
  %1560 = vmatmul.mubr.bf16.gmra.mxu0 %v1471
  %v1561 = vpop.f32.mrf.mxu0
  %v1562 = vadd.f32 %v256, %v1561
  %v1563 = vpop.f32.mrf.mxu0
  %v1564 = vpop.f32.mrf.mxu0
  %v1565 = vadd.f32 %v256, %v1564
  %v1566 = vpop.f32.mrf.mxu0
  %1567 = vmatprep.mubr.bf16.mxu0 %v1485
  %1568 = vmatmul.mubr.bf16.gmra.mxu0 %v1484
  %v1569 = vpop.f32.mrf.mxu0
  %v1570 = vadd.f32 %v256, %v1569
  %v1571 = vpop.f32.mrf.mxu0
  %v1572 = vpop.f32.mrf.mxu0
  %v1573 = vadd.f32 %v256, %v1572
  %v1574 = vpop.f32.mrf.mxu0
  %1575 = vdwg.mxu0
  %1576 = vmatprep.subr.bf16.mxu0 0
  %1577 = vmatpush1.bf16.msra.mxu0 %v811
  %1578 = vmatprep.subr.bf16.mxu0 0
  %1579 = vmatpush1.bf16.msra.mxu0 %v810
  %1580 = vmatprep.subr.bf16.mxu0 0
  %1581 = vmatpush1.bf16.msra.mxu0 %v809
  %1582 = vmatprep.subr.bf16.mxu0 0
  %1583 = vmatpush1.bf16.msra.mxu0 %v808
  %1584 = vmatprep.subr.bf16.mxu0 0
  %1585 = vmatpush1.bf16.msra.mxu0 %v807
  %1586 = vmatprep.subr.bf16.mxu0 0
  %1587 = vmatpush1.bf16.msra.mxu0 %v806
  %1588 = vmatprep.subr.bf16.mxu0 0
  %1589 = vmatpush1.bf16.msra.mxu0 %v805
  %1590 = vmatprep.subr.bf16.mxu0 0
  %1591 = vmatpush1.bf16.msra.mxu0 %v804
  %1592 = vmatprep.subr.bf16.mxu0 0
  %1593 = vmatpush2.bf16.msra.mxu0 %v819
  %1594 = vmatprep.subr.bf16.mxu0 0
  %1595 = vmatpush2.bf16.msra.mxu0 %v818
  %1596 = vmatprep.subr.bf16.mxu0 0
  %1597 = vmatpush2.bf16.msra.mxu0 %v817
  %1598 = vmatprep.subr.bf16.mxu0 0
  %1599 = vmatpush2.bf16.msra.mxu0 %v816
  %1600 = vmatprep.subr.bf16.mxu0 0
  %1601 = vmatpush2.bf16.msra.mxu0 %v815
  %1602 = vmatprep.subr.bf16.mxu0 0
  %1603 = vmatpush2.bf16.msra.mxu0 %v814
  %1604 = vmatprep.subr.bf16.mxu0 0
  %1605 = vmatpush2.bf16.msra.mxu0 %v813
  %1606 = vmatprep.subr.bf16.mxu0 0
  %1607 = vmatpush2.bf16.msra.mxu0 %v812
  %1608 = vmatprep.mubr.bf16.mxu0 %v1474
  %1609 = vmatmul.mubr.bf16.gmra.mxu0 %v1473
  %v1610 = vpop.f32.mrf.mxu0
  %v1611 = vadd.f32 %v1562, %v1610
  %v1612 = vpop.f32.mrf.mxu0
  %v1613 = vpop.f32.mrf.mxu0
  %v1614 = vadd.f32 %v1565, %v1613
  %v1615 = vpop.f32.mrf.mxu0
  %1616 = vmatprep.mubr.bf16.mxu0 %v1487
  %1617 = vmatmul.mubr.bf16.gmra.mxu0 %v1486
  %v1618 = vpop.f32.mrf.mxu0
  %v1619 = vadd.f32 %v1570, %v1618
  %v1620 = vpop.f32.mrf.mxu0
  %v1621 = vpop.f32.mrf.mxu0
  %v1622 = vadd.f32 %v1573, %v1621
  %v1623 = vpop.f32.mrf.mxu0
  %1624 = vdwg.mxu0
  %1625 = vmatprep.subr.bf16.mxu0 0
  %1626 = vmatpush1.bf16.msra.mxu0 %v827
  %1627 = vmatprep.subr.bf16.mxu0 0
  %1628 = vmatpush1.bf16.msra.mxu0 %v826
  %1629 = vmatprep.subr.bf16.mxu0 0
  %1630 = vmatpush1.bf16.msra.mxu0 %v825
  %1631 = vmatprep.subr.bf16.mxu0 0
  %1632 = vmatpush1.bf16.msra.mxu0 %v824
  %1633 = vmatprep.subr.bf16.mxu0 0
  %1634 = vmatpush1.bf16.msra.mxu0 %v823
  %1635 = vmatprep.subr.bf16.mxu0 0
  %1636 = vmatpush1.bf16.msra.mxu0 %v822
  %1637 = vmatprep.subr.bf16.mxu0 0
  %1638 = vmatpush1.bf16.msra.mxu0 %v821
  %1639 = vmatprep.subr.bf16.mxu0 0
  %1640 = vmatpush1.bf16.msra.mxu0 %v820
  %1641 = vmatprep.subr.bf16.mxu0 0
  %1642 = vmatpush2.bf16.msra.mxu0 %v835
  %1643 = vmatprep.subr.bf16.mxu0 0
  %1644 = vmatpush2.bf16.msra.mxu0 %v834
  %1645 = vmatprep.subr.bf16.mxu0 0
  %1646 = vmatpush2.bf16.msra.mxu0 %v833
  %1647 = vmatprep.subr.bf16.mxu0 0
  %1648 = vmatpush2.bf16.msra.mxu0 %v832
  %1649 = vmatprep.subr.bf16.mxu0 0
  %1650 = vmatpush2.bf16.msra.mxu0 %v831
  %1651 = vmatprep.subr.bf16.mxu0 0
  %1652 = vmatpush2.bf16.msra.mxu0 %v830
  %1653 = vmatprep.subr.bf16.mxu0 0
  %1654 = vmatpush2.bf16.msra.mxu0 %v829
  %1655 = vmatprep.subr.bf16.mxu0 0
  %1656 = vmatpush2.bf16.msra.mxu0 %v828
  %1657 = vmatprep.mubr.bf16.mxu0 %v1476
  %1658 = vmatmul.mubr.bf16.gmra.mxu0 %v1475
  %v1659 = vpop.f32.mrf.mxu0
  %v1660 = vadd.f32 %v1611, %v1659
  %v1661 = vpop.f32.mrf.mxu0
  %v1662 = vpop.f32.mrf.mxu0
  %v1663 = vadd.f32 %v1614, %v1662
  %v1664 = vpop.f32.mrf.mxu0
  %1665 = vmatprep.mubr.bf16.mxu0 %v1489
  %1666 = vmatmul.mubr.bf16.gmra.mxu0 %v1488
  %v1667 = vpop.f32.mrf.mxu0
  %v1668 = vadd.f32 %v1619, %v1667
  %v1669 = vpop.f32.mrf.mxu0
  %v1670 = vpop.f32.mrf.mxu0
  %v1671 = vadd.f32 %v1622, %v1670
  %v1672 = vpop.f32.mrf.mxu0
  %1673 = vdwg.mxu0
  %1674 = vmatprep.subr.bf16.mxu0 0
  %1675 = vmatpush1.bf16.msra.mxu0 %v843
  %1676 = vmatprep.subr.bf16.mxu0 0
  %1677 = vmatpush1.bf16.msra.mxu0 %v842
  %1678 = vmatprep.subr.bf16.mxu0 0
  %1679 = vmatpush1.bf16.msra.mxu0 %v841
  %1680 = vmatprep.subr.bf16.mxu0 0
  %1681 = vmatpush1.bf16.msra.mxu0 %v840
  %1682 = vmatprep.subr.bf16.mxu0 0
  %1683 = vmatpush1.bf16.msra.mxu0 %v839
  %1684 = vmatprep.subr.bf16.mxu0 0
  %1685 = vmatpush1.bf16.msra.mxu0 %v838
  %1686 = vmatprep.subr.bf16.mxu0 0
  %1687 = vmatpush1.bf16.msra.mxu0 %v837
  %1688 = vmatprep.subr.bf16.mxu0 0
  %1689 = vmatpush1.bf16.msra.mxu0 %v836
  %1690 = vmatprep.subr.bf16.mxu0 0
  %1691 = vmatpush2.bf16.msra.mxu0 %v851
  %1692 = vmatprep.subr.bf16.mxu0 0
  %1693 = vmatpush2.bf16.msra.mxu0 %v850
  %1694 = vmatprep.subr.bf16.mxu0 0
  %1695 = vmatpush2.bf16.msra.mxu0 %v849
  %1696 = vmatprep.subr.bf16.mxu0 0
  %1697 = vmatpush2.bf16.msra.mxu0 %v848
  %1698 = vmatprep.subr.bf16.mxu0 0
  %1699 = vmatpush2.bf16.msra.mxu0 %v847
  %1700 = vmatprep.subr.bf16.mxu0 0
  %1701 = vmatpush2.bf16.msra.mxu0 %v846
  %1702 = vmatprep.subr.bf16.mxu0 0
  %1703 = vmatpush2.bf16.msra.mxu0 %v845
  %1704 = vmatprep.subr.bf16.mxu0 0
  %1705 = vmatpush2.bf16.msra.mxu0 %v844
  %1706 = vmatprep.mubr.bf16.mxu0 %v1478
  %1707 = vmatmul.mubr.bf16.gmra.mxu0 %v1477
  %v1708 = vpop.f32.mrf.mxu0
  %v1709 = vadd.f32 %v1660, %v1708
  %v1710 = vpop.f32.mrf.mxu0
  %v1711 = vpop.f32.mrf.mxu0
  %v1712 = vadd.f32 %v1663, %v1711
  %v1713 = vpop.f32.mrf.mxu0
  %1714 = vmatprep.mubr.bf16.mxu0 %v1491
  %1715 = vmatmul.mubr.bf16.gmra.mxu0 %v1490
  %v1716 = vpop.f32.mrf.mxu0
  %v1717 = vadd.f32 %v1668, %v1716
  %v1718 = vpop.f32.mrf.mxu0
  %v1719 = vpop.f32.mrf.mxu0
  %v1720 = vadd.f32 %v1671, %v1719
  %v1721 = vpop.f32.mrf.mxu0
  %1722 = vdwg.mxu0
  %1723 = vmatprep.subr.bf16.mxu0 0
  %1724 = vmatpush1.bf16.msra.mxu0 %v859
  %1725 = vmatprep.subr.bf16.mxu0 0
  %1726 = vmatpush1.bf16.msra.mxu0 %v858
  %1727 = vmatprep.subr.bf16.mxu0 0
  %1728 = vmatpush1.bf16.msra.mxu0 %v857
  %1729 = vmatprep.subr.bf16.mxu0 0
  %1730 = vmatpush1.bf16.msra.mxu0 %v856
  %1731 = vmatprep.subr.bf16.mxu0 0
  %1732 = vmatpush1.bf16.msra.mxu0 %v855
  %1733 = vmatprep.subr.bf16.mxu0 0
  %1734 = vmatpush1.bf16.msra.mxu0 %v854
  %1735 = vmatprep.subr.bf16.mxu0 0
  %1736 = vmatpush1.bf16.msra.mxu0 %v853
  %1737 = vmatprep.subr.bf16.mxu0 0
  %1738 = vmatpush1.bf16.msra.mxu0 %v852
  %1739 = vmatprep.subr.bf16.mxu0 0
  %1740 = vmatpush2.bf16.msra.mxu0 %v867
  %1741 = vmatprep.subr.bf16.mxu0 0
  %1742 = vmatpush2.bf16.msra.mxu0 %v866
  %1743 = vmatprep.subr.bf16.mxu0 0
  %1744 = vmatpush2.bf16.msra.mxu0 %v865
  %1745 = vmatprep.subr.bf16.mxu0 0
  %1746 = vmatpush2.bf16.msra.mxu0 %v864
  %1747 = vmatprep.subr.bf16.mxu0 0
  %1748 = vmatpush2.bf16.msra.mxu0 %v863
  %1749 = vmatprep.subr.bf16.mxu0 0
  %1750 = vmatpush2.bf16.msra.mxu0 %v862
  %1751 = vmatprep.subr.bf16.mxu0 0
  %1752 = vmatpush2.bf16.msra.mxu0 %v861
  %1753 = vmatprep.subr.bf16.mxu0 0
  %1754 = vmatpush2.bf16.msra.mxu0 %v860
  %1755 = vmatprep.mubr.bf16.mxu0 %v1480
  %1756 = vmatmul.mubr.bf16.gmra.mxu0 %v1479
  %v1757 = vpop.f32.mrf.mxu0
  %v1758 = vadd.f32 %v1709, %v1757
  %v1759 = vpop.f32.mrf.mxu0
  %v1760 = vpop.f32.mrf.mxu0
  %v1761 = vadd.f32 %v1712, %v1760
  %v1762 = vpop.f32.mrf.mxu0
  %1763 = vmatprep.mubr.bf16.mxu0 %v1493
  %1764 = vmatmul.mubr.bf16.gmra.mxu0 %v1492
  %v1765 = vpop.f32.mrf.mxu0
  %v1766 = vadd.f32 %v1717, %v1765
  %v1767 = vpop.f32.mrf.mxu0
  %v1768 = vpop.f32.mrf.mxu0
  %v1769 = vadd.f32 %v1720, %v1768
  %v1770 = vpop.f32.mrf.mxu0
  %1771 = vdwg.mxu0
  %1772 = vmatprep.subr.bf16.mxu0 0
  %1773 = vmatpush1.bf16.msra.mxu0 %v875
  %1774 = vmatprep.subr.bf16.mxu0 0
  %1775 = vmatpush1.bf16.msra.mxu0 %v874
  %1776 = vmatprep.subr.bf16.mxu0 0
  %1777 = vmatpush1.bf16.msra.mxu0 %v873
  %1778 = vmatprep.subr.bf16.mxu0 0
  %1779 = vmatpush1.bf16.msra.mxu0 %v872
  %1780 = vmatprep.subr.bf16.mxu0 0
  %1781 = vmatpush1.bf16.msra.mxu0 %v871
  %1782 = vmatprep.subr.bf16.mxu0 0
  %1783 = vmatpush1.bf16.msra.mxu0 %v870
  %1784 = vmatprep.subr.bf16.mxu0 0
  %1785 = vmatpush1.bf16.msra.mxu0 %v869
  %1786 = vmatprep.subr.bf16.mxu0 0
  %1787 = vmatpush1.bf16.msra.mxu0 %v868
  %1788 = vmatprep.subr.bf16.mxu0 0
  %1789 = vmatpush2.bf16.msra.mxu0 %v883
  %1790 = vmatprep.subr.bf16.mxu0 0
  %1791 = vmatpush2.bf16.msra.mxu0 %v882
  %1792 = vmatprep.subr.bf16.mxu0 0
  %1793 = vmatpush2.bf16.msra.mxu0 %v881
  %1794 = vmatprep.subr.bf16.mxu0 0
  %1795 = vmatpush2.bf16.msra.mxu0 %v880
  %1796 = vmatprep.subr.bf16.mxu0 0
  %1797 = vmatpush2.bf16.msra.mxu0 %v879
  %1798 = vmatprep.subr.bf16.mxu0 0
  %1799 = vmatpush2.bf16.msra.mxu0 %v878
  %1800 = vmatprep.subr.bf16.mxu0 0
  %1801 = vmatpush2.bf16.msra.mxu0 %v877
  %1802 = vmatprep.subr.bf16.mxu0 0
  %1803 = vmatpush2.bf16.msra.mxu0 %v876
  %1804 = vmatprep.mubr.bf16.mxu0 %v1482
  %1805 = vmatmul.mubr.bf16.gmra.mxu0 %v1481
  %v1806 = vpop.f32.mrf.mxu0
  %v1807 = vadd.f32 %v1758, %v1806
  %v1808 = vpop.f32.mrf.mxu0
  %v1809 = vpop.f32.mrf.mxu0
  %v1810 = vadd.f32 %v1761, %v1809
  %v1811 = vpop.f32.mrf.mxu0
  %1812 = vmatprep.mubr.bf16.mxu0 %v1495
  %1813 = vmatmul.mubr.bf16.gmra.mxu0 %v1494
  %v1814 = vpop.f32.mrf.mxu0
  %v1815 = vadd.f32 %v1766, %v1814
  %v1816 = vpop.f32.mrf.mxu0
  %v1817 = vpop.f32.mrf.mxu0
  %v1818 = vadd.f32 %v1769, %v1817
  %v1819 = vpop.f32.mrf.mxu0
  %1820 = vdwg.mxu0
  %1821 = vmatprep.subr.bf16.mxu0 0
  %1822 = vmatpush1.bf16.msra.mxu0 0
  %1823 = vmatprep.subr.bf16.mxu0 0
  %1824 = vmatpush1.bf16.msra.mxu0 0
  %1825 = vmatprep.subr.bf16.mxu0 0
  %1826 = vmatpush1.bf16.msra.mxu0 0
  %1827 = vmatprep.subr.bf16.mxu0 0
  %1828 = vmatpush1.bf16.msra.mxu0 0
  %1829 = vmatprep.subr.bf16.mxu0 0
  %1830 = vmatpush1.bf16.msra.mxu0 %v887
  %1831 = vmatprep.subr.bf16.mxu0 0
  %1832 = vmatpush1.bf16.msra.mxu0 %v886
  %1833 = vmatprep.subr.bf16.mxu0 0
  %1834 = vmatpush1.bf16.msra.mxu0 %v885
  %1835 = vmatprep.subr.bf16.mxu0 0
  %1836 = vmatpush1.bf16.msra.mxu0 %v884
  %1837 = vmatprep.subr.bf16.mxu0 0
  %1838 = vmatpush2.bf16.msra.mxu0 0
  %1839 = vmatprep.subr.bf16.mxu0 0
  %1840 = vmatpush2.bf16.msra.mxu0 0
  %1841 = vmatprep.subr.bf16.mxu0 0
  %1842 = vmatpush2.bf16.msra.mxu0 0
  %1843 = vmatprep.subr.bf16.mxu0 0
  %1844 = vmatpush2.bf16.msra.mxu0 0
  %1845 = vmatprep.subr.bf16.mxu0 0
  %1846 = vmatpush2.bf16.msra.mxu0 0
  %1847 = vmatprep.subr.bf16.mxu0 0
  %1848 = vmatpush2.bf16.msra.mxu0 0
  %1849 = vmatprep.subr.bf16.mxu0 0
  %1850 = vmatpush2.bf16.msra.mxu0 0
  %1851 = vmatprep.subr.bf16.mxu0 0
  %1852 = vmatpush2.bf16.msra.mxu0 0
  %1853 = vmatprep.mubr.bf16.mxu0 0
  %1854 = vmatmul.mubr.bf16.gmra.mxu0 %v1522
  %v1855 = vpop.f32.mrf.mxu0
  %v1856 = vadd.f32 %v1807, %v1855
  %v1857 = vpop.f32.mrf.mxu0
  %v1858 = vpop.f32.mrf.mxu0
  %v1859 = vadd.f32 %v1810, %v1858
  %v1860 = vpop.f32.mrf.mxu0
  %1861 = vmatprep.mubr.bf16.mxu0 0
  %1862 = vmatmul.mubr.bf16.gmra.mxu0 %v1525
  %v1863 = vpop.f32.mrf.mxu0
  %v1864 = vadd.f32 %v1815, %v1863
  %v1865 = vpop.f32.mrf.mxu0
  %v1866 = vpop.f32.mrf.mxu0
  %v1867 = vadd.f32 %v1818, %v1866
  %v1868 = vpop.f32.mrf.mxu0
  %1869 = vdwg.mxu0
  %v1870 = vmax.f32 %v1856, 0.0
  %v1871 = vmax.f32 %v1859, 0.0
  %v1872 = vmax.f32 %v1864, 0.0
  %v1873 = vmax.f32 %v1867, 0.0
  %v1874 = vmul.f32 %v1870, %v1346
  %v1875 = vmul.f32 %v1871, %v1346
  %v1876 = vmul.f32 %v1872, %v1346
  %v1877 = vmul.f32 %v1873, %v1346
  %v1878 = vadd.f32 %v1874, %v1356
  %v1879 = vadd.f32 %v1875, %v1356
  %v1880 = vadd.f32 %v1876, %v1356
  %v1881 = vadd.f32 %v1877, %v1356
  %v1882 = vmax.f32 %v1358, %v1878
  %v1883 = vmax.f32 %v1359, %v1879
  %v1884 = vmax.f32 %v1360, %v1880
  %v1885 = vmax.f32 %v1361, %v1881
  %s1886 = scalar_lea.vmem %s0, 416
  %v1887 = vld [vmem:[%s1886] sm:$0xff]
  %v1888 = vld [vmem:[%s1886 + $0x8] sm:$0xff]
  %v1889 = vld [vmem:[%s1886 + $0x10] sm:$0xff]
  %v1890 = vld [vmem:[%s1886 + $0x18] sm:$0xff]
  %v1891 = vld [vmem:[%s1886 + $0x20] sm:$0xff]
  %v1892 = vld [vmem:[%s1886 + $0x28] sm:$0xff]
  %v1893 = vld [vmem:[%s1886 + $0x30] sm:$0xf]
  %v1894 = vld [vmem:[%s1886 + $0x34] sm:$0xff]
  %v1895 = vld [vmem:[%s1886 + $0x3c] sm:$0xff]
  %v1896 = vld [vmem:[%s1886 + $0x44] sm:$0xff]
  %v1897 = vld [vmem:[%s1886 + $0x4c] sm:$0xff]
  %v1898 = vld [vmem:[%s1886 + $0x54] sm:$0xff]
  %v1899 = vld [vmem:[%s1886 + $0x5c] sm:$0xff]
  %v1900 = vld [vmem:[%s1886 + $0x64] sm:$0xf]
  %v1901 = vld [vmem:[%s1886 + $0x68] sm:$0xff]
  %v1902 = vld [vmem:[%s1886 + $0x70] sm:$0xff]
  %v1903 = vld [vmem:[%s1886 + $0x78] sm:$0xff]
  %v1904 = vld [vmem:[%s1886 + $0x80] sm:$0xff]
  %v1905 = vld [vmem:[%s1886 + $0x88] sm:$0xff]
  %v1906 = vld [vmem:[%s1886 + $0x90] sm:$0xff]
  %v1907 = vld [vmem:[%s1886 + $0x98] sm:$0xf]
  %v1908 = vld [vmem:[%s1886 + $0x9c] sm:$0xff]
  %v1909 = vld [vmem:[%s1886 + $0xa4] sm:$0xff]
  %v1910 = vld [vmem:[%s1886 + $0xac] sm:$0xff]
  %v1911 = vld [vmem:[%s1886 + $0xb4] sm:$0xff]
  %v1912 = vld [vmem:[%s1886 + $0xbc] sm:$0xff]
  %v1913 = vld [vmem:[%s1886 + $0xc4] sm:$0xff]
  %v1914 = vld [vmem:[%s1886 + $0xcc] sm:$0xf]
  %v1943 = vunpack.c.l.b16 %v1887
  %v1944 = vunpack.c.h.b16 %v1887
  %v1945 = vunpack.c.l.b16 %v1888
  %v1946 = vunpack.c.h.b16 %v1888
  %v1947 = vunpack.c.l.b16 %v1889
  %v1948 = vunpack.c.h.b16 %v1889
  %v1949 = vunpack.c.l.b16 %v1890
  %v1950 = vunpack.c.h.b16 %v1890
  %v1951 = vunpack.c.l.b16 %v1891
  %v1952 = vunpack.c.h.b16 %v1891
  %v1953 = vunpack.c.l.b16 %v1892
  %v1954 = vunpack.c.h.b16 %v1892
  %v1955 = vunpack.c.l.b16 %v1893
  %v1956 = vunpack.c.l.b16 %v1894
  %v1957 = vunpack.c.h.b16 %v1894
  %v1958 = vunpack.c.l.b16 %v1895
  %v1959 = vunpack.c.h.b16 %v1895
  %v1960 = vunpack.c.l.b16 %v1896
  %v1961 = vunpack.c.h.b16 %v1896
  %v1962 = vunpack.c.l.b16 %v1897
  %v1963 = vunpack.c.h.b16 %v1897
  %v1964 = vunpack.c.l.b16 %v1898
  %v1965 = vunpack.c.h.b16 %v1898
  %v1966 = vunpack.c.l.b16 %v1899
  %v1967 = vunpack.c.h.b16 %v1899
  %v1968 = vunpack.c.l.b16 %v1900
  %v1969 = vunpack.c.l.b16 %v1901
  %v1970 = vunpack.c.h.b16 %v1901
  %v1971 = vunpack.c.l.b16 %v1902
  %v1972 = vunpack.c.h.b16 %v1902
  %v1973 = vunpack.c.l.b16 %v1903
  %v1974 = vunpack.c.h.b16 %v1903
  %v1975 = vunpack.c.l.b16 %v1904
  %v1976 = vunpack.c.h.b16 %v1904
  %v1977 = vunpack.c.l.b16 %v1905
  %v1978 = vunpack.c.h.b16 %v1905
  %v1979 = vunpack.c.l.b16 %v1906
  %v1980 = vunpack.c.h.b16 %v1906
  %v1981 = vunpack.c.l.b16 %v1907
  %v1982 = vunpack.c.l.b16 %v1908
  %v1983 = vunpack.c.h.b16 %v1908
  %v1984 = vunpack.c.l.b16 %v1909
  %v1985 = vunpack.c.h.b16 %v1909
  %v1986 = vunpack.c.l.b16 %v1910
  %v1987 = vunpack.c.h.b16 %v1910
  %v1988 = vunpack.c.l.b16 %v1911
  %v1989 = vunpack.c.h.b16 %v1911
  %v1990 = vunpack.c.l.b16 %v1912
  %v1991 = vunpack.c.h.b16 %v1912
  %v1992 = vunpack.c.l.b16 %v1913
  %v1993 = vunpack.c.h.b16 %v1913
  %v1994 = vunpack.c.l.b16 %v1914
  %v1995 = vpack.c.b16 %v1956, %v1943
  %v1996 = vpack.c.b16 %v1957, %v1944
  %v1997 = vpack.c.b16 %v1958, %v1945
  %v1998 = vpack.c.b16 %v1959, %v1946
  %v1999 = vpack.c.b16 %v1960, %v1947
  %v2000 = vpack.c.b16 %v1961, %v1948
  %v2001 = vpack.c.b16 %v1962, %v1949
  %v2002 = vpack.c.b16 %v1963, %v1950
  %v2003 = vpack.c.b16 %v1964, %v1951
  %v2004 = vpack.c.b16 %v1965, %v1952
  %v2005 = vpack.c.b16 %v1966, %v1953
  %v2006 = vpack.c.b16 %v1967, %v1954
  %v2007 = vpack.c.b16 %v1968, %v1955
  %v2008 = vpack.c.b16 %v1982, %v1969
  %v2009 = vpack.c.b16 %v1983, %v1970
  %v2010 = vpack.c.b16 %v1984, %v1971
  %v2011 = vpack.c.b16 %v1985, %v1972
  %v2012 = vpack.c.b16 %v1986, %v1973
  %v2013 = vpack.c.b16 %v1987, %v1974
  %v2014 = vpack.c.b16 %v1988, %v1975
  %v2015 = vpack.c.b16 %v1989, %v1976
  %v2016 = vpack.c.b16 %v1990, %v1977
  %v2017 = vpack.c.b16 %v1991, %v1978
  %v2018 = vpack.c.b16 %v1992, %v1979
  %v2019 = vpack.c.b16 %v1993, %v1980
  %v2020 = vpack.c.b16 %v1994, %v1981
  %v2046 = vsel %vm988, %v2007, 0
  %v2049 = vsel %vm988, %v2020, 0
  %2051 = vmatprep.subr.bf16.mxu0 0
  %2052 = vmatpush1.bf16.msra.mxu0 %v795
  %2053 = vmatprep.subr.bf16.mxu0 0
  %2054 = vmatpush1.bf16.msra.mxu0 %v794
  %2055 = vmatprep.subr.bf16.mxu0 0
  %2056 = vmatpush1.bf16.msra.mxu0 %v793
  %2057 = vmatprep.subr.bf16.mxu0 0
  %2058 = vmatpush1.bf16.msra.mxu0 %v792
  %2059 = vmatprep.subr.bf16.mxu0 0
  %2060 = vmatpush1.bf16.msra.mxu0 %v791
  %2061 = vmatprep.subr.bf16.mxu0 0
  %2062 = vmatpush1.bf16.msra.mxu0 %v790
  %2063 = vmatprep.subr.bf16.mxu0 0
  %2064 = vmatpush1.bf16.msra.mxu0 %v789
  %2065 = vmatprep.subr.bf16.mxu0 0
  %2066 = vmatpush1.bf16.msra.mxu0 %v788
  %2067 = vmatprep.subr.bf16.mxu0 0
  %2068 = vmatpush2.bf16.msra.mxu0 %v803
  %2069 = vmatprep.subr.bf16.mxu0 0
  %2070 = vmatpush2.bf16.msra.mxu0 %v802
  %2071 = vmatprep.subr.bf16.mxu0 0
  %2072 = vmatpush2.bf16.msra.mxu0 %v801
  %2073 = vmatprep.subr.bf16.mxu0 0
  %2074 = vmatpush2.bf16.msra.mxu0 %v800
  %2075 = vmatprep.subr.bf16.mxu0 0
  %2076 = vmatpush2.bf16.msra.mxu0 %v799
  %2077 = vmatprep.subr.bf16.mxu0 0
  %2078 = vmatpush2.bf16.msra.mxu0 %v798
  %2079 = vmatprep.subr.bf16.mxu0 0
  %2080 = vmatpush2.bf16.msra.mxu0 %v797
  %2081 = vmatprep.subr.bf16.mxu0 0
  %2082 = vmatpush2.bf16.msra.mxu0 %v796
  %2083 = vmatprep.mubr.bf16.mxu0 %v1996
  %2084 = vmatmul.mubr.bf16.gmra.mxu0 %v1995
  %v2085 = vpop.f32.mrf.mxu0
  %v2086 = vadd.f32 %v256, %v2085
  %v2087 = vpop.f32.mrf.mxu0
  %v2088 = vpop.f32.mrf.mxu0
  %v2089 = vadd.f32 %v256, %v2088
  %v2090 = vpop.f32.mrf.mxu0
  %2091 = vmatprep.mubr.bf16.mxu0 %v2009
  %2092 = vmatmul.mubr.bf16.gmra.mxu0 %v2008
  %v2093 = vpop.f32.mrf.mxu0
  %v2094 = vadd.f32 %v256, %v2093
  %v2095 = vpop.f32.mrf.mxu0
  %v2096 = vpop.f32.mrf.mxu0
  %v2097 = vadd.f32 %v256, %v2096
  %v2098 = vpop.f32.mrf.mxu0
  %2099 = vdwg.mxu0
  %2100 = vmatprep.subr.bf16.mxu0 0
  %2101 = vmatpush1.bf16.msra.mxu0 %v811
  %2102 = vmatprep.subr.bf16.mxu0 0
  %2103 = vmatpush1.bf16.msra.mxu0 %v810
  %2104 = vmatprep.subr.bf16.mxu0 0
  %2105 = vmatpush1.bf16.msra.mxu0 %v809
  %2106 = vmatprep.subr.bf16.mxu0 0
  %2107 = vmatpush1.bf16.msra.mxu0 %v808
  %2108 = vmatprep.subr.bf16.mxu0 0
  %2109 = vmatpush1.bf16.msra.mxu0 %v807
  %2110 = vmatprep.subr.bf16.mxu0 0
  %2111 = vmatpush1.bf16.msra.mxu0 %v806
  %2112 = vmatprep.subr.bf16.mxu0 0
  %2113 = vmatpush1.bf16.msra.mxu0 %v805
  %2114 = vmatprep.subr.bf16.mxu0 0
  %2115 = vmatpush1.bf16.msra.mxu0 %v804
  %2116 = vmatprep.subr.bf16.mxu0 0
  %2117 = vmatpush2.bf16.msra.mxu0 %v819
  %2118 = vmatprep.subr.bf16.mxu0 0
  %2119 = vmatpush2.bf16.msra.mxu0 %v818
  %2120 = vmatprep.subr.bf16.mxu0 0
  %2121 = vmatpush2.bf16.msra.mxu0 %v817
  %2122 = vmatprep.subr.bf16.mxu0 0
  %2123 = vmatpush2.bf16.msra.mxu0 %v816
  %2124 = vmatprep.subr.bf16.mxu0 0
  %2125 = vmatpush2.bf16.msra.mxu0 %v815
  %2126 = vmatprep.subr.bf16.mxu0 0
  %2127 = vmatpush2.bf16.msra.mxu0 %v814
  %2128 = vmatprep.subr.bf16.mxu0 0
  %2129 = vmatpush2.bf16.msra.mxu0 %v813
  %2130 = vmatprep.subr.bf16.mxu0 0
  %2131 = vmatpush2.bf16.msra.mxu0 %v812
  %2132 = vmatprep.mubr.bf16.mxu0 %v1998
  %2133 = vmatmul.mubr.bf16.gmra.mxu0 %v1997
  %v2134 = vpop.f32.mrf.mxu0
  %v2135 = vadd.f32 %v2086, %v2134
  %v2136 = vpop.f32.mrf.mxu0
  %v2137 = vpop.f32.mrf.mxu0
  %v2138 = vadd.f32 %v2089, %v2137
  %v2139 = vpop.f32.mrf.mxu0
  %2140 = vmatprep.mubr.bf16.mxu0 %v2011
  %2141 = vmatmul.mubr.bf16.gmra.mxu0 %v2010
  %v2142 = vpop.f32.mrf.mxu0
  %v2143 = vadd.f32 %v2094, %v2142
  %v2144 = vpop.f32.mrf.mxu0
  %v2145 = vpop.f32.mrf.mxu0
  %v2146 = vadd.f32 %v2097, %v2145
  %v2147 = vpop.f32.mrf.mxu0
  %2148 = vdwg.mxu0
  %2149 = vmatprep.subr.bf16.mxu0 0
  %2150 = vmatpush1.bf16.msra.mxu0 %v827
  %2151 = vmatprep.subr.bf16.mxu0 0
  %2152 = vmatpush1.bf16.msra.mxu0 %v826
  %2153 = vmatprep.subr.bf16.mxu0 0
  %2154 = vmatpush1.bf16.msra.mxu0 %v825
  %2155 = vmatprep.subr.bf16.mxu0 0
  %2156 = vmatpush1.bf16.msra.mxu0 %v824
  %2157 = vmatprep.subr.bf16.mxu0 0
  %2158 = vmatpush1.bf16.msra.mxu0 %v823
  %2159 = vmatprep.subr.bf16.mxu0 0
  %2160 = vmatpush1.bf16.msra.mxu0 %v822
  %2161 = vmatprep.subr.bf16.mxu0 0
  %2162 = vmatpush1.bf16.msra.mxu0 %v821
  %2163 = vmatprep.subr.bf16.mxu0 0
  %2164 = vmatpush1.bf16.msra.mxu0 %v820
  %2165 = vmatprep.subr.bf16.mxu0 0
  %2166 = vmatpush2.bf16.msra.mxu0 %v835
  %2167 = vmatprep.subr.bf16.mxu0 0
  %2168 = vmatpush2.bf16.msra.mxu0 %v834
  %2169 = vmatprep.subr.bf16.mxu0 0
  %2170 = vmatpush2.bf16.msra.mxu0 %v833
  %2171 = vmatprep.subr.bf16.mxu0 0
  %2172 = vmatpush2.bf16.msra.mxu0 %v832
  %2173 = vmatprep.subr.bf16.mxu0 0
  %2174 = vmatpush2.bf16.msra.mxu0 %v831
  %2175 = vmatprep.subr.bf16.mxu0 0
  %2176 = vmatpush2.bf16.msra.mxu0 %v830
  %2177 = vmatprep.subr.bf16.mxu0 0
  %2178 = vmatpush2.bf16.msra.mxu0 %v829
  %2179 = vmatprep.subr.bf16.mxu0 0
  %2180 = vmatpush2.bf16.msra.mxu0 %v828
  %2181 = vmatprep.mubr.bf16.mxu0 %v2000
  %2182 = vmatmul.mubr.bf16.gmra.mxu0 %v1999
  %v2183 = vpop.f32.mrf.mxu0
  %v2184 = vadd.f32 %v2135, %v2183
  %v2185 = vpop.f32.mrf.mxu0
  %v2186 = vpop.f32.mrf.mxu0
  %v2187 = vadd.f32 %v2138, %v2186
  %v2188 = vpop.f32.mrf.mxu0
  %2189 = vmatprep.mubr.bf16.mxu0 %v2013
  %2190 = vmatmul.mubr.bf16.gmra.mxu0 %v2012
  %v2191 = vpop.f32.mrf.mxu0
  %v2192 = vadd.f32 %v2143, %v2191
  %v2193 = vpop.f32.mrf.mxu0
  %v2194 = vpop.f32.mrf.mxu0
  %v2195 = vadd.f32 %v2146, %v2194
  %v2196 = vpop.f32.mrf.mxu0
  %2197 = vdwg.mxu0
  %2198 = vmatprep.subr.bf16.mxu0 0
  %2199 = vmatpush1.bf16.msra.mxu0 %v843
  %2200 = vmatprep.subr.bf16.mxu0 0
  %2201 = vmatpush1.bf16.msra.mxu0 %v842
  %2202 = vmatprep.subr.bf16.mxu0 0
  %2203 = vmatpush1.bf16.msra.mxu0 %v841
  %2204 = vmatprep.subr.bf16.mxu0 0
  %2205 = vmatpush1.bf16.msra.mxu0 %v840
  %2206 = vmatprep.subr.bf16.mxu0 0
  %2207 = vmatpush1.bf16.msra.mxu0 %v839
  %2208 = vmatprep.subr.bf16.mxu0 0
  %2209 = vmatpush1.bf16.msra.mxu0 %v838
  %2210 = vmatprep.subr.bf16.mxu0 0
  %2211 = vmatpush1.bf16.msra.mxu0 %v837
  %2212 = vmatprep.subr.bf16.mxu0 0
  %2213 = vmatpush1.bf16.msra.mxu0 %v836
  %2214 = vmatprep.subr.bf16.mxu0 0
  %2215 = vmatpush2.bf16.msra.mxu0 %v851
  %2216 = vmatprep.subr.bf16.mxu0 0
  %2217 = vmatpush2.bf16.msra.mxu0 %v850
  %2218 = vmatprep.subr.bf16.mxu0 0
  %2219 = vmatpush2.bf16.msra.mxu0 %v849
  %2220 = vmatprep.subr.bf16.mxu0 0
  %2221 = vmatpush2.bf16.msra.mxu0 %v848
  %2222 = vmatprep.subr.bf16.mxu0 0
  %2223 = vmatpush2.bf16.msra.mxu0 %v847
  %2224 = vmatprep.subr.bf16.mxu0 0
  %2225 = vmatpush2.bf16.msra.mxu0 %v846
  %2226 = vmatprep.subr.bf16.mxu0 0
  %2227 = vmatpush2.bf16.msra.mxu0 %v845
  %2228 = vmatprep.subr.bf16.mxu0 0
  %2229 = vmatpush2.bf16.msra.mxu0 %v844
  %2230 = vmatprep.mubr.bf16.mxu0 %v2002
  %2231 = vmatmul.mubr.bf16.gmra.mxu0 %v2001
  %v2232 = vpop.f32.mrf.mxu0
  %v2233 = vadd.f32 %v2184, %v2232
  %v2234 = vpop.f32.mrf.mxu0
  %v2235 = vpop.f32.mrf.mxu0
  %v2236 = vadd.f32 %v2187, %v2235
  %v2237 = vpop.f32.mrf.mxu0
  %2238 = vmatprep.mubr.bf16.mxu0 %v2015
  %2239 = vmatmul.mubr.bf16.gmra.mxu0 %v2014
  %v2240 = vpop.f32.mrf.mxu0
  %v2241 = vadd.f32 %v2192, %v2240
  %v2242 = vpop.f32.mrf.mxu0
  %v2243 = vpop.f32.mrf.mxu0
  %v2244 = vadd.f32 %v2195, %v2243
  %v2245 = vpop.f32.mrf.mxu0
  %2246 = vdwg.mxu0
  %2247 = vmatprep.subr.bf16.mxu0 0
  %2248 = vmatpush1.bf16.msra.mxu0 %v859
  %2249 = vmatprep.subr.bf16.mxu0 0
  %2250 = vmatpush1.bf16.msra.mxu0 %v858
  %2251 = vmatprep.subr.bf16.mxu0 0
  %2252 = vmatpush1.bf16.msra.mxu0 %v857
  %2253 = vmatprep.subr.bf16.mxu0 0
  %2254 = vmatpush1.bf16.msra.mxu0 %v856
  %2255 = vmatprep.subr.bf16.mxu0 0
  %2256 = vmatpush1.bf16.msra.mxu0 %v855
  %2257 = vmatprep.subr.bf16.mxu0 0
  %2258 = vmatpush1.bf16.msra.mxu0 %v854
  %2259 = vmatprep.subr.bf16.mxu0 0
  %2260 = vmatpush1.bf16.msra.mxu0 %v853
  %2261 = vmatprep.subr.bf16.mxu0 0
  %2262 = vmatpush1.bf16.msra.mxu0 %v852
  %2263 = vmatprep.subr.bf16.mxu0 0
  %2264 = vmatpush2.bf16.msra.mxu0 %v867
  %2265 = vmatprep.subr.bf16.mxu0 0
  %2266 = vmatpush2.bf16.msra.mxu0 %v866
  %2267 = vmatprep.subr.bf16.mxu0 0
  %2268 = vmatpush2.bf16.msra.mxu0 %v865
  %2269 = vmatprep.subr.bf16.mxu0 0
  %2270 = vmatpush2.bf16.msra.mxu0 %v864
  %2271 = vmatprep.subr.bf16.mxu0 0
  %2272 = vmatpush2.bf16.msra.mxu0 %v863
  %2273 = vmatprep.subr.bf16.mxu0 0
  %2274 = vmatpush2.bf16.msra.mxu0 %v862
  %2275 = vmatprep.subr.bf16.mxu0 0
  %2276 = vmatpush2.bf16.msra.mxu0 %v861
  %2277 = vmatprep.subr.bf16.mxu0 0
  %2278 = vmatpush2.bf16.msra.mxu0 %v860
  %2279 = vmatprep.mubr.bf16.mxu0 %v2004
  %2280 = vmatmul.mubr.bf16.gmra.mxu0 %v2003
  %v2281 = vpop.f32.mrf.mxu0
  %v2282 = vadd.f32 %v2233, %v2281
  %v2283 = vpop.f32.mrf.mxu0
  %v2284 = vpop.f32.mrf.mxu0
  %v2285 = vadd.f32 %v2236, %v2284
  %v2286 = vpop.f32.mrf.mxu0
  %2287 = vmatprep.mubr.bf16.mxu0 %v2017
  %2288 = vmatmul.mubr.bf16.gmra.mxu0 %v2016
  %v2289 = vpop.f32.mrf.mxu0
  %v2290 = vadd.f32 %v2241, %v2289
  %v2291 = vpop.f32.mrf.mxu0
  %v2292 = vpop.f32.mrf.mxu0
  %v2293 = vadd.f32 %v2244, %v2292
  %v2294 = vpop.f32.mrf.mxu0
  %2295 = vdwg.mxu0
  %2296 = vmatprep.subr.bf16.mxu0 0
  %2297 = vmatpush1.bf16.msra.mxu0 %v875
  %2298 = vmatprep.subr.bf16.mxu0 0
  %2299 = vmatpush1.bf16.msra.mxu0 %v874
  %2300 = vmatprep.subr.bf16.mxu0 0
  %2301 = vmatpush1.bf16.msra.mxu0 %v873
  %2302 = vmatprep.subr.bf16.mxu0 0
  %2303 = vmatpush1.bf16.msra.mxu0 %v872
  %2304 = vmatprep.subr.bf16.mxu0 0
  %2305 = vmatpush1.bf16.msra.mxu0 %v871
  %2306 = vmatprep.subr.bf16.mxu0 0
  %2307 = vmatpush1.bf16.msra.mxu0 %v870
  %2308 = vmatprep.subr.bf16.mxu0 0
  %2309 = vmatpush1.bf16.msra.mxu0 %v869
  %2310 = vmatprep.subr.bf16.mxu0 0
  %2311 = vmatpush1.bf16.msra.mxu0 %v868
  %2312 = vmatprep.subr.bf16.mxu0 0
  %2313 = vmatpush2.bf16.msra.mxu0 %v883
  %2314 = vmatprep.subr.bf16.mxu0 0
  %2315 = vmatpush2.bf16.msra.mxu0 %v882
  %2316 = vmatprep.subr.bf16.mxu0 0
  %2317 = vmatpush2.bf16.msra.mxu0 %v881
  %2318 = vmatprep.subr.bf16.mxu0 0
  %2319 = vmatpush2.bf16.msra.mxu0 %v880
  %2320 = vmatprep.subr.bf16.mxu0 0
  %2321 = vmatpush2.bf16.msra.mxu0 %v879
  %2322 = vmatprep.subr.bf16.mxu0 0
  %2323 = vmatpush2.bf16.msra.mxu0 %v878
  %2324 = vmatprep.subr.bf16.mxu0 0
  %2325 = vmatpush2.bf16.msra.mxu0 %v877
  %2326 = vmatprep.subr.bf16.mxu0 0
  %2327 = vmatpush2.bf16.msra.mxu0 %v876
  %2328 = vmatprep.mubr.bf16.mxu0 %v2006
  %2329 = vmatmul.mubr.bf16.gmra.mxu0 %v2005
  %v2330 = vpop.f32.mrf.mxu0
  %v2331 = vadd.f32 %v2282, %v2330
  %v2332 = vpop.f32.mrf.mxu0
  %v2333 = vpop.f32.mrf.mxu0
  %v2334 = vadd.f32 %v2285, %v2333
  %v2335 = vpop.f32.mrf.mxu0
  %2336 = vmatprep.mubr.bf16.mxu0 %v2019
  %2337 = vmatmul.mubr.bf16.gmra.mxu0 %v2018
  %v2338 = vpop.f32.mrf.mxu0
  %v2339 = vadd.f32 %v2290, %v2338
  %v2340 = vpop.f32.mrf.mxu0
  %v2341 = vpop.f32.mrf.mxu0
  %v2342 = vadd.f32 %v2293, %v2341
  %v2343 = vpop.f32.mrf.mxu0
  %2344 = vdwg.mxu0
  %2345 = vmatprep.subr.bf16.mxu0 0
  %2346 = vmatpush1.bf16.msra.mxu0 0
  %2347 = vmatprep.subr.bf16.mxu0 0
  %2348 = vmatpush1.bf16.msra.mxu0 0
  %2349 = vmatprep.subr.bf16.mxu0 0
  %2350 = vmatpush1.bf16.msra.mxu0 0
  %2351 = vmatprep.subr.bf16.mxu0 0
  %2352 = vmatpush1.bf16.msra.mxu0 0
  %2353 = vmatprep.subr.bf16.mxu0 0
  %2354 = vmatpush1.bf16.msra.mxu0 %v887
  %2355 = vmatprep.subr.bf16.mxu0 0
  %2356 = vmatpush1.bf16.msra.mxu0 %v886
  %2357 = vmatprep.subr.bf16.mxu0 0
  %2358 = vmatpush1.bf16.msra.mxu0 %v885
  %2359 = vmatprep.subr.bf16.mxu0 0
  %2360 = vmatpush1.bf16.msra.mxu0 %v884
  %2361 = vmatprep.subr.bf16.mxu0 0
  %2362 = vmatpush2.bf16.msra.mxu0 0
  %2363 = vmatprep.subr.bf16.mxu0 0
  %2364 = vmatpush2.bf16.msra.mxu0 0
  %2365 = vmatprep.subr.bf16.mxu0 0
  %2366 = vmatpush2.bf16.msra.mxu0 0
  %2367 = vmatprep.subr.bf16.mxu0 0
  %2368 = vmatpush2.bf16.msra.mxu0 0
  %2369 = vmatprep.subr.bf16.mxu0 0
  %2370 = vmatpush2.bf16.msra.mxu0 0
  %2371 = vmatprep.subr.bf16.mxu0 0
  %2372 = vmatpush2.bf16.msra.mxu0 0
  %2373 = vmatprep.subr.bf16.mxu0 0
  %2374 = vmatpush2.bf16.msra.mxu0 0
  %2375 = vmatprep.subr.bf16.mxu0 0
  %2376 = vmatpush2.bf16.msra.mxu0 0
  %2377 = vmatprep.mubr.bf16.mxu0 0
  %2378 = vmatmul.mubr.bf16.gmra.mxu0 %v2046
  %v2379 = vpop.f32.mrf.mxu0
  %v2380 = vadd.f32 %v2331, %v2379
  %v2381 = vpop.f32.mrf.mxu0
  %v2382 = vpop.f32.mrf.mxu0
  %v2383 = vadd.f32 %v2334, %v2382
  %v2384 = vpop.f32.mrf.mxu0
  %2385 = vmatprep.mubr.bf16.mxu0 0
  %2386 = vmatmul.mubr.bf16.gmra.mxu0 %v2049
  %v2387 = vpop.f32.mrf.mxu0
  %v2388 = vadd.f32 %v2339, %v2387
  %v2389 = vpop.f32.mrf.mxu0
  %v2390 = vpop.f32.mrf.mxu0
  %v2391 = vadd.f32 %v2342, %v2390
  %v2392 = vpop.f32.mrf.mxu0
  %2393 = vdwg.mxu0
  %v2394 = vmax.f32 %v2380, 0.0
  %v2395 = vmax.f32 %v2383, 0.0
  %v2396 = vmax.f32 %v2388, 0.0
  %v2397 = vmax.f32 %v2391, 0.0
  %v2398 = vmul.f32 %v2394, %v1346
  %v2399 = vmul.f32 %v2395, %v1346
  %v2400 = vmul.f32 %v2396, %v1346
  %v2401 = vmul.f32 %v2397, %v1346
  %v2402 = vadd.f32 %v2398, %v1356
  %v2403 = vadd.f32 %v2399, %v1356
  %v2404 = vadd.f32 %v2400, %v1356
  %v2405 = vadd.f32 %v2401, %v1356
  %v2406 = vmax.f32 %v1882, %v2402
  %v2407 = vmax.f32 %v1883, %v2403
  %v2408 = vmax.f32 %v1884, %v2404
  %v2409 = vmax.f32 %v1885, %v2405
  %s2410 = scalar_lea.vmem %s0, 624
  %v2411 = vld [vmem:[%s2410] sm:$0xff]
  %v2412 = vld [vmem:[%s2410 + $0x8] sm:$0xff]
  %v2413 = vld [vmem:[%s2410 + $0x10] sm:$0xff]
  %v2414 = vld [vmem:[%s2410 + $0x18] sm:$0xff]
  %v2415 = vld [vmem:[%s2410 + $0x20] sm:$0xff]
  %v2416 = vld [vmem:[%s2410 + $0x28] sm:$0xff]
  %v2417 = vld [vmem:[%s2410 + $0x30] sm:$0xf]
  %v2418 = vld [vmem:[%s2410 + $0x34] sm:$0xff]
  %v2419 = vld [vmem:[%s2410 + $0x3c] sm:$0xff]
  %v2420 = vld [vmem:[%s2410 + $0x44] sm:$0xff]
  %v2421 = vld [vmem:[%s2410 + $0x4c] sm:$0xff]
  %v2422 = vld [vmem:[%s2410 + $0x54] sm:$0xff]
  %v2423 = vld [vmem:[%s2410 + $0x5c] sm:$0xff]
  %v2424 = vld [vmem:[%s2410 + $0x64] sm:$0xf]
  %v2425 = vld [vmem:[%s2410 + $0x68] sm:$0xff]
  %v2426 = vld [vmem:[%s2410 + $0x70] sm:$0xff]
  %v2427 = vld [vmem:[%s2410 + $0x78] sm:$0xff]
  %v2428 = vld [vmem:[%s2410 + $0x80] sm:$0xff]
  %v2429 = vld [vmem:[%s2410 + $0x88] sm:$0xff]
  %v2430 = vld [vmem:[%s2410 + $0x90] sm:$0xff]
  %v2431 = vld [vmem:[%s2410 + $0x98] sm:$0xf]
  %v2432 = vld [vmem:[%s2410 + $0x9c] sm:$0xff]
  %v2433 = vld [vmem:[%s2410 + $0xa4] sm:$0xff]
  %v2434 = vld [vmem:[%s2410 + $0xac] sm:$0xff]
  %v2435 = vld [vmem:[%s2410 + $0xb4] sm:$0xff]
  %v2436 = vld [vmem:[%s2410 + $0xbc] sm:$0xff]
  %v2437 = vld [vmem:[%s2410 + $0xc4] sm:$0xff]
  %v2438 = vld [vmem:[%s2410 + $0xcc] sm:$0xf]
  %v2467 = vunpack.c.l.b16 %v2411
  %v2468 = vunpack.c.h.b16 %v2411
  %v2469 = vunpack.c.l.b16 %v2412
  %v2470 = vunpack.c.h.b16 %v2412
  %v2471 = vunpack.c.l.b16 %v2413
  %v2472 = vunpack.c.h.b16 %v2413
  %v2473 = vunpack.c.l.b16 %v2414
  %v2474 = vunpack.c.h.b16 %v2414
  %v2475 = vunpack.c.l.b16 %v2415
  %v2476 = vunpack.c.h.b16 %v2415
  %v2477 = vunpack.c.l.b16 %v2416
  %v2478 = vunpack.c.h.b16 %v2416
  %v2479 = vunpack.c.l.b16 %v2417
  %v2480 = vunpack.c.l.b16 %v2418
  %v2481 = vunpack.c.h.b16 %v2418
  %v2482 = vunpack.c.l.b16 %v2419
  %v2483 = vunpack.c.h.b16 %v2419
  %v2484 = vunpack.c.l.b16 %v2420
  %v2485 = vunpack.c.h.b16 %v2420
  %v2486 = vunpack.c.l.b16 %v2421
  %v2487 = vunpack.c.h.b16 %v2421
  %v2488 = vunpack.c.l.b16 %v2422
  %v2489 = vunpack.c.h.b16 %v2422
  %v2490 = vunpack.c.l.b16 %v2423
  %v2491 = vunpack.c.h.b16 %v2423
  %v2492 = vunpack.c.l.b16 %v2424
  %v2493 = vunpack.c.l.b16 %v2425
  %v2494 = vunpack.c.h.b16 %v2425
  %v2495 = vunpack.c.l.b16 %v2426
  %v2496 = vunpack.c.h.b16 %v2426
  %v2497 = vunpack.c.l.b16 %v2427
  %v2498 = vunpack.c.h.b16 %v2427
  %v2499 = vunpack.c.l.b16 %v2428
  %v2500 = vunpack.c.h.b16 %v2428
  %v2501 = vunpack.c.l.b16 %v2429
  %v2502 = vunpack.c.h.b16 %v2429
  %v2503 = vunpack.c.l.b16 %v2430
  %v2504 = vunpack.c.h.b16 %v2430
  %v2505 = vunpack.c.l.b16 %v2431
  %v2506 = vunpack.c.l.b16 %v2432
  %v2507 = vunpack.c.h.b16 %v2432
  %v2508 = vunpack.c.l.b16 %v2433
  %v2509 = vunpack.c.h.b16 %v2433
  %v2510 = vunpack.c.l.b16 %v2434
  %v2511 = vunpack.c.h.b16 %v2434
  %v2512 = vunpack.c.l.b16 %v2435
  %v2513 = vunpack.c.h.b16 %v2435
  %v2514 = vunpack.c.l.b16 %v2436
  %v2515 = vunpack.c.h.b16 %v2436
  %v2516 = vunpack.c.l.b16 %v2437
  %v2517 = vunpack.c.h.b16 %v2437
  %v2518 = vunpack.c.l.b16 %v2438
  %v2519 = vpack.c.b16 %v2480, %v2467
  %v2520 = vpack.c.b16 %v2481, %v2468
  %v2521 = vpack.c.b16 %v2482, %v2469
  %v2522 = vpack.c.b16 %v2483, %v2470
  %v2523 = vpack.c.b16 %v2484, %v2471
  %v2524 = vpack.c.b16 %v2485, %v2472
  %v2525 = vpack.c.b16 %v2486, %v2473
  %v2526 = vpack.c.b16 %v2487, %v2474
  %v2527 = vpack.c.b16 %v2488, %v2475
  %v2528 = vpack.c.b16 %v2489, %v2476
  %v2529 = vpack.c.b16 %v2490, %v2477
  %v2530 = vpack.c.b16 %v2491, %v2478
  %v2531 = vpack.c.b16 %v2492, %v2479
  %v2532 = vpack.c.b16 %v2506, %v2493
  %v2533 = vpack.c.b16 %v2507, %v2494
  %v2534 = vpack.c.b16 %v2508, %v2495
  %v2535 = vpack.c.b16 %v2509, %v2496
  %v2536 = vpack.c.b16 %v2510, %v2497
  %v2537 = vpack.c.b16 %v2511, %v2498
  %v2538 = vpack.c.b16 %v2512, %v2499
  %v2539 = vpack.c.b16 %v2513, %v2500
  %v2540 = vpack.c.b16 %v2514, %v2501
  %v2541 = vpack.c.b16 %v2515, %v2502
  %v2542 = vpack.c.b16 %v2516, %v2503
  %v2543 = vpack.c.b16 %v2517, %v2504
  %v2544 = vpack.c.b16 %v2518, %v2505
  %v2570 = vsel %vm988, %v2531, 0
  %v2573 = vsel %vm988, %v2544, 0
  %2575 = vmatprep.subr.bf16.mxu0 0
  %2576 = vmatpush1.bf16.msra.mxu0 %v795
  %2577 = vmatprep.subr.bf16.mxu0 0
  %2578 = vmatpush1.bf16.msra.mxu0 %v794
  %2579 = vmatprep.subr.bf16.mxu0 0
  %2580 = vmatpush1.bf16.msra.mxu0 %v793
  %2581 = vmatprep.subr.bf16.mxu0 0
  %2582 = vmatpush1.bf16.msra.mxu0 %v792
  %2583 = vmatprep.subr.bf16.mxu0 0
  %2584 = vmatpush1.bf16.msra.mxu0 %v791
  %2585 = vmatprep.subr.bf16.mxu0 0
  %2586 = vmatpush1.bf16.msra.mxu0 %v790
  %2587 = vmatprep.subr.bf16.mxu0 0
  %2588 = vmatpush1.bf16.msra.mxu0 %v789
  %2589 = vmatprep.subr.bf16.mxu0 0
  %2590 = vmatpush1.bf16.msra.mxu0 %v788
  %2591 = vmatprep.subr.bf16.mxu0 0
  %2592 = vmatpush2.bf16.msra.mxu0 %v803
  %2593 = vmatprep.subr.bf16.mxu0 0
  %2594 = vmatpush2.bf16.msra.mxu0 %v802
  %2595 = vmatprep.subr.bf16.mxu0 0
  %2596 = vmatpush2.bf16.msra.mxu0 %v801
  %2597 = vmatprep.subr.bf16.mxu0 0
  %2598 = vmatpush2.bf16.msra.mxu0 %v800
  %2599 = vmatprep.subr.bf16.mxu0 0
  %2600 = vmatpush2.bf16.msra.mxu0 %v799
  %2601 = vmatprep.subr.bf16.mxu0 0
  %2602 = vmatpush2.bf16.msra.mxu0 %v798
  %2603 = vmatprep.subr.bf16.mxu0 0
  %2604 = vmatpush2.bf16.msra.mxu0 %v797
  %2605 = vmatprep.subr.bf16.mxu0 0
  %2606 = vmatpush2.bf16.msra.mxu0 %v796
  %2607 = vmatprep.mubr.bf16.mxu0 %v2520
  %2608 = vmatmul.mubr.bf16.gmra.mxu0 %v2519
  %v2609 = vpop.f32.mrf.mxu0
  %v2610 = vadd.f32 %v256, %v2609
  %v2611 = vpop.f32.mrf.mxu0
  %v2612 = vpop.f32.mrf.mxu0
  %v2613 = vadd.f32 %v256, %v2612
  %v2614 = vpop.f32.mrf.mxu0
  %2615 = vmatprep.mubr.bf16.mxu0 %v2533
  %2616 = vmatmul.mubr.bf16.gmra.mxu0 %v2532
  %v2617 = vpop.f32.mrf.mxu0
  %v2618 = vadd.f32 %v256, %v2617
  %v2619 = vpop.f32.mrf.mxu0
  %v2620 = vpop.f32.mrf.mxu0
  %v2621 = vadd.f32 %v256, %v2620
  %v2622 = vpop.f32.mrf.mxu0
  %2623 = vdwg.mxu0
  %2624 = vmatprep.subr.bf16.mxu0 0
  %2625 = vmatpush1.bf16.msra.mxu0 %v811
  %2626 = vmatprep.subr.bf16.mxu0 0
  %2627 = vmatpush1.bf16.msra.mxu0 %v810
  %2628 = vmatprep.subr.bf16.mxu0 0
  %2629 = vmatpush1.bf16.msra.mxu0 %v809
  %2630 = vmatprep.subr.bf16.mxu0 0
  %2631 = vmatpush1.bf16.msra.mxu0 %v808
  %2632 = vmatprep.subr.bf16.mxu0 0
  %2633 = vmatpush1.bf16.msra.mxu0 %v807
  %2634 = vmatprep.subr.bf16.mxu0 0
  %2635 = vmatpush1.bf16.msra.mxu0 %v806
  %2636 = vmatprep.subr.bf16.mxu0 0
  %2637 = vmatpush1.bf16.msra.mxu0 %v805
  %2638 = vmatprep.subr.bf16.mxu0 0
  %2639 = vmatpush1.bf16.msra.mxu0 %v804
  %2640 = vmatprep.subr.bf16.mxu0 0
  %2641 = vmatpush2.bf16.msra.mxu0 %v819
  %2642 = vmatprep.subr.bf16.mxu0 0
  %2643 = vmatpush2.bf16.msra.mxu0 %v818
  %2644 = vmatprep.subr.bf16.mxu0 0
  %2645 = vmatpush2.bf16.msra.mxu0 %v817
  %2646 = vmatprep.subr.bf16.mxu0 0
  %2647 = vmatpush2.bf16.msra.mxu0 %v816
  %2648 = vmatprep.subr.bf16.mxu0 0
  %2649 = vmatpush2.bf16.msra.mxu0 %v815
  %2650 = vmatprep.subr.bf16.mxu0 0
  %2651 = vmatpush2.bf16.msra.mxu0 %v814
  %2652 = vmatprep.subr.bf16.mxu0 0
  %2653 = vmatpush2.bf16.msra.mxu0 %v813
  %2654 = vmatprep.subr.bf16.mxu0 0
  %2655 = vmatpush2.bf16.msra.mxu0 %v812
  %2656 = vmatprep.mubr.bf16.mxu0 %v2522
  %2657 = vmatmul.mubr.bf16.gmra.mxu0 %v2521
  %v2658 = vpop.f32.mrf.mxu0
  %v2659 = vadd.f32 %v2610, %v2658
  %v2660 = vpop.f32.mrf.mxu0
  %v2661 = vpop.f32.mrf.mxu0
  %v2662 = vadd.f32 %v2613, %v2661
  %v2663 = vpop.f32.mrf.mxu0
  %2664 = vmatprep.mubr.bf16.mxu0 %v2535
  %2665 = vmatmul.mubr.bf16.gmra.mxu0 %v2534
  %v2666 = vpop.f32.mrf.mxu0
  %v2667 = vadd.f32 %v2618, %v2666
  %v2668 = vpop.f32.mrf.mxu0
  %v2669 = vpop.f32.mrf.mxu0
  %v2670 = vadd.f32 %v2621, %v2669
  %v2671 = vpop.f32.mrf.mxu0
  %2672 = vdwg.mxu0
  %2673 = vmatprep.subr.bf16.mxu0 0
  %2674 = vmatpush1.bf16.msra.mxu0 %v827
  %2675 = vmatprep.subr.bf16.mxu0 0
  %2676 = vmatpush1.bf16.msra.mxu0 %v826
  %2677 = vmatprep.subr.bf16.mxu0 0
  %2678 = vmatpush1.bf16.msra.mxu0 %v825
  %2679 = vmatprep.subr.bf16.mxu0 0
  %2680 = vmatpush1.bf16.msra.mxu0 %v824
  %2681 = vmatprep.subr.bf16.mxu0 0
  %2682 = vmatpush1.bf16.msra.mxu0 %v823
  %2683 = vmatprep.subr.bf16.mxu0 0
  %2684 = vmatpush1.bf16.msra.mxu0 %v822
  %2685 = vmatprep.subr.bf16.mxu0 0
  %2686 = vmatpush1.bf16.msra.mxu0 %v821
  %2687 = vmatprep.subr.bf16.mxu0 0
  %2688 = vmatpush1.bf16.msra.mxu0 %v820
  %2689 = vmatprep.subr.bf16.mxu0 0
  %2690 = vmatpush2.bf16.msra.mxu0 %v835
  %2691 = vmatprep.subr.bf16.mxu0 0
  %2692 = vmatpush2.bf16.msra.mxu0 %v834
  %2693 = vmatprep.subr.bf16.mxu0 0
  %2694 = vmatpush2.bf16.msra.mxu0 %v833
  %2695 = vmatprep.subr.bf16.mxu0 0
  %2696 = vmatpush2.bf16.msra.mxu0 %v832
  %2697 = vmatprep.subr.bf16.mxu0 0
  %2698 = vmatpush2.bf16.msra.mxu0 %v831
  %2699 = vmatprep.subr.bf16.mxu0 0
  %2700 = vmatpush2.bf16.msra.mxu0 %v830
  %2701 = vmatprep.subr.bf16.mxu0 0
  %2702 = vmatpush2.bf16.msra.mxu0 %v829
  %2703 = vmatprep.subr.bf16.mxu0 0
  %2704 = vmatpush2.bf16.msra.mxu0 %v828
  %2705 = vmatprep.mubr.bf16.mxu0 %v2524
  %2706 = vmatmul.mubr.bf16.gmra.mxu0 %v2523
  %v2707 = vpop.f32.mrf.mxu0
  %v2708 = vadd.f32 %v2659, %v2707
  %v2709 = vpop.f32.mrf.mxu0
  %v2710 = vpop.f32.mrf.mxu0
  %v2711 = vadd.f32 %v2662, %v2710
  %v2712 = vpop.f32.mrf.mxu0
  %2713 = vmatprep.mubr.bf16.mxu0 %v2537
  %2714 = vmatmul.mubr.bf16.gmra.mxu0 %v2536
  %v2715 = vpop.f32.mrf.mxu0
  %v2716 = vadd.f32 %v2667, %v2715
  %v2717 = vpop.f32.mrf.mxu0
  %v2718 = vpop.f32.mrf.mxu0
  %v2719 = vadd.f32 %v2670, %v2718
  %v2720 = vpop.f32.mrf.mxu0
  %2721 = vdwg.mxu0
  %2722 = vmatprep.subr.bf16.mxu0 0
  %2723 = vmatpush1.bf16.msra.mxu0 %v843
  %2724 = vmatprep.subr.bf16.mxu0 0
  %2725 = vmatpush1.bf16.msra.mxu0 %v842
  %2726 = vmatprep.subr.bf16.mxu0 0
  %2727 = vmatpush1.bf16.msra.mxu0 %v841
  %2728 = vmatprep.subr.bf16.mxu0 0
  %2729 = vmatpush1.bf16.msra.mxu0 %v840
  %2730 = vmatprep.subr.bf16.mxu0 0
  %2731 = vmatpush1.bf16.msra.mxu0 %v839
  %2732 = vmatprep.subr.bf16.mxu0 0
  %2733 = vmatpush1.bf16.msra.mxu0 %v838
  %2734 = vmatprep.subr.bf16.mxu0 0
  %2735 = vmatpush1.bf16.msra.mxu0 %v837
  %2736 = vmatprep.subr.bf16.mxu0 0
  %2737 = vmatpush1.bf16.msra.mxu0 %v836
  %2738 = vmatprep.subr.bf16.mxu0 0
  %2739 = vmatpush2.bf16.msra.mxu0 %v851
  %2740 = vmatprep.subr.bf16.mxu0 0
  %2741 = vmatpush2.bf16.msra.mxu0 %v850
  %2742 = vmatprep.subr.bf16.mxu0 0
  %2743 = vmatpush2.bf16.msra.mxu0 %v849
  %2744 = vmatprep.subr.bf16.mxu0 0
  %2745 = vmatpush2.bf16.msra.mxu0 %v848
  %2746 = vmatprep.subr.bf16.mxu0 0
  %2747 = vmatpush2.bf16.msra.mxu0 %v847
  %2748 = vmatprep.subr.bf16.mxu0 0
  %2749 = vmatpush2.bf16.msra.mxu0 %v846
  %2750 = vmatprep.subr.bf16.mxu0 0
  %2751 = vmatpush2.bf16.msra.mxu0 %v845
  %2752 = vmatprep.subr.bf16.mxu0 0
  %2753 = vmatpush2.bf16.msra.mxu0 %v844
  %2754 = vmatprep.mubr.bf16.mxu0 %v2526
  %2755 = vmatmul.mubr.bf16.gmra.mxu0 %v2525
  %v2756 = vpop.f32.mrf.mxu0
  %v2757 = vadd.f32 %v2708, %v2756
  %v2758 = vpop.f32.mrf.mxu0
  %v2759 = vpop.f32.mrf.mxu0
  %v2760 = vadd.f32 %v2711, %v2759
  %v2761 = vpop.f32.mrf.mxu0
  %2762 = vmatprep.mubr.bf16.mxu0 %v2539
  %2763 = vmatmul.mubr.bf16.gmra.mxu0 %v2538
  %v2764 = vpop.f32.mrf.mxu0
  %v2765 = vadd.f32 %v2716, %v2764
  %v2766 = vpop.f32.mrf.mxu0
  %v2767 = vpop.f32.mrf.mxu0
  %v2768 = vadd.f32 %v2719, %v2767
  %v2769 = vpop.f32.mrf.mxu0
  %2770 = vdwg.mxu0
  %2771 = vmatprep.subr.bf16.mxu0 0
  %2772 = vmatpush1.bf16.msra.mxu0 %v859
  %2773 = vmatprep.subr.bf16.mxu0 0
  %2774 = vmatpush1.bf16.msra.mxu0 %v858
  %2775 = vmatprep.subr.bf16.mxu0 0
  %2776 = vmatpush1.bf16.msra.mxu0 %v857
  %2777 = vmatprep.subr.bf16.mxu0 0
  %2778 = vmatpush1.bf16.msra.mxu0 %v856
  %2779 = vmatprep.subr.bf16.mxu0 0
  %2780 = vmatpush1.bf16.msra.mxu0 %v855
  %2781 = vmatprep.subr.bf16.mxu0 0
  %2782 = vmatpush1.bf16.msra.mxu0 %v854
  %2783 = vmatprep.subr.bf16.mxu0 0
  %2784 = vmatpush1.bf16.msra.mxu0 %v853
  %2785 = vmatprep.subr.bf16.mxu0 0
  %2786 = vmatpush1.bf16.msra.mxu0 %v852
  %2787 = vmatprep.subr.bf16.mxu0 0
  %2788 = vmatpush2.bf16.msra.mxu0 %v867
  %2789 = vmatprep.subr.bf16.mxu0 0
  %2790 = vmatpush2.bf16.msra.mxu0 %v866
  %2791 = vmatprep.subr.bf16.mxu0 0
  %2792 = vmatpush2.bf16.msra.mxu0 %v865
  %2793 = vmatprep.subr.bf16.mxu0 0
  %2794 = vmatpush2.bf16.msra.mxu0 %v864
  %2795 = vmatprep.subr.bf16.mxu0 0
  %2796 = vmatpush2.bf16.msra.mxu0 %v863
  %2797 = vmatprep.subr.bf16.mxu0 0
  %2798 = vmatpush2.bf16.msra.mxu0 %v862
  %2799 = vmatprep.subr.bf16.mxu0 0
  %2800 = vmatpush2.bf16.msra.mxu0 %v861
  %2801 = vmatprep.subr.bf16.mxu0 0
  %2802 = vmatpush2.bf16.msra.mxu0 %v860
  %2803 = vmatprep.mubr.bf16.mxu0 %v2528
  %2804 = vmatmul.mubr.bf16.gmra.mxu0 %v2527
  %v2805 = vpop.f32.mrf.mxu0
  %v2806 = vadd.f32 %v2757, %v2805
  %v2807 = vpop.f32.mrf.mxu0
  %v2808 = vpop.f32.mrf.mxu0
  %v2809 = vadd.f32 %v2760, %v2808
  %v2810 = vpop.f32.mrf.mxu0
  %2811 = vmatprep.mubr.bf16.mxu0 %v2541
  %2812 = vmatmul.mubr.bf16.gmra.mxu0 %v2540
  %v2813 = vpop.f32.mrf.mxu0
  %v2814 = vadd.f32 %v2765, %v2813
  %v2815 = vpop.f32.mrf.mxu0
  %v2816 = vpop.f32.mrf.mxu0
  %v2817 = vadd.f32 %v2768, %v2816
  %v2818 = vpop.f32.mrf.mxu0
  %2819 = vdwg.mxu0
  %2820 = vmatprep.subr.bf16.mxu0 0
  %2821 = vmatpush1.bf16.msra.mxu0 %v875
  %2822 = vmatprep.subr.bf16.mxu0 0
  %2823 = vmatpush1.bf16.msra.mxu0 %v874
  %2824 = vmatprep.subr.bf16.mxu0 0
  %2825 = vmatpush1.bf16.msra.mxu0 %v873
  %2826 = vmatprep.subr.bf16.mxu0 0
  %2827 = vmatpush1.bf16.msra.mxu0 %v872
  %2828 = vmatprep.subr.bf16.mxu0 0
  %2829 = vmatpush1.bf16.msra.mxu0 %v871
  %2830 = vmatprep.subr.bf16.mxu0 0
  %2831 = vmatpush1.bf16.msra.mxu0 %v870
  %2832 = vmatprep.subr.bf16.mxu0 0
  %2833 = vmatpush1.bf16.msra.mxu0 %v869
  %2834 = vmatprep.subr.bf16.mxu0 0
  %2835 = vmatpush1.bf16.msra.mxu0 %v868
  %2836 = vmatprep.subr.bf16.mxu0 0
  %2837 = vmatpush2.bf16.msra.mxu0 %v883
  %2838 = vmatprep.subr.bf16.mxu0 0
  %2839 = vmatpush2.bf16.msra.mxu0 %v882
  %2840 = vmatprep.subr.bf16.mxu0 0
  %2841 = vmatpush2.bf16.msra.mxu0 %v881
  %2842 = vmatprep.subr.bf16.mxu0 0
  %2843 = vmatpush2.bf16.msra.mxu0 %v880
  %2844 = vmatprep.subr.bf16.mxu0 0
  %2845 = vmatpush2.bf16.msra.mxu0 %v879
  %2846 = vmatprep.subr.bf16.mxu0 0
  %2847 = vmatpush2.bf16.msra.mxu0 %v878
  %2848 = vmatprep.subr.bf16.mxu0 0
  %2849 = vmatpush2.bf16.msra.mxu0 %v877
  %2850 = vmatprep.subr.bf16.mxu0 0
  %2851 = vmatpush2.bf16.msra.mxu0 %v876
  %2852 = vmatprep.mubr.bf16.mxu0 %v2530
  %2853 = vmatmul.mubr.bf16.gmra.mxu0 %v2529
  %v2854 = vpop.f32.mrf.mxu0
  %v2855 = vadd.f32 %v2806, %v2854
  %v2856 = vpop.f32.mrf.mxu0
  %v2857 = vpop.f32.mrf.mxu0
  %v2858 = vadd.f32 %v2809, %v2857
  %v2859 = vpop.f32.mrf.mxu0
  %2860 = vmatprep.mubr.bf16.mxu0 %v2543
  %2861 = vmatmul.mubr.bf16.gmra.mxu0 %v2542
  %v2862 = vpop.f32.mrf.mxu0
  %v2863 = vadd.f32 %v2814, %v2862
  %v2864 = vpop.f32.mrf.mxu0
  %v2865 = vpop.f32.mrf.mxu0
  %v2866 = vadd.f32 %v2817, %v2865
  %v2867 = vpop.f32.mrf.mxu0
  %2868 = vdwg.mxu0
  %2869 = vmatprep.subr.bf16.mxu0 0
  %2870 = vmatpush1.bf16.msra.mxu0 0
  %2871 = vmatprep.subr.bf16.mxu0 0
  %2872 = vmatpush1.bf16.msra.mxu0 0
  %2873 = vmatprep.subr.bf16.mxu0 0
  %2874 = vmatpush1.bf16.msra.mxu0 0
  %2875 = vmatprep.subr.bf16.mxu0 0
  %2876 = vmatpush1.bf16.msra.mxu0 0
  %2877 = vmatprep.subr.bf16.mxu0 0
  %2878 = vmatpush1.bf16.msra.mxu0 %v887
  %2879 = vmatprep.subr.bf16.mxu0 0
  %2880 = vmatpush1.bf16.msra.mxu0 %v886
  %2881 = vmatprep.subr.bf16.mxu0 0
  %2882 = vmatpush1.bf16.msra.mxu0 %v885
  %2883 = vmatprep.subr.bf16.mxu0 0
  %2884 = vmatpush1.bf16.msra.mxu0 %v884
  %2885 = vmatprep.subr.bf16.mxu0 0
  %2886 = vmatpush2.bf16.msra.mxu0 0
  %2887 = vmatprep.subr.bf16.mxu0 0
  %2888 = vmatpush2.bf16.msra.mxu0 0
  %2889 = vmatprep.subr.bf16.mxu0 0
  %2890 = vmatpush2.bf16.msra.mxu0 0
  %2891 = vmatprep.subr.bf16.mxu0 0
  %2892 = vmatpush2.bf16.msra.mxu0 0
  %2893 = vmatprep.subr.bf16.mxu0 0
  %2894 = vmatpush2.bf16.msra.mxu0 0
  %2895 = vmatprep.subr.bf16.mxu0 0
  %2896 = vmatpush2.bf16.msra.mxu0 0
  %2897 = vmatprep.subr.bf16.mxu0 0
  %2898 = vmatpush2.bf16.msra.mxu0 0
  %2899 = vmatprep.subr.bf16.mxu0 0
  %2900 = vmatpush2.bf16.msra.mxu0 0
  %2901 = vmatprep.mubr.bf16.mxu0 0
  %2902 = vmatmul.mubr.bf16.gmra.mxu0 %v2570
  %v2903 = vpop.f32.mrf.mxu0
  %v2904 = vadd.f32 %v2855, %v2903
  %v2905 = vpop.f32.mrf.mxu0
  %v2906 = vpop.f32.mrf.mxu0
  %v2907 = vadd.f32 %v2858, %v2906
  %v2908 = vpop.f32.mrf.mxu0
  %2909 = vmatprep.mubr.bf16.mxu0 0
  %2910 = vmatmul.mubr.bf16.gmra.mxu0 %v2573
  %v2911 = vpop.f32.mrf.mxu0
  %v2912 = vadd.f32 %v2863, %v2911
  %v2913 = vpop.f32.mrf.mxu0
  %v2914 = vpop.f32.mrf.mxu0
  %v2915 = vadd.f32 %v2866, %v2914
  %v2916 = vpop.f32.mrf.mxu0
  %2917 = vdwg.mxu0
  %v2918 = vmax.f32 %v2904, 0.0
  %v2919 = vmax.f32 %v2907, 0.0
  %v2920 = vmax.f32 %v2912, 0.0
  %v2921 = vmax.f32 %v2915, 0.0
  %v2922 = vmul.f32 %v2918, %v1346
  %v2923 = vmul.f32 %v2919, %v1346
  %v2924 = vmul.f32 %v2920, %v1346
  %v2925 = vmul.f32 %v2921, %v1346
  %v2926 = vadd.f32 %v2922, %v1356
  %v2927 = vadd.f32 %v2923, %v1356
  %v2928 = vadd.f32 %v2924, %v1356
  %v2929 = vadd.f32 %v2925, %v1356
  %v2930 = vmax.f32 %v2406, %v2926
  %v2931 = vmax.f32 %v2407, %v2927
  %v2932 = vmax.f32 %v2408, %v2928
  %v2933 = vmax.f32 %v2409, %v2929
  %v2934 = vpack.c.bf16 %v2931, %v2930
  %v2935 = vpack.c.bf16 %v2933, %v2932
  %v2938 = vunpack.c.l.b16 %v2934
  %v2939 = vunpack.c.h.b16 %v2934
  %v2940 = vunpack.c.l.b16 %v2935
  %v2941 = vunpack.c.h.b16 %v2935
  %v2942 = vpack.c.b16 %v2938, %v2938
  %v2943 = vpack.c.b16 %v2939, %v2939
  %v2944 = vpack.c.b16 %v2940, %v2940
  %v2945 = vpack.c.b16 %v2941, %v2941
  %2950 = vst [vmem:[%s5] sm:$0xf] %v2942
  %2951 = vst [vmem:[%s5 + $0x4] sm:$0xf] %v2943
  %2952 = vst [vmem:[%s5 + $0x8] sm:$0xf] %v2944
  %2953 = vst [vmem:[%s5 + $0xc] sm:$0xf] %v2945
  // Predicated region
  $region22: #{conv_model_forward.5} parent=0 // pred_check
    _
  $region23: #{conv_model_forward.5} parent=0 // pred_check_branch
    %2955 = sbr.rel (0) target = $region25
  $region24: #{conv_model_forward.5} parent=0 // pred_region
    _
  $region25: #{conv_model_forward.5} parent=0 // pred_fallthru
    _
  // Predicated region
  $region26: #{conv_model_forward.5} parent=0 // pred_check
    _
  $region27: #{conv_model_forward.5} parent=0 // pred_check_branch
    %2957 = sbr.rel (0) target = $region29
  $region28: #{conv_model_forward.5} parent=0 // pred_region
    _
  $region29: #{conv_model_forward.5} parent=0 // pred_fallthru
    _

// kernel: conv_model_forward.7
$region0: #{conv_model_forward.7}
  #allocation0 [shape = 'u32[]', space=smem, size = 0x4, offset = 0x4, fixed_abs, tag = 'smem constant byte address 0x4 - core index']
  #allocation1 [shape = 'u32[144,128]{1,0:T(1,128)}', space=vmem, size = 0x12000, scoped, tag = 'internal scratch']
  %s0 = inlined_call_operand.vmem [shape: bf16[8,1024], index: 0, kind: input, shape index: {}]
  %s1 = inlined_call_operand.vmem [shape: bf16[1024,128], index: 1, kind: input, shape index: {}]
  %s2 = inlined_call_operand.vmem [shape: f32[1,128], index: 2, kind: input, shape index: {}]
  %s3 = inlined_call_operand.vmem [shape: f32[8,128], index: 3, kind: output, shape index: {}]
  %s4 = sld [smem:[#allocation0]]
  $region22: #{conv_model_forward.7} parent=0
    _
  %s6 = ssub.s32 1, %s4
  %s7 = scalar_select 0, %s6, %s4
  // Predicated region
  $region2: #{conv_model_forward.7} parent=0 // pred_check
    _
  $region3: #{conv_model_forward.7} parent=0 // pred_check_branch
    %9 = sbr.rel (0) target = $region5
  $region4: #{conv_model_forward.7} parent=0 // pred_region
    _
  $region5: #{conv_model_forward.7} parent=0 // pred_fallthru
    _
  // Predicated region
  $region6: #{conv_model_forward.7} parent=0 // pred_check
    _
  $region7: #{conv_model_forward.7} parent=0 // pred_check_branch
    %11 = sbr.rel (0) target = $region9
  $region8: #{conv_model_forward.7} parent=0 // pred_region
    _
  $region9: #{conv_model_forward.7} parent=0 // pred_fallthru
    _
  // Predicated region
  $region10: #{conv_model_forward.7} parent=0 // pred_check
    _
  $region11: #{conv_model_forward.7} parent=0 // pred_check_branch
    %13 = sbr.rel (0) target = $region13
  $region12: #{conv_model_forward.7} parent=0 // pred_region
    _
  $region13: #{conv_model_forward.7} parent=0 // pred_fallthru
    _
  %v15 = vld [vmem:[%s0] sm:$0xff]
  %v16 = vld [vmem:[%s0 + $0x8] sm:$0xff]
  %v17 = vld [vmem:[%s0 + $0x10] sm:$0xff]
  %v18 = vld [vmem:[%s0 + $0x18] sm:$0xff]
  %v19 = vld [vmem:[%s1] sm:$0xf]
  %v20 = vld [vmem:[%s1 + $0x4] sm:$0xf]
  %v21 = vld [vmem:[%s1 + $0x8] sm:$0xf]
  %v22 = vld [vmem:[%s1 + $0xc] sm:$0xf]
  %v23 = vld [vmem:[%s1 + $0x10] sm:$0xf]
  %v24 = vld [vmem:[%s1 + $0x14] sm:$0xf]
  %v25 = vld [vmem:[%s1 + $0x18] sm:$0xf]
  %v26 = vld [vmem:[%s1 + $0x1c] sm:$0xf]
  %v27 = vld [vmem:[%s1 + $0x20] sm:$0xf]
  %v28 = vld [vmem:[%s1 + $0x24] sm:$0xf]
  %v29 = vld [vmem:[%s1 + $0x28] sm:$0xf]
  %v30 = vld [vmem:[%s1 + $0x2c] sm:$0xf]
  %v31 = vld [vmem:[%s1 + $0x30] sm:$0xf]
  %v32 = vld [vmem:[%s1 + $0x34] sm:$0xf]
  %v33 = vld [vmem:[%s1 + $0x38] sm:$0xf]
  %v34 = vld [vmem:[%s1 + $0x3c] sm:$0xf]
  %v35 = vld [vmem:[%s1 + $0x40] sm:$0xf]
  %v36 = vld [vmem:[%s1 + $0x44] sm:$0xf]
  %v37 = vld [vmem:[%s1 + $0x48] sm:$0xf]
  %v38 = vld [vmem:[%s1 + $0x4c] sm:$0xf]
  %v39 = vld [vmem:[%s1 + $0x50] sm:$0xf]
  %v40 = vld [vmem:[%s1 + $0x54] sm:$0xf]
  %v41 = vld [vmem:[%s1 + $0x58] sm:$0xf]
  %v42 = vld [vmem:[%s1 + $0x5c] sm:$0xf]
  %v43 = vld [vmem:[%s1 + $0x60] sm:$0xf]
  %v44 = vld [vmem:[%s1 + $0x64] sm:$0xf]
  %v45 = vld [vmem:[%s1 + $0x68] sm:$0xf]
  %v46 = vld [vmem:[%s1 + $0x6c] sm:$0xf]
  %v47 = vld [vmem:[%s1 + $0x70] sm:$0xf]
  %v48 = vld [vmem:[%s1 + $0x74] sm:$0xf]
  %v49 = vld [vmem:[%s1 + $0x78] sm:$0xf]
  %v50 = vld [vmem:[%s1 + $0x7c] sm:$0xf]
  %v51 = vld [vmem:[%s1 + $0x80] sm:$0xf]
  %v52 = vld [vmem:[%s1 + $0x84] sm:$0xf]
  %v53 = vld [vmem:[%s1 + $0x88] sm:$0xf]
  %v54 = vld [vmem:[%s1 + $0x8c] sm:$0xf]
  %v55 = vld [vmem:[%s1 + $0x90] sm:$0xf]
  %v56 = vld [vmem:[%s1 + $0x94] sm:$0xf]
  %v57 = vld [vmem:[%s1 + $0x98] sm:$0xf]
  %v58 = vld [vmem:[%s1 + $0x9c] sm:$0xf]
  %v59 = vld [vmem:[%s1 + $0xa0] sm:$0xf]
  %v60 = vld [vmem:[%s1 + $0xa4] sm:$0xf]
  %v61 = vld [vmem:[%s1 + $0xa8] sm:$0xf]
  %v62 = vld [vmem:[%s1 + $0xac] sm:$0xf]
  %v63 = vld [vmem:[%s1 + $0xb0] sm:$0xf]
  %v64 = vld [vmem:[%s1 + $0xb4] sm:$0xf]
  %v65 = vld [vmem:[%s1 + $0xb8] sm:$0xf]
  %v66 = vld [vmem:[%s1 + $0xbc] sm:$0xf]
  %v67 = vld [vmem:[%s1 + $0xc0] sm:$0xf]
  %v68 = vld [vmem:[%s1 + $0xc4] sm:$0xf]
  %v69 = vld [vmem:[%s1 + $0xc8] sm:$0xf]
  %v70 = vld [vmem:[%s1 + $0xcc] sm:$0xf]
  %v71 = vld [vmem:[%s1 + $0xd0] sm:$0xf]
  %v72 = vld [vmem:[%s1 + $0xd4] sm:$0xf]
  %v73 = vld [vmem:[%s1 + $0xd8] sm:$0xf]
  %v74 = vld [vmem:[%s1 + $0xdc] sm:$0xf]
  %v75 = vld [vmem:[%s1 + $0xe0] sm:$0xf]
  %v76 = vld [vmem:[%s1 + $0xe4] sm:$0xf]
  %v77 = vld [vmem:[%s1 + $0xe8] sm:$0xf]
  %v78 = vld [vmem:[%s1 + $0xec] sm:$0xf]
  %v79 = vld [vmem:[%s1 + $0xf0] sm:$0xf]
  %v80 = vld [vmem:[%s1 + $0xf4] sm:$0xf]
  %v81 = vld [vmem:[%s1 + $0xf8] sm:$0xf]
  %v82 = vld [vmem:[%s1 + $0xfc] sm:$0xf]
  %v83 = vld [vmem:[%s1 + $0x100] sm:$0xf]
  %v84 = vld [vmem:[%s1 + $0x104] sm:$0xf]
  %v85 = vld [vmem:[%s1 + $0x108] sm:$0xf]
  %v86 = vld [vmem:[%s1 + $0x10c] sm:$0xf]
  %v87 = vld [vmem:[%s1 + $0x110] sm:$0xf]
  %v88 = vld [vmem:[%s1 + $0x114] sm:$0xf]
  %v89 = vld [vmem:[%s1 + $0x118] sm:$0xf]
  %v90 = vld [vmem:[%s1 + $0x11c] sm:$0xf]
  %v91 = vld [vmem:[%s1 + $0x120] sm:$0xf]
  %v92 = vld [vmem:[%s1 + $0x124] sm:$0xf]
  %v93 = vld [vmem:[%s1 + $0x128] sm:$0xf]
  %v94 = vld [vmem:[%s1 + $0x12c] sm:$0xf]
  %v95 = vld [vmem:[%s1 + $0x130] sm:$0xf]
  %v96 = vld [vmem:[%s1 + $0x134] sm:$0xf]
  %v97 = vld [vmem:[%s1 + $0x138] sm:$0xf]
  %v98 = vld [vmem:[%s1 + $0x13c] sm:$0xf]
  %v99 = vld [vmem:[%s1 + $0x140] sm:$0xf]
  %v100 = vld [vmem:[%s1 + $0x144] sm:$0xf]
  %v101 = vld [vmem:[%s1 + $0x148] sm:$0xf]
  %v102 = vld [vmem:[%s1 + $0x14c] sm:$0xf]
  %v103 = vld [vmem:[%s1 + $0x150] sm:$0xf]
  %v104 = vld [vmem:[%s1 + $0x154] sm:$0xf]
  %v105 = vld [vmem:[%s1 + $0x158] sm:$0xf]
  %v106 = vld [vmem:[%s1 + $0x15c] sm:$0xf]
  %v107 = vld [vmem:[%s1 + $0x160] sm:$0xf]
  %v108 = vld [vmem:[%s1 + $0x164] sm:$0xf]
  %v109 = vld [vmem:[%s1 + $0x168] sm:$0xf]
  %v110 = vld [vmem:[%s1 + $0x16c] sm:$0xf]
  %v111 = vld [vmem:[%s1 + $0x170] sm:$0xf]
  %v112 = vld [vmem:[%s1 + $0x174] sm:$0xf]
  %v113 = vld [vmem:[%s1 + $0x178] sm:$0xf]
  %v114 = vld [vmem:[%s1 + $0x17c] sm:$0xf]
  %v115 = vld [vmem:[%s1 + $0x180] sm:$0xf]
  %v116 = vld [vmem:[%s1 + $0x184] sm:$0xf]
  %v117 = vld [vmem:[%s1 + $0x188] sm:$0xf]
  %v118 = vld [vmem:[%s1 + $0x18c] sm:$0xf]
  %v119 = vld [vmem:[%s1 + $0x190] sm:$0xf]
  %v120 = vld [vmem:[%s1 + $0x194] sm:$0xf]
  %v121 = vld [vmem:[%s1 + $0x198] sm:$0xf]
  %v122 = vld [vmem:[%s1 + $0x19c] sm:$0xf]
  %v123 = vld [vmem:[%s1 + $0x1a0] sm:$0xf]
  %v124 = vld [vmem:[%s1 + $0x1a4] sm:$0xf]
  %v125 = vld [vmem:[%s1 + $0x1a8] sm:$0xf]
  %v126 = vld [vmem:[%s1 + $0x1ac] sm:$0xf]
  %v127 = vld [vmem:[%s1 + $0x1b0] sm:$0xf]
  %v128 = vld [vmem:[%s1 + $0x1b4] sm:$0xf]
  %v129 = vld [vmem:[%s1 + $0x1b8] sm:$0xf]
  %v130 = vld [vmem:[%s1 + $0x1bc] sm:$0xf]
  %v131 = vld [vmem:[%s1 + $0x1c0] sm:$0xf]
  %v132 = vld [vmem:[%s1 + $0x1c4] sm:$0xf]
  %v133 = vld [vmem:[%s1 + $0x1c8] sm:$0xf]
  %v134 = vld [vmem:[%s1 + $0x1cc] sm:$0xf]
  %v135 = vld [vmem:[%s1 + $0x1d0] sm:$0xf]
  %v136 = vld [vmem:[%s1 + $0x1d4] sm:$0xf]
  %v137 = vld [vmem:[%s1 + $0x1d8] sm:$0xf]
  %v138 = vld [vmem:[%s1 + $0x1dc] sm:$0xf]
  %v139 = vld [vmem:[%s1 + $0x1e0] sm:$0xf]
  %v140 = vld [vmem:[%s1 + $0x1e4] sm:$0xf]
  %v141 = vld [vmem:[%s1 + $0x1e8] sm:$0xf]
  %v142 = vld [vmem:[%s1 + $0x1ec] sm:$0xf]
  %v143 = vld [vmem:[%s1 + $0x1f0] sm:$0xf]
  %v144 = vld [vmem:[%s1 + $0x1f4] sm:$0xf]
  %v145 = vld [vmem:[%s1 + $0x1f8] sm:$0xf]
  %v146 = vld [vmem:[%s1 + $0x1fc] sm:$0xf]
  %v147 = vld [vmem:[%s2] sm:$0x1]
  %v149 = vlaneseq
  %v150 = vshrl.u32 %v149, 7
  %v151 = vsub.s32 0, %v150
  %v152 = vrot.slane %v147, %v151
  %v158 = vunpack.c.l.b16 %v15
  %v159 = vunpack.c.h.b16 %v15
  %v160 = vunpack.c.l.b16 %v16
  %v161 = vunpack.c.h.b16 %v16
  %v162 = vunpack.c.l.b16 %v17
  %v163 = vunpack.c.h.b16 %v17
  %v164 = vunpack.c.l.b16 %v18
  %v165 = vunpack.c.h.b16 %v18
  %v166 = vpack.c.b16 %v158, %v158
  %v167 = vpack.c.b16 %v159, %v159
  %v168 = vpack.c.b16 %v160, %v160
  %v169 = vpack.c.b16 %v161, %v161
  %v170 = vpack.c.b16 %v162, %v162
  %v171 = vpack.c.b16 %v163, %v163
  %v172 = vpack.c.b16 %v164, %v164
  %v173 = vpack.c.b16 %v165, %v165
  %v310 = vunpack.c.l.b16 %v19
  %v311 = vunpack.c.l.b16 %v20
  %v312 = vunpack.c.l.b16 %v21
  %v313 = vunpack.c.l.b16 %v22
  %v314 = vunpack.c.l.b16 %v23
  %v315 = vunpack.c.l.b16 %v24
  %v316 = vunpack.c.l.b16 %v25
  %v317 = vunpack.c.l.b16 %v26
  %v318 = vunpack.c.l.b16 %v27
  %v319 = vunpack.c.l.b16 %v28
  %v320 = vunpack.c.l.b16 %v29
  %v321 = vunpack.c.l.b16 %v30
  %v322 = vunpack.c.l.b16 %v31
  %v323 = vunpack.c.l.b16 %v32
  %v324 = vunpack.c.l.b16 %v33
  %v325 = vunpack.c.l.b16 %v34
  %v326 = vunpack.c.l.b16 %v35
  %v327 = vunpack.c.l.b16 %v36
  %v328 = vunpack.c.l.b16 %v37
  %v329 = vunpack.c.l.b16 %v38
  %v330 = vunpack.c.l.b16 %v39
  %v331 = vunpack.c.l.b16 %v40
  %v332 = vunpack.c.l.b16 %v41
  %v333 = vunpack.c.l.b16 %v42
  %v334 = vunpack.c.l.b16 %v43
  %v335 = vunpack.c.l.b16 %v44
  %v336 = vunpack.c.l.b16 %v45
  %v337 = vunpack.c.l.b16 %v46
  %v338 = vunpack.c.l.b16 %v47
  %v339 = vunpack.c.l.b16 %v48
  %v340 = vunpack.c.l.b16 %v49
  %v341 = vunpack.c.l.b16 %v50
  %v342 = vunpack.c.l.b16 %v51
  %v343 = vunpack.c.l.b16 %v52
  %v344 = vunpack.c.l.b16 %v53
  %v345 = vunpack.c.l.b16 %v54
  %v346 = vunpack.c.l.b16 %v55
  %v347 = vunpack.c.l.b16 %v56
  %v348 = vunpack.c.l.b16 %v57
  %v349 = vunpack.c.l.b16 %v58
  %v350 = vunpack.c.l.b16 %v59
  %v351 = vunpack.c.l.b16 %v60
  %v352 = vunpack.c.l.b16 %v61
  %v353 = vunpack.c.l.b16 %v62
  %v354 = vunpack.c.l.b16 %v63
  %v355 = vunpack.c.l.b16 %v64
  %v356 = vunpack.c.l.b16 %v65
  %v357 = vunpack.c.l.b16 %v66
  %v358 = vunpack.c.l.b16 %v67
  %v359 = vunpack.c.l.b16 %v68
  %v360 = vunpack.c.l.b16 %v69
  %v361 = vunpack.c.l.b16 %v70
  %v362 = vunpack.c.l.b16 %v71
  %v363 = vunpack.c.l.b16 %v72
  %v364 = vunpack.c.l.b16 %v73
  %v365 = vunpack.c.l.b16 %v74
  %v366 = vunpack.c.l.b16 %v75
  %v367 = vunpack.c.l.b16 %v76
  %v368 = vunpack.c.l.b16 %v77
  %v369 = vunpack.c.l.b16 %v78
  %v370 = vunpack.c.l.b16 %v79
  %v371 = vunpack.c.l.b16 %v80
  %v372 = vunpack.c.l.b16 %v81
  %v373 = vunpack.c.l.b16 %v82
  %v374 = vunpack.c.l.b16 %v83
  %v375 = vunpack.c.l.b16 %v84
  %v376 = vunpack.c.l.b16 %v85
  %v377 = vunpack.c.l.b16 %v86
  %v378 = vunpack.c.l.b16 %v87
  %v379 = vunpack.c.l.b16 %v88
  %v380 = vunpack.c.l.b16 %v89
  %v381 = vunpack.c.l.b16 %v90
  %v382 = vunpack.c.l.b16 %v91
  %v383 = vunpack.c.l.b16 %v92
  %v384 = vunpack.c.l.b16 %v93
  %v385 = vunpack.c.l.b16 %v94
  %v386 = vunpack.c.l.b16 %v95
  %v387 = vunpack.c.l.b16 %v96
  %v388 = vunpack.c.l.b16 %v97
  %v389 = vunpack.c.l.b16 %v98
  %v390 = vunpack.c.l.b16 %v99
  %v391 = vunpack.c.l.b16 %v100
  %v392 = vunpack.c.l.b16 %v101
  %v393 = vunpack.c.l.b16 %v102
  %v394 = vunpack.c.l.b16 %v103
  %v395 = vunpack.c.l.b16 %v104
  %v396 = vunpack.c.l.b16 %v105
  %v397 = vunpack.c.l.b16 %v106
  %v398 = vunpack.c.l.b16 %v107
  %v399 = vunpack.c.l.b16 %v108
  %v400 = vunpack.c.l.b16 %v109
  %v401 = vunpack.c.l.b16 %v110
  %v402 = vunpack.c.l.b16 %v111
  %v403 = vunpack.c.l.b16 %v112
  %v404 = vunpack.c.l.b16 %v113
  %v405 = vunpack.c.l.b16 %v114
  %v406 = vunpack.c.l.b16 %v115
  %v407 = vunpack.c.l.b16 %v116
  %v408 = vunpack.c.l.b16 %v117
  %v409 = vunpack.c.l.b16 %v118
  %v410 = vunpack.c.l.b16 %v119
  %v411 = vunpack.c.l.b16 %v120
  %v412 = vunpack.c.l.b16 %v121
  %v413 = vunpack.c.l.b16 %v122
  %v414 = vunpack.c.l.b16 %v123
  %v415 = vunpack.c.l.b16 %v124
  %v416 = vunpack.c.l.b16 %v125
  %v417 = vunpack.c.l.b16 %v126
  %v418 = vunpack.c.l.b16 %v127
  %v419 = vunpack.c.l.b16 %v128
  %v420 = vunpack.c.l.b16 %v129
  %v421 = vunpack.c.l.b16 %v130
  %v422 = vunpack.c.l.b16 %v131
  %v423 = vunpack.c.l.b16 %v132
  %v424 = vunpack.c.l.b16 %v133
  %v425 = vunpack.c.l.b16 %v134
  %v426 = vunpack.c.l.b16 %v135
  %v427 = vunpack.c.l.b16 %v136
  %v428 = vunpack.c.l.b16 %v137
  %v429 = vunpack.c.l.b16 %v138
  %v430 = vunpack.c.l.b16 %v139
  %v431 = vunpack.c.l.b16 %v140
  %v432 = vunpack.c.l.b16 %v141
  %v433 = vunpack.c.l.b16 %v142
  %v434 = vunpack.c.l.b16 %v143
  %v435 = vunpack.c.l.b16 %v144
  %v436 = vunpack.c.l.b16 %v145
  %v437 = vunpack.c.l.b16 %v146
  %v438 = vpack.c.b16 %v311, %v310
  %v439 = vpack.c.b16 %v313, %v312
  %v440 = vpack.c.b16 %v315, %v314
  %v441 = vpack.c.b16 %v317, %v316
  %v442 = vpack.c.b16 %v319, %v318
  %v443 = vpack.c.b16 %v321, %v320
  %v444 = vpack.c.b16 %v323, %v322
  %v445 = vpack.c.b16 %v325, %v324
  %v446 = vpack.c.b16 %v327, %v326
  %v447 = vpack.c.b16 %v329, %v328
  %v448 = vpack.c.b16 %v331, %v330
  %v449 = vpack.c.b16 %v333, %v332
  %v450 = vpack.c.b16 %v335, %v334
  %v451 = vpack.c.b16 %v337, %v336
  %v452 = vpack.c.b16 %v339, %v338
  %v453 = vpack.c.b16 %v341, %v340
  %v454 = vpack.c.b16 %v343, %v342
  %v455 = vpack.c.b16 %v345, %v344
  %v456 = vpack.c.b16 %v347, %v346
  %v457 = vpack.c.b16 %v349, %v348
  %v458 = vpack.c.b16 %v351, %v350
  %v459 = vpack.c.b16 %v353, %v352
  %v460 = vpack.c.b16 %v355, %v354
  %v461 = vpack.c.b16 %v357, %v356
  %v462 = vpack.c.b16 %v359, %v358
  %v463 = vpack.c.b16 %v361, %v360
  %v464 = vpack.c.b16 %v363, %v362
  %v465 = vpack.c.b16 %v365, %v364
  %v466 = vpack.c.b16 %v367, %v366
  %v467 = vpack.c.b16 %v369, %v368
  %v468 = vpack.c.b16 %v371, %v370
  %v469 = vpack.c.b16 %v373, %v372
  %v470 = vpack.c.b16 %v375, %v374
  %v471 = vpack.c.b16 %v377, %v376
  %v472 = vpack.c.b16 %v379, %v378
  %v473 = vpack.c.b16 %v381, %v380
  %v474 = vpack.c.b16 %v383, %v382
  %v475 = vpack.c.b16 %v385, %v384
  %v476 = vpack.c.b16 %v387, %v386
  %v477 = vpack.c.b16 %v389, %v388
  %v478 = vpack.c.b16 %v391, %v390
  %v479 = vpack.c.b16 %v393, %v392
  %v480 = vpack.c.b16 %v395, %v394
  %v481 = vpack.c.b16 %v397, %v396
  %v482 = vpack.c.b16 %v399, %v398
  %v483 = vpack.c.b16 %v401, %v400
  %v484 = vpack.c.b16 %v403, %v402
  %v485 = vpack.c.b16 %v405, %v404
  %v486 = vpack.c.b16 %v407, %v406
  %v487 = vpack.c.b16 %v409, %v408
  %v488 = vpack.c.b16 %v411, %v410
  %v489 = vpack.c.b16 %v413, %v412
  %v490 = vpack.c.b16 %v415, %v414
  %v491 = vpack.c.b16 %v417, %v416
  %v492 = vpack.c.b16 %v419, %v418
  %v493 = vpack.c.b16 %v421, %v420
  %v494 = vpack.c.b16 %v423, %v422
  %v495 = vpack.c.b16 %v425, %v424
  %v496 = vpack.c.b16 %v427, %v426
  %v497 = vpack.c.b16 %v429, %v428
  %v498 = vpack.c.b16 %v431, %v430
  %v499 = vpack.c.b16 %v433, %v432
  %v500 = vpack.c.b16 %v435, %v434
  %v501 = vpack.c.b16 %v437, %v436
  %566 = vmatprep.subr.bf16.mxu0 0
  %567 = vmatpush1.bf16.msra.mxu0 %v445
  %568 = vmatprep.subr.bf16.mxu0 0
  %569 = vmatpush1.bf16.msra.mxu0 %v444
  %570 = vmatprep.subr.bf16.mxu0 0
  %571 = vmatpush1.bf16.msra.mxu0 %v443
  %572 = vmatprep.subr.bf16.mxu0 0
  %573 = vmatpush1.bf16.msra.mxu0 %v442
  %574 = vmatprep.subr.bf16.mxu0 0
  %575 = vmatpush1.bf16.msra.mxu0 %v441
  %576 = vmatprep.subr.bf16.mxu0 0
  %577 = vmatpush1.bf16.msra.mxu0 %v440
  %578 = vmatprep.subr.bf16.mxu0 0
  %579 = vmatpush1.bf16.msra.mxu0 %v439
  %580 = vmatprep.subr.bf16.mxu0 0
  %581 = vmatpush1.bf16.msra.mxu0 %v438
  %582 = vmatprep.subr.bf16.mxu0 0
  %583 = vmatpush2.bf16.msra.mxu0 %v453
  %584 = vmatprep.subr.bf16.mxu0 0
  %585 = vmatpush2.bf16.msra.mxu0 %v452
  %586 = vmatprep.subr.bf16.mxu0 0
  %587 = vmatpush2.bf16.msra.mxu0 %v451
  %588 = vmatprep.subr.bf16.mxu0 0
  %589 = vmatpush2.bf16.msra.mxu0 %v450
  %590 = vmatprep.subr.bf16.mxu0 0
  %591 = vmatpush2.bf16.msra.mxu0 %v449
  %592 = vmatprep.subr.bf16.mxu0 0
  %593 = vmatpush2.bf16.msra.mxu0 %v448
  %594 = vmatprep.subr.bf16.mxu0 0
  %595 = vmatpush2.bf16.msra.mxu0 %v447
  %596 = vmatprep.subr.bf16.mxu0 0
  %597 = vmatpush2.bf16.msra.mxu0 %v446
  %598 = vmatprep.mubr.bf16.mxu0 %v167
  %599 = vmatmul.mubr.bf16.gmra.mxu0 %v166
  %v600 = vpop.f32.mrf.mxu0
  %v601 = vadd.f32 %v152, %v600
  %v602 = vpop.f32.mrf.mxu0
  %v603 = vpop.f32.mrf.mxu0
  %v604 = vpop.f32.mrf.mxu0
  %605 = vdwg.mxu0
  %606 = vmatprep.subr.bf16.mxu0 0
  %607 = vmatpush1.bf16.msra.mxu0 %v461
  %608 = vmatprep.subr.bf16.mxu0 0
  %609 = vmatpush1.bf16.msra.mxu0 %v460
  %610 = vmatprep.subr.bf16.mxu0 0
  %611 = vmatpush1.bf16.msra.mxu0 %v459
  %612 = vmatprep.subr.bf16.mxu0 0
  %613 = vmatpush1.bf16.msra.mxu0 %v458
  %614 = vmatprep.subr.bf16.mxu0 0
  %615 = vmatpush1.bf16.msra.mxu0 %v457
  %616 = vmatprep.subr.bf16.mxu0 0
  %617 = vmatpush1.bf16.msra.mxu0 %v456
  %618 = vmatprep.subr.bf16.mxu0 0
  %619 = vmatpush1.bf16.msra.mxu0 %v455
  %620 = vmatprep.subr.bf16.mxu0 0
  %621 = vmatpush1.bf16.msra.mxu0 %v454
  %622 = vmatprep.subr.bf16.mxu0 0
  %623 = vmatpush2.bf16.msra.mxu0 %v469
  %624 = vmatprep.subr.bf16.mxu0 0
  %625 = vmatpush2.bf16.msra.mxu0 %v468
  %626 = vmatprep.subr.bf16.mxu0 0
  %627 = vmatpush2.bf16.msra.mxu0 %v467
  %628 = vmatprep.subr.bf16.mxu0 0
  %629 = vmatpush2.bf16.msra.mxu0 %v466
  %630 = vmatprep.subr.bf16.mxu0 0
  %631 = vmatpush2.bf16.msra.mxu0 %v465
  %632 = vmatprep.subr.bf16.mxu0 0
  %633 = vmatpush2.bf16.msra.mxu0 %v464
  %634 = vmatprep.subr.bf16.mxu0 0
  %635 = vmatpush2.bf16.msra.mxu0 %v463
  %636 = vmatprep.subr.bf16.mxu0 0
  %637 = vmatpush2.bf16.msra.mxu0 %v462
  %638 = vmatprep.mubr.bf16.mxu0 %v169
  %639 = vmatmul.mubr.bf16.gmra.mxu0 %v168
  %v640 = vpop.f32.mrf.mxu0
  %v641 = vadd.f32 %v601, %v640
  %v642 = vpop.f32.mrf.mxu0
  %v643 = vpop.f32.mrf.mxu0
  %v644 = vpop.f32.mrf.mxu0
  %645 = vdwg.mxu0
  %646 = vmatprep.subr.bf16.mxu0 0
  %647 = vmatpush1.bf16.msra.mxu0 %v477
  %648 = vmatprep.subr.bf16.mxu0 0
  %649 = vmatpush1.bf16.msra.mxu0 %v476
  %650 = vmatprep.subr.bf16.mxu0 0
  %651 = vmatpush1.bf16.msra.mxu0 %v475
  %652 = vmatprep.subr.bf16.mxu0 0
  %653 = vmatpush1.bf16.msra.mxu0 %v474
  %654 = vmatprep.subr.bf16.mxu0 0
  %655 = vmatpush1.bf16.msra.mxu0 %v473
  %656 = vmatprep.subr.bf16.mxu0 0
  %657 = vmatpush1.bf16.msra.mxu0 %v472
  %658 = vmatprep.subr.bf16.mxu0 0
  %659 = vmatpush1.bf16.msra.mxu0 %v471
  %660 = vmatprep.subr.bf16.mxu0 0
  %661 = vmatpush1.bf16.msra.mxu0 %v470
  %662 = vmatprep.subr.bf16.mxu0 0
  %663 = vmatpush2.bf16.msra.mxu0 %v485
  %664 = vmatprep.subr.bf16.mxu0 0
  %665 = vmatpush2.bf16.msra.mxu0 %v484
  %666 = vmatprep.subr.bf16.mxu0 0
  %667 = vmatpush2.bf16.msra.mxu0 %v483
  %668 = vmatprep.subr.bf16.mxu0 0
  %669 = vmatpush2.bf16.msra.mxu0 %v482
  %670 = vmatprep.subr.bf16.mxu0 0
  %671 = vmatpush2.bf16.msra.mxu0 %v481
  %672 = vmatprep.subr.bf16.mxu0 0
  %673 = vmatpush2.bf16.msra.mxu0 %v480
  %674 = vmatprep.subr.bf16.mxu0 0
  %675 = vmatpush2.bf16.msra.mxu0 %v479
  %676 = vmatprep.subr.bf16.mxu0 0
  %677 = vmatpush2.bf16.msra.mxu0 %v478
  %678 = vmatprep.mubr.bf16.mxu0 %v171
  %679 = vmatmul.mubr.bf16.gmra.mxu0 %v170
  %v680 = vpop.f32.mrf.mxu0
  %v681 = vadd.f32 %v641, %v680
  %v682 = vpop.f32.mrf.mxu0
  %v683 = vpop.f32.mrf.mxu0
  %v684 = vpop.f32.mrf.mxu0
  %685 = vdwg.mxu0
  %686 = vmatprep.subr.bf16.mxu0 0
  %687 = vmatpush1.bf16.msra.mxu0 %v493
  %688 = vmatprep.subr.bf16.mxu0 0
  %689 = vmatpush1.bf16.msra.mxu0 %v492
  %690 = vmatprep.subr.bf16.mxu0 0
  %691 = vmatpush1.bf16.msra.mxu0 %v491
  %692 = vmatprep.subr.bf16.mxu0 0
  %693 = vmatpush1.bf16.msra.mxu0 %v490
  %694 = vmatprep.subr.bf16.mxu0 0
  %695 = vmatpush1.bf16.msra.mxu0 %v489
  %696 = vmatprep.subr.bf16.mxu0 0
  %697 = vmatpush1.bf16.msra.mxu0 %v488
  %698 = vmatprep.subr.bf16.mxu0 0
  %699 = vmatpush1.bf16.msra.mxu0 %v487
  %700 = vmatprep.subr.bf16.mxu0 0
  %701 = vmatpush1.bf16.msra.mxu0 %v486
  %702 = vmatprep.subr.bf16.mxu0 0
  %703 = vmatpush2.bf16.msra.mxu0 %v501
  %704 = vmatprep.subr.bf16.mxu0 0
  %705 = vmatpush2.bf16.msra.mxu0 %v500
  %706 = vmatprep.subr.bf16.mxu0 0
  %707 = vmatpush2.bf16.msra.mxu0 %v499
  %708 = vmatprep.subr.bf16.mxu0 0
  %709 = vmatpush2.bf16.msra.mxu0 %v498
  %710 = vmatprep.subr.bf16.mxu0 0
  %711 = vmatpush2.bf16.msra.mxu0 %v497
  %712 = vmatprep.subr.bf16.mxu0 0
  %713 = vmatpush2.bf16.msra.mxu0 %v496
  %714 = vmatprep.subr.bf16.mxu0 0
  %715 = vmatpush2.bf16.msra.mxu0 %v495
  %716 = vmatprep.subr.bf16.mxu0 0
  %717 = vmatpush2.bf16.msra.mxu0 %v494
  %718 = vmatprep.mubr.bf16.mxu0 %v173
  %719 = vmatmul.mubr.bf16.gmra.mxu0 %v172
  %v720 = vpop.f32.mrf.mxu0
  %v721 = vadd.f32 %v681, %v720
  %v722 = vpop.f32.mrf.mxu0
  %v723 = vpop.f32.mrf.mxu0
  %v724 = vpop.f32.mrf.mxu0
  %725 = vdwg.mxu0
  %726 = vst [vmem:[%s3] sm:$0xff] %v721
  // Predicated region
  $region14: #{conv_model_forward.7} parent=0 // pred_check
    _
  $region15: #{conv_model_forward.7} parent=0 // pred_check_branch
    %728 = sbr.rel (0) target = $region17
  $region16: #{conv_model_forward.7} parent=0 // pred_region
    _
  $region17: #{conv_model_forward.7} parent=0 // pred_fallthru
    _
  // Predicated region
  $region18: #{conv_model_forward.7} parent=0 // pred_check
    _
  $region19: #{conv_model_forward.7} parent=0 // pred_check_branch
    %730 = sbr.rel (0) target = $region21
  $region20: #{conv_model_forward.7} parent=0 // pred_region
    _
  $region21: #{conv_model_forward.7} parent=0 // pred_fallthru
    _

// kernel: conv_model_forward.6
$region0: #{conv_model_forward.6}
  #allocation0 [shape = 'u32[]', space=smem, size = 0x4, offset = 0x4, fixed_abs, tag = 'smem constant byte address 0x4 - core index']
  #allocation1 [shape = 'u32[144,128]{1,0:T(1,128)}', space=vmem, size = 0x12000, scoped, tag = 'internal scratch']
  %s0 = inlined_call_operand.vmem [shape: bf16[8,2048], index: 0, kind: input, shape index: {}]
  %s1 = inlined_call_operand.vmem [shape: bf16[2048,1024], index: 1, kind: input, shape index: {}]
  %s2 = inlined_call_operand.vmem [shape: f32[1,1024], index: 2, kind: input, shape index: {}]
  %s3 = inlined_call_operand.vmem [shape: bf16[8,1024], index: 3, kind: output, shape index: {}]
  %s4 = sld [smem:[#allocation0]]
  $region22: #{conv_model_forward.6} parent=0
    _
  %s6 = ssub.s32 1, %s4
  %s7 = scalar_select 0, %s6, %s4
  // Predicated region
  $region2: #{conv_model_forward.6} parent=0 // pred_check
    _
  $region3: #{conv_model_forward.6} parent=0 // pred_check_branch
    %9 = sbr.rel (0) target = $region5
  $region4: #{conv_model_forward.6} parent=0 // pred_region
    _
  $region5: #{conv_model_forward.6} parent=0 // pred_fallthru
    _
  // Predicated region
  $region6: #{conv_model_forward.6} parent=0 // pred_check
    _
  $region7: #{conv_model_forward.6} parent=0 // pred_check_branch
    %11 = sbr.rel (0) target = $region9
  $region8: #{conv_model_forward.6} parent=0 // pred_region
    _
  $region9: #{conv_model_forward.6} parent=0 // pred_fallthru
    _
  // Predicated region
  $region10: #{conv_model_forward.6} parent=0 // pred_check
    _
  $region11: #{conv_model_forward.6} parent=0 // pred_check_branch
    %13 = sbr.rel (0) target = $region13
  $region12: #{conv_model_forward.6} parent=0 // pred_region
    _
  $region13: #{conv_model_forward.6} parent=0 // pred_fallthru
    _
  %v14 = vld [vmem:[%s0] sm:$0xff]
  %v15 = vld [vmem:[%s0 + $0x8] sm:$0xff]
  %v16 = vld [vmem:[%s0 + $0x10] sm:$0xff]
  %v17 = vld [vmem:[%s0 + $0x18] sm:$0xff]
  %v18 = vld [vmem:[%s0 + $0x20] sm:$0xff]
  %v19 = vld [vmem:[%s0 + $0x28] sm:$0xff]
  %v20 = vld [vmem:[%s0 + $0x30] sm:$0xff]
  %v21 = vld [vmem:[%s0 + $0x38] sm:$0xff]
  %v22 = vld [vmem:[%s1] sm:$0xff]
  %v23 = vld [vmem:[%s1 + $0x8] sm:$0xff]
  %v24 = vld [vmem:[%s1 + $0x10] sm:$0xff]
  %v25 = vld [vmem:[%s1 + $0x18] sm:$0xff]
  %v26 = vld [vmem:[%s1 + $0x20] sm:$0xff]
  %v27 = vld [vmem:[%s1 + $0x28] sm:$0xff]
  %v28 = vld [vmem:[%s1 + $0x30] sm:$0xff]
  %v29 = vld [vmem:[%s1 + $0x38] sm:$0xff]
  %v30 = vld [vmem:[%s1 + $0x40] sm:$0xff]
  %v31 = vld [vmem:[%s1 + $0x48] sm:$0xff]
  %v32 = vld [vmem:[%s1 + $0x50] sm:$0xff]
  %v33 = vld [vmem:[%s1 + $0x58] sm:$0xff]
  %v34 = vld [vmem:[%s1 + $0x60] sm:$0xff]
  %v35 = vld [vmem:[%s1 + $0x68] sm:$0xff]
  %v36 = vld [vmem:[%s1 + $0x70] sm:$0xff]
  %v37 = vld [vmem:[%s1 + $0x78] sm:$0xff]
  %v38 = vld [vmem:[%s1 + $0x80] sm:$0xff]
  %v39 = vld [vmem:[%s1 + $0x88] sm:$0xff]
  %v40 = vld [vmem:[%s1 + $0x90] sm:$0xff]
  %v41 = vld [vmem:[%s1 + $0x98] sm:$0xff]
  %v42 = vld [vmem:[%s1 + $0xa0] sm:$0xff]
  %v43 = vld [vmem:[%s1 + $0xa8] sm:$0xff]
  %v44 = vld [vmem:[%s1 + $0xb0] sm:$0xff]
  %v45 = vld [vmem:[%s1 + $0xb8] sm:$0xff]
  %v46 = vld [vmem:[%s1 + $0xc0] sm:$0xff]
  %v47 = vld [vmem:[%s1 + $0xc8] sm:$0xff]
  %v48 = vld [vmem:[%s1 + $0xd0] sm:$0xff]
  %v49 = vld [vmem:[%s1 + $0xd8] sm:$0xff]
  %v50 = vld [vmem:[%s1 + $0xe0] sm:$0xff]
  %v51 = vld [vmem:[%s1 + $0xe8] sm:$0xff]
  %v52 = vld [vmem:[%s1 + $0xf0] sm:$0xff]
  %v53 = vld [vmem:[%s1 + $0xf8] sm:$0xff]
  %v54 = vld [vmem:[%s1 + $0x100] sm:$0xff]
  %v55 = vld [vmem:[%s1 + $0x108] sm:$0xff]
  %v56 = vld [vmem:[%s1 + $0x110] sm:$0xff]
  %v57 = vld [vmem:[%s1 + $0x118] sm:$0xff]
  %v58 = vld [vmem:[%s1 + $0x120] sm:$0xff]
  %v59 = vld [vmem:[%s1 + $0x128] sm:$0xff]
  %v60 = vld [vmem:[%s1 + $0x130] sm:$0xff]
  %v61 = vld [vmem:[%s1 + $0x138] sm:$0xff]
  %v62 = vld [vmem:[%s1 + $0x140] sm:$0xff]
  %v63 = vld [vmem:[%s1 + $0x148] sm:$0xff]
  %v64 = vld [vmem:[%s1 + $0x150] sm:$0xff]
  %v65 = vld [vmem:[%s1 + $0x158] sm:$0xff]
  %v66 = vld [vmem:[%s1 + $0x160] sm:$0xff]
  %v67 = vld [vmem:[%s1 + $0x168] sm:$0xff]
  %v68 = vld [vmem:[%s1 + $0x170] sm:$0xff]
  %v69 = vld [vmem:[%s1 + $0x178] sm:$0xff]
  %v70 = vld [vmem:[%s1 + $0x180] sm:$0xff]
  %v71 = vld [vmem:[%s1 + $0x188] sm:$0xff]
  %v72 = vld [vmem:[%s1 + $0x190] sm:$0xff]
  %v73 = vld [vmem:[%s1 + $0x198] sm:$0xff]
  %v74 = vld [vmem:[%s1 + $0x1a0] sm:$0xff]
  %v75 = vld [vmem:[%s1 + $0x1a8] sm:$0xff]
  %v76 = vld [vmem:[%s1 + $0x1b0] sm:$0xff]
  %v77 = vld [vmem:[%s1 + $0x1b8] sm:$0xff]
  %v78 = vld [vmem:[%s1 + $0x1c0] sm:$0xff]
  %v79 = vld [vmem:[%s1 + $0x1c8] sm:$0xff]
  %v80 = vld [vmem:[%s1 + $0x1d0] sm:$0xff]
  %v81 = vld [vmem:[%s1 + $0x1d8] sm:$0xff]
  %v82 = vld [vmem:[%s1 + $0x1e0] sm:$0xff]
  %v83 = vld [vmem:[%s1 + $0x1e8] sm:$0xff]
  %v84 = vld [vmem:[%s1 + $0x1f0] sm:$0xff]
  %v85 = vld [vmem:[%s1 + $0x1f8] sm:$0xff]
  %v86 = vld [vmem:[%s1 + $0x200] sm:$0xff]
  %v87 = vld [vmem:[%s1 + $0x208] sm:$0xff]
  %v88 = vld [vmem:[%s1 + $0x210] sm:$0xff]
  %v89 = vld [vmem:[%s1 + $0x218] sm:$0xff]
  %v90 = vld [vmem:[%s1 + $0x220] sm:$0xff]
  %v91 = vld [vmem:[%s1 + $0x228] sm:$0xff]
  %v92 = vld [vmem:[%s1 + $0x230] sm:$0xff]
  %v93 = vld [vmem:[%s1 + $0x238] sm:$0xff]
  %v94 = vld [vmem:[%s1 + $0x240] sm:$0xff]
  %v95 = vld [vmem:[%s1 + $0x248] sm:$0xff]
  %v96 = vld [vmem:[%s1 + $0x250] sm:$0xff]
  %v97 = vld [vmem:[%s1 + $0x258] sm:$0xff]
  %v98 = vld [vmem:[%s1 + $0x260] sm:$0xff]
  %v99 = vld [vmem:[%s1 + $0x268] sm:$0xff]
  %v100 = vld [vmem:[%s1 + $0x270] sm:$0xff]
  %v101 = vld [vmem:[%s1 + $0x278] sm:$0xff]
  %v102 = vld [vmem:[%s1 + $0x280] sm:$0xff]
  %v103 = vld [vmem:[%s1 + $0x288] sm:$0xff]
  %v104 = vld [vmem:[%s1 + $0x290] sm:$0xff]
  %v105 = vld [vmem:[%s1 + $0x298] sm:$0xff]
  %v106 = vld [vmem:[%s1 + $0x2a0] sm:$0xff]
  %v107 = vld [vmem:[%s1 + $0x2a8] sm:$0xff]
  %v108 = vld [vmem:[%s1 + $0x2b0] sm:$0xff]
  %v109 = vld [vmem:[%s1 + $0x2b8] sm:$0xff]
  %v110 = vld [vmem:[%s1 + $0x2c0] sm:$0xff]
  %v111 = vld [vmem:[%s1 + $0x2c8] sm:$0xff]
  %v112 = vld [vmem:[%s1 + $0x2d0] sm:$0xff]
  %v113 = vld [vmem:[%s1 + $0x2d8] sm:$0xff]
  %v114 = vld [vmem:[%s1 + $0x2e0] sm:$0xff]
  %v115 = vld [vmem:[%s1 + $0x2e8] sm:$0xff]
  %v116 = vld [vmem:[%s1 + $0x2f0] sm:$0xff]
  %v117 = vld [vmem:[%s1 + $0x2f8] sm:$0xff]
  %v118 = vld [vmem:[%s1 + $0x300] sm:$0xff]
  %v119 = vld [vmem:[%s1 + $0x308] sm:$0xff]
  %v120 = vld [vmem:[%s1 + $0x310] sm:$0xff]
  %v121 = vld [vmem:[%s1 + $0x318] sm:$0xff]
  %v122 = vld [vmem:[%s1 + $0x320] sm:$0xff]
  %v123 = vld [vmem:[%s1 + $0x328] sm:$0xff]
  %v124 = vld [vmem:[%s1 + $0x330] sm:$0xff]
  %v125 = vld [vmem:[%s1 + $0x338] sm:$0xff]
  %v126 = vld [vmem:[%s1 + $0x340] sm:$0xff]
  %v127 = vld [vmem:[%s1 + $0x348] sm:$0xff]
  %v128 = vld [vmem:[%s1 + $0x350] sm:$0xff]
  %v129 = vld [vmem:[%s1 + $0x358] sm:$0xff]
  %v130 = vld [vmem:[%s1 + $0x360] sm:$0xff]
  %v131 = vld [vmem:[%s1 + $0x368] sm:$0xff]
  %v132 = vld [vmem:[%s1 + $0x370] sm:$0xff]
  %v133 = vld [vmem:[%s1 + $0x378] sm:$0xff]
  %v134 = vld [vmem:[%s1 + $0x380] sm:$0xff]
  %v135 = vld [vmem:[%s1 + $0x388] sm:$0xff]
  %v136 = vld [vmem:[%s1 + $0x390] sm:$0xff]
  %v137 = vld [vmem:[%s1 + $0x398] sm:$0xff]
  %v138 = vld [vmem:[%s1 + $0x3a0] sm:$0xff]
  %v139 = vld [vmem:[%s1 + $0x3a8] sm:$0xff]
  %v140 = vld [vmem:[%s1 + $0x3b0] sm:$0xff]
  %v141 = vld [vmem:[%s1 + $0x3b8] sm:$0xff]
  %v142 = vld [vmem:[%s1 + $0x3c0] sm:$0xff]
  %v143 = vld [vmem:[%s1 + $0x3c8] sm:$0xff]
  %v144 = vld [vmem:[%s1 + $0x3d0] sm:$0xff]
  %v145 = vld [vmem:[%s1 + $0x3d8] sm:$0xff]
  %v146 = vld [vmem:[%s1 + $0x3e0] sm:$0xff]
  %v147 = vld [vmem:[%s1 + $0x3e8] sm:$0xff]
  %v148 = vld [vmem:[%s1 + $0x3f0] sm:$0xff]
  %v149 = vld [vmem:[%s1 + $0x3f8] sm:$0xff]
  %v150 = vld [vmem:[%s1 + $0x400] sm:$0xff]
  %v151 = vld [vmem:[%s1 + $0x408] sm:$0xff]
  %v152 = vld [vmem:[%s1 + $0x410] sm:$0xff]
  %v153 = vld [vmem:[%s1 + $0x418] sm:$0xff]
  %v154 = vld [vmem:[%s1 + $0x420] sm:$0xff]
  %v155 = vld [vmem:[%s1 + $0x428] sm:$0xff]
  %v156 = vld [vmem:[%s1 + $0x430] sm:$0xff]
  %v157 = vld [vmem:[%s1 + $0x438] sm:$0xff]
  %v158 = vld [vmem:[%s1 + $0x440] sm:$0xff]
  %v159 = vld [vmem:[%s1 + $0x448] sm:$0xff]
  %v160 = vld [vmem:[%s1 + $0x450] sm:$0xff]
  %v161 = vld [vmem:[%s1 + $0x458] sm:$0xff]
  %v162 = vld [vmem:[%s1 + $0x460] sm:$0xff]
  %v163 = vld [vmem:[%s1 + $0x468] sm:$0xff]
  %v164 = vld [vmem:[%s1 + $0x470] sm:$0xff]
  %v165 = vld [vmem:[%s1 + $0x478] sm:$0xff]
  %v166 = vld [vmem:[%s1 + $0x480] sm:$0xff]
  %v167 = vld [vmem:[%s1 + $0x488] sm:$0xff]
  %v168 = vld [vmem:[%s1 + $0x490] sm:$0xff]
  %v169 = vld [vmem:[%s1 + $0x498] sm:$0xff]
  %v170 = vld [vmem:[%s1 + $0x4a0] sm:$0xff]
  %v171 = vld [vmem:[%s1 + $0x4a8] sm:$0xff]
  %v172 = vld [vmem:[%s1 + $0x4b0] sm:$0xff]
  %v173 = vld [vmem:[%s1 + $0x4b8] sm:$0xff]
  %v174 = vld [vmem:[%s1 + $0x4c0] sm:$0xff]
  %v175 = vld [vmem:[%s1 + $0x4c8] sm:$0xff]
  %v176 = vld [vmem:[%s1 + $0x4d0] sm:$0xff]
  %v177 = vld [vmem:[%s1 + $0x4d8] sm:$0xff]
  %v178 = vld [vmem:[%s1 + $0x4e0] sm:$0xff]
  %v179 = vld [vmem:[%s1 + $0x4e8] sm:$0xff]
  %v180 = vld [vmem:[%s1 + $0x4f0] sm:$0xff]
  %v181 = vld [vmem:[%s1 + $0x4f8] sm:$0xff]
  %v182 = vld [vmem:[%s1 + $0x500] sm:$0xff]
  %v183 = vld [vmem:[%s1 + $0x508] sm:$0xff]
  %v184 = vld [vmem:[%s1 + $0x510] sm:$0xff]
  %v185 = vld [vmem:[%s1 + $0x518] sm:$0xff]
  %v186 = vld [vmem:[%s1 + $0x520] sm:$0xff]
  %v187 = vld [vmem:[%s1 + $0x528] sm:$0xff]
  %v188 = vld [vmem:[%s1 + $0x530] sm:$0xff]
  %v189 = vld [vmem:[%s1 + $0x538] sm:$0xff]
  %v190 = vld [vmem:[%s1 + $0x540] sm:$0xff]
  %v191 = vld [vmem:[%s1 + $0x548] sm:$0xff]
  %v192 = vld [vmem:[%s1 + $0x550] sm:$0xff]
  %v193 = vld [vmem:[%s1 + $0x558] sm:$0xff]
  %v194 = vld [vmem:[%s1 + $0x560] sm:$0xff]
  %v195 = vld [vmem:[%s1 + $0x568] sm:$0xff]
  %v196 = vld [vmem:[%s1 + $0x570] sm:$0xff]
  %v197 = vld [vmem:[%s1 + $0x578] sm:$0xff]
  %v198 = vld [vmem:[%s1 + $0x580] sm:$0xff]
  %v199 = vld [vmem:[%s1 + $0x588] sm:$0xff]
  %v200 = vld [vmem:[%s1 + $0x590] sm:$0xff]
  %v201 = vld [vmem:[%s1 + $0x598] sm:$0xff]
  %v202 = vld [vmem:[%s1 + $0x5a0] sm:$0xff]
  %v203 = vld [vmem:[%s1 + $0x5a8] sm:$0xff]
  %v204 = vld [vmem:[%s1 + $0x5b0] sm:$0xff]
  %v205 = vld [vmem:[%s1 + $0x5b8] sm:$0xff]
  %v206 = vld [vmem:[%s1 + $0x5c0] sm:$0xff]
  %v207 = vld [vmem:[%s1 + $0x5c8] sm:$0xff]
  %v208 = vld [vmem:[%s1 + $0x5d0] sm:$0xff]
  %v209 = vld [vmem:[%s1 + $0x5d8] sm:$0xff]
  %v210 = vld [vmem:[%s1 + $0x5e0] sm:$0xff]
  %v211 = vld [vmem:[%s1 + $0x5e8] sm:$0xff]
  %v212 = vld [vmem:[%s1 + $0x5f0] sm:$0xff]
  %v213 = vld [vmem:[%s1 + $0x5f8] sm:$0xff]
  %v214 = vld [vmem:[%s1 + $0x600] sm:$0xff]
  %v215 = vld [vmem:[%s1 + $0x608] sm:$0xff]
  %v216 = vld [vmem:[%s1 + $0x610] sm:$0xff]
  %v217 = vld [vmem:[%s1 + $0x618] sm:$0xff]
  %v218 = vld [vmem:[%s1 + $0x620] sm:$0xff]
  %v219 = vld [vmem:[%s1 + $0x628] sm:$0xff]
  %v220 = vld [vmem:[%s1 + $0x630] sm:$0xff]
  %v221 = vld [vmem:[%s1 + $0x638] sm:$0xff]
  %v222 = vld [vmem:[%s1 + $0x640] sm:$0xff]
  %v223 = vld [vmem:[%s1 + $0x648] sm:$0xff]
  %v224 = vld [vmem:[%s1 + $0x650] sm:$0xff]
  %v225 = vld [vmem:[%s1 + $0x658] sm:$0xff]
  %v226 = vld [vmem:[%s1 + $0x660] sm:$0xff]
  %v227 = vld [vmem:[%s1 + $0x668] sm:$0xff]
  %v228 = vld [vmem:[%s1 + $0x670] sm:$0xff]
  %v229 = vld [vmem:[%s1 + $0x678] sm:$0xff]
  %v230 = vld [vmem:[%s1 + $0x680] sm:$0xff]
  %v231 = vld [vmem:[%s1 + $0x688] sm:$0xff]
  %v232 = vld [vmem:[%s1 + $0x690] sm:$0xff]
  %v233 = vld [vmem:[%s1 + $0x698] sm:$0xff]
  %v234 = vld [vmem:[%s1 + $0x6a0] sm:$0xff]
  %v235 = vld [vmem:[%s1 + $0x6a8] sm:$0xff]
  %v236 = vld [vmem:[%s1 + $0x6b0] sm:$0xff]
  %v237 = vld [vmem:[%s1 + $0x6b8] sm:$0xff]
  %v238 = vld [vmem:[%s1 + $0x6c0] sm:$0xff]
  %v239 = vld [vmem:[%s1 + $0x6c8] sm:$0xff]
  %v240 = vld [vmem:[%s1 + $0x6d0] sm:$0xff]
  %v241 = vld [vmem:[%s1 + $0x6d8] sm:$0xff]
  %v242 = vld [vmem:[%s1 + $0x6e0] sm:$0xff]
  %v243 = vld [vmem:[%s1 + $0x6e8] sm:$0xff]
  %v244 = vld [vmem:[%s1 + $0x6f0] sm:$0xff]
  %v245 = vld [vmem:[%s1 + $0x6f8] sm:$0xff]
  %v246 = vld [vmem:[%s1 + $0x700] sm:$0xff]
  %v247 = vld [vmem:[%s1 + $0x708] sm:$0xff]
  %v248 = vld [vmem:[%s1 + $0x710] sm:$0xff]
  %v249 = vld [vmem:[%s1 + $0x718] sm:$0xff]
  %v250 = vld [vmem:[%s1 + $0x720] sm:$0xff]
  %v251 = vld [vmem:[%s1 + $0x728] sm:$0xff]
  %v252 = vld [vmem:[%s1 + $0x730] sm:$0xff]
  %v253 = vld [vmem:[%s1 + $0x738] sm:$0xff]
  %v254 = vld [vmem:[%s1 + $0x740] sm:$0xff]
  %v255 = vld [vmem:[%s1 + $0x748] sm:$0xff]
  %v256 = vld [vmem:[%s1 + $0x750] sm:$0xff]
  %v257 = vld [vmem:[%s1 + $0x758] sm:$0xff]
  %v258 = vld [vmem:[%s1 + $0x760] sm:$0xff]
  %v259 = vld [vmem:[%s1 + $0x768] sm:$0xff]
  %v260 = vld [vmem:[%s1 + $0x770] sm:$0xff]
  %v261 = vld [vmem:[%s1 + $0x778] sm:$0xff]
  %v262 = vld [vmem:[%s1 + $0x780] sm:$0xff]
  %v263 = vld [vmem:[%s1 + $0x788] sm:$0xff]
  %v264 = vld [vmem:[%s1 + $0x790] sm:$0xff]
  %v265 = vld [vmem:[%s1 + $0x798] sm:$0xff]
  %v266 = vld [vmem:[%s1 + $0x7a0] sm:$0xff]
  %v267 = vld [vmem:[%s1 + $0x7a8] sm:$0xff]
  %v268 = vld [vmem:[%s1 + $0x7b0] sm:$0xff]
  %v269 = vld [vmem:[%s1 + $0x7b8] sm:$0xff]
  %v270 = vld [vmem:[%s1 + $0x7c0] sm:$0xff]
  %v271 = vld [vmem:[%s1 + $0x7c8] sm:$0xff]
  %v272 = vld [vmem:[%s1 + $0x7d0] sm:$0xff]
  %v273 = vld [vmem:[%s1 + $0x7d8] sm:$0xff]
  %v274 = vld [vmem:[%s1 + $0x7e0] sm:$0xff]
  %v275 = vld [vmem:[%s1 + $0x7e8] sm:$0xff]
  %v276 = vld [vmem:[%s1 + $0x7f0] sm:$0xff]
  %v277 = vld [vmem:[%s1 + $0x7f8] sm:$0xff]
  %v278 = vld [vmem:[%s1 + $0x800] sm:$0xff]
  %v279 = vld [vmem:[%s1 + $0x808] sm:$0xff]
  %v280 = vld [vmem:[%s1 + $0x810] sm:$0xff]
  %v281 = vld [vmem:[%s1 + $0x818] sm:$0xff]
  %v282 = vld [vmem:[%s1 + $0x820] sm:$0xff]
  %v283 = vld [vmem:[%s1 + $0x828] sm:$0xff]
  %v284 = vld [vmem:[%s1 + $0x830] sm:$0xff]
  %v285 = vld [vmem:[%s1 + $0x838] sm:$0xff]
  %v286 = vld [vmem:[%s1 + $0x840] sm:$0xff]
  %v287 = vld [vmem:[%s1 + $0x848] sm:$0xff]
  %v288 = vld [vmem:[%s1 + $0x850] sm:$0xff]
  %v289 = vld [vmem:[%s1 + $0x858] sm:$0xff]
  %v290 = vld [vmem:[%s1 + $0x860] sm:$0xff]
  %v291 = vld [vmem:[%s1 + $0x868] sm:$0xff]
  %v292 = vld [vmem:[%s1 + $0x870] sm:$0xff]
  %v293 = vld [vmem:[%s1 + $0x878] sm:$0xff]
  %v294 = vld [vmem:[%s1 + $0x880] sm:$0xff]
  %v295 = vld [vmem:[%s1 + $0x888] sm:$0xff]
  %v296 = vld [vmem:[%s1 + $0x890] sm:$0xff]
  %v297 = vld [vmem:[%s1 + $0x898] sm:$0xff]
  %v298 = vld [vmem:[%s1 + $0x8a0] sm:$0xff]
  %v299 = vld [vmem:[%s1 + $0x8a8] sm:$0xff]
  %v300 = vld [vmem:[%s1 + $0x8b0] sm:$0xff]
  %v301 = vld [vmem:[%s1 + $0x8b8] sm:$0xff]
  %v302 = vld [vmem:[%s1 + $0x8c0] sm:$0xff]
  %v303 = vld [vmem:[%s1 + $0x8c8] sm:$0xff]
  %v304 = vld [vmem:[%s1 + $0x8d0] sm:$0xff]
  %v305 = vld [vmem:[%s1 + $0x8d8] sm:$0xff]
  %v306 = vld [vmem:[%s1 + $0x8e0] sm:$0xff]
  %v307 = vld [vmem:[%s1 + $0x8e8] sm:$0xff]
  %v308 = vld [vmem:[%s1 + $0x8f0] sm:$0xff]
  %v309 = vld [vmem:[%s1 + $0x8f8] sm:$0xff]
  %v310 = vld [vmem:[%s1 + $0x900] sm:$0xff]
  %v311 = vld [vmem:[%s1 + $0x908] sm:$0xff]
  %v312 = vld [vmem:[%s1 + $0x910] sm:$0xff]
  %v313 = vld [vmem:[%s1 + $0x918] sm:$0xff]
  %v314 = vld [vmem:[%s1 + $0x920] sm:$0xff]
  %v315 = vld [vmem:[%s1 + $0x928] sm:$0xff]
  %v316 = vld [vmem:[%s1 + $0x930] sm:$0xff]
  %v317 = vld [vmem:[%s1 + $0x938] sm:$0xff]
  %v318 = vld [vmem:[%s1 + $0x940] sm:$0xff]
  %v319 = vld [vmem:[%s1 + $0x948] sm:$0xff]
  %v320 = vld [vmem:[%s1 + $0x950] sm:$0xff]
  %v321 = vld [vmem:[%s1 + $0x958] sm:$0xff]
  %v322 = vld [vmem:[%s1 + $0x960] sm:$0xff]
  %v323 = vld [vmem:[%s1 + $0x968] sm:$0xff]
  %v324 = vld [vmem:[%s1 + $0x970] sm:$0xff]
  %v325 = vld [vmem:[%s1 + $0x978] sm:$0xff]
  %v326 = vld [vmem:[%s1 + $0x980] sm:$0xff]
  %v327 = vld [vmem:[%s1 + $0x988] sm:$0xff]
  %v328 = vld [vmem:[%s1 + $0x990] sm:$0xff]
  %v329 = vld [vmem:[%s1 + $0x998] sm:$0xff]
  %v330 = vld [vmem:[%s1 + $0x9a0] sm:$0xff]
  %v331 = vld [vmem:[%s1 + $0x9a8] sm:$0xff]
  %v332 = vld [vmem:[%s1 + $0x9b0] sm:$0xff]
  %v333 = vld [vmem:[%s1 + $0x9b8] sm:$0xff]
  %v334 = vld [vmem:[%s1 + $0x9c0] sm:$0xff]
  %v335 = vld [vmem:[%s1 + $0x9c8] sm:$0xff]
  %v336 = vld [vmem:[%s1 + $0x9d0] sm:$0xff]
  %v337 = vld [vmem:[%s1 + $0x9d8] sm:$0xff]
  %v338 = vld [vmem:[%s1 + $0x9e0] sm:$0xff]
  %v339 = vld [vmem:[%s1 + $0x9e8] sm:$0xff]
  %v340 = vld [vmem:[%s1 + $0x9f0] sm:$0xff]
  %v341 = vld [vmem:[%s1 + $0x9f8] sm:$0xff]
  %v342 = vld [vmem:[%s1 + $0xa00] sm:$0xff]
  %v343 = vld [vmem:[%s1 + $0xa08] sm:$0xff]
  %v344 = vld [vmem:[%s1 + $0xa10] sm:$0xff]
  %v345 = vld [vmem:[%s1 + $0xa18] sm:$0xff]
  %v346 = vld [vmem:[%s1 + $0xa20] sm:$0xff]
  %v347 = vld [vmem:[%s1 + $0xa28] sm:$0xff]
  %v348 = vld [vmem:[%s1 + $0xa30] sm:$0xff]
  %v349 = vld [vmem:[%s1 + $0xa38] sm:$0xff]
  %v350 = vld [vmem:[%s1 + $0xa40] sm:$0xff]
  %v351 = vld [vmem:[%s1 + $0xa48] sm:$0xff]
  %v352 = vld [vmem:[%s1 + $0xa50] sm:$0xff]
  %v353 = vld [vmem:[%s1 + $0xa58] sm:$0xff]
  %v354 = vld [vmem:[%s1 + $0xa60] sm:$0xff]
  %v355 = vld [vmem:[%s1 + $0xa68] sm:$0xff]
  %v356 = vld [vmem:[%s1 + $0xa70] sm:$0xff]
  %v357 = vld [vmem:[%s1 + $0xa78] sm:$0xff]
  %v358 = vld [vmem:[%s1 + $0xa80] sm:$0xff]
  %v359 = vld [vmem:[%s1 + $0xa88] sm:$0xff]
  %v360 = vld [vmem:[%s1 + $0xa90] sm:$0xff]
  %v361 = vld [vmem:[%s1 + $0xa98] sm:$0xff]
  %v362 = vld [vmem:[%s1 + $0xaa0] sm:$0xff]
  %v363 = vld [vmem:[%s1 + $0xaa8] sm:$0xff]
  %v364 = vld [vmem:[%s1 + $0xab0] sm:$0xff]
  %v365 = vld [vmem:[%s1 + $0xab8] sm:$0xff]
  %v366 = vld [vmem:[%s1 + $0xac0] sm:$0xff]
  %v367 = vld [vmem:[%s1 + $0xac8] sm:$0xff]
  %v368 = vld [vmem:[%s1 + $0xad0] sm:$0xff]
  %v369 = vld [vmem:[%s1 + $0xad8] sm:$0xff]
  %v370 = vld [vmem:[%s1 + $0xae0] sm:$0xff]
  %v371 = vld [vmem:[%s1 + $0xae8] sm:$0xff]
  %v372 = vld [vmem:[%s1 + $0xaf0] sm:$0xff]
  %v373 = vld [vmem:[%s1 + $0xaf8] sm:$0xff]
  %v374 = vld [vmem:[%s1 + $0xb00] sm:$0xff]
  %v375 = vld [vmem:[%s1 + $0xb08] sm:$0xff]
  %v376 = vld [vmem:[%s1 + $0xb10] sm:$0xff]
  %v377 = vld [vmem:[%s1 + $0xb18] sm:$0xff]
  %v378 = vld [vmem:[%s1 + $0xb20] sm:$0xff]
  %v379 = vld [vmem:[%s1 + $0xb28] sm:$0xff]
  %v380 = vld [vmem:[%s1 + $0xb30] sm:$0xff]
  %v381 = vld [vmem:[%s1 + $0xb38] sm:$0xff]
  %v382 = vld [vmem:[%s1 + $0xb40] sm:$0xff]
  %v383 = vld [vmem:[%s1 + $0xb48] sm:$0xff]
  %v384 = vld [vmem:[%s1 + $0xb50] sm:$0xff]
  %v385 = vld [vmem:[%s1 + $0xb58] sm:$0xff]
  %v386 = vld [vmem:[%s1 + $0xb60] sm:$0xff]
  %v387 = vld [vmem:[%s1 + $0xb68] sm:$0xff]
  %v388 = vld [vmem:[%s1 + $0xb70] sm:$0xff]
  %v389 = vld [vmem:[%s1 + $0xb78] sm:$0xff]
  %v390 = vld [vmem:[%s1 + $0xb80] sm:$0xff]
  %v391 = vld [vmem:[%s1 + $0xb88] sm:$0xff]
  %v392 = vld [vmem:[%s1 + $0xb90] sm:$0xff]
  %v393 = vld [vmem:[%s1 + $0xb98] sm:$0xff]
  %v394 = vld [vmem:[%s1 + $0xba0] sm:$0xff]
  %v395 = vld [vmem:[%s1 + $0xba8] sm:$0xff]
  %v396 = vld [vmem:[%s1 + $0xbb0] sm:$0xff]
  %v397 = vld [vmem:[%s1 + $0xbb8] sm:$0xff]
  %v398 = vld [vmem:[%s1 + $0xbc0] sm:$0xff]
  %v399 = vld [vmem:[%s1 + $0xbc8] sm:$0xff]
  %v400 = vld [vmem:[%s1 + $0xbd0] sm:$0xff]
  %v401 = vld [vmem:[%s1 + $0xbd8] sm:$0xff]
  %v402 = vld [vmem:[%s1 + $0xbe0] sm:$0xff]
  %v403 = vld [vmem:[%s1 + $0xbe8] sm:$0xff]
  %v404 = vld [vmem:[%s1 + $0xbf0] sm:$0xff]
  %v405 = vld [vmem:[%s1 + $0xbf8] sm:$0xff]
  %v406 = vld [vmem:[%s1 + $0xc00] sm:$0xff]
  %v407 = vld [vmem:[%s1 + $0xc08] sm:$0xff]
  %v408 = vld [vmem:[%s1 + $0xc10] sm:$0xff]
  %v409 = vld [vmem:[%s1 + $0xc18] sm:$0xff]
  %v410 = vld [vmem:[%s1 + $0xc20] sm:$0xff]
  %v411 = vld [vmem:[%s1 + $0xc28] sm:$0xff]
  %v412 = vld [vmem:[%s1 + $0xc30] sm:$0xff]
  %v413 = vld [vmem:[%s1 + $0xc38] sm:$0xff]
  %v414 = vld [vmem:[%s1 + $0xc40] sm:$0xff]
  %v415 = vld [vmem:[%s1 + $0xc48] sm:$0xff]
  %v416 = vld [vmem:[%s1 + $0xc50] sm:$0xff]
  %v417 = vld [vmem:[%s1 + $0xc58] sm:$0xff]
  %v418 = vld [vmem:[%s1 + $0xc60] sm:$0xff]
  %v419 = vld [vmem:[%s1 + $0xc68] sm:$0xff]
  %v420 = vld [vmem:[%s1 + $0xc70] sm:$0xff]
  %v421 = vld [vmem:[%s1 + $0xc78] sm:$0xff]
  %v422 = vld [vmem:[%s1 + $0xc80] sm:$0xff]
  %v423 = vld [vmem:[%s1 + $0xc88] sm:$0xff]
  %v424 = vld [vmem:[%s1 + $0xc90] sm:$0xff]
  %v425 = vld [vmem:[%s1 + $0xc98] sm:$0xff]
  %v426 = vld [vmem:[%s1 + $0xca0] sm:$0xff]
  %v427 = vld [vmem:[%s1 + $0xca8] sm:$0xff]
  %v428 = vld [vmem:[%s1 + $0xcb0] sm:$0xff]
  %v429 = vld [vmem:[%s1 + $0xcb8] sm:$0xff]
  %v430 = vld [vmem:[%s1 + $0xcc0] sm:$0xff]
  %v431 = vld [vmem:[%s1 + $0xcc8] sm:$0xff]
  %v432 = vld [vmem:[%s1 + $0xcd0] sm:$0xff]
  %v433 = vld [vmem:[%s1 + $0xcd8] sm:$0xff]
  %v434 = vld [vmem:[%s1 + $0xce0] sm:$0xff]
  %v435 = vld [vmem:[%s1 + $0xce8] sm:$0xff]
  %v436 = vld [vmem:[%s1 + $0xcf0] sm:$0xff]
  %v437 = vld [vmem:[%s1 + $0xcf8] sm:$0xff]
  %v438 = vld [vmem:[%s1 + $0xd00] sm:$0xff]
  %v439 = vld [vmem:[%s1 + $0xd08] sm:$0xff]
  %v440 = vld [vmem:[%s1 + $0xd10] sm:$0xff]
  %v441 = vld [vmem:[%s1 + $0xd18] sm:$0xff]
  %v442 = vld [vmem:[%s1 + $0xd20] sm:$0xff]
  %v443 = vld [vmem:[%s1 + $0xd28] sm:$0xff]
  %v444 = vld [vmem:[%s1 + $0xd30] sm:$0xff]
  %v445 = vld [vmem:[%s1 + $0xd38] sm:$0xff]
  %v446 = vld [vmem:[%s1 + $0xd40] sm:$0xff]
  %v447 = vld [vmem:[%s1 + $0xd48] sm:$0xff]
  %v448 = vld [vmem:[%s1 + $0xd50] sm:$0xff]
  %v449 = vld [vmem:[%s1 + $0xd58] sm:$0xff]
  %v450 = vld [vmem:[%s1 + $0xd60] sm:$0xff]
  %v451 = vld [vmem:[%s1 + $0xd68] sm:$0xff]
  %v452 = vld [vmem:[%s1 + $0xd70] sm:$0xff]
  %v453 = vld [vmem:[%s1 + $0xd78] sm:$0xff]
  %v454 = vld [vmem:[%s1 + $0xd80] sm:$0xff]
  %v455 = vld [vmem:[%s1 + $0xd88] sm:$0xff]
  %v456 = vld [vmem:[%s1 + $0xd90] sm:$0xff]
  %v457 = vld [vmem:[%s1 + $0xd98] sm:$0xff]
  %v458 = vld [vmem:[%s1 + $0xda0] sm:$0xff]
  %v459 = vld [vmem:[%s1 + $0xda8] sm:$0xff]
  %v460 = vld [vmem:[%s1 + $0xdb0] sm:$0xff]
  %v461 = vld [vmem:[%s1 + $0xdb8] sm:$0xff]
  %v462 = vld [vmem:[%s1 + $0xdc0] sm:$0xff]
  %v463 = vld [vmem:[%s1 + $0xdc8] sm:$0xff]
  %v464 = vld [vmem:[%s1 + $0xdd0] sm:$0xff]
  %v465 = vld [vmem:[%s1 + $0xdd8] sm:$0xff]
  %v466 = vld [vmem:[%s1 + $0xde0] sm:$0xff]
  %v467 = vld [vmem:[%s1 + $0xde8] sm:$0xff]
  %v468 = vld [vmem:[%s1 + $0xdf0] sm:$0xff]
  %v469 = vld [vmem:[%s1 + $0xdf8] sm:$0xff]
  %v470 = vld [vmem:[%s1 + $0xe00] sm:$0xff]
  %v471 = vld [vmem:[%s1 + $0xe08] sm:$0xff]
  %v472 = vld [vmem:[%s1 + $0xe10] sm:$0xff]
  %v473 = vld [vmem:[%s1 + $0xe18] sm:$0xff]
  %v474 = vld [vmem:[%s1 + $0xe20] sm:$0xff]
  %v475 = vld [vmem:[%s1 + $0xe28] sm:$0xff]
  %v476 = vld [vmem:[%s1 + $0xe30] sm:$0xff]
  %v477 = vld [vmem:[%s1 + $0xe38] sm:$0xff]
  %v478 = vld [vmem:[%s1 + $0xe40] sm:$0xff]
  %v479 = vld [vmem:[%s1 + $0xe48] sm:$0xff]
  %v480 = vld [vmem:[%s1 + $0xe50] sm:$0xff]
  %v481 = vld [vmem:[%s1 + $0xe58] sm:$0xff]
  %v482 = vld [vmem:[%s1 + $0xe60] sm:$0xff]
  %v483 = vld [vmem:[%s1 + $0xe68] sm:$0xff]
  %v484 = vld [vmem:[%s1 + $0xe70] sm:$0xff]
  %v485 = vld [vmem:[%s1 + $0xe78] sm:$0xff]
  %v486 = vld [vmem:[%s1 + $0xe80] sm:$0xff]
  %v487 = vld [vmem:[%s1 + $0xe88] sm:$0xff]
  %v488 = vld [vmem:[%s1 + $0xe90] sm:$0xff]
  %v489 = vld [vmem:[%s1 + $0xe98] sm:$0xff]
  %v490 = vld [vmem:[%s1 + $0xea0] sm:$0xff]
  %v491 = vld [vmem:[%s1 + $0xea8] sm:$0xff]
  %v492 = vld [vmem:[%s1 + $0xeb0] sm:$0xff]
  %v493 = vld [vmem:[%s1 + $0xeb8] sm:$0xff]
  %v494 = vld [vmem:[%s1 + $0xec0] sm:$0xff]
  %v495 = vld [vmem:[%s1 + $0xec8] sm:$0xff]
  %v496 = vld [vmem:[%s1 + $0xed0] sm:$0xff]
  %v497 = vld [vmem:[%s1 + $0xed8] sm:$0xff]
  %v498 = vld [vmem:[%s1 + $0xee0] sm:$0xff]
  %v499 = vld [vmem:[%s1 + $0xee8] sm:$0xff]
  %v500 = vld [vmem:[%s1 + $0xef0] sm:$0xff]
  %v501 = vld [vmem:[%s1 + $0xef8] sm:$0xff]
  %v502 = vld [vmem:[%s1 + $0xf00] sm:$0xff]
  %v503 = vld [vmem:[%s1 + $0xf08] sm:$0xff]
  %v504 = vld [vmem:[%s1 + $0xf10] sm:$0xff]
  %v505 = vld [vmem:[%s1 + $0xf18] sm:$0xff]
  %v506 = vld [vmem:[%s1 + $0xf20] sm:$0xff]
  %v507 = vld [vmem:[%s1 + $0xf28] sm:$0xff]
  %v508 = vld [vmem:[%s1 + $0xf30] sm:$0xff]
  %v509 = vld [vmem:[%s1 + $0xf38] sm:$0xff]
  %v510 = vld [vmem:[%s1 + $0xf40] sm:$0xff]
  %v511 = vld [vmem:[%s1 + $0xf48] sm:$0xff]
  %v512 = vld [vmem:[%s1 + $0xf50] sm:$0xff]
  %v513 = vld [vmem:[%s1 + $0xf58] sm:$0xff]
  %v514 = vld [vmem:[%s1 + $0xf60] sm:$0xff]
  %v515 = vld [vmem:[%s1 + $0xf68] sm:$0xff]
  %v516 = vld [vmem:[%s1 + $0xf70] sm:$0xff]
  %v517 = vld [vmem:[%s1 + $0xf78] sm:$0xff]
  %v518 = vld [vmem:[%s1 + $0xf80] sm:$0xff]
  %v519 = vld [vmem:[%s1 + $0xf88] sm:$0xff]
  %v520 = vld [vmem:[%s1 + $0xf90] sm:$0xff]
  %v521 = vld [vmem:[%s1 + $0xf98] sm:$0xff]
  %v522 = vld [vmem:[%s1 + $0xfa0] sm:$0xff]
  %v523 = vld [vmem:[%s1 + $0xfa8] sm:$0xff]
  %v524 = vld [vmem:[%s1 + $0xfb0] sm:$0xff]
  %v525 = vld [vmem:[%s1 + $0xfb8] sm:$0xff]
  %v526 = vld [vmem:[%s1 + $0xfc0] sm:$0xff]
  %v527 = vld [vmem:[%s1 + $0xfc8] sm:$0xff]
  %v528 = vld [vmem:[%s1 + $0xfd0] sm:$0xff]
  %v529 = vld [vmem:[%s1 + $0xfd8] sm:$0xff]
  %v530 = vld [vmem:[%s1 + $0xfe0] sm:$0xff]
  %v531 = vld [vmem:[%s1 + $0xfe8] sm:$0xff]
  %v532 = vld [vmem:[%s1 + $0xff0] sm:$0xff]
  %v533 = vld [vmem:[%s1 + $0xff8] sm:$0xff]
  %v534 = vld [vmem:[%s1 + $0x1000] sm:$0xff]
  %v535 = vld [vmem:[%s1 + $0x1008] sm:$0xff]
  %v536 = vld [vmem:[%s1 + $0x1010] sm:$0xff]
  %v537 = vld [vmem:[%s1 + $0x1018] sm:$0xff]
  %v538 = vld [vmem:[%s1 + $0x1020] sm:$0xff]
  %v539 = vld [vmem:[%s1 + $0x1028] sm:$0xff]
  %v540 = vld [vmem:[%s1 + $0x1030] sm:$0xff]
  %v541 = vld [vmem:[%s1 + $0x1038] sm:$0xff]
  %v542 = vld [vmem:[%s1 + $0x1040] sm:$0xff]
  %v543 = vld [vmem:[%s1 + $0x1048] sm:$0xff]
  %v544 = vld [vmem:[%s1 + $0x1050] sm:$0xff]
  %v545 = vld [vmem:[%s1 + $0x1058] sm:$0xff]
  %v546 = vld [vmem:[%s1 + $0x1060] sm:$0xff]
  %v547 = vld [vmem:[%s1 + $0x1068] sm:$0xff]
  %v548 = vld [vmem:[%s1 + $0x1070] sm:$0xff]
  %v549 = vld [vmem:[%s1 + $0x1078] sm:$0xff]
  %v550 = vld [vmem:[%s1 + $0x1080] sm:$0xff]
  %v551 = vld [vmem:[%s1 + $0x1088] sm:$0xff]
  %v552 = vld [vmem:[%s1 + $0x1090] sm:$0xff]
  %v553 = vld [vmem:[%s1 + $0x1098] sm:$0xff]
  %v554 = vld [vmem:[%s1 + $0x10a0] sm:$0xff]
  %v555 = vld [vmem:[%s1 + $0x10a8] sm:$0xff]
  %v556 = vld [vmem:[%s1 + $0x10b0] sm:$0xff]
  %v557 = vld [vmem:[%s1 + $0x10b8] sm:$0xff]
  %v558 = vld [vmem:[%s1 + $0x10c0] sm:$0xff]
  %v559 = vld [vmem:[%s1 + $0x10c8] sm:$0xff]
  %v560 = vld [vmem:[%s1 + $0x10d0] sm:$0xff]
  %v561 = vld [vmem:[%s1 + $0x10d8] sm:$0xff]
  %v562 = vld [vmem:[%s1 + $0x10e0] sm:$0xff]
  %v563 = vld [vmem:[%s1 + $0x10e8] sm:$0xff]
  %v564 = vld [vmem:[%s1 + $0x10f0] sm:$0xff]
  %v565 = vld [vmem:[%s1 + $0x10f8] sm:$0xff]
  %v566 = vld [vmem:[%s1 + $0x1100] sm:$0xff]
  %v567 = vld [vmem:[%s1 + $0x1108] sm:$0xff]
  %v568 = vld [vmem:[%s1 + $0x1110] sm:$0xff]
  %v569 = vld [vmem:[%s1 + $0x1118] sm:$0xff]
  %v570 = vld [vmem:[%s1 + $0x1120] sm:$0xff]
  %v571 = vld [vmem:[%s1 + $0x1128] sm:$0xff]
  %v572 = vld [vmem:[%s1 + $0x1130] sm:$0xff]
  %v573 = vld [vmem:[%s1 + $0x1138] sm:$0xff]
  %v574 = vld [vmem:[%s1 + $0x1140] sm:$0xff]
  %v575 = vld [vmem:[%s1 + $0x1148] sm:$0xff]
  %v576 = vld [vmem:[%s1 + $0x1150] sm:$0xff]
  %v577 = vld [vmem:[%s1 + $0x1158] sm:$0xff]
  %v578 = vld [vmem:[%s1 + $0x1160] sm:$0xff]
  %v579 = vld [vmem:[%s1 + $0x1168] sm:$0xff]
  %v580 = vld [vmem:[%s1 + $0x1170] sm:$0xff]
  %v581 = vld [vmem:[%s1 + $0x1178] sm:$0xff]
  %v582 = vld [vmem:[%s1 + $0x1180] sm:$0xff]
  %v583 = vld [vmem:[%s1 + $0x1188] sm:$0xff]
  %v584 = vld [vmem:[%s1 + $0x1190] sm:$0xff]
  %v585 = vld [vmem:[%s1 + $0x1198] sm:$0xff]
  %v586 = vld [vmem:[%s1 + $0x11a0] sm:$0xff]
  %v587 = vld [vmem:[%s1 + $0x11a8] sm:$0xff]
  %v588 = vld [vmem:[%s1 + $0x11b0] sm:$0xff]
  %v589 = vld [vmem:[%s1 + $0x11b8] sm:$0xff]
  %v590 = vld [vmem:[%s1 + $0x11c0] sm:$0xff]
  %v591 = vld [vmem:[%s1 + $0x11c8] sm:$0xff]
  %v592 = vld [vmem:[%s1 + $0x11d0] sm:$0xff]
  %v593 = vld [vmem:[%s1 + $0x11d8] sm:$0xff]
  %v594 = vld [vmem:[%s1 + $0x11e0] sm:$0xff]
  %v595 = vld [vmem:[%s1 + $0x11e8] sm:$0xff]
  %v596 = vld [vmem:[%s1 + $0x11f0] sm:$0xff]
  %v597 = vld [vmem:[%s1 + $0x11f8] sm:$0xff]
  %v598 = vld [vmem:[%s1 + $0x1200] sm:$0xff]
  %v599 = vld [vmem:[%s1 + $0x1208] sm:$0xff]
  %v600 = vld [vmem:[%s1 + $0x1210] sm:$0xff]
  %v601 = vld [vmem:[%s1 + $0x1218] sm:$0xff]
  %v602 = vld [vmem:[%s1 + $0x1220] sm:$0xff]
  %v603 = vld [vmem:[%s1 + $0x1228] sm:$0xff]
  %v604 = vld [vmem:[%s1 + $0x1230] sm:$0xff]
  %v605 = vld [vmem:[%s1 + $0x1238] sm:$0xff]
  %v606 = vld [vmem:[%s1 + $0x1240] sm:$0xff]
  %v607 = vld [vmem:[%s1 + $0x1248] sm:$0xff]
  %v608 = vld [vmem:[%s1 + $0x1250] sm:$0xff]
  %v609 = vld [vmem:[%s1 + $0x1258] sm:$0xff]
  %v610 = vld [vmem:[%s1 + $0x1260] sm:$0xff]
  %v611 = vld [vmem:[%s1 + $0x1268] sm:$0xff]
  %v612 = vld [vmem:[%s1 + $0x1270] sm:$0xff]
  %v613 = vld [vmem:[%s1 + $0x1278] sm:$0xff]
  %v614 = vld [vmem:[%s1 + $0x1280] sm:$0xff]
  %v615 = vld [vmem:[%s1 + $0x1288] sm:$0xff]
  %v616 = vld [vmem:[%s1 + $0x1290] sm:$0xff]
  %v617 = vld [vmem:[%s1 + $0x1298] sm:$0xff]
  %v618 = vld [vmem:[%s1 + $0x12a0] sm:$0xff]
  %v619 = vld [vmem:[%s1 + $0x12a8] sm:$0xff]
  %v620 = vld [vmem:[%s1 + $0x12b0] sm:$0xff]
  %v621 = vld [vmem:[%s1 + $0x12b8] sm:$0xff]
  %v622 = vld [vmem:[%s1 + $0x12c0] sm:$0xff]
  %v623 = vld [vmem:[%s1 + $0x12c8] sm:$0xff]
  %v624 = vld [vmem:[%s1 + $0x12d0] sm:$0xff]
  %v625 = vld [vmem:[%s1 + $0x12d8] sm:$0xff]
  %v626 = vld [vmem:[%s1 + $0x12e0] sm:$0xff]
  %v627 = vld [vmem:[%s1 + $0x12e8] sm:$0xff]
  %v628 = vld [vmem:[%s1 + $0x12f0] sm:$0xff]
  %v629 = vld [vmem:[%s1 + $0x12f8] sm:$0xff]
  %v630 = vld [vmem:[%s1 + $0x1300] sm:$0xff]
  %v631 = vld [vmem:[%s1 + $0x1308] sm:$0xff]
  %v632 = vld [vmem:[%s1 + $0x1310] sm:$0xff]
  %v633 = vld [vmem:[%s1 + $0x1318] sm:$0xff]
  %v634 = vld [vmem:[%s1 + $0x1320] sm:$0xff]
  %v635 = vld [vmem:[%s1 + $0x1328] sm:$0xff]
  %v636 = vld [vmem:[%s1 + $0x1330] sm:$0xff]
  %v637 = vld [vmem:[%s1 + $0x1338] sm:$0xff]
  %v638 = vld [vmem:[%s1 + $0x1340] sm:$0xff]
  %v639 = vld [vmem:[%s1 + $0x1348] sm:$0xff]
  %v640 = vld [vmem:[%s1 + $0x1350] sm:$0xff]
  %v641 = vld [vmem:[%s1 + $0x1358] sm:$0xff]
  %v642 = vld [vmem:[%s1 + $0x1360] sm:$0xff]
  %v643 = vld [vmem:[%s1 + $0x1368] sm:$0xff]
  %v644 = vld [vmem:[%s1 + $0x1370] sm:$0xff]
  %v645 = vld [vmem:[%s1 + $0x1378] sm:$0xff]
  %v646 = vld [vmem:[%s1 + $0x1380] sm:$0xff]
  %v647 = vld [vmem:[%s1 + $0x1388] sm:$0xff]
  %v648 = vld [vmem:[%s1 + $0x1390] sm:$0xff]
  %v649 = vld [vmem:[%s1 + $0x1398] sm:$0xff]
  %v650 = vld [vmem:[%s1 + $0x13a0] sm:$0xff]
  %v651 = vld [vmem:[%s1 + $0x13a8] sm:$0xff]
  %v652 = vld [vmem:[%s1 + $0x13b0] sm:$0xff]
  %v653 = vld [vmem:[%s1 + $0x13b8] sm:$0xff]
  %v654 = vld [vmem:[%s1 + $0x13c0] sm:$0xff]
  %v655 = vld [vmem:[%s1 + $0x13c8] sm:$0xff]
  %v656 = vld [vmem:[%s1 + $0x13d0] sm:$0xff]
  %v657 = vld [vmem:[%s1 + $0x13d8] sm:$0xff]
  %v658 = vld [vmem:[%s1 + $0x13e0] sm:$0xff]
  %v659 = vld [vmem:[%s1 + $0x13e8] sm:$0xff]
  %v660 = vld [vmem:[%s1 + $0x13f0] sm:$0xff]
  %v661 = vld [vmem:[%s1 + $0x13f8] sm:$0xff]
  %v662 = vld [vmem:[%s1 + $0x1400] sm:$0xff]
  %v663 = vld [vmem:[%s1 + $0x1408] sm:$0xff]
  %v664 = vld [vmem:[%s1 + $0x1410] sm:$0xff]
  %v665 = vld [vmem:[%s1 + $0x1418] sm:$0xff]
  %v666 = vld [vmem:[%s1 + $0x1420] sm:$0xff]
  %v667 = vld [vmem:[%s1 + $0x1428] sm:$0xff]
  %v668 = vld [vmem:[%s1 + $0x1430] sm:$0xff]
  %v669 = vld [vmem:[%s1 + $0x1438] sm:$0xff]
  %v670 = vld [vmem:[%s1 + $0x1440] sm:$0xff]
  %v671 = vld [vmem:[%s1 + $0x1448] sm:$0xff]
  %v672 = vld [vmem:[%s1 + $0x1450] sm:$0xff]
  %v673 = vld [vmem:[%s1 + $0x1458] sm:$0xff]
  %v674 = vld [vmem:[%s1 + $0x1460] sm:$0xff]
  %v675 = vld [vmem:[%s1 + $0x1468] sm:$0xff]
  %v676 = vld [vmem:[%s1 + $0x1470] sm:$0xff]
  %v677 = vld [vmem:[%s1 + $0x1478] sm:$0xff]
  %v678 = vld [vmem:[%s1 + $0x1480] sm:$0xff]
  %v679 = vld [vmem:[%s1 + $0x1488] sm:$0xff]
  %v680 = vld [vmem:[%s1 + $0x1490] sm:$0xff]
  %v681 = vld [vmem:[%s1 + $0x1498] sm:$0xff]
  %v682 = vld [vmem:[%s1 + $0x14a0] sm:$0xff]
  %v683 = vld [vmem:[%s1 + $0x14a8] sm:$0xff]
  %v684 = vld [vmem:[%s1 + $0x14b0] sm:$0xff]
  %v685 = vld [vmem:[%s1 + $0x14b8] sm:$0xff]
  %v686 = vld [vmem:[%s1 + $0x14c0] sm:$0xff]
  %v687 = vld [vmem:[%s1 + $0x14c8] sm:$0xff]
  %v688 = vld [vmem:[%s1 + $0x14d0] sm:$0xff]
  %v689 = vld [vmem:[%s1 + $0x14d8] sm:$0xff]
  %v690 = vld [vmem:[%s1 + $0x14e0] sm:$0xff]
  %v691 = vld [vmem:[%s1 + $0x14e8] sm:$0xff]
  %v692 = vld [vmem:[%s1 + $0x14f0] sm:$0xff]
  %v693 = vld [vmem:[%s1 + $0x14f8] sm:$0xff]
  %v694 = vld [vmem:[%s1 + $0x1500] sm:$0xff]
  %v695 = vld [vmem:[%s1 + $0x1508] sm:$0xff]
  %v696 = vld [vmem:[%s1 + $0x1510] sm:$0xff]
  %v697 = vld [vmem:[%s1 + $0x1518] sm:$0xff]
  %v698 = vld [vmem:[%s1 + $0x1520] sm:$0xff]
  %v699 = vld [vmem:[%s1 + $0x1528] sm:$0xff]
  %v700 = vld [vmem:[%s1 + $0x1530] sm:$0xff]
  %v701 = vld [vmem:[%s1 + $0x1538] sm:$0xff]
  %v702 = vld [vmem:[%s1 + $0x1540] sm:$0xff]
  %v703 = vld [vmem:[%s1 + $0x1548] sm:$0xff]
  %v704 = vld [vmem:[%s1 + $0x1550] sm:$0xff]
  %v705 = vld [vmem:[%s1 + $0x1558] sm:$0xff]
  %v706 = vld [vmem:[%s1 + $0x1560] sm:$0xff]
  %v707 = vld [vmem:[%s1 + $0x1568] sm:$0xff]
  %v708 = vld [vmem:[%s1 + $0x1570] sm:$0xff]
  %v709 = vld [vmem:[%s1 + $0x1578] sm:$0xff]
  %v710 = vld [vmem:[%s1 + $0x1580] sm:$0xff]
  %v711 = vld [vmem:[%s1 + $0x1588] sm:$0xff]
  %v712 = vld [vmem:[%s1 + $0x1590] sm:$0xff]
  %v713 = vld [vmem:[%s1 + $0x1598] sm:$0xff]
  %v714 = vld [vmem:[%s1 + $0x15a0] sm:$0xff]
  %v715 = vld [vmem:[%s1 + $0x15a8] sm:$0xff]
  %v716 = vld [vmem:[%s1 + $0x15b0] sm:$0xff]
  %v717 = vld [vmem:[%s1 + $0x15b8] sm:$0xff]
  %v718 = vld [vmem:[%s1 + $0x15c0] sm:$0xff]
  %v719 = vld [vmem:[%s1 + $0x15c8] sm:$0xff]
  %v720 = vld [vmem:[%s1 + $0x15d0] sm:$0xff]
  %v721 = vld [vmem:[%s1 + $0x15d8] sm:$0xff]
  %v722 = vld [vmem:[%s1 + $0x15e0] sm:$0xff]
  %v723 = vld [vmem:[%s1 + $0x15e8] sm:$0xff]
  %v724 = vld [vmem:[%s1 + $0x15f0] sm:$0xff]
  %v725 = vld [vmem:[%s1 + $0x15f8] sm:$0xff]
  %v726 = vld [vmem:[%s1 + $0x1600] sm:$0xff]
  %v727 = vld [vmem:[%s1 + $0x1608] sm:$0xff]
  %v728 = vld [vmem:[%s1 + $0x1610] sm:$0xff]
  %v729 = vld [vmem:[%s1 + $0x1618] sm:$0xff]
  %v730 = vld [vmem:[%s1 + $0x1620] sm:$0xff]
  %v731 = vld [vmem:[%s1 + $0x1628] sm:$0xff]
  %v732 = vld [vmem:[%s1 + $0x1630] sm:$0xff]
  %v733 = vld [vmem:[%s1 + $0x1638] sm:$0xff]
  %v734 = vld [vmem:[%s1 + $0x1640] sm:$0xff]
  %v735 = vld [vmem:[%s1 + $0x1648] sm:$0xff]
  %v736 = vld [vmem:[%s1 + $0x1650] sm:$0xff]
  %v737 = vld [vmem:[%s1 + $0x1658] sm:$0xff]
  %v738 = vld [vmem:[%s1 + $0x1660] sm:$0xff]
  %v739 = vld [vmem:[%s1 + $0x1668] sm:$0xff]
  %v740 = vld [vmem:[%s1 + $0x1670] sm:$0xff]
  %v741 = vld [vmem:[%s1 + $0x1678] sm:$0xff]
  %v742 = vld [vmem:[%s1 + $0x1680] sm:$0xff]
  %v743 = vld [vmem:[%s1 + $0x1688] sm:$0xff]
  %v744 = vld [vmem:[%s1 + $0x1690] sm:$0xff]
  %v745 = vld [vmem:[%s1 + $0x1698] sm:$0xff]
  %v746 = vld [vmem:[%s1 + $0x16a0] sm:$0xff]
  %v747 = vld [vmem:[%s1 + $0x16a8] sm:$0xff]
  %v748 = vld [vmem:[%s1 + $0x16b0] sm:$0xff]
  %v749 = vld [vmem:[%s1 + $0x16b8] sm:$0xff]
  %v750 = vld [vmem:[%s1 + $0x16c0] sm:$0xff]
  %v751 = vld [vmem:[%s1 + $0x16c8] sm:$0xff]
  %v752 = vld [vmem:[%s1 + $0x16d0] sm:$0xff]
  %v753 = vld [vmem:[%s1 + $0x16d8] sm:$0xff]
  %v754 = vld [vmem:[%s1 + $0x16e0] sm:$0xff]
  %v755 = vld [vmem:[%s1 + $0x16e8] sm:$0xff]
  %v756 = vld [vmem:[%s1 + $0x16f0] sm:$0xff]
  %v757 = vld [vmem:[%s1 + $0x16f8] sm:$0xff]
  %v758 = vld [vmem:[%s1 + $0x1700] sm:$0xff]
  %v759 = vld [vmem:[%s1 + $0x1708] sm:$0xff]
  %v760 = vld [vmem:[%s1 + $0x1710] sm:$0xff]
  %v761 = vld [vmem:[%s1 + $0x1718] sm:$0xff]
  %v762 = vld [vmem:[%s1 + $0x1720] sm:$0xff]
  %v763 = vld [vmem:[%s1 + $0x1728] sm:$0xff]
  %v764 = vld [vmem:[%s1 + $0x1730] sm:$0xff]
  %v765 = vld [vmem:[%s1 + $0x1738] sm:$0xff]
  %v766 = vld [vmem:[%s1 + $0x1740] sm:$0xff]
  %v767 = vld [vmem:[%s1 + $0x1748] sm:$0xff]
  %v768 = vld [vmem:[%s1 + $0x1750] sm:$0xff]
  %v769 = vld [vmem:[%s1 + $0x1758] sm:$0xff]
  %v770 = vld [vmem:[%s1 + $0x1760] sm:$0xff]
  %v771 = vld [vmem:[%s1 + $0x1768] sm:$0xff]
  %v772 = vld [vmem:[%s1 + $0x1770] sm:$0xff]
  %v773 = vld [vmem:[%s1 + $0x1778] sm:$0xff]
  %v774 = vld [vmem:[%s1 + $0x1780] sm:$0xff]
  %v775 = vld [vmem:[%s1 + $0x1788] sm:$0xff]
  %v776 = vld [vmem:[%s1 + $0x1790] sm:$0xff]
  %v777 = vld [vmem:[%s1 + $0x1798] sm:$0xff]
  %v778 = vld [vmem:[%s1 + $0x17a0] sm:$0xff]
  %v779 = vld [vmem:[%s1 + $0x17a8] sm:$0xff]
  %v780 = vld [vmem:[%s1 + $0x17b0] sm:$0xff]
  %v781 = vld [vmem:[%s1 + $0x17b8] sm:$0xff]
  %v782 = vld [vmem:[%s1 + $0x17c0] sm:$0xff]
  %v783 = vld [vmem:[%s1 + $0x17c8] sm:$0xff]
  %v784 = vld [vmem:[%s1 + $0x17d0] sm:$0xff]
  %v785 = vld [vmem:[%s1 + $0x17d8] sm:$0xff]
  %v786 = vld [vmem:[%s1 + $0x17e0] sm:$0xff]
  %v787 = vld [vmem:[%s1 + $0x17e8] sm:$0xff]
  %v788 = vld [vmem:[%s1 + $0x17f0] sm:$0xff]
  %v789 = vld [vmem:[%s1 + $0x17f8] sm:$0xff]
  %v790 = vld [vmem:[%s1 + $0x1800] sm:$0xff]
  %v791 = vld [vmem:[%s1 + $0x1808] sm:$0xff]
  %v792 = vld [vmem:[%s1 + $0x1810] sm:$0xff]
  %v793 = vld [vmem:[%s1 + $0x1818] sm:$0xff]
  %v794 = vld [vmem:[%s1 + $0x1820] sm:$0xff]
  %v795 = vld [vmem:[%s1 + $0x1828] sm:$0xff]
  %v796 = vld [vmem:[%s1 + $0x1830] sm:$0xff]
  %v797 = vld [vmem:[%s1 + $0x1838] sm:$0xff]
  %v798 = vld [vmem:[%s1 + $0x1840] sm:$0xff]
  %v799 = vld [vmem:[%s1 + $0x1848] sm:$0xff]
  %v800 = vld [vmem:[%s1 + $0x1850] sm:$0xff]
  %v801 = vld [vmem:[%s1 + $0x1858] sm:$0xff]
  %v802 = vld [vmem:[%s1 + $0x1860] sm:$0xff]
  %v803 = vld [vmem:[%s1 + $0x1868] sm:$0xff]
  %v804 = vld [vmem:[%s1 + $0x1870] sm:$0xff]
  %v805 = vld [vmem:[%s1 + $0x1878] sm:$0xff]
  %v806 = vld [vmem:[%s1 + $0x1880] sm:$0xff]
  %v807 = vld [vmem:[%s1 + $0x1888] sm:$0xff]
  %v808 = vld [vmem:[%s1 + $0x1890] sm:$0xff]
  %v809 = vld [vmem:[%s1 + $0x1898] sm:$0xff]
  %v810 = vld [vmem:[%s1 + $0x18a0] sm:$0xff]
  %v811 = vld [vmem:[%s1 + $0x18a8] sm:$0xff]
  %v812 = vld [vmem:[%s1 + $0x18b0] sm:$0xff]
  %v813 = vld [vmem:[%s1 + $0x18b8] sm:$0xff]
  %v814 = vld [vmem:[%s1 + $0x18c0] sm:$0xff]
  %v815 = vld [vmem:[%s1 + $0x18c8] sm:$0xff]
  %v816 = vld [vmem:[%s1 + $0x18d0] sm:$0xff]
  %v817 = vld [vmem:[%s1 + $0x18d8] sm:$0xff]
  %v818 = vld [vmem:[%s1 + $0x18e0] sm:$0xff]
  %v819 = vld [vmem:[%s1 + $0x18e8] sm:$0xff]
  %v820 = vld [vmem:[%s1 + $0x18f0] sm:$0xff]
  %v821 = vld [vmem:[%s1 + $0x18f8] sm:$0xff]
  %v822 = vld [vmem:[%s1 + $0x1900] sm:$0xff]
  %v823 = vld [vmem:[%s1 + $0x1908] sm:$0xff]
  %v824 = vld [vmem:[%s1 + $0x1910] sm:$0xff]
  %v825 = vld [vmem:[%s1 + $0x1918] sm:$0xff]
  %v826 = vld [vmem:[%s1 + $0x1920] sm:$0xff]
  %v827 = vld [vmem:[%s1 + $0x1928] sm:$0xff]
  %v828 = vld [vmem:[%s1 + $0x1930] sm:$0xff]
  %v829 = vld [vmem:[%s1 + $0x1938] sm:$0xff]
  %v830 = vld [vmem:[%s1 + $0x1940] sm:$0xff]
  %v831 = vld [vmem:[%s1 + $0x1948] sm:$0xff]
  %v832 = vld [vmem:[%s1 + $0x1950] sm:$0xff]
  %v833 = vld [vmem:[%s1 + $0x1958] sm:$0xff]
  %v834 = vld [vmem:[%s1 + $0x1960] sm:$0xff]
  %v835 = vld [vmem:[%s1 + $0x1968] sm:$0xff]
  %v836 = vld [vmem:[%s1 + $0x1970] sm:$0xff]
  %v837 = vld [vmem:[%s1 + $0x1978] sm:$0xff]
  %v838 = vld [vmem:[%s1 + $0x1980] sm:$0xff]
  %v839 = vld [vmem:[%s1 + $0x1988] sm:$0xff]
  %v840 = vld [vmem:[%s1 + $0x1990] sm:$0xff]
  %v841 = vld [vmem:[%s1 + $0x1998] sm:$0xff]
  %v842 = vld [vmem:[%s1 + $0x19a0] sm:$0xff]
  %v843 = vld [vmem:[%s1 + $0x19a8] sm:$0xff]
  %v844 = vld [vmem:[%s1 + $0x19b0] sm:$0xff]
  %v845 = vld [vmem:[%s1 + $0x19b8] sm:$0xff]
  %v846 = vld [vmem:[%s1 + $0x19c0] sm:$0xff]
  %v847 = vld [vmem:[%s1 + $0x19c8] sm:$0xff]
  %v848 = vld [vmem:[%s1 + $0x19d0] sm:$0xff]
  %v849 = vld [vmem:[%s1 + $0x19d8] sm:$0xff]
  %v850 = vld [vmem:[%s1 + $0x19e0] sm:$0xff]
  %v851 = vld [vmem:[%s1 + $0x19e8] sm:$0xff]
  %v852 = vld [vmem:[%s1 + $0x19f0] sm:$0xff]
  %v853 = vld [vmem:[%s1 + $0x19f8] sm:$0xff]
  %v854 = vld [vmem:[%s1 + $0x1a00] sm:$0xff]
  %v855 = vld [vmem:[%s1 + $0x1a08] sm:$0xff]
  %v856 = vld [vmem:[%s1 + $0x1a10] sm:$0xff]
  %v857 = vld [vmem:[%s1 + $0x1a18] sm:$0xff]
  %v858 = vld [vmem:[%s1 + $0x1a20] sm:$0xff]
  %v859 = vld [vmem:[%s1 + $0x1a28] sm:$0xff]
  %v860 = vld [vmem:[%s1 + $0x1a30] sm:$0xff]
  %v861 = vld [vmem:[%s1 + $0x1a38] sm:$0xff]
  %v862 = vld [vmem:[%s1 + $0x1a40] sm:$0xff]
  %v863 = vld [vmem:[%s1 + $0x1a48] sm:$0xff]
  %v864 = vld [vmem:[%s1 + $0x1a50] sm:$0xff]
  %v865 = vld [vmem:[%s1 + $0x1a58] sm:$0xff]
  %v866 = vld [vmem:[%s1 + $0x1a60] sm:$0xff]
  %v867 = vld [vmem:[%s1 + $0x1a68] sm:$0xff]
  %v868 = vld [vmem:[%s1 + $0x1a70] sm:$0xff]
  %v869 = vld [vmem:[%s1 + $0x1a78] sm:$0xff]
  %v870 = vld [vmem:[%s1 + $0x1a80] sm:$0xff]
  %v871 = vld [vmem:[%s1 + $0x1a88] sm:$0xff]
  %v872 = vld [vmem:[%s1 + $0x1a90] sm:$0xff]
  %v873 = vld [vmem:[%s1 + $0x1a98] sm:$0xff]
  %v874 = vld [vmem:[%s1 + $0x1aa0] sm:$0xff]
  %v875 = vld [vmem:[%s1 + $0x1aa8] sm:$0xff]
  %v876 = vld [vmem:[%s1 + $0x1ab0] sm:$0xff]
  %v877 = vld [vmem:[%s1 + $0x1ab8] sm:$0xff]
  %v878 = vld [vmem:[%s1 + $0x1ac0] sm:$0xff]
  %v879 = vld [vmem:[%s1 + $0x1ac8] sm:$0xff]
  %v880 = vld [vmem:[%s1 + $0x1ad0] sm:$0xff]
  %v881 = vld [vmem:[%s1 + $0x1ad8] sm:$0xff]
  %v882 = vld [vmem:[%s1 + $0x1ae0] sm:$0xff]
  %v883 = vld [vmem:[%s1 + $0x1ae8] sm:$0xff]
  %v884 = vld [vmem:[%s1 + $0x1af0] sm:$0xff]
  %v885 = vld [vmem:[%s1 + $0x1af8] sm:$0xff]
  %v886 = vld [vmem:[%s1 + $0x1b00] sm:$0xff]
  %v887 = vld [vmem:[%s1 + $0x1b08] sm:$0xff]
  %v888 = vld [vmem:[%s1 + $0x1b10] sm:$0xff]
  %v889 = vld [vmem:[%s1 + $0x1b18] sm:$0xff]
  %v890 = vld [vmem:[%s1 + $0x1b20] sm:$0xff]
  %v891 = vld [vmem:[%s1 + $0x1b28] sm:$0xff]
  %v892 = vld [vmem:[%s1 + $0x1b30] sm:$0xff]
  %v893 = vld [vmem:[%s1 + $0x1b38] sm:$0xff]
  %v894 = vld [vmem:[%s1 + $0x1b40] sm:$0xff]
  %v895 = vld [vmem:[%s1 + $0x1b48] sm:$0xff]
  %v896 = vld [vmem:[%s1 + $0x1b50] sm:$0xff]
  %v897 = vld [vmem:[%s1 + $0x1b58] sm:$0xff]
  %v898 = vld [vmem:[%s1 + $0x1b60] sm:$0xff]
  %v899 = vld [vmem:[%s1 + $0x1b68] sm:$0xff]
  %v900 = vld [vmem:[%s1 + $0x1b70] sm:$0xff]
  %v901 = vld [vmem:[%s1 + $0x1b78] sm:$0xff]
  %v902 = vld [vmem:[%s1 + $0x1b80] sm:$0xff]
  %v903 = vld [vmem:[%s1 + $0x1b88] sm:$0xff]
  %v904 = vld [vmem:[%s1 + $0x1b90] sm:$0xff]
  %v905 = vld [vmem:[%s1 + $0x1b98] sm:$0xff]
  %v906 = vld [vmem:[%s1 + $0x1ba0] sm:$0xff]
  %v907 = vld [vmem:[%s1 + $0x1ba8] sm:$0xff]
  %v908 = vld [vmem:[%s1 + $0x1bb0] sm:$0xff]
  %v909 = vld [vmem:[%s1 + $0x1bb8] sm:$0xff]
  %v910 = vld [vmem:[%s1 + $0x1bc0] sm:$0xff]
  %v911 = vld [vmem:[%s1 + $0x1bc8] sm:$0xff]
  %v912 = vld [vmem:[%s1 + $0x1bd0] sm:$0xff]
  %v913 = vld [vmem:[%s1 + $0x1bd8] sm:$0xff]
  %v914 = vld [vmem:[%s1 + $0x1be0] sm:$0xff]
  %v915 = vld [vmem:[%s1 + $0x1be8] sm:$0xff]
  %v916 = vld [vmem:[%s1 + $0x1bf0] sm:$0xff]
  %v917 = vld [vmem:[%s1 + $0x1bf8] sm:$0xff]
  %v918 = vld [vmem:[%s1 + $0x1c00] sm:$0xff]
  %v919 = vld [vmem:[%s1 + $0x1c08] sm:$0xff]
  %v920 = vld [vmem:[%s1 + $0x1c10] sm:$0xff]
  %v921 = vld [vmem:[%s1 + $0x1c18] sm:$0xff]
  %v922 = vld [vmem:[%s1 + $0x1c20] sm:$0xff]
  %v923 = vld [vmem:[%s1 + $0x1c28] sm:$0xff]
  %v924 = vld [vmem:[%s1 + $0x1c30] sm:$0xff]
  %v925 = vld [vmem:[%s1 + $0x1c38] sm:$0xff]
  %v926 = vld [vmem:[%s1 + $0x1c40] sm:$0xff]
  %v927 = vld [vmem:[%s1 + $0x1c48] sm:$0xff]
  %v928 = vld [vmem:[%s1 + $0x1c50] sm:$0xff]
  %v929 = vld [vmem:[%s1 + $0x1c58] sm:$0xff]
  %v930 = vld [vmem:[%s1 + $0x1c60] sm:$0xff]
  %v931 = vld [vmem:[%s1 + $0x1c68] sm:$0xff]
  %v932 = vld [vmem:[%s1 + $0x1c70] sm:$0xff]
  %v933 = vld [vmem:[%s1 + $0x1c78] sm:$0xff]
  %v934 = vld [vmem:[%s1 + $0x1c80] sm:$0xff]
  %v935 = vld [vmem:[%s1 + $0x1c88] sm:$0xff]
  %v936 = vld [vmem:[%s1 + $0x1c90] sm:$0xff]
  %v937 = vld [vmem:[%s1 + $0x1c98] sm:$0xff]
  %v938 = vld [vmem:[%s1 + $0x1ca0] sm:$0xff]
  %v939 = vld [vmem:[%s1 + $0x1ca8] sm:$0xff]
  %v940 = vld [vmem:[%s1 + $0x1cb0] sm:$0xff]
  %v941 = vld [vmem:[%s1 + $0x1cb8] sm:$0xff]
  %v942 = vld [vmem:[%s1 + $0x1cc0] sm:$0xff]
  %v943 = vld [vmem:[%s1 + $0x1cc8] sm:$0xff]
  %v944 = vld [vmem:[%s1 + $0x1cd0] sm:$0xff]
  %v945 = vld [vmem:[%s1 + $0x1cd8] sm:$0xff]
  %v946 = vld [vmem:[%s1 + $0x1ce0] sm:$0xff]
  %v947 = vld [vmem:[%s1 + $0x1ce8] sm:$0xff]
  %v948 = vld [vmem:[%s1 + $0x1cf0] sm:$0xff]
  %v949 = vld [vmem:[%s1 + $0x1cf8] sm:$0xff]
  %v950 = vld [vmem:[%s1 + $0x1d00] sm:$0xff]
  %v951 = vld [vmem:[%s1 + $0x1d08] sm:$0xff]
  %v952 = vld [vmem:[%s1 + $0x1d10] sm:$0xff]
  %v953 = vld [vmem:[%s1 + $0x1d18] sm:$0xff]
  %v954 = vld [vmem:[%s1 + $0x1d20] sm:$0xff]
  %v955 = vld [vmem:[%s1 + $0x1d28] sm:$0xff]
  %v956 = vld [vmem:[%s1 + $0x1d30] sm:$0xff]
  %v957 = vld [vmem:[%s1 + $0x1d38] sm:$0xff]
  %v958 = vld [vmem:[%s1 + $0x1d40] sm:$0xff]
  %v959 = vld [vmem:[%s1 + $0x1d48] sm:$0xff]
  %v960 = vld [vmem:[%s1 + $0x1d50] sm:$0xff]
  %v961 = vld [vmem:[%s1 + $0x1d58] sm:$0xff]
  %v962 = vld [vmem:[%s1 + $0x1d60] sm:$0xff]
  %v963 = vld [vmem:[%s1 + $0x1d68] sm:$0xff]
  %v964 = vld [vmem:[%s1 + $0x1d70] sm:$0xff]
  %v965 = vld [vmem:[%s1 + $0x1d78] sm:$0xff]
  %v966 = vld [vmem:[%s1 + $0x1d80] sm:$0xff]
  %v967 = vld [vmem:[%s1 + $0x1d88] sm:$0xff]
  %v968 = vld [vmem:[%s1 + $0x1d90] sm:$0xff]
  %v969 = vld [vmem:[%s1 + $0x1d98] sm:$0xff]
  %v970 = vld [vmem:[%s1 + $0x1da0] sm:$0xff]
  %v971 = vld [vmem:[%s1 + $0x1da8] sm:$0xff]
  %v972 = vld [vmem:[%s1 + $0x1db0] sm:$0xff]
  %v973 = vld [vmem:[%s1 + $0x1db8] sm:$0xff]
  %v974 = vld [vmem:[%s1 + $0x1dc0] sm:$0xff]
  %v975 = vld [vmem:[%s1 + $0x1dc8] sm:$0xff]
  %v976 = vld [vmem:[%s1 + $0x1dd0] sm:$0xff]
  %v977 = vld [vmem:[%s1 + $0x1dd8] sm:$0xff]
  %v978 = vld [vmem:[%s1 + $0x1de0] sm:$0xff]
  %v979 = vld [vmem:[%s1 + $0x1de8] sm:$0xff]
  %v980 = vld [vmem:[%s1 + $0x1df0] sm:$0xff]
  %v981 = vld [vmem:[%s1 + $0x1df8] sm:$0xff]
  %v982 = vld [vmem:[%s1 + $0x1e00] sm:$0xff]
  %v983 = vld [vmem:[%s1 + $0x1e08] sm:$0xff]
  %v984 = vld [vmem:[%s1 + $0x1e10] sm:$0xff]
  %v985 = vld [vmem:[%s1 + $0x1e18] sm:$0xff]
  %v986 = vld [vmem:[%s1 + $0x1e20] sm:$0xff]
  %v987 = vld [vmem:[%s1 + $0x1e28] sm:$0xff]
  %v988 = vld [vmem:[%s1 + $0x1e30] sm:$0xff]
  %v989 = vld [vmem:[%s1 + $0x1e38] sm:$0xff]
  %v990 = vld [vmem:[%s1 + $0x1e40] sm:$0xff]
  %v991 = vld [vmem:[%s1 + $0x1e48] sm:$0xff]
  %v992 = vld [vmem:[%s1 + $0x1e50] sm:$0xff]
  %v993 = vld [vmem:[%s1 + $0x1e58] sm:$0xff]
  %v994 = vld [vmem:[%s1 + $0x1e60] sm:$0xff]
  %v995 = vld [vmem:[%s1 + $0x1e68] sm:$0xff]
  %v996 = vld [vmem:[%s1 + $0x1e70] sm:$0xff]
  %v997 = vld [vmem:[%s1 + $0x1e78] sm:$0xff]
  %v998 = vld [vmem:[%s1 + $0x1e80] sm:$0xff]
  %v999 = vld [vmem:[%s1 + $0x1e88] sm:$0xff]
  %v1000 = vld [vmem:[%s1 + $0x1e90] sm:$0xff]
  %v1001 = vld [vmem:[%s1 + $0x1e98] sm:$0xff]
  %v1002 = vld [vmem:[%s1 + $0x1ea0] sm:$0xff]
  %v1003 = vld [vmem:[%s1 + $0x1ea8] sm:$0xff]
  %v1004 = vld [vmem:[%s1 + $0x1eb0] sm:$0xff]
  %v1005 = vld [vmem:[%s1 + $0x1eb8] sm:$0xff]
  %v1006 = vld [vmem:[%s1 + $0x1ec0] sm:$0xff]
  %v1007 = vld [vmem:[%s1 + $0x1ec8] sm:$0xff]
  %v1008 = vld [vmem:[%s1 + $0x1ed0] sm:$0xff]
  %v1009 = vld [vmem:[%s1 + $0x1ed8] sm:$0xff]
  %v1010 = vld [vmem:[%s1 + $0x1ee0] sm:$0xff]
  %v1011 = vld [vmem:[%s1 + $0x1ee8] sm:$0xff]
  %v1012 = vld [vmem:[%s1 + $0x1ef0] sm:$0xff]
  %v1013 = vld [vmem:[%s1 + $0x1ef8] sm:$0xff]
  %v1014 = vld [vmem:[%s1 + $0x1f00] sm:$0xff]
  %v1015 = vld [vmem:[%s1 + $0x1f08] sm:$0xff]
  %v1016 = vld [vmem:[%s1 + $0x1f10] sm:$0xff]
  %v1017 = vld [vmem:[%s1 + $0x1f18] sm:$0xff]
  %v1018 = vld [vmem:[%s1 + $0x1f20] sm:$0xff]
  %v1019 = vld [vmem:[%s1 + $0x1f28] sm:$0xff]
  %v1020 = vld [vmem:[%s1 + $0x1f30] sm:$0xff]
  %v1021 = vld [vmem:[%s1 + $0x1f38] sm:$0xff]
  %v1022 = vld [vmem:[%s1 + $0x1f40] sm:$0xff]
  %v1023 = vld [vmem:[%s1 + $0x1f48] sm:$0xff]
  %v1024 = vld [vmem:[%s1 + $0x1f50] sm:$0xff]
  %v1025 = vld [vmem:[%s1 + $0x1f58] sm:$0xff]
  %v1026 = vld [vmem:[%s1 + $0x1f60] sm:$0xff]
  %v1027 = vld [vmem:[%s1 + $0x1f68] sm:$0xff]
  %v1028 = vld [vmem:[%s1 + $0x1f70] sm:$0xff]
  %v1029 = vld [vmem:[%s1 + $0x1f78] sm:$0xff]
  %v1030 = vld [vmem:[%s1 + $0x1f80] sm:$0xff]
  %v1031 = vld [vmem:[%s1 + $0x1f88] sm:$0xff]
  %v1032 = vld [vmem:[%s1 + $0x1f90] sm:$0xff]
  %v1033 = vld [vmem:[%s1 + $0x1f98] sm:$0xff]
  %v1034 = vld [vmem:[%s1 + $0x1fa0] sm:$0xff]
  %v1035 = vld [vmem:[%s1 + $0x1fa8] sm:$0xff]
  %v1036 = vld [vmem:[%s1 + $0x1fb0] sm:$0xff]
  %v1037 = vld [vmem:[%s1 + $0x1fb8] sm:$0xff]
  %v1038 = vld [vmem:[%s1 + $0x1fc0] sm:$0xff]
  %v1039 = vld [vmem:[%s1 + $0x1fc8] sm:$0xff]
  %v1040 = vld [vmem:[%s1 + $0x1fd0] sm:$0xff]
  %v1041 = vld [vmem:[%s1 + $0x1fd8] sm:$0xff]
  %v1042 = vld [vmem:[%s1 + $0x1fe0] sm:$0xff]
  %v1043 = vld [vmem:[%s1 + $0x1fe8] sm:$0xff]
  %v1044 = vld [vmem:[%s1 + $0x1ff0] sm:$0xff]
  %v1045 = vld [vmem:[%s1 + $0x1ff8] sm:$0xff]
  %v1046 = vld [vmem:[%s2] sm:$0xff]
  %v1048 = vlaneseq
  %v1049 = vshrl.u32 %v1048, 7
  %v1050 = vsub.s32 0, %v1049
  %v1051 = vrot.slane %v1046, %v1050
  %v1052 = vlaneseq
  %v1053 = vshrl.u32 %v1052, 7
  %v1054 = vsub.s32 1, %v1053
  %v1055 = vrot.slane %v1046, %v1054
  %v1056 = vlaneseq
  %v1057 = vshrl.u32 %v1056, 7
  %v1058 = vsub.s32 2, %v1057
  %v1059 = vrot.slane %v1046, %v1058
  %v1060 = vlaneseq
  %v1061 = vshrl.u32 %v1060, 7
  %v1062 = vsub.s32 3, %v1061
  %v1063 = vrot.slane %v1046, %v1062
  %v1064 = vlaneseq
  %v1065 = vshrl.u32 %v1064, 7
  %v1066 = vsub.s32 4, %v1065
  %v1067 = vrot.slane %v1046, %v1066
  %v1068 = vlaneseq
  %v1069 = vshrl.u32 %v1068, 7
  %v1070 = vsub.s32 5, %v1069
  %v1071 = vrot.slane %v1046, %v1070
  %v1072 = vlaneseq
  %v1073 = vshrl.u32 %v1072, 7
  %v1074 = vsub.s32 6, %v1073
  %v1075 = vrot.slane %v1046, %v1074
  %v1076 = vlaneseq
  %v1077 = vshrl.u32 %v1076, 7
  %v1078 = vsub.s32 7, %v1077
  %v1079 = vrot.slane %v1046, %v1078
  %v1096 = vunpack.c.l.b16 %v14
  %v1097 = vunpack.c.h.b16 %v14
  %v1098 = vunpack.c.l.b16 %v15
  %v1099 = vunpack.c.h.b16 %v15
  %v1100 = vunpack.c.l.b16 %v16
  %v1101 = vunpack.c.h.b16 %v16
  %v1102 = vunpack.c.l.b16 %v17
  %v1103 = vunpack.c.h.b16 %v17
  %v1104 = vunpack.c.l.b16 %v18
  %v1105 = vunpack.c.h.b16 %v18
  %v1106 = vunpack.c.l.b16 %v19
  %v1107 = vunpack.c.h.b16 %v19
  %v1108 = vunpack.c.l.b16 %v20
  %v1109 = vunpack.c.h.b16 %v20
  %v1110 = vunpack.c.l.b16 %v21
  %v1111 = vunpack.c.h.b16 %v21
  %v1112 = vpack.c.b16 %v1096, %v1096
  %v1113 = vpack.c.b16 %v1097, %v1097
  %v1114 = vpack.c.b16 %v1098, %v1098
  %v1115 = vpack.c.b16 %v1099, %v1099
  %v1116 = vpack.c.b16 %v1100, %v1100
  %v1117 = vpack.c.b16 %v1101, %v1101
  %v1118 = vpack.c.b16 %v1102, %v1102
  %v1119 = vpack.c.b16 %v1103, %v1103
  %v1120 = vpack.c.b16 %v1104, %v1104
  %v1121 = vpack.c.b16 %v1105, %v1105
  %v1122 = vpack.c.b16 %v1106, %v1106
  %v1123 = vpack.c.b16 %v1107, %v1107
  %v1124 = vpack.c.b16 %v1108, %v1108
  %v1125 = vpack.c.b16 %v1109, %v1109
  %v1126 = vpack.c.b16 %v1110, %v1110
  %v1127 = vpack.c.b16 %v1111, %v1111
  %v2168 = vunpack.c.l.b16 %v22
  %v2169 = vunpack.c.h.b16 %v22
  %v2170 = vunpack.c.l.b16 %v23
  %v2171 = vunpack.c.h.b16 %v23
  %v2172 = vunpack.c.l.b16 %v24
  %v2173 = vunpack.c.h.b16 %v24
  %v2174 = vunpack.c.l.b16 %v25
  %v2175 = vunpack.c.h.b16 %v25
  %v2176 = vunpack.c.l.b16 %v26
  %v2177 = vunpack.c.h.b16 %v26
  %v2178 = vunpack.c.l.b16 %v27
  %v2179 = vunpack.c.h.b16 %v27
  %v2180 = vunpack.c.l.b16 %v28
  %v2181 = vunpack.c.h.b16 %v28
  %v2182 = vunpack.c.l.b16 %v29
  %v2183 = vunpack.c.h.b16 %v29
  %v2184 = vunpack.c.l.b16 %v30
  %v2185 = vunpack.c.h.b16 %v30
  %v2186 = vunpack.c.l.b16 %v31
  %v2187 = vunpack.c.h.b16 %v31
  %v2188 = vunpack.c.l.b16 %v32
  %v2189 = vunpack.c.h.b16 %v32
  %v2190 = vunpack.c.l.b16 %v33
  %v2191 = vunpack.c.h.b16 %v33
  %v2192 = vunpack.c.l.b16 %v34
  %v2193 = vunpack.c.h.b16 %v34
  %v2194 = vunpack.c.l.b16 %v35
  %v2195 = vunpack.c.h.b16 %v35
  %v2196 = vunpack.c.l.b16 %v36
  %v2197 = vunpack.c.h.b16 %v36
  %v2198 = vunpack.c.l.b16 %v37
  %v2199 = vunpack.c.h.b16 %v37
  %v2200 = vunpack.c.l.b16 %v38
  %v2201 = vunpack.c.h.b16 %v38
  %v2202 = vunpack.c.l.b16 %v39
  %v2203 = vunpack.c.h.b16 %v39
  %v2204 = vunpack.c.l.b16 %v40
  %v2205 = vunpack.c.h.b16 %v40
  %v2206 = vunpack.c.l.b16 %v41
  %v2207 = vunpack.c.h.b16 %v41
  %v2208 = vunpack.c.l.b16 %v42
  %v2209 = vunpack.c.h.b16 %v42
  %v2210 = vunpack.c.l.b16 %v43
  %v2211 = vunpack.c.h.b16 %v43
  %v2212 = vunpack.c.l.b16 %v44
  %v2213 = vunpack.c.h.b16 %v44
  %v2214 = vunpack.c.l.b16 %v45
  %v2215 = vunpack.c.h.b16 %v45
  %v2216 = vunpack.c.l.b16 %v46
  %v2217 = vunpack.c.h.b16 %v46
  %v2218 = vunpack.c.l.b16 %v47
  %v2219 = vunpack.c.h.b16 %v47
  %v2220 = vunpack.c.l.b16 %v48
  %v2221 = vunpack.c.h.b16 %v48
  %v2222 = vunpack.c.l.b16 %v49
  %v2223 = vunpack.c.h.b16 %v49
  %v2224 = vunpack.c.l.b16 %v50
  %v2225 = vunpack.c.h.b16 %v50
  %v2226 = vunpack.c.l.b16 %v51
  %v2227 = vunpack.c.h.b16 %v51
  %v2228 = vunpack.c.l.b16 %v52
  %v2229 = vunpack.c.h.b16 %v52
  %v2230 = vunpack.c.l.b16 %v53
  %v2231 = vunpack.c.h.b16 %v53
  %v2232 = vunpack.c.l.b16 %v54
  %v2233 = vunpack.c.h.b16 %v54
  %v2234 = vunpack.c.l.b16 %v55
  %v2235 = vunpack.c.h.b16 %v55
  %v2236 = vunpack.c.l.b16 %v56
  %v2237 = vunpack.c.h.b16 %v56
  %v2238 = vunpack.c.l.b16 %v57
  %v2239 = vunpack.c.h.b16 %v57
  %v2240 = vunpack.c.l.b16 %v58
  %v2241 = vunpack.c.h.b16 %v58
  %v2242 = vunpack.c.l.b16 %v59
  %v2243 = vunpack.c.h.b16 %v59
  %v2244 = vunpack.c.l.b16 %v60
  %v2245 = vunpack.c.h.b16 %v60
  %v2246 = vunpack.c.l.b16 %v61
  %v2247 = vunpack.c.h.b16 %v61
  %v2248 = vunpack.c.l.b16 %v62
  %v2249 = vunpack.c.h.b16 %v62
  %v2250 = vunpack.c.l.b16 %v63
  %v2251 = vunpack.c.h.b16 %v63
  %v2252 = vunpack.c.l.b16 %v64
  %v2253 = vunpack.c.h.b16 %v64
  %v2254 = vunpack.c.l.b16 %v65
  %v2255 = vunpack.c.h.b16 %v65
  %v2256 = vunpack.c.l.b16 %v66
  %v2257 = vunpack.c.h.b16 %v66
  %v2258 = vunpack.c.l.b16 %v67
  %v2259 = vunpack.c.h.b16 %v67
  %v2260 = vunpack.c.l.b16 %v68
  %v2261 = vunpack.c.h.b16 %v68
  %v2262 = vunpack.c.l.b16 %v69
  %v2263 = vunpack.c.h.b16 %v69
  %v2264 = vunpack.c.l.b16 %v70
  %v2265 = vunpack.c.h.b16 %v70
  %v2266 = vunpack.c.l.b16 %v71
  %v2267 = vunpack.c.h.b16 %v71
  %v2268 = vunpack.c.l.b16 %v72
  %v2269 = vunpack.c.h.b16 %v72
  %v2270 = vunpack.c.l.b16 %v73
  %v2271 = vunpack.c.h.b16 %v73
  %v2272 = vunpack.c.l.b16 %v74
  %v2273 = vunpack.c.h.b16 %v74
  %v2274 = vunpack.c.l.b16 %v75
  %v2275 = vunpack.c.h.b16 %v75
  %v2276 = vunpack.c.l.b16 %v76
  %v2277 = vunpack.c.h.b16 %v76
  %v2278 = vunpack.c.l.b16 %v77
  %v2279 = vunpack.c.h.b16 %v77
  %v2280 = vunpack.c.l.b16 %v78
  %v2281 = vunpack.c.h.b16 %v78
  %v2282 = vunpack.c.l.b16 %v79
  %v2283 = vunpack.c.h.b16 %v79
  %v2284 = vunpack.c.l.b16 %v80
  %v2285 = vunpack.c.h.b16 %v80
  %v2286 = vunpack.c.l.b16 %v81
  %v2287 = vunpack.c.h.b16 %v81
  %v2288 = vunpack.c.l.b16 %v82
  %v2289 = vunpack.c.h.b16 %v82
  %v2290 = vunpack.c.l.b16 %v83
  %v2291 = vunpack.c.h.b16 %v83
  %v2292 = vunpack.c.l.b16 %v84
  %v2293 = vunpack.c.h.b16 %v84
  %v2294 = vunpack.c.l.b16 %v85
  %v2295 = vunpack.c.h.b16 %v85
  %v2296 = vunpack.c.l.b16 %v86
  %v2297 = vunpack.c.h.b16 %v86
  %v2298 = vunpack.c.l.b16 %v87
  %v2299 = vunpack.c.h.b16 %v87
  %v2300 = vunpack.c.l.b16 %v88
  %v2301 = vunpack.c.h.b16 %v88
  %v2302 = vunpack.c.l.b16 %v89
  %v2303 = vunpack.c.h.b16 %v89
  %v2304 = vunpack.c.l.b16 %v90
  %v2305 = vunpack.c.h.b16 %v90
  %v2306 = vunpack.c.l.b16 %v91
  %v2307 = vunpack.c.h.b16 %v91
  %v2308 = vunpack.c.l.b16 %v92
  %v2309 = vunpack.c.h.b16 %v92
  %v2310 = vunpack.c.l.b16 %v93
  %v2311 = vunpack.c.h.b16 %v93
  %v2312 = vunpack.c.l.b16 %v94
  %v2313 = vunpack.c.h.b16 %v94
  %v2314 = vunpack.c.l.b16 %v95
  %v2315 = vunpack.c.h.b16 %v95
  %v2316 = vunpack.c.l.b16 %v96
  %v2317 = vunpack.c.h.b16 %v96
  %v2318 = vunpack.c.l.b16 %v97
  %v2319 = vunpack.c.h.b16 %v97
  %v2320 = vunpack.c.l.b16 %v98
  %v2321 = vunpack.c.h.b16 %v98
  %v2322 = vunpack.c.l.b16 %v99
  %v2323 = vunpack.c.h.b16 %v99
  %v2324 = vunpack.c.l.b16 %v100
  %v2325 = vunpack.c.h.b16 %v100
  %v2326 = vunpack.c.l.b16 %v101
  %v2327 = vunpack.c.h.b16 %v101
  %v2328 = vunpack.c.l.b16 %v102
  %v2329 = vunpack.c.h.b16 %v102
  %v2330 = vunpack.c.l.b16 %v103
  %v2331 = vunpack.c.h.b16 %v103
  %v2332 = vunpack.c.l.b16 %v104
  %v2333 = vunpack.c.h.b16 %v104
  %v2334 = vunpack.c.l.b16 %v105
  %v2335 = vunpack.c.h.b16 %v105
  %v2336 = vunpack.c.l.b16 %v106
  %v2337 = vunpack.c.h.b16 %v106
  %v2338 = vunpack.c.l.b16 %v107
  %v2339 = vunpack.c.h.b16 %v107
  %v2340 = vunpack.c.l.b16 %v108
  %v2341 = vunpack.c.h.b16 %v108
  %v2342 = vunpack.c.l.b16 %v109
  %v2343 = vunpack.c.h.b16 %v109
  %v2344 = vunpack.c.l.b16 %v110
  %v2345 = vunpack.c.h.b16 %v110
  %v2346 = vunpack.c.l.b16 %v111
  %v2347 = vunpack.c.h.b16 %v111
  %v2348 = vunpack.c.l.b16 %v112
  %v2349 = vunpack.c.h.b16 %v112
  %v2350 = vunpack.c.l.b16 %v113
  %v2351 = vunpack.c.h.b16 %v113
  %v2352 = vunpack.c.l.b16 %v114
  %v2353 = vunpack.c.h.b16 %v114
  %v2354 = vunpack.c.l.b16 %v115
  %v2355 = vunpack.c.h.b16 %v115
  %v2356 = vunpack.c.l.b16 %v116
  %v2357 = vunpack.c.h.b16 %v116
  %v2358 = vunpack.c.l.b16 %v117
  %v2359 = vunpack.c.h.b16 %v117
  %v2360 = vunpack.c.l.b16 %v118
  %v2361 = vunpack.c.h.b16 %v118
  %v2362 = vunpack.c.l.b16 %v119
  %v2363 = vunpack.c.h.b16 %v119
  %v2364 = vunpack.c.l.b16 %v120
  %v2365 = vunpack.c.h.b16 %v120
  %v2366 = vunpack.c.l.b16 %v121
  %v2367 = vunpack.c.h.b16 %v121
  %v2368 = vunpack.c.l.b16 %v122
  %v2369 = vunpack.c.h.b16 %v122
  %v2370 = vunpack.c.l.b16 %v123
  %v2371 = vunpack.c.h.b16 %v123
  %v2372 = vunpack.c.l.b16 %v124
  %v2373 = vunpack.c.h.b16 %v124
  %v2374 = vunpack.c.l.b16 %v125
  %v2375 = vunpack.c.h.b16 %v125
  %v2376 = vunpack.c.l.b16 %v126
  %v2377 = vunpack.c.h.b16 %v126
  %v2378 = vunpack.c.l.b16 %v127
  %v2379 = vunpack.c.h.b16 %v127
  %v2380 = vunpack.c.l.b16 %v128
  %v2381 = vunpack.c.h.b16 %v128
  %v2382 = vunpack.c.l.b16 %v129
  %v2383 = vunpack.c.h.b16 %v129
  %v2384 = vunpack.c.l.b16 %v130
  %v2385 = vunpack.c.h.b16 %v130
  %v2386 = vunpack.c.l.b16 %v131
  %v2387 = vunpack.c.h.b16 %v131
  %v2388 = vunpack.c.l.b16 %v132
  %v2389 = vunpack.c.h.b16 %v132
  %v2390 = vunpack.c.l.b16 %v133
  %v2391 = vunpack.c.h.b16 %v133
  %v2392 = vunpack.c.l.b16 %v134
  %v2393 = vunpack.c.h.b16 %v134
  %v2394 = vunpack.c.l.b16 %v135
  %v2395 = vunpack.c.h.b16 %v135
  %v2396 = vunpack.c.l.b16 %v136
  %v2397 = vunpack.c.h.b16 %v136
  %v2398 = vunpack.c.l.b16 %v137
  %v2399 = vunpack.c.h.b16 %v137
  %v2400 = vunpack.c.l.b16 %v138
  %v2401 = vunpack.c.h.b16 %v138
  %v2402 = vunpack.c.l.b16 %v139
  %v2403 = vunpack.c.h.b16 %v139
  %v2404 = vunpack.c.l.b16 %v140
  %v2405 = vunpack.c.h.b16 %v140
  %v2406 = vunpack.c.l.b16 %v141
  %v2407 = vunpack.c.h.b16 %v141
  %v2408 = vunpack.c.l.b16 %v142
  %v2409 = vunpack.c.h.b16 %v142
  %v2410 = vunpack.c.l.b16 %v143
  %v2411 = vunpack.c.h.b16 %v143
  %v2412 = vunpack.c.l.b16 %v144
  %v2413 = vunpack.c.h.b16 %v144
  %v2414 = vunpack.c.l.b16 %v145
  %v2415 = vunpack.c.h.b16 %v145
  %v2416 = vunpack.c.l.b16 %v146
  %v2417 = vunpack.c.h.b16 %v146
  %v2418 = vunpack.c.l.b16 %v147
  %v2419 = vunpack.c.h.b16 %v147
  %v2420 = vunpack.c.l.b16 %v148
  %v2421 = vunpack.c.h.b16 %v148
  %v2422 = vunpack.c.l.b16 %v149
  %v2423 = vunpack.c.h.b16 %v149
  %v2424 = vunpack.c.l.b16 %v150
  %v2425 = vunpack.c.h.b16 %v150
  %v2426 = vunpack.c.l.b16 %v151
  %v2427 = vunpack.c.h.b16 %v151
  %v2428 = vunpack.c.l.b16 %v152
  %v2429 = vunpack.c.h.b16 %v152
  %v2430 = vunpack.c.l.b16 %v153
  %v2431 = vunpack.c.h.b16 %v153
  %v2432 = vunpack.c.l.b16 %v154
  %v2433 = vunpack.c.h.b16 %v154
  %v2434 = vunpack.c.l.b16 %v155
  %v2435 = vunpack.c.h.b16 %v155
  %v2436 = vunpack.c.l.b16 %v156
  %v2437 = vunpack.c.h.b16 %v156
  %v2438 = vunpack.c.l.b16 %v157
  %v2439 = vunpack.c.h.b16 %v157
  %v2440 = vunpack.c.l.b16 %v158
  %v2441 = vunpack.c.h.b16 %v158
  %v2442 = vunpack.c.l.b16 %v159
  %v2443 = vunpack.c.h.b16 %v159
  %v2444 = vunpack.c.l.b16 %v160
  %v2445 = vunpack.c.h.b16 %v160
  %v2446 = vunpack.c.l.b16 %v161
  %v2447 = vunpack.c.h.b16 %v161
  %v2448 = vunpack.c.l.b16 %v162
  %v2449 = vunpack.c.h.b16 %v162
  %v2450 = vunpack.c.l.b16 %v163
  %v2451 = vunpack.c.h.b16 %v163
  %v2452 = vunpack.c.l.b16 %v164
  %v2453 = vunpack.c.h.b16 %v164
  %v2454 = vunpack.c.l.b16 %v165
  %v2455 = vunpack.c.h.b16 %v165
  %v2456 = vunpack.c.l.b16 %v166
  %v2457 = vunpack.c.h.b16 %v166
  %v2458 = vunpack.c.l.b16 %v167
  %v2459 = vunpack.c.h.b16 %v167
  %v2460 = vunpack.c.l.b16 %v168
  %v2461 = vunpack.c.h.b16 %v168
  %v2462 = vunpack.c.l.b16 %v169
  %v2463 = vunpack.c.h.b16 %v169
  %v2464 = vunpack.c.l.b16 %v170
  %v2465 = vunpack.c.h.b16 %v170
  %v2466 = vunpack.c.l.b16 %v171
  %v2467 = vunpack.c.h.b16 %v171
  %v2468 = vunpack.c.l.b16 %v172
  %v2469 = vunpack.c.h.b16 %v172
  %v2470 = vunpack.c.l.b16 %v173
  %v2471 = vunpack.c.h.b16 %v173
  %v2472 = vunpack.c.l.b16 %v174
  %v2473 = vunpack.c.h.b16 %v174
  %v2474 = vunpack.c.l.b16 %v175
  %v2475 = vunpack.c.h.b16 %v175
  %v2476 = vunpack.c.l.b16 %v176
  %v2477 = vunpack.c.h.b16 %v176
  %v2478 = vunpack.c.l.b16 %v177
  %v2479 = vunpack.c.h.b16 %v177
  %v2480 = vunpack.c.l.b16 %v178
  %v2481 = vunpack.c.h.b16 %v178
  %v2482 = vunpack.c.l.b16 %v179
  %v2483 = vunpack.c.h.b16 %v179
  %v2484 = vunpack.c.l.b16 %v180
  %v2485 = vunpack.c.h.b16 %v180
  %v2486 = vunpack.c.l.b16 %v181
  %v2487 = vunpack.c.h.b16 %v181
  %v2488 = vunpack.c.l.b16 %v182
  %v2489 = vunpack.c.h.b16 %v182
  %v2490 = vunpack.c.l.b16 %v183
  %v2491 = vunpack.c.h.b16 %v183
  %v2492 = vunpack.c.l.b16 %v184
  %v2493 = vunpack.c.h.b16 %v184
  %v2494 = vunpack.c.l.b16 %v185
  %v2495 = vunpack.c.h.b16 %v185
  %v2496 = vunpack.c.l.b16 %v186
  %v2497 = vunpack.c.h.b16 %v186
  %v2498 = vunpack.c.l.b16 %v187
  %v2499 = vunpack.c.h.b16 %v187
  %v2500 = vunpack.c.l.b16 %v188
  %v2501 = vunpack.c.h.b16 %v188
  %v2502 = vunpack.c.l.b16 %v189
  %v2503 = vunpack.c.h.b16 %v189
  %v2504 = vunpack.c.l.b16 %v190
  %v2505 = vunpack.c.h.b16 %v190
  %v2506 = vunpack.c.l.b16 %v191
  %v2507 = vunpack.c.h.b16 %v191
  %v2508 = vunpack.c.l.b16 %v192
  %v2509 = vunpack.c.h.b16 %v192
  %v2510 = vunpack.c.l.b16 %v193
  %v2511 = vunpack.c.h.b16 %v193
  %v2512 = vunpack.c.l.b16 %v194
  %v2513 = vunpack.c.h.b16 %v194
  %v2514 = vunpack.c.l.b16 %v195
  %v2515 = vunpack.c.h.b16 %v195
  %v2516 = vunpack.c.l.b16 %v196
  %v2517 = vunpack.c.h.b16 %v196
  %v2518 = vunpack.c.l.b16 %v197
  %v2519 = vunpack.c.h.b16 %v197
  %v2520 = vunpack.c.l.b16 %v198
  %v2521 = vunpack.c.h.b16 %v198
  %v2522 = vunpack.c.l.b16 %v199
  %v2523 = vunpack.c.h.b16 %v199
  %v2524 = vunpack.c.l.b16 %v200
  %v2525 = vunpack.c.h.b16 %v200
  %v2526 = vunpack.c.l.b16 %v201
  %v2527 = vunpack.c.h.b16 %v201
  %v2528 = vunpack.c.l.b16 %v202
  %v2529 = vunpack.c.h.b16 %v202
  %v2530 = vunpack.c.l.b16 %v203
  %v2531 = vunpack.c.h.b16 %v203
  %v2532 = vunpack.c.l.b16 %v204
  %v2533 = vunpack.c.h.b16 %v204
  %v2534 = vunpack.c.l.b16 %v205
  %v2535 = vunpack.c.h.b16 %v205
  %v2536 = vunpack.c.l.b16 %v206
  %v2537 = vunpack.c.h.b16 %v206
  %v2538 = vunpack.c.l.b16 %v207
  %v2539 = vunpack.c.h.b16 %v207
  %v2540 = vunpack.c.l.b16 %v208
  %v2541 = vunpack.c.h.b16 %v208
  %v2542 = vunpack.c.l.b16 %v209
  %v2543 = vunpack.c.h.b16 %v209
  %v2544 = vunpack.c.l.b16 %v210
  %v2545 = vunpack.c.h.b16 %v210
  %v2546 = vunpack.c.l.b16 %v211
  %v2547 = vunpack.c.h.b16 %v211
  %v2548 = vunpack.c.l.b16 %v212
  %v2549 = vunpack.c.h.b16 %v212
  %v2550 = vunpack.c.l.b16 %v213
  %v2551 = vunpack.c.h.b16 %v213
  %v2552 = vunpack.c.l.b16 %v214
  %v2553 = vunpack.c.h.b16 %v214
  %v2554 = vunpack.c.l.b16 %v215
  %v2555 = vunpack.c.h.b16 %v215
  %v2556 = vunpack.c.l.b16 %v216
  %v2557 = vunpack.c.h.b16 %v216
  %v2558 = vunpack.c.l.b16 %v217
  %v2559 = vunpack.c.h.b16 %v217
  %v2560 = vunpack.c.l.b16 %v218
  %v2561 = vunpack.c.h.b16 %v218
  %v2562 = vunpack.c.l.b16 %v219
  %v2563 = vunpack.c.h.b16 %v219
  %v2564 = vunpack.c.l.b16 %v220
  %v2565 = vunpack.c.h.b16 %v220
  %v2566 = vunpack.c.l.b16 %v221
  %v2567 = vunpack.c.h.b16 %v221
  %v2568 = vunpack.c.l.b16 %v222
  %v2569 = vunpack.c.h.b16 %v222
  %v2570 = vunpack.c.l.b16 %v223
  %v2571 = vunpack.c.h.b16 %v223
  %v2572 = vunpack.c.l.b16 %v224
  %v2573 = vunpack.c.h.b16 %v224
  %v2574 = vunpack.c.l.b16 %v225
  %v2575 = vunpack.c.h.b16 %v225
  %v2576 = vunpack.c.l.b16 %v226
  %v2577 = vunpack.c.h.b16 %v226
  %v2578 = vunpack.c.l.b16 %v227
  %v2579 = vunpack.c.h.b16 %v227
  %v2580 = vunpack.c.l.b16 %v228
  %v2581 = vunpack.c.h.b16 %v228
  %v2582 = vunpack.c.l.b16 %v229
  %v2583 = vunpack.c.h.b16 %v229
  %v2584 = vunpack.c.l.b16 %v230
  %v2585 = vunpack.c.h.b16 %v230
  %v2586 = vunpack.c.l.b16 %v231
  %v2587 = vunpack.c.h.b16 %v231
  %v2588 = vunpack.c.l.b16 %v232
  %v2589 = vunpack.c.h.b16 %v232
  %v2590 = vunpack.c.l.b16 %v233
  %v2591 = vunpack.c.h.b16 %v233
  %v2592 = vunpack.c.l.b16 %v234
  %v2593 = vunpack.c.h.b16 %v234
  %v2594 = vunpack.c.l.b16 %v235
  %v2595 = vunpack.c.h.b16 %v235
  %v2596 = vunpack.c.l.b16 %v236
  %v2597 = vunpack.c.h.b16 %v236
  %v2598 = vunpack.c.l.b16 %v237
  %v2599 = vunpack.c.h.b16 %v237
  %v2600 = vunpack.c.l.b16 %v238
  %v2601 = vunpack.c.h.b16 %v238
  %v2602 = vunpack.c.l.b16 %v239
  %v2603 = vunpack.c.h.b16 %v239
  %v2604 = vunpack.c.l.b16 %v240
  %v2605 = vunpack.c.h.b16 %v240
  %v2606 = vunpack.c.l.b16 %v241
  %v2607 = vunpack.c.h.b16 %v241
  %v2608 = vunpack.c.l.b16 %v242
  %v2609 = vunpack.c.h.b16 %v242
  %v2610 = vunpack.c.l.b16 %v243
  %v2611 = vunpack.c.h.b16 %v243
  %v2612 = vunpack.c.l.b16 %v244
  %v2613 = vunpack.c.h.b16 %v244
  %v2614 = vunpack.c.l.b16 %v245
  %v2615 = vunpack.c.h.b16 %v245
  %v2616 = vunpack.c.l.b16 %v246
  %v2617 = vunpack.c.h.b16 %v246
  %v2618 = vunpack.c.l.b16 %v247
  %v2619 = vunpack.c.h.b16 %v247
  %v2620 = vunpack.c.l.b16 %v248
  %v2621 = vunpack.c.h.b16 %v248
  %v2622 = vunpack.c.l.b16 %v249
  %v2623 = vunpack.c.h.b16 %v249
  %v2624 = vunpack.c.l.b16 %v250
  %v2625 = vunpack.c.h.b16 %v250
  %v2626 = vunpack.c.l.b16 %v251
  %v2627 = vunpack.c.h.b16 %v251
  %v2628 = vunpack.c.l.b16 %v252
  %v2629 = vunpack.c.h.b16 %v252
  %v2630 = vunpack.c.l.b16 %v253
  %v2631 = vunpack.c.h.b16 %v253
  %v2632 = vunpack.c.l.b16 %v254
  %v2633 = vunpack.c.h.b16 %v254
  %v2634 = vunpack.c.l.b16 %v255
  %v2635 = vunpack.c.h.b16 %v255
  %v2636 = vunpack.c.l.b16 %v256
  %v2637 = vunpack.c.h.b16 %v256
  %v2638 = vunpack.c.l.b16 %v257
  %v2639 = vunpack.c.h.b16 %v257
  %v2640 = vunpack.c.l.b16 %v258
  %v2641 = vunpack.c.h.b16 %v258
  %v2642 = vunpack.c.l.b16 %v259
  %v2643 = vunpack.c.h.b16 %v259
  %v2644 = vunpack.c.l.b16 %v260
  %v2645 = vunpack.c.h.b16 %v260
  %v2646 = vunpack.c.l.b16 %v261
  %v2647 = vunpack.c.h.b16 %v261
  %v2648 = vunpack.c.l.b16 %v262
  %v2649 = vunpack.c.h.b16 %v262
  %v2650 = vunpack.c.l.b16 %v263
  %v2651 = vunpack.c.h.b16 %v263
  %v2652 = vunpack.c.l.b16 %v264
  %v2653 = vunpack.c.h.b16 %v264
  %v2654 = vunpack.c.l.b16 %v265
  %v2655 = vunpack.c.h.b16 %v265
  %v2656 = vunpack.c.l.b16 %v266
  %v2657 = vunpack.c.h.b16 %v266
  %v2658 = vunpack.c.l.b16 %v267
  %v2659 = vunpack.c.h.b16 %v267
  %v2660 = vunpack.c.l.b16 %v268
  %v2661 = vunpack.c.h.b16 %v268
  %v2662 = vunpack.c.l.b16 %v269
  %v2663 = vunpack.c.h.b16 %v269
  %v2664 = vunpack.c.l.b16 %v270
  %v2665 = vunpack.c.h.b16 %v270
  %v2666 = vunpack.c.l.b16 %v271
  %v2667 = vunpack.c.h.b16 %v271
  %v2668 = vunpack.c.l.b16 %v272
  %v2669 = vunpack.c.h.b16 %v272
  %v2670 = vunpack.c.l.b16 %v273
  %v2671 = vunpack.c.h.b16 %v273
  %v2672 = vunpack.c.l.b16 %v274
  %v2673 = vunpack.c.h.b16 %v274
  %v2674 = vunpack.c.l.b16 %v275
  %v2675 = vunpack.c.h.b16 %v275
  %v2676 = vunpack.c.l.b16 %v276
  %v2677 = vunpack.c.h.b16 %v276
  %v2678 = vunpack.c.l.b16 %v277
  %v2679 = vunpack.c.h.b16 %v277
  %v2680 = vunpack.c.l.b16 %v278
  %v2681 = vunpack.c.h.b16 %v278
  %v2682 = vunpack.c.l.b16 %v279
  %v2683 = vunpack.c.h.b16 %v279
  %v2684 = vunpack.c.l.b16 %v280
  %v2685 = vunpack.c.h.b16 %v280
  %v2686 = vunpack.c.l.b16 %v281
  %v2687 = vunpack.c.h.b16 %v281
  %v2688 = vunpack.c.l.b16 %v282
  %v2689 = vunpack.c.h.b16 %v282
  %v2690 = vunpack.c.l.b16 %v283
  %v2691 = vunpack.c.h.b16 %v283
  %v2692 = vunpack.c.l.b16 %v284
  %v2693 = vunpack.c.h.b16 %v284
  %v2694 = vunpack.c.l.b16 %v285
  %v2695 = vunpack.c.h.b16 %v285
  %v2696 = vunpack.c.l.b16 %v286
  %v2697 = vunpack.c.h.b16 %v286
  %v2698 = vunpack.c.l.b16 %v287
  %v2699 = vunpack.c.h.b16 %v287
  %v2700 = vunpack.c.l.b16 %v288
  %v2701 = vunpack.c.h.b16 %v288
  %v2702 = vunpack.c.l.b16 %v289
  %v2703 = vunpack.c.h.b16 %v289
  %v2704 = vunpack.c.l.b16 %v290
  %v2705 = vunpack.c.h.b16 %v290
  %v2706 = vunpack.c.l.b16 %v291
  %v2707 = vunpack.c.h.b16 %v291
  %v2708 = vunpack.c.l.b16 %v292
  %v2709 = vunpack.c.h.b16 %v292
  %v2710 = vunpack.c.l.b16 %v293
  %v2711 = vunpack.c.h.b16 %v293
  %v2712 = vunpack.c.l.b16 %v294
  %v2713 = vunpack.c.h.b16 %v294
  %v2714 = vunpack.c.l.b16 %v295
  %v2715 = vunpack.c.h.b16 %v295
  %v2716 = vunpack.c.l.b16 %v296
  %v2717 = vunpack.c.h.b16 %v296
  %v2718 = vunpack.c.l.b16 %v297
  %v2719 = vunpack.c.h.b16 %v297
  %v2720 = vunpack.c.l.b16 %v298
  %v2721 = vunpack.c.h.b16 %v298
  %v2722 = vunpack.c.l.b16 %v299
  %v2723 = vunpack.c.h.b16 %v299
  %v2724 = vunpack.c.l.b16 %v300
  %v2725 = vunpack.c.h.b16 %v300
  %v2726 = vunpack.c.l.b16 %v301
  %v2727 = vunpack.c.h.b16 %v301
  %v2728 = vunpack.c.l.b16 %v302
  %v2729 = vunpack.c.h.b16 %v302
  %v2730 = vunpack.c.l.b16 %v303
  %v2731 = vunpack.c.h.b16 %v303
  %v2732 = vunpack.c.l.b16 %v304
  %v2733 = vunpack.c.h.b16 %v304
  %v2734 = vunpack.c.l.b16 %v305
  %v2735 = vunpack.c.h.b16 %v305
  %v2736 = vunpack.c.l.b16 %v306
  %v2737 = vunpack.c.h.b16 %v306
  %v2738 = vunpack.c.l.b16 %v307
  %v2739 = vunpack.c.h.b16 %v307
  %v2740 = vunpack.c.l.b16 %v308
  %v2741 = vunpack.c.h.b16 %v308
  %v2742 = vunpack.c.l.b16 %v309
  %v2743 = vunpack.c.h.b16 %v309
  %v2744 = vunpack.c.l.b16 %v310
  %v2745 = vunpack.c.h.b16 %v310
  %v2746 = vunpack.c.l.b16 %v311
  %v2747 = vunpack.c.h.b16 %v311
  %v2748 = vunpack.c.l.b16 %v312
  %v2749 = vunpack.c.h.b16 %v312
  %v2750 = vunpack.c.l.b16 %v313
  %v2751 = vunpack.c.h.b16 %v313
  %v2752 = vunpack.c.l.b16 %v314
  %v2753 = vunpack.c.h.b16 %v314
  %v2754 = vunpack.c.l.b16 %v315
  %v2755 = vunpack.c.h.b16 %v315
  %v2756 = vunpack.c.l.b16 %v316
  %v2757 = vunpack.c.h.b16 %v316
  %v2758 = vunpack.c.l.b16 %v317
  %v2759 = vunpack.c.h.b16 %v317
  %v2760 = vunpack.c.l.b16 %v318
  %v2761 = vunpack.c.h.b16 %v318
  %v2762 = vunpack.c.l.b16 %v319
  %v2763 = vunpack.c.h.b16 %v319
  %v2764 = vunpack.c.l.b16 %v320
  %v2765 = vunpack.c.h.b16 %v320
  %v2766 = vunpack.c.l.b16 %v321
  %v2767 = vunpack.c.h.b16 %v321
  %v2768 = vunpack.c.l.b16 %v322
  %v2769 = vunpack.c.h.b16 %v322
  %v2770 = vunpack.c.l.b16 %v323
  %v2771 = vunpack.c.h.b16 %v323
  %v2772 = vunpack.c.l.b16 %v324
  %v2773 = vunpack.c.h.b16 %v324
  %v2774 = vunpack.c.l.b16 %v325
  %v2775 = vunpack.c.h.b16 %v325
  %v2776 = vunpack.c.l.b16 %v326
  %v2777 = vunpack.c.h.b16 %v326
  %v2778 = vunpack.c.l.b16 %v327
  %v2779 = vunpack.c.h.b16 %v327
  %v2780 = vunpack.c.l.b16 %v328
  %v2781 = vunpack.c.h.b16 %v328
  %v2782 = vunpack.c.l.b16 %v329
  %v2783 = vunpack.c.h.b16 %v329
  %v2784 = vunpack.c.l.b16 %v330
  %v2785 = vunpack.c.h.b16 %v330
  %v2786 = vunpack.c.l.b16 %v331
  %v2787 = vunpack.c.h.b16 %v331
  %v2788 = vunpack.c.l.b16 %v332
  %v2789 = vunpack.c.h.b16 %v332
  %v2790 = vunpack.c.l.b16 %v333
  %v2791 = vunpack.c.h.b16 %v333
  %v2792 = vunpack.c.l.b16 %v334
  %v2793 = vunpack.c.h.b16 %v334
  %v2794 = vunpack.c.l.b16 %v335
  %v2795 = vunpack.c.h.b16 %v335
  %v2796 = vunpack.c.l.b16 %v336
  %v2797 = vunpack.c.h.b16 %v336
  %v2798 = vunpack.c.l.b16 %v337
  %v2799 = vunpack.c.h.b16 %v337
  %v2800 = vunpack.c.l.b16 %v338
  %v2801 = vunpack.c.h.b16 %v338
  %v2802 = vunpack.c.l.b16 %v339
  %v2803 = vunpack.c.h.b16 %v339
  %v2804 = vunpack.c.l.b16 %v340
  %v2805 = vunpack.c.h.b16 %v340
  %v2806 = vunpack.c.l.b16 %v341
  %v2807 = vunpack.c.h.b16 %v341
  %v2808 = vunpack.c.l.b16 %v342
  %v2809 = vunpack.c.h.b16 %v342
  %v2810 = vunpack.c.l.b16 %v343
  %v2811 = vunpack.c.h.b16 %v343
  %v2812 = vunpack.c.l.b16 %v344
  %v2813 = vunpack.c.h.b16 %v344
  %v2814 = vunpack.c.l.b16 %v345
  %v2815 = vunpack.c.h.b16 %v345
  %v2816 = vunpack.c.l.b16 %v346
  %v2817 = vunpack.c.h.b16 %v346
  %v2818 = vunpack.c.l.b16 %v347
  %v2819 = vunpack.c.h.b16 %v347
  %v2820 = vunpack.c.l.b16 %v348
  %v2821 = vunpack.c.h.b16 %v348
  %v2822 = vunpack.c.l.b16 %v349
  %v2823 = vunpack.c.h.b16 %v349
  %v2824 = vunpack.c.l.b16 %v350
  %v2825 = vunpack.c.h.b16 %v350
  %v2826 = vunpack.c.l.b16 %v351
  %v2827 = vunpack.c.h.b16 %v351
  %v2828 = vunpack.c.l.b16 %v352
  %v2829 = vunpack.c.h.b16 %v352
  %v2830 = vunpack.c.l.b16 %v353
  %v2831 = vunpack.c.h.b16 %v353
  %v2832 = vunpack.c.l.b16 %v354
  %v2833 = vunpack.c.h.b16 %v354
  %v2834 = vunpack.c.l.b16 %v355
  %v2835 = vunpack.c.h.b16 %v355
  %v2836 = vunpack.c.l.b16 %v356
  %v2837 = vunpack.c.h.b16 %v356
  %v2838 = vunpack.c.l.b16 %v357
  %v2839 = vunpack.c.h.b16 %v357
  %v2840 = vunpack.c.l.b16 %v358
  %v2841 = vunpack.c.h.b16 %v358
  %v2842 = vunpack.c.l.b16 %v359
  %v2843 = vunpack.c.h.b16 %v359
  %v2844 = vunpack.c.l.b16 %v360
  %v2845 = vunpack.c.h.b16 %v360
  %v2846 = vunpack.c.l.b16 %v361
  %v2847 = vunpack.c.h.b16 %v361
  %v2848 = vunpack.c.l.b16 %v362
  %v2849 = vunpack.c.h.b16 %v362
  %v2850 = vunpack.c.l.b16 %v363
  %v2851 = vunpack.c.h.b16 %v363
  %v2852 = vunpack.c.l.b16 %v364
  %v2853 = vunpack.c.h.b16 %v364
  %v2854 = vunpack.c.l.b16 %v365
  %v2855 = vunpack.c.h.b16 %v365
  %v2856 = vunpack.c.l.b16 %v366
  %v2857 = vunpack.c.h.b16 %v366
  %v2858 = vunpack.c.l.b16 %v367
  %v2859 = vunpack.c.h.b16 %v367
  %v2860 = vunpack.c.l.b16 %v368
  %v2861 = vunpack.c.h.b16 %v368
  %v2862 = vunpack.c.l.b16 %v369
  %v2863 = vunpack.c.h.b16 %v369
  %v2864 = vunpack.c.l.b16 %v370
  %v2865 = vunpack.c.h.b16 %v370
  %v2866 = vunpack.c.l.b16 %v371
  %v2867 = vunpack.c.h.b16 %v371
  %v2868 = vunpack.c.l.b16 %v372
  %v2869 = vunpack.c.h.b16 %v372
  %v2870 = vunpack.c.l.b16 %v373
  %v2871 = vunpack.c.h.b16 %v373
  %v2872 = vunpack.c.l.b16 %v374
  %v2873 = vunpack.c.h.b16 %v374
  %v2874 = vunpack.c.l.b16 %v375
  %v2875 = vunpack.c.h.b16 %v375
  %v2876 = vunpack.c.l.b16 %v376
  %v2877 = vunpack.c.h.b16 %v376
  %v2878 = vunpack.c.l.b16 %v377
  %v2879 = vunpack.c.h.b16 %v377
  %v2880 = vunpack.c.l.b16 %v378
  %v2881 = vunpack.c.h.b16 %v378
  %v2882 = vunpack.c.l.b16 %v379
  %v2883 = vunpack.c.h.b16 %v379
  %v2884 = vunpack.c.l.b16 %v380
  %v2885 = vunpack.c.h.b16 %v380
  %v2886 = vunpack.c.l.b16 %v381
  %v2887 = vunpack.c.h.b16 %v381
  %v2888 = vunpack.c.l.b16 %v382
  %v2889 = vunpack.c.h.b16 %v382
  %v2890 = vunpack.c.l.b16 %v383
  %v2891 = vunpack.c.h.b16 %v383
  %v2892 = vunpack.c.l.b16 %v384
  %v2893 = vunpack.c.h.b16 %v384
  %v2894 = vunpack.c.l.b16 %v385
  %v2895 = vunpack.c.h.b16 %v385
  %v2896 = vunpack.c.l.b16 %v386
  %v2897 = vunpack.c.h.b16 %v386
  %v2898 = vunpack.c.l.b16 %v387
  %v2899 = vunpack.c.h.b16 %v387
  %v2900 = vunpack.c.l.b16 %v388
  %v2901 = vunpack.c.h.b16 %v388
  %v2902 = vunpack.c.l.b16 %v389
  %v2903 = vunpack.c.h.b16 %v389
  %v2904 = vunpack.c.l.b16 %v390
  %v2905 = vunpack.c.h.b16 %v390
  %v2906 = vunpack.c.l.b16 %v391
  %v2907 = vunpack.c.h.b16 %v391
  %v2908 = vunpack.c.l.b16 %v392
  %v2909 = vunpack.c.h.b16 %v392
  %v2910 = vunpack.c.l.b16 %v393
  %v2911 = vunpack.c.h.b16 %v393
  %v2912 = vunpack.c.l.b16 %v394
  %v2913 = vunpack.c.h.b16 %v394
  %v2914 = vunpack.c.l.b16 %v395
  %v2915 = vunpack.c.h.b16 %v395
  %v2916 = vunpack.c.l.b16 %v396
  %v2917 = vunpack.c.h.b16 %v396
  %v2918 = vunpack.c.l.b16 %v397
  %v2919 = vunpack.c.h.b16 %v397
  %v2920 = vunpack.c.l.b16 %v398
  %v2921 = vunpack.c.h.b16 %v398
  %v2922 = vunpack.c.l.b16 %v399
  %v2923 = vunpack.c.h.b16 %v399
  %v2924 = vunpack.c.l.b16 %v400
  %v2925 = vunpack.c.h.b16 %v400
  %v2926 = vunpack.c.l.b16 %v401
  %v2927 = vunpack.c.h.b16 %v401
  %v2928 = vunpack.c.l.b16 %v402
  %v2929 = vunpack.c.h.b16 %v402
  %v2930 = vunpack.c.l.b16 %v403
  %v2931 = vunpack.c.h.b16 %v403
  %v2932 = vunpack.c.l.b16 %v404
  %v2933 = vunpack.c.h.b16 %v404
  %v2934 = vunpack.c.l.b16 %v405
  %v2935 = vunpack.c.h.b16 %v405
  %v2936 = vunpack.c.l.b16 %v406
  %v2937 = vunpack.c.h.b16 %v406
  %v2938 = vunpack.c.l.b16 %v407
  %v2939 = vunpack.c.h.b16 %v407
  %v2940 = vunpack.c.l.b16 %v408
  %v2941 = vunpack.c.h.b16 %v408
  %v2942 = vunpack.c.l.b16 %v409
  %v2943 = vunpack.c.h.b16 %v409
  %v2944 = vunpack.c.l.b16 %v410
  %v2945 = vunpack.c.h.b16 %v410
  %v2946 = vunpack.c.l.b16 %v411
  %v2947 = vunpack.c.h.b16 %v411
  %v2948 = vunpack.c.l.b16 %v412
  %v2949 = vunpack.c.h.b16 %v412
  %v2950 = vunpack.c.l.b16 %v413
  %v2951 = vunpack.c.h.b16 %v413
  %v2952 = vunpack.c.l.b16 %v414
  %v2953 = vunpack.c.h.b16 %v414
  %v2954 = vunpack.c.l.b16 %v415
  %v2955 = vunpack.c.h.b16 %v415
  %v2956 = vunpack.c.l.b16 %v416
  %v2957 = vunpack.c.h.b16 %v416
  %v2958 = vunpack.c.l.b16 %v417
  %v2959 = vunpack.c.h.b16 %v417
  %v2960 = vunpack.c.l.b16 %v418
  %v2961 = vunpack.c.h.b16 %v418
  %v2962 = vunpack.c.l.b16 %v419
  %v2963 = vunpack.c.h.b16 %v419
  %v2964 = vunpack.c.l.b16 %v420
  %v2965 = vunpack.c.h.b16 %v420
  %v2966 = vunpack.c.l.b16 %v421
  %v2967 = vunpack.c.h.b16 %v421
  %v2968 = vunpack.c.l.b16 %v422
  %v2969 = vunpack.c.h.b16 %v422
  %v2970 = vunpack.c.l.b16 %v423
  %v2971 = vunpack.c.h.b16 %v423
  %v2972 = vunpack.c.l.b16 %v424
  %v2973 = vunpack.c.h.b16 %v424
  %v2974 = vunpack.c.l.b16 %v425
  %v2975 = vunpack.c.h.b16 %v425
  %v2976 = vunpack.c.l.b16 %v426
  %v2977 = vunpack.c.h.b16 %v426
  %v2978 = vunpack.c.l.b16 %v427
  %v2979 = vunpack.c.h.b16 %v427
  %v2980 = vunpack.c.l.b16 %v428
  %v2981 = vunpack.c.h.b16 %v428
  %v2982 = vunpack.c.l.b16 %v429
  %v2983 = vunpack.c.h.b16 %v429
  %v2984 = vunpack.c.l.b16 %v430
  %v2985 = vunpack.c.h.b16 %v430
  %v2986 = vunpack.c.l.b16 %v431
  %v2987 = vunpack.c.h.b16 %v431
  %v2988 = vunpack.c.l.b16 %v432
  %v2989 = vunpack.c.h.b16 %v432
  %v2990 = vunpack.c.l.b16 %v433
  %v2991 = vunpack.c.h.b16 %v433
  %v2992 = vunpack.c.l.b16 %v434
  %v2993 = vunpack.c.h.b16 %v434
  %v2994 = vunpack.c.l.b16 %v435
  %v2995 = vunpack.c.h.b16 %v435
  %v2996 = vunpack.c.l.b16 %v436
  %v2997 = vunpack.c.h.b16 %v436
  %v2998 = vunpack.c.l.b16 %v437
  %v2999 = vunpack.c.h.b16 %v437
  %v3000 = vunpack.c.l.b16 %v438
  %v3001 = vunpack.c.h.b16 %v438
  %v3002 = vunpack.c.l.b16 %v439
  %v3003 = vunpack.c.h.b16 %v439
  %v3004 = vunpack.c.l.b16 %v440
  %v3005 = vunpack.c.h.b16 %v440
  %v3006 = vunpack.c.l.b16 %v441
  %v3007 = vunpack.c.h.b16 %v441
  %v3008 = vunpack.c.l.b16 %v442
  %v3009 = vunpack.c.h.b16 %v442
  %v3010 = vunpack.c.l.b16 %v443
  %v3011 = vunpack.c.h.b16 %v443
  %v3012 = vunpack.c.l.b16 %v444
  %v3013 = vunpack.c.h.b16 %v444
  %v3014 = vunpack.c.l.b16 %v445
  %v3015 = vunpack.c.h.b16 %v445
  %v3016 = vunpack.c.l.b16 %v446
  %v3017 = vunpack.c.h.b16 %v446
  %v3018 = vunpack.c.l.b16 %v447
  %v3019 = vunpack.c.h.b16 %v447
  %v3020 = vunpack.c.l.b16 %v448
  %v3021 = vunpack.c.h.b16 %v448
  %v3022 = vunpack.c.l.b16 %v449
  %v3023 = vunpack.c.h.b16 %v449
  %v3024 = vunpack.c.l.b16 %v450
  %v3025 = vunpack.c.h.b16 %v450
  %v3026 = vunpack.c.l.b16 %v451
  %v3027 = vunpack.c.h.b16 %v451
  %v3028 = vunpack.c.l.b16 %v452
  %v3029 = vunpack.c.h.b16 %v452
  %v3030 = vunpack.c.l.b16 %v453
  %v3031 = vunpack.c.h.b16 %v453
  %v3032 = vunpack.c.l.b16 %v454
  %v3033 = vunpack.c.h.b16 %v454
  %v3034 = vunpack.c.l.b16 %v455
  %v3035 = vunpack.c.h.b16 %v455
  %v3036 = vunpack.c.l.b16 %v456
  %v3037 = vunpack.c.h.b16 %v456
  %v3038 = vunpack.c.l.b16 %v457
  %v3039 = vunpack.c.h.b16 %v457
  %v3040 = vunpack.c.l.b16 %v458
  %v3041 = vunpack.c.h.b16 %v458
  %v3042 = vunpack.c.l.b16 %v459
  %v3043 = vunpack.c.h.b16 %v459
  %v3044 = vunpack.c.l.b16 %v460
  %v3045 = vunpack.c.h.b16 %v460
  %v3046 = vunpack.c.l.b16 %v461
  %v3047 = vunpack.c.h.b16 %v461
  %v3048 = vunpack.c.l.b16 %v462
  %v3049 = vunpack.c.h.b16 %v462
  %v3050 = vunpack.c.l.b16 %v463
  %v3051 = vunpack.c.h.b16 %v463
  %v3052 = vunpack.c.l.b16 %v464
  %v3053 = vunpack.c.h.b16 %v464
  %v3054 = vunpack.c.l.b16 %v465
  %v3055 = vunpack.c.h.b16 %v465
  %v3056 = vunpack.c.l.b16 %v466
  %v3057 = vunpack.c.h.b16 %v466
  %v3058 = vunpack.c.l.b16 %v467
  %v3059 = vunpack.c.h.b16 %v467
  %v3060 = vunpack.c.l.b16 %v468
  %v3061 = vunpack.c.h.b16 %v468
  %v3062 = vunpack.c.l.b16 %v469
  %v3063 = vunpack.c.h.b16 %v469
  %v3064 = vunpack.c.l.b16 %v470
  %v3065 = vunpack.c.h.b16 %v470
  %v3066 = vunpack.c.l.b16 %v471
  %v3067 = vunpack.c.h.b16 %v471
  %v3068 = vunpack.c.l.b16 %v472
  %v3069 = vunpack.c.h.b16 %v472
  %v3070 = vunpack.c.l.b16 %v473
  %v3071 = vunpack.c.h.b16 %v473
  %v3072 = vunpack.c.l.b16 %v474
  %v3073 = vunpack.c.h.b16 %v474
  %v3074 = vunpack.c.l.b16 %v475
  %v3075 = vunpack.c.h.b16 %v475
  %v3076 = vunpack.c.l.b16 %v476
  %v3077 = vunpack.c.h.b16 %v476
  %v3078 = vunpack.c.l.b16 %v477
  %v3079 = vunpack.c.h.b16 %v477
  %v3080 = vunpack.c.l.b16 %v478
  %v3081 = vunpack.c.h.b16 %v478
  %v3082 = vunpack.c.l.b16 %v479
  %v3083 = vunpack.c.h.b16 %v479
  %v3084 = vunpack.c.l.b16 %v480
  %v3085 = vunpack.c.h.b16 %v480
  %v3086 = vunpack.c.l.b16 %v481
  %v3087 = vunpack.c.h.b16 %v481
  %v3088 = vunpack.c.l.b16 %v482
  %v3089 = vunpack.c.h.b16 %v482
  %v3090 = vunpack.c.l.b16 %v483
  %v3091 = vunpack.c.h.b16 %v483
  %v3092 = vunpack.c.l.b16 %v484
  %v3093 = vunpack.c.h.b16 %v484
  %v3094 = vunpack.c.l.b16 %v485
  %v3095 = vunpack.c.h.b16 %v485
  %v3096 = vunpack.c.l.b16 %v486
  %v3097 = vunpack.c.h.b16 %v486
  %v3098 = vunpack.c.l.b16 %v487
  %v3099 = vunpack.c.h.b16 %v487
  %v3100 = vunpack.c.l.b16 %v488
  %v3101 = vunpack.c.h.b16 %v488
  %v3102 = vunpack.c.l.b16 %v489
  %v3103 = vunpack.c.h.b16 %v489
  %v3104 = vunpack.c.l.b16 %v490
  %v3105 = vunpack.c.h.b16 %v490
  %v3106 = vunpack.c.l.b16 %v491
  %v3107 = vunpack.c.h.b16 %v491
  %v3108 = vunpack.c.l.b16 %v492
  %v3109 = vunpack.c.h.b16 %v492
  %v3110 = vunpack.c.l.b16 %v493
  %v3111 = vunpack.c.h.b16 %v493
  %v3112 = vunpack.c.l.b16 %v494
  %v3113 = vunpack.c.h.b16 %v494
  %v3114 = vunpack.c.l.b16 %v495
  %v3115 = vunpack.c.h.b16 %v495
  %v3116 = vunpack.c.l.b16 %v496
  %v3117 = vunpack.c.h.b16 %v496
  %v3118 = vunpack.c.l.b16 %v497
  %v3119 = vunpack.c.h.b16 %v497
  %v3120 = vunpack.c.l.b16 %v498
  %v3121 = vunpack.c.h.b16 %v498
  %v3122 = vunpack.c.l.b16 %v499
  %v3123 = vunpack.c.h.b16 %v499
  %v3124 = vunpack.c.l.b16 %v500
  %v3125 = vunpack.c.h.b16 %v500
  %v3126 = vunpack.c.l.b16 %v501
  %v3127 = vunpack.c.h.b16 %v501
  %v3128 = vunpack.c.l.b16 %v502
  %v3129 = vunpack.c.h.b16 %v502
  %v3130 = vunpack.c.l.b16 %v503
  %v3131 = vunpack.c.h.b16 %v503
  %v3132 = vunpack.c.l.b16 %v504
  %v3133 = vunpack.c.h.b16 %v504
  %v3134 = vunpack.c.l.b16 %v505
  %v3135 = vunpack.c.h.b16 %v505
  %v3136 = vunpack.c.l.b16 %v506
  %v3137 = vunpack.c.h.b16 %v506
  %v3138 = vunpack.c.l.b16 %v507
  %v3139 = vunpack.c.h.b16 %v507
  %v3140 = vunpack.c.l.b16 %v508
  %v3141 = vunpack.c.h.b16 %v508
  %v3142 = vunpack.c.l.b16 %v509
  %v3143 = vunpack.c.h.b16 %v509
  %v3144 = vunpack.c.l.b16 %v510
  %v3145 = vunpack.c.h.b16 %v510
  %v3146 = vunpack.c.l.b16 %v511
  %v3147 = vunpack.c.h.b16 %v511
  %v3148 = vunpack.c.l.b16 %v512
  %v3149 = vunpack.c.h.b16 %v512
  %v3150 = vunpack.c.l.b16 %v513
  %v3151 = vunpack.c.h.b16 %v513
  %v3152 = vunpack.c.l.b16 %v514
  %v3153 = vunpack.c.h.b16 %v514
  %v3154 = vunpack.c.l.b16 %v515
  %v3155 = vunpack.c.h.b16 %v515
  %v3156 = vunpack.c.l.b16 %v516
  %v3157 = vunpack.c.h.b16 %v516
  %v3158 = vunpack.c.l.b16 %v517
  %v3159 = vunpack.c.h.b16 %v517
  %v3160 = vunpack.c.l.b16 %v518
  %v3161 = vunpack.c.h.b16 %v518
  %v3162 = vunpack.c.l.b16 %v519
  %v3163 = vunpack.c.h.b16 %v519
  %v3164 = vunpack.c.l.b16 %v520
  %v3165 = vunpack.c.h.b16 %v520
  %v3166 = vunpack.c.l.b16 %v521
  %v3167 = vunpack.c.h.b16 %v521
  %v3168 = vunpack.c.l.b16 %v522
  %v3169 = vunpack.c.h.b16 %v522
  %v3170 = vunpack.c.l.b16 %v523
  %v3171 = vunpack.c.h.b16 %v523
  %v3172 = vunpack.c.l.b16 %v524
  %v3173 = vunpack.c.h.b16 %v524
  %v3174 = vunpack.c.l.b16 %v525
  %v3175 = vunpack.c.h.b16 %v525
  %v3176 = vunpack.c.l.b16 %v526
  %v3177 = vunpack.c.h.b16 %v526
  %v3178 = vunpack.c.l.b16 %v527
  %v3179 = vunpack.c.h.b16 %v527
  %v3180 = vunpack.c.l.b16 %v528
  %v3181 = vunpack.c.h.b16 %v528
  %v3182 = vunpack.c.l.b16 %v529
  %v3183 = vunpack.c.h.b16 %v529
  %v3184 = vunpack.c.l.b16 %v530
  %v3185 = vunpack.c.h.b16 %v530
  %v3186 = vunpack.c.l.b16 %v531
  %v3187 = vunpack.c.h.b16 %v531
  %v3188 = vunpack.c.l.b16 %v532
  %v3189 = vunpack.c.h.b16 %v532
  %v3190 = vunpack.c.l.b16 %v533
  %v3191 = vunpack.c.h.b16 %v533
  %v3192 = vunpack.c.l.b16 %v534
  %v3193 = vunpack.c.h.b16 %v534
  %v3194 = vunpack.c.l.b16 %v535
  %v3195 = vunpack.c.h.b16 %v535
  %v3196 = vunpack.c.l.b16 %v536
  %v3197 = vunpack.c.h.b16 %v536
  %v3198 = vunpack.c.l.b16 %v537
  %v3199 = vunpack.c.h.b16 %v537
  %v3200 = vunpack.c.l.b16 %v538
  %v3201 = vunpack.c.h.b16 %v538
  %v3202 = vunpack.c.l.b16 %v539
  %v3203 = vunpack.c.h.b16 %v539
  %v3204 = vunpack.c.l.b16 %v540
  %v3205 = vunpack.c.h.b16 %v540
  %v3206 = vunpack.c.l.b16 %v541
  %v3207 = vunpack.c.h.b16 %v541
  %v3208 = vunpack.c.l.b16 %v542
  %v3209 = vunpack.c.h.b16 %v542
  %v3210 = vunpack.c.l.b16 %v543
  %v3211 = vunpack.c.h.b16 %v543
  %v3212 = vunpack.c.l.b16 %v544
  %v3213 = vunpack.c.h.b16 %v544
  %v3214 = vunpack.c.l.b16 %v545
  %v3215 = vunpack.c.h.b16 %v545
  %v3216 = vunpack.c.l.b16 %v546
  %v3217 = vunpack.c.h.b16 %v546
  %v3218 = vunpack.c.l.b16 %v547
  %v3219 = vunpack.c.h.b16 %v547
  %v3220 = vunpack.c.l.b16 %v548
  %v3221 = vunpack.c.h.b16 %v548
  %v3222 = vunpack.c.l.b16 %v549
  %v3223 = vunpack.c.h.b16 %v549
  %v3224 = vunpack.c.l.b16 %v550
  %v3225 = vunpack.c.h.b16 %v550
  %v3226 = vunpack.c.l.b16 %v551
  %v3227 = vunpack.c.h.b16 %v551
  %v3228 = vunpack.c.l.b16 %v552
  %v3229 = vunpack.c.h.b16 %v552
  %v3230 = vunpack.c.l.b16 %v553
  %v3231 = vunpack.c.h.b16 %v553
  %v3232 = vunpack.c.l.b16 %v554
  %v3233 = vunpack.c.h.b16 %v554
  %v3234 = vunpack.c.l.b16 %v555
  %v3235 = vunpack.c.h.b16 %v555
  %v3236 = vunpack.c.l.b16 %v556
  %v3237 = vunpack.c.h.b16 %v556
  %v3238 = vunpack.c.l.b16 %v557
  %v3239 = vunpack.c.h.b16 %v557
  %v3240 = vunpack.c.l.b16 %v558
  %v3241 = vunpack.c.h.b16 %v558
  %v3242 = vunpack.c.l.b16 %v559
  %v3243 = vunpack.c.h.b16 %v559
  %v3244 = vunpack.c.l.b16 %v560
  %v3245 = vunpack.c.h.b16 %v560
  %v3246 = vunpack.c.l.b16 %v561
  %v3247 = vunpack.c.h.b16 %v561
  %v3248 = vunpack.c.l.b16 %v562
  %v3249 = vunpack.c.h.b16 %v562
  %v3250 = vunpack.c.l.b16 %v563
  %v3251 = vunpack.c.h.b16 %v563
  %v3252 = vunpack.c.l.b16 %v564
  %v3253 = vunpack.c.h.b16 %v564
  %v3254 = vunpack.c.l.b16 %v565
  %v3255 = vunpack.c.h.b16 %v565
  %v3256 = vunpack.c.l.b16 %v566
  %v3257 = vunpack.c.h.b16 %v566
  %v3258 = vunpack.c.l.b16 %v567
  %v3259 = vunpack.c.h.b16 %v567
  %v3260 = vunpack.c.l.b16 %v568
  %v3261 = vunpack.c.h.b16 %v568
  %v3262 = vunpack.c.l.b16 %v569
  %v3263 = vunpack.c.h.b16 %v569
  %v3264 = vunpack.c.l.b16 %v570
  %v3265 = vunpack.c.h.b16 %v570
  %v3266 = vunpack.c.l.b16 %v571
  %v3267 = vunpack.c.h.b16 %v571
  %v3268 = vunpack.c.l.b16 %v572
  %v3269 = vunpack.c.h.b16 %v572
  %v3270 = vunpack.c.l.b16 %v573
  %v3271 = vunpack.c.h.b16 %v573
  %v3272 = vunpack.c.l.b16 %v574
  %v3273 = vunpack.c.h.b16 %v574
  %v3274 = vunpack.c.l.b16 %v575
  %v3275 = vunpack.c.h.b16 %v575
  %v3276 = vunpack.c.l.b16 %v576
  %v3277 = vunpack.c.h.b16 %v576
  %v3278 = vunpack.c.l.b16 %v577
  %v3279 = vunpack.c.h.b16 %v577
  %v3280 = vunpack.c.l.b16 %v578
  %v3281 = vunpack.c.h.b16 %v578
  %v3282 = vunpack.c.l.b16 %v579
  %v3283 = vunpack.c.h.b16 %v579
  %v3284 = vunpack.c.l.b16 %v580
  %v3285 = vunpack.c.h.b16 %v580
  %v3286 = vunpack.c.l.b16 %v581
  %v3287 = vunpack.c.h.b16 %v581
  %v3288 = vunpack.c.l.b16 %v582
  %v3289 = vunpack.c.h.b16 %v582
  %v3290 = vunpack.c.l.b16 %v583
  %v3291 = vunpack.c.h.b16 %v583
  %v3292 = vunpack.c.l.b16 %v584
  %v3293 = vunpack.c.h.b16 %v584
  %v3294 = vunpack.c.l.b16 %v585
  %v3295 = vunpack.c.h.b16 %v585
  %v3296 = vunpack.c.l.b16 %v586
  %v3297 = vunpack.c.h.b16 %v586
  %v3298 = vunpack.c.l.b16 %v587
  %v3299 = vunpack.c.h.b16 %v587
  %v3300 = vunpack.c.l.b16 %v588
  %v3301 = vunpack.c.h.b16 %v588
  %v3302 = vunpack.c.l.b16 %v589
  %v3303 = vunpack.c.h.b16 %v589
  %v3304 = vunpack.c.l.b16 %v590
  %v3305 = vunpack.c.h.b16 %v590
  %v3306 = vunpack.c.l.b16 %v591
  %v3307 = vunpack.c.h.b16 %v591
  %v3308 = vunpack.c.l.b16 %v592
  %v3309 = vunpack.c.h.b16 %v592
  %v3310 = vunpack.c.l.b16 %v593
  %v3311 = vunpack.c.h.b16 %v593
  %v3312 = vunpack.c.l.b16 %v594
  %v3313 = vunpack.c.h.b16 %v594
  %v3314 = vunpack.c.l.b16 %v595
  %v3315 = vunpack.c.h.b16 %v595
  %v3316 = vunpack.c.l.b16 %v596
  %v3317 = vunpack.c.h.b16 %v596
  %v3318 = vunpack.c.l.b16 %v597
  %v3319 = vunpack.c.h.b16 %v597
  %v3320 = vunpack.c.l.b16 %v598
  %v3321 = vunpack.c.h.b16 %v598
  %v3322 = vunpack.c.l.b16 %v599
  %v3323 = vunpack.c.h.b16 %v599
  %v3324 = vunpack.c.l.b16 %v600
  %v3325 = vunpack.c.h.b16 %v600
  %v3326 = vunpack.c.l.b16 %v601
  %v3327 = vunpack.c.h.b16 %v601
  %v3328 = vunpack.c.l.b16 %v602
  %v3329 = vunpack.c.h.b16 %v602
  %v3330 = vunpack.c.l.b16 %v603
  %v3331 = vunpack.c.h.b16 %v603
  %v3332 = vunpack.c.l.b16 %v604
  %v3333 = vunpack.c.h.b16 %v604
  %v3334 = vunpack.c.l.b16 %v605
  %v3335 = vunpack.c.h.b16 %v605
  %v3336 = vunpack.c.l.b16 %v606
  %v3337 = vunpack.c.h.b16 %v606
  %v3338 = vunpack.c.l.b16 %v607
  %v3339 = vunpack.c.h.b16 %v607
  %v3340 = vunpack.c.l.b16 %v608
  %v3341 = vunpack.c.h.b16 %v608
  %v3342 = vunpack.c.l.b16 %v609
  %v3343 = vunpack.c.h.b16 %v609
  %v3344 = vunpack.c.l.b16 %v610
  %v3345 = vunpack.c.h.b16 %v610
  %v3346 = vunpack.c.l.b16 %v611
  %v3347 = vunpack.c.h.b16 %v611
  %v3348 = vunpack.c.l.b16 %v612
  %v3349 = vunpack.c.h.b16 %v612
  %v3350 = vunpack.c.l.b16 %v613
  %v3351 = vunpack.c.h.b16 %v613
  %v3352 = vunpack.c.l.b16 %v614
  %v3353 = vunpack.c.h.b16 %v614
  %v3354 = vunpack.c.l.b16 %v615
  %v3355 = vunpack.c.h.b16 %v615
  %v3356 = vunpack.c.l.b16 %v616
  %v3357 = vunpack.c.h.b16 %v616
  %v3358 = vunpack.c.l.b16 %v617
  %v3359 = vunpack.c.h.b16 %v617
  %v3360 = vunpack.c.l.b16 %v618
  %v3361 = vunpack.c.h.b16 %v618
  %v3362 = vunpack.c.l.b16 %v619
  %v3363 = vunpack.c.h.b16 %v619
  %v3364 = vunpack.c.l.b16 %v620
  %v3365 = vunpack.c.h.b16 %v620
  %v3366 = vunpack.c.l.b16 %v621
  %v3367 = vunpack.c.h.b16 %v621
  %v3368 = vunpack.c.l.b16 %v622
  %v3369 = vunpack.c.h.b16 %v622
  %v3370 = vunpack.c.l.b16 %v623
  %v3371 = vunpack.c.h.b16 %v623
  %v3372 = vunpack.c.l.b16 %v624
  %v3373 = vunpack.c.h.b16 %v624
  %v3374 = vunpack.c.l.b16 %v625
  %v3375 = vunpack.c.h.b16 %v625
  %v3376 = vunpack.c.l.b16 %v626
  %v3377 = vunpack.c.h.b16 %v626
  %v3378 = vunpack.c.l.b16 %v627
  %v3379 = vunpack.c.h.b16 %v627
  %v3380 = vunpack.c.l.b16 %v628
  %v3381 = vunpack.c.h.b16 %v628
  %v3382 = vunpack.c.l.b16 %v629
  %v3383 = vunpack.c.h.b16 %v629
  %v3384 = vunpack.c.l.b16 %v630
  %v3385 = vunpack.c.h.b16 %v630
  %v3386 = vunpack.c.l.b16 %v631
  %v3387 = vunpack.c.h.b16 %v631
  %v3388 = vunpack.c.l.b16 %v632
  %v3389 = vunpack.c.h.b16 %v632
  %v3390 = vunpack.c.l.b16 %v633
  %v3391 = vunpack.c.h.b16 %v633
  %v3392 = vunpack.c.l.b16 %v634
  %v3393 = vunpack.c.h.b16 %v634
  %v3394 = vunpack.c.l.b16 %v635
  %v3395 = vunpack.c.h.b16 %v635
  %v3396 = vunpack.c.l.b16 %v636
  %v3397 = vunpack.c.h.b16 %v636
  %v3398 = vunpack.c.l.b16 %v637
  %v3399 = vunpack.c.h.b16 %v637
  %v3400 = vunpack.c.l.b16 %v638
  %v3401 = vunpack.c.h.b16 %v638
  %v3402 = vunpack.c.l.b16 %v639
  %v3403 = vunpack.c.h.b16 %v639
  %v3404 = vunpack.c.l.b16 %v640
  %v3405 = vunpack.c.h.b16 %v640
  %v3406 = vunpack.c.l.b16 %v641
  %v3407 = vunpack.c.h.b16 %v641
  %v3408 = vunpack.c.l.b16 %v642
  %v3409 = vunpack.c.h.b16 %v642
  %v3410 = vunpack.c.l.b16 %v643
  %v3411 = vunpack.c.h.b16 %v643
  %v3412 = vunpack.c.l.b16 %v644
  %v3413 = vunpack.c.h.b16 %v644
  %v3414 = vunpack.c.l.b16 %v645
  %v3415 = vunpack.c.h.b16 %v645
  %v3416 = vunpack.c.l.b16 %v646
  %v3417 = vunpack.c.h.b16 %v646
  %v3418 = vunpack.c.l.b16 %v647
  %v3419 = vunpack.c.h.b16 %v647
  %v3420 = vunpack.c.l.b16 %v648
  %v3421 = vunpack.c.h.b16 %v648
  %v3422 = vunpack.c.l.b16 %v649
  %v3423 = vunpack.c.h.b16 %v649
  %v3424 = vunpack.c.l.b16 %v650
  %v3425 = vunpack.c.h.b16 %v650
  %v3426 = vunpack.c.l.b16 %v651
  %v3427 = vunpack.c.h.b16 %v651
  %v3428 = vunpack.c.l.b16 %v652
  %v3429 = vunpack.c.h.b16 %v652
  %v3430 = vunpack.c.l.b16 %v653
  %v3431 = vunpack.c.h.b16 %v653
  %v3432 = vunpack.c.l.b16 %v654
  %v3433 = vunpack.c.h.b16 %v654
  %v3434 = vunpack.c.l.b16 %v655
  %v3435 = vunpack.c.h.b16 %v655
  %v3436 = vunpack.c.l.b16 %v656
  %v3437 = vunpack.c.h.b16 %v656
  %v3438 = vunpack.c.l.b16 %v657
  %v3439 = vunpack.c.h.b16 %v657
  %v3440 = vunpack.c.l.b16 %v658
  %v3441 = vunpack.c.h.b16 %v658
  %v3442 = vunpack.c.l.b16 %v659
  %v3443 = vunpack.c.h.b16 %v659
  %v3444 = vunpack.c.l.b16 %v660
  %v3445 = vunpack.c.h.b16 %v660
  %v3446 = vunpack.c.l.b16 %v661
  %v3447 = vunpack.c.h.b16 %v661
  %v3448 = vunpack.c.l.b16 %v662
  %v3449 = vunpack.c.h.b16 %v662
  %v3450 = vunpack.c.l.b16 %v663
  %v3451 = vunpack.c.h.b16 %v663
  %v3452 = vunpack.c.l.b16 %v664
  %v3453 = vunpack.c.h.b16 %v664
  %v3454 = vunpack.c.l.b16 %v665
  %v3455 = vunpack.c.h.b16 %v665
  %v3456 = vunpack.c.l.b16 %v666
  %v3457 = vunpack.c.h.b16 %v666
  %v3458 = vunpack.c.l.b16 %v667
  %v3459 = vunpack.c.h.b16 %v667
  %v3460 = vunpack.c.l.b16 %v668
  %v3461 = vunpack.c.h.b16 %v668
  %v3462 = vunpack.c.l.b16 %v669
  %v3463 = vunpack.c.h.b16 %v669
  %v3464 = vunpack.c.l.b16 %v670
  %v3465 = vunpack.c.h.b16 %v670
  %v3466 = vunpack.c.l.b16 %v671
  %v3467 = vunpack.c.h.b16 %v671
  %v3468 = vunpack.c.l.b16 %v672
  %v3469 = vunpack.c.h.b16 %v672
  %v3470 = vunpack.c.l.b16 %v673
  %v3471 = vunpack.c.h.b16 %v673
  %v3472 = vunpack.c.l.b16 %v674
  %v3473 = vunpack.c.h.b16 %v674
  %v3474 = vunpack.c.l.b16 %v675
  %v3475 = vunpack.c.h.b16 %v675
  %v3476 = vunpack.c.l.b16 %v676
  %v3477 = vunpack.c.h.b16 %v676
  %v3478 = vunpack.c.l.b16 %v677
  %v3479 = vunpack.c.h.b16 %v677
  %v3480 = vunpack.c.l.b16 %v678
  %v3481 = vunpack.c.h.b16 %v678
  %v3482 = vunpack.c.l.b16 %v679
  %v3483 = vunpack.c.h.b16 %v679
  %v3484 = vunpack.c.l.b16 %v680
  %v3485 = vunpack.c.h.b16 %v680
  %v3486 = vunpack.c.l.b16 %v681
  %v3487 = vunpack.c.h.b16 %v681
  %v3488 = vunpack.c.l.b16 %v682
  %v3489 = vunpack.c.h.b16 %v682
  %v3490 = vunpack.c.l.b16 %v683
  %v3491 = vunpack.c.h.b16 %v683
  %v3492 = vunpack.c.l.b16 %v684
  %v3493 = vunpack.c.h.b16 %v684
  %v3494 = vunpack.c.l.b16 %v685
  %v3495 = vunpack.c.h.b16 %v685
  %v3496 = vunpack.c.l.b16 %v686
  %v3497 = vunpack.c.h.b16 %v686
  %v3498 = vunpack.c.l.b16 %v687
  %v3499 = vunpack.c.h.b16 %v687
  %v3500 = vunpack.c.l.b16 %v688
  %v3501 = vunpack.c.h.b16 %v688
  %v3502 = vunpack.c.l.b16 %v689
  %v3503 = vunpack.c.h.b16 %v689
  %v3504 = vunpack.c.l.b16 %v690
  %v3505 = vunpack.c.h.b16 %v690
  %v3506 = vunpack.c.l.b16 %v691
  %v3507 = vunpack.c.h.b16 %v691
  %v3508 = vunpack.c.l.b16 %v692
  %v3509 = vunpack.c.h.b16 %v692
  %v3510 = vunpack.c.l.b16 %v693
  %v3511 = vunpack.c.h.b16 %v693
  %v3512 = vunpack.c.l.b16 %v694
  %v3513 = vunpack.c.h.b16 %v694
  %v3514 = vunpack.c.l.b16 %v695
  %v3515 = vunpack.c.h.b16 %v695
  %v3516 = vunpack.c.l.b16 %v696
  %v3517 = vunpack.c.h.b16 %v696
  %v3518 = vunpack.c.l.b16 %v697
  %v3519 = vunpack.c.h.b16 %v697
  %v3520 = vunpack.c.l.b16 %v698
  %v3521 = vunpack.c.h.b16 %v698
  %v3522 = vunpack.c.l.b16 %v699
  %v3523 = vunpack.c.h.b16 %v699
  %v3524 = vunpack.c.l.b16 %v700
  %v3525 = vunpack.c.h.b16 %v700
  %v3526 = vunpack.c.l.b16 %v701
  %v3527 = vunpack.c.h.b16 %v701
  %v3528 = vunpack.c.l.b16 %v702
  %v3529 = vunpack.c.h.b16 %v702
  %v3530 = vunpack.c.l.b16 %v703
  %v3531 = vunpack.c.h.b16 %v703
  %v3532 = vunpack.c.l.b16 %v704
  %v3533 = vunpack.c.h.b16 %v704
  %v3534 = vunpack.c.l.b16 %v705
  %v3535 = vunpack.c.h.b16 %v705
  %v3536 = vunpack.c.l.b16 %v706
  %v3537 = vunpack.c.h.b16 %v706
  %v3538 = vunpack.c.l.b16 %v707
  %v3539 = vunpack.c.h.b16 %v707
  %v3540 = vunpack.c.l.b16 %v708
  %v3541 = vunpack.c.h.b16 %v708
  %v3542 = vunpack.c.l.b16 %v709
  %v3543 = vunpack.c.h.b16 %v709
  %v3544 = vunpack.c.l.b16 %v710
  %v3545 = vunpack.c.h.b16 %v710
  %v3546 = vunpack.c.l.b16 %v711
  %v3547 = vunpack.c.h.b16 %v711
  %v3548 = vunpack.c.l.b16 %v712
  %v3549 = vunpack.c.h.b16 %v712
  %v3550 = vunpack.c.l.b16 %v713
  %v3551 = vunpack.c.h.b16 %v713
  %v3552 = vunpack.c.l.b16 %v714
  %v3553 = vunpack.c.h.b16 %v714
  %v3554 = vunpack.c.l.b16 %v715
  %v3555 = vunpack.c.h.b16 %v715
  %v3556 = vunpack.c.l.b16 %v716
  %v3557 = vunpack.c.h.b16 %v716
  %v3558 = vunpack.c.l.b16 %v717
  %v3559 = vunpack.c.h.b16 %v717
  %v3560 = vunpack.c.l.b16 %v718
  %v3561 = vunpack.c.h.b16 %v718
  %v3562 = vunpack.c.l.b16 %v719
  %v3563 = vunpack.c.h.b16 %v719
  %v3564 = vunpack.c.l.b16 %v720
  %v3565 = vunpack.c.h.b16 %v720
  %v3566 = vunpack.c.l.b16 %v721
  %v3567 = vunpack.c.h.b16 %v721
  %v3568 = vunpack.c.l.b16 %v722
  %v3569 = vunpack.c.h.b16 %v722
  %v3570 = vunpack.c.l.b16 %v723
  %v3571 = vunpack.c.h.b16 %v723
  %v3572 = vunpack.c.l.b16 %v724
  %v3573 = vunpack.c.h.b16 %v724
  %v3574 = vunpack.c.l.b16 %v725
  %v3575 = vunpack.c.h.b16 %v725
  %v3576 = vunpack.c.l.b16 %v726
  %v3577 = vunpack.c.h.b16 %v726
  %v3578 = vunpack.c.l.b16 %v727
  %v3579 = vunpack.c.h.b16 %v727
  %v3580 = vunpack.c.l.b16 %v728
  %v3581 = vunpack.c.h.b16 %v728
  %v3582 = vunpack.c.l.b16 %v729
  %v3583 = vunpack.c.h.b16 %v729
  %v3584 = vunpack.c.l.b16 %v730
  %v3585 = vunpack.c.h.b16 %v730
  %v3586 = vunpack.c.l.b16 %v731
  %v3587 = vunpack.c.h.b16 %v731
  %v3588 = vunpack.c.l.b16 %v732
  %v3589 = vunpack.c.h.b16 %v732
  %v3590 = vunpack.c.l.b16 %v733
  %v3591 = vunpack.c.h.b16 %v733
  %v3592 = vunpack.c.l.b16 %v734
  %v3593 = vunpack.c.h.b16 %v734
  %v3594 = vunpack.c.l.b16 %v735
  %v3595 = vunpack.c.h.b16 %v735
  %v3596 = vunpack.c.l.b16 %v736
  %v3597 = vunpack.c.h.b16 %v736
  %v3598 = vunpack.c.l.b16 %v737
  %v3599 = vunpack.c.h.b16 %v737
  %v3600 = vunpack.c.l.b16 %v738
  %v3601 = vunpack.c.h.b16 %v738
  %v3602 = vunpack.c.l.b16 %v739
  %v3603 = vunpack.c.h.b16 %v739
  %v3604 = vunpack.c.l.b16 %v740
  %v3605 = vunpack.c.h.b16 %v740
  %v3606 = vunpack.c.l.b16 %v741
  %v3607 = vunpack.c.h.b16 %v741
  %v3608 = vunpack.c.l.b16 %v742
  %v3609 = vunpack.c.h.b16 %v742
  %v3610 = vunpack.c.l.b16 %v743
  %v3611 = vunpack.c.h.b16 %v743
  %v3612 = vunpack.c.l.b16 %v744
  %v3613 = vunpack.c.h.b16 %v744
  %v3614 = vunpack.c.l.b16 %v745
  %v3615 = vunpack.c.h.b16 %v745
  %v3616 = vunpack.c.l.b16 %v746
  %v3617 = vunpack.c.h.b16 %v746
  %v3618 = vunpack.c.l.b16 %v747
  %v3619 = vunpack.c.h.b16 %v747
  %v3620 = vunpack.c.l.b16 %v748
  %v3621 = vunpack.c.h.b16 %v748
  %v3622 = vunpack.c.l.b16 %v749
  %v3623 = vunpack.c.h.b16 %v749
  %v3624 = vunpack.c.l.b16 %v750
  %v3625 = vunpack.c.h.b16 %v750
  %v3626 = vunpack.c.l.b16 %v751
  %v3627 = vunpack.c.h.b16 %v751
  %v3628 = vunpack.c.l.b16 %v752
  %v3629 = vunpack.c.h.b16 %v752
  %v3630 = vunpack.c.l.b16 %v753
  %v3631 = vunpack.c.h.b16 %v753
  %v3632 = vunpack.c.l.b16 %v754
  %v3633 = vunpack.c.h.b16 %v754
  %v3634 = vunpack.c.l.b16 %v755
  %v3635 = vunpack.c.h.b16 %v755
  %v3636 = vunpack.c.l.b16 %v756
  %v3637 = vunpack.c.h.b16 %v756
  %v3638 = vunpack.c.l.b16 %v757
  %v3639 = vunpack.c.h.b16 %v757
  %v3640 = vunpack.c.l.b16 %v758
  %v3641 = vunpack.c.h.b16 %v758
  %v3642 = vunpack.c.l.b16 %v759
  %v3643 = vunpack.c.h.b16 %v759
  %v3644 = vunpack.c.l.b16 %v760
  %v3645 = vunpack.c.h.b16 %v760
  %v3646 = vunpack.c.l.b16 %v761
  %v3647 = vunpack.c.h.b16 %v761
  %v3648 = vunpack.c.l.b16 %v762
  %v3649 = vunpack.c.h.b16 %v762
  %v3650 = vunpack.c.l.b16 %v763
  %v3651 = vunpack.c.h.b16 %v763
  %v3652 = vunpack.c.l.b16 %v764
  %v3653 = vunpack.c.h.b16 %v764
  %v3654 = vunpack.c.l.b16 %v765
  %v3655 = vunpack.c.h.b16 %v765
  %v3656 = vunpack.c.l.b16 %v766
  %v3657 = vunpack.c.h.b16 %v766
  %v3658 = vunpack.c.l.b16 %v767
  %v3659 = vunpack.c.h.b16 %v767
  %v3660 = vunpack.c.l.b16 %v768
  %v3661 = vunpack.c.h.b16 %v768
  %v3662 = vunpack.c.l.b16 %v769
  %v3663 = vunpack.c.h.b16 %v769
  %v3664 = vunpack.c.l.b16 %v770
  %v3665 = vunpack.c.h.b16 %v770
  %v3666 = vunpack.c.l.b16 %v771
  %v3667 = vunpack.c.h.b16 %v771
  %v3668 = vunpack.c.l.b16 %v772
  %v3669 = vunpack.c.h.b16 %v772
  %v3670 = vunpack.c.l.b16 %v773
  %v3671 = vunpack.c.h.b16 %v773
  %v3672 = vunpack.c.l.b16 %v774
  %v3673 = vunpack.c.h.b16 %v774
  %v3674 = vunpack.c.l.b16 %v775
  %v3675 = vunpack.c.h.b16 %v775
  %v3676 = vunpack.c.l.b16 %v776
  %v3677 = vunpack.c.h.b16 %v776
  %v3678 = vunpack.c.l.b16 %v777
  %v3679 = vunpack.c.h.b16 %v777
  %v3680 = vunpack.c.l.b16 %v778
  %v3681 = vunpack.c.h.b16 %v778
  %v3682 = vunpack.c.l.b16 %v779
  %v3683 = vunpack.c.h.b16 %v779
  %v3684 = vunpack.c.l.b16 %v780
  %v3685 = vunpack.c.h.b16 %v780
  %v3686 = vunpack.c.l.b16 %v781
  %v3687 = vunpack.c.h.b16 %v781
  %v3688 = vunpack.c.l.b16 %v782
  %v3689 = vunpack.c.h.b16 %v782
  %v3690 = vunpack.c.l.b16 %v783
  %v3691 = vunpack.c.h.b16 %v783
  %v3692 = vunpack.c.l.b16 %v784
  %v3693 = vunpack.c.h.b16 %v784
  %v3694 = vunpack.c.l.b16 %v785
  %v3695 = vunpack.c.h.b16 %v785
  %v3696 = vunpack.c.l.b16 %v786
  %v3697 = vunpack.c.h.b16 %v786
  %v3698 = vunpack.c.l.b16 %v787
  %v3699 = vunpack.c.h.b16 %v787
  %v3700 = vunpack.c.l.b16 %v788
  %v3701 = vunpack.c.h.b16 %v788
  %v3702 = vunpack.c.l.b16 %v789
  %v3703 = vunpack.c.h.b16 %v789
  %v3704 = vunpack.c.l.b16 %v790
  %v3705 = vunpack.c.h.b16 %v790
  %v3706 = vunpack.c.l.b16 %v791
  %v3707 = vunpack.c.h.b16 %v791
  %v3708 = vunpack.c.l.b16 %v792
  %v3709 = vunpack.c.h.b16 %v792
  %v3710 = vunpack.c.l.b16 %v793
  %v3711 = vunpack.c.h.b16 %v793
  %v3712 = vunpack.c.l.b16 %v794
  %v3713 = vunpack.c.h.b16 %v794
  %v3714 = vunpack.c.l.b16 %v795
  %v3715 = vunpack.c.h.b16 %v795
  %v3716 = vunpack.c.l.b16 %v796
  %v3717 = vunpack.c.h.b16 %v796
  %v3718 = vunpack.c.l.b16 %v797
  %v3719 = vunpack.c.h.b16 %v797
  %v3720 = vunpack.c.l.b16 %v798
  %v3721 = vunpack.c.h.b16 %v798
  %v3722 = vunpack.c.l.b16 %v799
  %v3723 = vunpack.c.h.b16 %v799
  %v3724 = vunpack.c.l.b16 %v800
  %v3725 = vunpack.c.h.b16 %v800
  %v3726 = vunpack.c.l.b16 %v801
  %v3727 = vunpack.c.h.b16 %v801
  %v3728 = vunpack.c.l.b16 %v802
  %v3729 = vunpack.c.h.b16 %v802
  %v3730 = vunpack.c.l.b16 %v803
  %v3731 = vunpack.c.h.b16 %v803
  %v3732 = vunpack.c.l.b16 %v804
  %v3733 = vunpack.c.h.b16 %v804
  %v3734 = vunpack.c.l.b16 %v805
  %v3735 = vunpack.c.h.b16 %v805
  %v3736 = vunpack.c.l.b16 %v806
  %v3737 = vunpack.c.h.b16 %v806
  %v3738 = vunpack.c.l.b16 %v807
  %v3739 = vunpack.c.h.b16 %v807
  %v3740 = vunpack.c.l.b16 %v808
  %v3741 = vunpack.c.h.b16 %v808
  %v3742 = vunpack.c.l.b16 %v809
  %v3743 = vunpack.c.h.b16 %v809
  %v3744 = vunpack.c.l.b16 %v810
  %v3745 = vunpack.c.h.b16 %v810
  %v3746 = vunpack.c.l.b16 %v811
  %v3747 = vunpack.c.h.b16 %v811
  %v3748 = vunpack.c.l.b16 %v812
  %v3749 = vunpack.c.h.b16 %v812
  %v3750 = vunpack.c.l.b16 %v813
  %v3751 = vunpack.c.h.b16 %v813
  %v3752 = vunpack.c.l.b16 %v814
  %v3753 = vunpack.c.h.b16 %v814
  %v3754 = vunpack.c.l.b16 %v815
  %v3755 = vunpack.c.h.b16 %v815
  %v3756 = vunpack.c.l.b16 %v816
  %v3757 = vunpack.c.h.b16 %v816
  %v3758 = vunpack.c.l.b16 %v817
  %v3759 = vunpack.c.h.b16 %v817
  %v3760 = vunpack.c.l.b16 %v818
  %v3761 = vunpack.c.h.b16 %v818
  %v3762 = vunpack.c.l.b16 %v819
  %v3763 = vunpack.c.h.b16 %v819
  %v3764 = vunpack.c.l.b16 %v820
  %v3765 = vunpack.c.h.b16 %v820
  %v3766 = vunpack.c.l.b16 %v821
  %v3767 = vunpack.c.h.b16 %v821
  %v3768 = vunpack.c.l.b16 %v822
  %v3769 = vunpack.c.h.b16 %v822
  %v3770 = vunpack.c.l.b16 %v823
  %v3771 = vunpack.c.h.b16 %v823
  %v3772 = vunpack.c.l.b16 %v824
  %v3773 = vunpack.c.h.b16 %v824
  %v3774 = vunpack.c.l.b16 %v825
  %v3775 = vunpack.c.h.b16 %v825
  %v3776 = vunpack.c.l.b16 %v826
  %v3777 = vunpack.c.h.b16 %v826
  %v3778 = vunpack.c.l.b16 %v827
  %v3779 = vunpack.c.h.b16 %v827
  %v3780 = vunpack.c.l.b16 %v828
  %v3781 = vunpack.c.h.b16 %v828
  %v3782 = vunpack.c.l.b16 %v829
  %v3783 = vunpack.c.h.b16 %v829
  %v3784 = vunpack.c.l.b16 %v830
  %v3785 = vunpack.c.h.b16 %v830
  %v3786 = vunpack.c.l.b16 %v831
  %v3787 = vunpack.c.h.b16 %v831
  %v3788 = vunpack.c.l.b16 %v832
  %v3789 = vunpack.c.h.b16 %v832
  %v3790 = vunpack.c.l.b16 %v833
  %v3791 = vunpack.c.h.b16 %v833
  %v3792 = vunpack.c.l.b16 %v834
  %v3793 = vunpack.c.h.b16 %v834
  %v3794 = vunpack.c.l.b16 %v835
  %v3795 = vunpack.c.h.b16 %v835
  %v3796 = vunpack.c.l.b16 %v836
  %v3797 = vunpack.c.h.b16 %v836
  %v3798 = vunpack.c.l.b16 %v837
  %v3799 = vunpack.c.h.b16 %v837
  %v3800 = vunpack.c.l.b16 %v838
  %v3801 = vunpack.c.h.b16 %v838
  %v3802 = vunpack.c.l.b16 %v839
  %v3803 = vunpack.c.h.b16 %v839
  %v3804 = vunpack.c.l.b16 %v840
  %v3805 = vunpack.c.h.b16 %v840
  %v3806 = vunpack.c.l.b16 %v841
  %v3807 = vunpack.c.h.b16 %v841
  %v3808 = vunpack.c.l.b16 %v842
  %v3809 = vunpack.c.h.b16 %v842
  %v3810 = vunpack.c.l.b16 %v843
  %v3811 = vunpack.c.h.b16 %v843
  %v3812 = vunpack.c.l.b16 %v844
  %v3813 = vunpack.c.h.b16 %v844
  %v3814 = vunpack.c.l.b16 %v845
  %v3815 = vunpack.c.h.b16 %v845
  %v3816 = vunpack.c.l.b16 %v846
  %v3817 = vunpack.c.h.b16 %v846
  %v3818 = vunpack.c.l.b16 %v847
  %v3819 = vunpack.c.h.b16 %v847
  %v3820 = vunpack.c.l.b16 %v848
  %v3821 = vunpack.c.h.b16 %v848
  %v3822 = vunpack.c.l.b16 %v849
  %v3823 = vunpack.c.h.b16 %v849
  %v3824 = vunpack.c.l.b16 %v850
  %v3825 = vunpack.c.h.b16 %v850
  %v3826 = vunpack.c.l.b16 %v851
  %v3827 = vunpack.c.h.b16 %v851
  %v3828 = vunpack.c.l.b16 %v852
  %v3829 = vunpack.c.h.b16 %v852
  %v3830 = vunpack.c.l.b16 %v853
  %v3831 = vunpack.c.h.b16 %v853
  %v3832 = vunpack.c.l.b16 %v854
  %v3833 = vunpack.c.h.b16 %v854
  %v3834 = vunpack.c.l.b16 %v855
  %v3835 = vunpack.c.h.b16 %v855
  %v3836 = vunpack.c.l.b16 %v856
  %v3837 = vunpack.c.h.b16 %v856
  %v3838 = vunpack.c.l.b16 %v857
  %v3839 = vunpack.c.h.b16 %v857
  %v3840 = vunpack.c.l.b16 %v858
  %v3841 = vunpack.c.h.b16 %v858
  %v3842 = vunpack.c.l.b16 %v859
  %v3843 = vunpack.c.h.b16 %v859
  %v3844 = vunpack.c.l.b16 %v860
  %v3845 = vunpack.c.h.b16 %v860
  %v3846 = vunpack.c.l.b16 %v861
  %v3847 = vunpack.c.h.b16 %v861
  %v3848 = vunpack.c.l.b16 %v862
  %v3849 = vunpack.c.h.b16 %v862
  %v3850 = vunpack.c.l.b16 %v863
  %v3851 = vunpack.c.h.b16 %v863
  %v3852 = vunpack.c.l.b16 %v864
  %v3853 = vunpack.c.h.b16 %v864
  %v3854 = vunpack.c.l.b16 %v865
  %v3855 = vunpack.c.h.b16 %v865
  %v3856 = vunpack.c.l.b16 %v866
  %v3857 = vunpack.c.h.b16 %v866
  %v3858 = vunpack.c.l.b16 %v867
  %v3859 = vunpack.c.h.b16 %v867
  %v3860 = vunpack.c.l.b16 %v868
  %v3861 = vunpack.c.h.b16 %v868
  %v3862 = vunpack.c.l.b16 %v869
  %v3863 = vunpack.c.h.b16 %v869
  %v3864 = vunpack.c.l.b16 %v870
  %v3865 = vunpack.c.h.b16 %v870
  %v3866 = vunpack.c.l.b16 %v871
  %v3867 = vunpack.c.h.b16 %v871
  %v3868 = vunpack.c.l.b16 %v872
  %v3869 = vunpack.c.h.b16 %v872
  %v3870 = vunpack.c.l.b16 %v873
  %v3871 = vunpack.c.h.b16 %v873
  %v3872 = vunpack.c.l.b16 %v874
  %v3873 = vunpack.c.h.b16 %v874
  %v3874 = vunpack.c.l.b16 %v875
  %v3875 = vunpack.c.h.b16 %v875
  %v3876 = vunpack.c.l.b16 %v876
  %v3877 = vunpack.c.h.b16 %v876
  %v3878 = vunpack.c.l.b16 %v877
  %v3879 = vunpack.c.h.b16 %v877
  %v3880 = vunpack.c.l.b16 %v878
  %v3881 = vunpack.c.h.b16 %v878
  %v3882 = vunpack.c.l.b16 %v879
  %v3883 = vunpack.c.h.b16 %v879
  %v3884 = vunpack.c.l.b16 %v880
  %v3885 = vunpack.c.h.b16 %v880
  %v3886 = vunpack.c.l.b16 %v881
  %v3887 = vunpack.c.h.b16 %v881
  %v3888 = vunpack.c.l.b16 %v882
  %v3889 = vunpack.c.h.b16 %v882
  %v3890 = vunpack.c.l.b16 %v883
  %v3891 = vunpack.c.h.b16 %v883
  %v3892 = vunpack.c.l.b16 %v884
  %v3893 = vunpack.c.h.b16 %v884
  %v3894 = vunpack.c.l.b16 %v885
  %v3895 = vunpack.c.h.b16 %v885
  %v3896 = vunpack.c.l.b16 %v886
  %v3897 = vunpack.c.h.b16 %v886
  %v3898 = vunpack.c.l.b16 %v887
  %v3899 = vunpack.c.h.b16 %v887
  %v3900 = vunpack.c.l.b16 %v888
  %v3901 = vunpack.c.h.b16 %v888
  %v3902 = vunpack.c.l.b16 %v889
  %v3903 = vunpack.c.h.b16 %v889
  %v3904 = vunpack.c.l.b16 %v890
  %v3905 = vunpack.c.h.b16 %v890
  %v3906 = vunpack.c.l.b16 %v891
  %v3907 = vunpack.c.h.b16 %v891
  %v3908 = vunpack.c.l.b16 %v892
  %v3909 = vunpack.c.h.b16 %v892
  %v3910 = vunpack.c.l.b16 %v893
  %v3911 = vunpack.c.h.b16 %v893
  %v3912 = vunpack.c.l.b16 %v894
  %v3913 = vunpack.c.h.b16 %v894
  %v3914 = vunpack.c.l.b16 %v895
  %v3915 = vunpack.c.h.b16 %v895
  %v3916 = vunpack.c.l.b16 %v896
  %v3917 = vunpack.c.h.b16 %v896
  %v3918 = vunpack.c.l.b16 %v897
  %v3919 = vunpack.c.h.b16 %v897
  %v3920 = vunpack.c.l.b16 %v898
  %v3921 = vunpack.c.h.b16 %v898
  %v3922 = vunpack.c.l.b16 %v899
  %v3923 = vunpack.c.h.b16 %v899
  %v3924 = vunpack.c.l.b16 %v900
  %v3925 = vunpack.c.h.b16 %v900
  %v3926 = vunpack.c.l.b16 %v901
  %v3927 = vunpack.c.h.b16 %v901
  %v3928 = vunpack.c.l.b16 %v902
  %v3929 = vunpack.c.h.b16 %v902
  %v3930 = vunpack.c.l.b16 %v903
  %v3931 = vunpack.c.h.b16 %v903
  %v3932 = vunpack.c.l.b16 %v904
  %v3933 = vunpack.c.h.b16 %v904
  %v3934 = vunpack.c.l.b16 %v905
  %v3935 = vunpack.c.h.b16 %v905
  %v3936 = vunpack.c.l.b16 %v906
  %v3937 = vunpack.c.h.b16 %v906
  %v3938 = vunpack.c.l.b16 %v907
  %v3939 = vunpack.c.h.b16 %v907
  %v3940 = vunpack.c.l.b16 %v908
  %v3941 = vunpack.c.h.b16 %v908
  %v3942 = vunpack.c.l.b16 %v909
  %v3943 = vunpack.c.h.b16 %v909
  %v3944 = vunpack.c.l.b16 %v910
  %v3945 = vunpack.c.h.b16 %v910
  %v3946 = vunpack.c.l.b16 %v911
  %v3947 = vunpack.c.h.b16 %v911
  %v3948 = vunpack.c.l.b16 %v912
  %v3949 = vunpack.c.h.b16 %v912
  %v3950 = vunpack.c.l.b16 %v913
  %v3951 = vunpack.c.h.b16 %v913
  %v3952 = vunpack.c.l.b16 %v914
  %v3953 = vunpack.c.h.b16 %v914
  %v3954 = vunpack.c.l.b16 %v915
  %v3955 = vunpack.c.h.b16 %v915
  %v3956 = vunpack.c.l.b16 %v916
  %v3957 = vunpack.c.h.b16 %v916
  %v3958 = vunpack.c.l.b16 %v917
  %v3959 = vunpack.c.h.b16 %v917
  %v3960 = vunpack.c.l.b16 %v918
  %v3961 = vunpack.c.h.b16 %v918
  %v3962 = vunpack.c.l.b16 %v919
  %v3963 = vunpack.c.h.b16 %v919
  %v3964 = vunpack.c.l.b16 %v920
  %v3965 = vunpack.c.h.b16 %v920
  %v3966 = vunpack.c.l.b16 %v921
  %v3967 = vunpack.c.h.b16 %v921
  %v3968 = vunpack.c.l.b16 %v922
  %v3969 = vunpack.c.h.b16 %v922
  %v3970 = vunpack.c.l.b16 %v923
  %v3971 = vunpack.c.h.b16 %v923
  %v3972 = vunpack.c.l.b16 %v924
  %v3973 = vunpack.c.h.b16 %v924
  %v3974 = vunpack.c.l.b16 %v925
  %v3975 = vunpack.c.h.b16 %v925
  %v3976 = vunpack.c.l.b16 %v926
  %v3977 = vunpack.c.h.b16 %v926
  %v3978 = vunpack.c.l.b16 %v927
  %v3979 = vunpack.c.h.b16 %v927
  %v3980 = vunpack.c.l.b16 %v928
  %v3981 = vunpack.c.h.b16 %v928
  %v3982 = vunpack.c.l.b16 %v929
  %v3983 = vunpack.c.h.b16 %v929
  %v3984 = vunpack.c.l.b16 %v930
  %v3985 = vunpack.c.h.b16 %v930
  %v3986 = vunpack.c.l.b16 %v931
  %v3987 = vunpack.c.h.b16 %v931
  %v3988 = vunpack.c.l.b16 %v932
  %v3989 = vunpack.c.h.b16 %v932
  %v3990 = vunpack.c.l.b16 %v933
  %v3991 = vunpack.c.h.b16 %v933
  %v3992 = vunpack.c.l.b16 %v934
  %v3993 = vunpack.c.h.b16 %v934
  %v3994 = vunpack.c.l.b16 %v935
  %v3995 = vunpack.c.h.b16 %v935
  %v3996 = vunpack.c.l.b16 %v936
  %v3997 = vunpack.c.h.b16 %v936
  %v3998 = vunpack.c.l.b16 %v937
  %v3999 = vunpack.c.h.b16 %v937
  %v4000 = vunpack.c.l.b16 %v938
  %v4001 = vunpack.c.h.b16 %v938
  %v4002 = vunpack.c.l.b16 %v939
  %v4003 = vunpack.c.h.b16 %v939
  %v4004 = vunpack.c.l.b16 %v940
  %v4005 = vunpack.c.h.b16 %v940
  %v4006 = vunpack.c.l.b16 %v941
  %v4007 = vunpack.c.h.b16 %v941
  %v4008 = vunpack.c.l.b16 %v942
  %v4009 = vunpack.c.h.b16 %v942
  %v4010 = vunpack.c.l.b16 %v943
  %v4011 = vunpack.c.h.b16 %v943
  %v4012 = vunpack.c.l.b16 %v944
  %v4013 = vunpack.c.h.b16 %v944
  %v4014 = vunpack.c.l.b16 %v945
  %v4015 = vunpack.c.h.b16 %v945
  %v4016 = vunpack.c.l.b16 %v946
  %v4017 = vunpack.c.h.b16 %v946
  %v4018 = vunpack.c.l.b16 %v947
  %v4019 = vunpack.c.h.b16 %v947
  %v4020 = vunpack.c.l.b16 %v948
  %v4021 = vunpack.c.h.b16 %v948
  %v4022 = vunpack.c.l.b16 %v949
  %v4023 = vunpack.c.h.b16 %v949
  %v4024 = vunpack.c.l.b16 %v950
  %v4025 = vunpack.c.h.b16 %v950
  %v4026 = vunpack.c.l.b16 %v951
  %v4027 = vunpack.c.h.b16 %v951
  %v4028 = vunpack.c.l.b16 %v952
  %v4029 = vunpack.c.h.b16 %v952
  %v4030 = vunpack.c.l.b16 %v953
  %v4031 = vunpack.c.h.b16 %v953
  %v4032 = vunpack.c.l.b16 %v954
  %v4033 = vunpack.c.h.b16 %v954
  %v4034 = vunpack.c.l.b16 %v955
  %v4035 = vunpack.c.h.b16 %v955
  %v4036 = vunpack.c.l.b16 %v956
  %v4037 = vunpack.c.h.b16 %v956
  %v4038 = vunpack.c.l.b16 %v957
  %v4039 = vunpack.c.h.b16 %v957
  %v4040 = vunpack.c.l.b16 %v958
  %v4041 = vunpack.c.h.b16 %v958
  %v4042 = vunpack.c.l.b16 %v959
  %v4043 = vunpack.c.h.b16 %v959
  %v4044 = vunpack.c.l.b16 %v960
  %v4045 = vunpack.c.h.b16 %v960
  %v4046 = vunpack.c.l.b16 %v961
  %v4047 = vunpack.c.h.b16 %v961
  %v4048 = vunpack.c.l.b16 %v962
  %v4049 = vunpack.c.h.b16 %v962
  %v4050 = vunpack.c.l.b16 %v963
  %v4051 = vunpack.c.h.b16 %v963
  %v4052 = vunpack.c.l.b16 %v964
  %v4053 = vunpack.c.h.b16 %v964
  %v4054 = vunpack.c.l.b16 %v965
  %v4055 = vunpack.c.h.b16 %v965
  %v4056 = vunpack.c.l.b16 %v966
  %v4057 = vunpack.c.h.b16 %v966
  %v4058 = vunpack.c.l.b16 %v967
  %v4059 = vunpack.c.h.b16 %v967
  %v4060 = vunpack.c.l.b16 %v968
  %v4061 = vunpack.c.h.b16 %v968
  %v4062 = vunpack.c.l.b16 %v969
  %v4063 = vunpack.c.h.b16 %v969
  %v4064 = vunpack.c.l.b16 %v970
  %v4065 = vunpack.c.h.b16 %v970
  %v4066 = vunpack.c.l.b16 %v971
  %v4067 = vunpack.c.h.b16 %v971
  %v4068 = vunpack.c.l.b16 %v972
  %v4069 = vunpack.c.h.b16 %v972
  %v4070 = vunpack.c.l.b16 %v973
  %v4071 = vunpack.c.h.b16 %v973
  %v4072 = vunpack.c.l.b16 %v974
  %v4073 = vunpack.c.h.b16 %v974
  %v4074 = vunpack.c.l.b16 %v975
  %v4075 = vunpack.c.h.b16 %v975
  %v4076 = vunpack.c.l.b16 %v976
  %v4077 = vunpack.c.h.b16 %v976
  %v4078 = vunpack.c.l.b16 %v977
  %v4079 = vunpack.c.h.b16 %v977
  %v4080 = vunpack.c.l.b16 %v978
  %v4081 = vunpack.c.h.b16 %v978
  %v4082 = vunpack.c.l.b16 %v979
  %v4083 = vunpack.c.h.b16 %v979
  %v4084 = vunpack.c.l.b16 %v980
  %v4085 = vunpack.c.h.b16 %v980
  %v4086 = vunpack.c.l.b16 %v981
  %v4087 = vunpack.c.h.b16 %v981
  %v4088 = vunpack.c.l.b16 %v982
  %v4089 = vunpack.c.h.b16 %v982
  %v4090 = vunpack.c.l.b16 %v983
  %v4091 = vunpack.c.h.b16 %v983
  %v4092 = vunpack.c.l.b16 %v984
  %v4093 = vunpack.c.h.b16 %v984
  %v4094 = vunpack.c.l.b16 %v985
  %v4095 = vunpack.c.h.b16 %v985
  %v4096 = vunpack.c.l.b16 %v986
  %v4097 = vunpack.c.h.b16 %v986
  %v4098 = vunpack.c.l.b16 %v987
  %v4099 = vunpack.c.h.b16 %v987
  %v4100 = vunpack.c.l.b16 %v988
  %v4101 = vunpack.c.h.b16 %v988
  %v4102 = vunpack.c.l.b16 %v989
  %v4103 = vunpack.c.h.b16 %v989
  %v4104 = vunpack.c.l.b16 %v990
  %v4105 = vunpack.c.h.b16 %v990
  %v4106 = vunpack.c.l.b16 %v991
  %v4107 = vunpack.c.h.b16 %v991
  %v4108 = vunpack.c.l.b16 %v992
  %v4109 = vunpack.c.h.b16 %v992
  %v4110 = vunpack.c.l.b16 %v993
  %v4111 = vunpack.c.h.b16 %v993
  %v4112 = vunpack.c.l.b16 %v994
  %v4113 = vunpack.c.h.b16 %v994
  %v4114 = vunpack.c.l.b16 %v995
  %v4115 = vunpack.c.h.b16 %v995
  %v4116 = vunpack.c.l.b16 %v996
  %v4117 = vunpack.c.h.b16 %v996
  %v4118 = vunpack.c.l.b16 %v997
  %v4119 = vunpack.c.h.b16 %v997
  %v4120 = vunpack.c.l.b16 %v998
  %v4121 = vunpack.c.h.b16 %v998
  %v4122 = vunpack.c.l.b16 %v999
  %v4123 = vunpack.c.h.b16 %v999
  %v4124 = vunpack.c.l.b16 %v1000
  %v4125 = vunpack.c.h.b16 %v1000
  %v4126 = vunpack.c.l.b16 %v1001
  %v4127 = vunpack.c.h.b16 %v1001
  %v4128 = vunpack.c.l.b16 %v1002
  %v4129 = vunpack.c.h.b16 %v1002
  %v4130 = vunpack.c.l.b16 %v1003
  %v4131 = vunpack.c.h.b16 %v1003
  %v4132 = vunpack.c.l.b16 %v1004
  %v4133 = vunpack.c.h.b16 %v1004
  %v4134 = vunpack.c.l.b16 %v1005
  %v4135 = vunpack.c.h.b16 %v1005
  %v4136 = vunpack.c.l.b16 %v1006
  %v4137 = vunpack.c.h.b16 %v1006
  %v4138 = vunpack.c.l.b16 %v1007
  %v4139 = vunpack.c.h.b16 %v1007
  %v4140 = vunpack.c.l.b16 %v1008
  %v4141 = vunpack.c.h.b16 %v1008
  %v4142 = vunpack.c.l.b16 %v1009
  %v4143 = vunpack.c.h.b16 %v1009
  %v4144 = vunpack.c.l.b16 %v1010
  %v4145 = vunpack.c.h.b16 %v1010
  %v4146 = vunpack.c.l.b16 %v1011
  %v4147 = vunpack.c.h.b16 %v1011
  %v4148 = vunpack.c.l.b16 %v1012
  %v4149 = vunpack.c.h.b16 %v1012
  %v4150 = vunpack.c.l.b16 %v1013
  %v4151 = vunpack.c.h.b16 %v1013
  %v4152 = vunpack.c.l.b16 %v1014
  %v4153 = vunpack.c.h.b16 %v1014
  %v4154 = vunpack.c.l.b16 %v1015
  %v4155 = vunpack.c.h.b16 %v1015
  %v4156 = vunpack.c.l.b16 %v1016
  %v4157 = vunpack.c.h.b16 %v1016
  %v4158 = vunpack.c.l.b16 %v1017
  %v4159 = vunpack.c.h.b16 %v1017
  %v4160 = vunpack.c.l.b16 %v1018
  %v4161 = vunpack.c.h.b16 %v1018
  %v4162 = vunpack.c.l.b16 %v1019
  %v4163 = vunpack.c.h.b16 %v1019
  %v4164 = vunpack.c.l.b16 %v1020
  %v4165 = vunpack.c.h.b16 %v1020
  %v4166 = vunpack.c.l.b16 %v1021
  %v4167 = vunpack.c.h.b16 %v1021
  %v4168 = vunpack.c.l.b16 %v1022
  %v4169 = vunpack.c.h.b16 %v1022
  %v4170 = vunpack.c.l.b16 %v1023
  %v4171 = vunpack.c.h.b16 %v1023
  %v4172 = vunpack.c.l.b16 %v1024
  %v4173 = vunpack.c.h.b16 %v1024
  %v4174 = vunpack.c.l.b16 %v1025
  %v4175 = vunpack.c.h.b16 %v1025
  %v4176 = vunpack.c.l.b16 %v1026
  %v4177 = vunpack.c.h.b16 %v1026
  %v4178 = vunpack.c.l.b16 %v1027
  %v4179 = vunpack.c.h.b16 %v1027
  %v4180 = vunpack.c.l.b16 %v1028
  %v4181 = vunpack.c.h.b16 %v1028
  %v4182 = vunpack.c.l.b16 %v1029
  %v4183 = vunpack.c.h.b16 %v1029
  %v4184 = vunpack.c.l.b16 %v1030
  %v4185 = vunpack.c.h.b16 %v1030
  %v4186 = vunpack.c.l.b16 %v1031
  %v4187 = vunpack.c.h.b16 %v1031
  %v4188 = vunpack.c.l.b16 %v1032
  %v4189 = vunpack.c.h.b16 %v1032
  %v4190 = vunpack.c.l.b16 %v1033
  %v4191 = vunpack.c.h.b16 %v1033
  %v4192 = vunpack.c.l.b16 %v1034
  %v4193 = vunpack.c.h.b16 %v1034
  %v4194 = vunpack.c.l.b16 %v1035
  %v4195 = vunpack.c.h.b16 %v1035
  %v4196 = vunpack.c.l.b16 %v1036
  %v4197 = vunpack.c.h.b16 %v1036
  %v4198 = vunpack.c.l.b16 %v1037
  %v4199 = vunpack.c.h.b16 %v1037
  %v4200 = vunpack.c.l.b16 %v1038
  %v4201 = vunpack.c.h.b16 %v1038
  %v4202 = vunpack.c.l.b16 %v1039
  %v4203 = vunpack.c.h.b16 %v1039
  %v4204 = vunpack.c.l.b16 %v1040
  %v4205 = vunpack.c.h.b16 %v1040
  %v4206 = vunpack.c.l.b16 %v1041
  %v4207 = vunpack.c.h.b16 %v1041
  %v4208 = vunpack.c.l.b16 %v1042
  %v4209 = vunpack.c.h.b16 %v1042
  %v4210 = vunpack.c.l.b16 %v1043
  %v4211 = vunpack.c.h.b16 %v1043
  %v4212 = vunpack.c.l.b16 %v1044
  %v4213 = vunpack.c.h.b16 %v1044
  %v4214 = vunpack.c.l.b16 %v1045
  %v4215 = vunpack.c.h.b16 %v1045
  %v4216 = vpack.c.b16 %v2176, %v2168
  %v4217 = vpack.c.b16 %v2177, %v2169
  %v4218 = vpack.c.b16 %v2178, %v2170
  %v4219 = vpack.c.b16 %v2179, %v2171
  %v4220 = vpack.c.b16 %v2180, %v2172
  %v4221 = vpack.c.b16 %v2181, %v2173
  %v4222 = vpack.c.b16 %v2182, %v2174
  %v4223 = vpack.c.b16 %v2183, %v2175
  %v4224 = vpack.c.b16 %v2192, %v2184
  %v4225 = vpack.c.b16 %v2193, %v2185
  %v4226 = vpack.c.b16 %v2194, %v2186
  %v4227 = vpack.c.b16 %v2195, %v2187
  %v4228 = vpack.c.b16 %v2196, %v2188
  %v4229 = vpack.c.b16 %v2197, %v2189
  %v4230 = vpack.c.b16 %v2198, %v2190
  %v4231 = vpack.c.b16 %v2199, %v2191
  %v4232 = vpack.c.b16 %v2208, %v2200
  %v4233 = vpack.c.b16 %v2209, %v2201
  %v4234 = vpack.c.b16 %v2210, %v2202
  %v4235 = vpack.c.b16 %v2211, %v2203
  %v4236 = vpack.c.b16 %v2212, %v2204
  %v4237 = vpack.c.b16 %v2213, %v2205
  %v4238 = vpack.c.b16 %v2214, %v2206
  %v4239 = vpack.c.b16 %v2215, %v2207
  %v4240 = vpack.c.b16 %v2224, %v2216
  %v4241 = vpack.c.b16 %v2225, %v2217
  %v4242 = vpack.c.b16 %v2226, %v2218
  %v4243 = vpack.c.b16 %v2227, %v2219
  %v4244 = vpack.c.b16 %v2228, %v2220
  %v4245 = vpack.c.b16 %v2229, %v2221
  %v4246 = vpack.c.b16 %v2230, %v2222
  %v4247 = vpack.c.b16 %v2231, %v2223
  %v4248 = vpack.c.b16 %v2240, %v2232
  %v4249 = vpack.c.b16 %v2241, %v2233
  %v4250 = vpack.c.b16 %v2242, %v2234
  %v4251 = vpack.c.b16 %v2243, %v2235
  %v4252 = vpack.c.b16 %v2244, %v2236
  %v4253 = vpack.c.b16 %v2245, %v2237
  %v4254 = vpack.c.b16 %v2246, %v2238
  %v4255 = vpack.c.b16 %v2247, %v2239
  %v4256 = vpack.c.b16 %v2256, %v2248
  %v4257 = vpack.c.b16 %v2257, %v2249
  %v4258 = vpack.c.b16 %v2258, %v2250
  %v4259 = vpack.c.b16 %v2259, %v2251
  %v4260 = vpack.c.b16 %v2260, %v2252
  %v4261 = vpack.c.b16 %v2261, %v2253
  %v4262 = vpack.c.b16 %v2262, %v2254
  %v4263 = vpack.c.b16 %v2263, %v2255
  %v4264 = vpack.c.b16 %v2272, %v2264
  %v4265 = vpack.c.b16 %v2273, %v2265
  %v4266 = vpack.c.b16 %v2274, %v2266
  %v4267 = vpack.c.b16 %v2275, %v2267
  %v4268 = vpack.c.b16 %v2276, %v2268
  %v4269 = vpack.c.b16 %v2277, %v2269
  %v4270 = vpack.c.b16 %v2278, %v2270
  %v4271 = vpack.c.b16 %v2279, %v2271
  %v4272 = vpack.c.b16 %v2288, %v2280
  %v4273 = vpack.c.b16 %v2289, %v2281
  %v4274 = vpack.c.b16 %v2290, %v2282
  %v4275 = vpack.c.b16 %v2291, %v2283
  %v4276 = vpack.c.b16 %v2292, %v2284
  %v4277 = vpack.c.b16 %v2293, %v2285
  %v4278 = vpack.c.b16 %v2294, %v2286
  %v4279 = vpack.c.b16 %v2295, %v2287
  %v4280 = vpack.c.b16 %v2304, %v2296
  %v4281 = vpack.c.b16 %v2305, %v2297
  %v4282 = vpack.c.b16 %v2306, %v2298
  %v4283 = vpack.c.b16 %v2307, %v2299
  %v4284 = vpack.c.b16 %v2308, %v2300
  %v4285 = vpack.c.b16 %v2309, %v2301
  %v4286 = vpack.c.b16 %v2310, %v2302
  %v4287 = vpack.c.b16 %v2311, %v2303
  %v4288 = vpack.c.b16 %v2320, %v2312
  %v4289 = vpack.c.b16 %v2321, %v2313
  %v4290 = vpack.c.b16 %v2322, %v2314
  %v4291 = vpack.c.b16 %v2323, %v2315
  %v4292 = vpack.c.b16 %v2324, %v2316
  %v4293 = vpack.c.b16 %v2325, %v2317
  %v4294 = vpack.c.b16 %v2326, %v2318
  %v4295 = vpack.c.b16 %v2327, %v2319
  %v4296 = vpack.c.b16 %v2336, %v2328
  %v4297 = vpack.c.b16 %v2337, %v2329
  %v4298 = vpack.c.b16 %v2338, %v2330
  %v4299 = vpack.c.b16 %v2339, %v2331
  %v4300 = vpack.c.b16 %v2340, %v2332
  %v4301 = vpack.c.b16 %v2341, %v2333
  %v4302 = vpack.c.b16 %v2342, %v2334
  %v4303 = vpack.c.b16 %v2343, %v2335
  %v4304 = vpack.c.b16 %v2352, %v2344
  %v4305 = vpack.c.b16 %v2353, %v2345
  %v4306 = vpack.c.b16 %v2354, %v2346
  %v4307 = vpack.c.b16 %v2355, %v2347
  %v4308 = vpack.c.b16 %v2356, %v2348
  %v4309 = vpack.c.b16 %v2357, %v2349
  %v4310 = vpack.c.b16 %v2358, %v2350
  %v4311 = vpack.c.b16 %v2359, %v2351
  %v4312 = vpack.c.b16 %v2368, %v2360
  %v4313 = vpack.c.b16 %v2369, %v2361
  %v4314 = vpack.c.b16 %v2370, %v2362
  %v4315 = vpack.c.b16 %v2371, %v2363
  %v4316 = vpack.c.b16 %v2372, %v2364
  %v4317 = vpack.c.b16 %v2373, %v2365
  %v4318 = vpack.c.b16 %v2374, %v2366
  %v4319 = vpack.c.b16 %v2375, %v2367
  %v4320 = vpack.c.b16 %v2384, %v2376
  %v4321 = vpack.c.b16 %v2385, %v2377
  %v4322 = vpack.c.b16 %v2386, %v2378
  %v4323 = vpack.c.b16 %v2387, %v2379
  %v4324 = vpack.c.b16 %v2388, %v2380
  %v4325 = vpack.c.b16 %v2389, %v2381
  %v4326 = vpack.c.b16 %v2390, %v2382
  %v4327 = vpack.c.b16 %v2391, %v2383
  %v4328 = vpack.c.b16 %v2400, %v2392
  %v4329 = vpack.c.b16 %v2401, %v2393
  %v4330 = vpack.c.b16 %v2402, %v2394
  %v4331 = vpack.c.b16 %v2403, %v2395
  %v4332 = vpack.c.b16 %v2404, %v2396
  %v4333 = vpack.c.b16 %v2405, %v2397
  %v4334 = vpack.c.b16 %v2406, %v2398
  %v4335 = vpack.c.b16 %v2407, %v2399
  %v4336 = vpack.c.b16 %v2416, %v2408
  %v4337 = vpack.c.b16 %v2417, %v2409
  %v4338 = vpack.c.b16 %v2418, %v2410
  %v4339 = vpack.c.b16 %v2419, %v2411
  %v4340 = vpack.c.b16 %v2420, %v2412
  %v4341 = vpack.c.b16 %v2421, %v2413
  %v4342 = vpack.c.b16 %v2422, %v2414
  %v4343 = vpack.c.b16 %v2423, %v2415
  %v4344 = vpack.c.b16 %v2432, %v2424
  %v4345 = vpack.c.b16 %v2433, %v2425
  %v4346 = vpack.c.b16 %v2434, %v2426
  %v4347 = vpack.c.b16 %v2435, %v2427
  %v4348 = vpack.c.b16 %v2436, %v2428
  %v4349 = vpack.c.b16 %v2437, %v2429
  %v4350 = vpack.c.b16 %v2438, %v2430
  %v4351 = vpack.c.b16 %v2439, %v2431
  %v4352 = vpack.c.b16 %v2448, %v2440
  %v4353 = vpack.c.b16 %v2449, %v2441
  %v4354 = vpack.c.b16 %v2450, %v2442
  %v4355 = vpack.c.b16 %v2451, %v2443
  %v4356 = vpack.c.b16 %v2452, %v2444
  %v4357 = vpack.c.b16 %v2453, %v2445
  %v4358 = vpack.c.b16 %v2454, %v2446
  %v4359 = vpack.c.b16 %v2455, %v2447
  %v4360 = vpack.c.b16 %v2464, %v2456
  %v4361 = vpack.c.b16 %v2465, %v2457
  %v4362 = vpack.c.b16 %v2466, %v2458
  %v4363 = vpack.c.b16 %v2467, %v2459
  %v4364 = vpack.c.b16 %v2468, %v2460
  %v4365 = vpack.c.b16 %v2469, %v2461
  %v4366 = vpack.c.b16 %v2470, %v2462
  %v4367 = vpack.c.b16 %v2471, %v2463
  %v4368 = vpack.c.b16 %v2480, %v2472
  %v4369 = vpack.c.b16 %v2481, %v2473
  %v4370 = vpack.c.b16 %v2482, %v2474
  %v4371 = vpack.c.b16 %v2483, %v2475
  %v4372 = vpack.c.b16 %v2484, %v2476
  %v4373 = vpack.c.b16 %v2485, %v2477
  %v4374 = vpack.c.b16 %v2486, %v2478
  %v4375 = vpack.c.b16 %v2487, %v2479
  %v4376 = vpack.c.b16 %v2496, %v2488
  %v4377 = vpack.c.b16 %v2497, %v2489
  %v4378 = vpack.c.b16 %v2498, %v2490
  %v4379 = vpack.c.b16 %v2499, %v2491
  %v4380 = vpack.c.b16 %v2500, %v2492
  %v4381 = vpack.c.b16 %v2501, %v2493
  %v4382 = vpack.c.b16 %v2502, %v2494
  %v4383 = vpack.c.b16 %v2503, %v2495
  %v4384 = vpack.c.b16 %v2512, %v2504
  %v4385 = vpack.c.b16 %v2513, %v2505
  %v4386 = vpack.c.b16 %v2514, %v2506
  %v4387 = vpack.c.b16 %v2515, %v2507
  %v4388 = vpack.c.b16 %v2516, %v2508
  %v4389 = vpack.c.b16 %v2517, %v2509
  %v4390 = vpack.c.b16 %v2518, %v2510
  %v4391 = vpack.c.b16 %v2519, %v2511
  %v4392 = vpack.c.b16 %v2528, %v2520
  %v4393 = vpack.c.b16 %v2529, %v2521
  %v4394 = vpack.c.b16 %v2530, %v2522
  %v4395 = vpack.c.b16 %v2531, %v2523
  %v4396 = vpack.c.b16 %v2532, %v2524
  %v4397 = vpack.c.b16 %v2533, %v2525
  %v4398 = vpack.c.b16 %v2534, %v2526
  %v4399 = vpack.c.b16 %v2535, %v2527
  %v4400 = vpack.c.b16 %v2544, %v2536
  %v4401 = vpack.c.b16 %v2545, %v2537
  %v4402 = vpack.c.b16 %v2546, %v2538
  %v4403 = vpack.c.b16 %v2547, %v2539
  %v4404 = vpack.c.b16 %v2548, %v2540
  %v4405 = vpack.c.b16 %v2549, %v2541
  %v4406 = vpack.c.b16 %v2550, %v2542
  %v4407 = vpack.c.b16 %v2551, %v2543
  %v4408 = vpack.c.b16 %v2560, %v2552
  %v4409 = vpack.c.b16 %v2561, %v2553
  %v4410 = vpack.c.b16 %v2562, %v2554
  %v4411 = vpack.c.b16 %v2563, %v2555
  %v4412 = vpack.c.b16 %v2564, %v2556
  %v4413 = vpack.c.b16 %v2565, %v2557
  %v4414 = vpack.c.b16 %v2566, %v2558
  %v4415 = vpack.c.b16 %v2567, %v2559
  %v4416 = vpack.c.b16 %v2576, %v2568
  %v4417 = vpack.c.b16 %v2577, %v2569
  %v4418 = vpack.c.b16 %v2578, %v2570
  %v4419 = vpack.c.b16 %v2579, %v2571
  %v4420 = vpack.c.b16 %v2580, %v2572
  %v4421 = vpack.c.b16 %v2581, %v2573
  %v4422 = vpack.c.b16 %v2582, %v2574
  %v4423 = vpack.c.b16 %v2583, %v2575
  %v4424 = vpack.c.b16 %v2592, %v2584
  %v4425 = vpack.c.b16 %v2593, %v2585
  %v4426 = vpack.c.b16 %v2594, %v2586
  %v4427 = vpack.c.b16 %v2595, %v2587
  %v4428 = vpack.c.b16 %v2596, %v2588
  %v4429 = vpack.c.b16 %v2597, %v2589
  %v4430 = vpack.c.b16 %v2598, %v2590
  %v4431 = vpack.c.b16 %v2599, %v2591
  %v4432 = vpack.c.b16 %v2608, %v2600
  %v4433 = vpack.c.b16 %v2609, %v2601
  %v4434 = vpack.c.b16 %v2610, %v2602
  %v4435 = vpack.c.b16 %v2611, %v2603
  %v4436 = vpack.c.b16 %v2612, %v2604
  %v4437 = vpack.c.b16 %v2613, %v2605
  %v4438 = vpack.c.b16 %v2614, %v2606
  %v4439 = vpack.c.b16 %v2615, %v2607
  %v4440 = vpack.c.b16 %v2624, %v2616
  %v4441 = vpack.c.b16 %v2625, %v2617
  %v4442 = vpack.c.b16 %v2626, %v2618
  %v4443 = vpack.c.b16 %v2627, %v2619
  %v4444 = vpack.c.b16 %v2628, %v2620
  %v4445 = vpack.c.b16 %v2629, %v2621
  %v4446 = vpack.c.b16 %v2630, %v2622
  %v4447 = vpack.c.b16 %v2631, %v2623
  %v4448 = vpack.c.b16 %v2640, %v2632
  %v4449 = vpack.c.b16 %v2641, %v2633
  %v4450 = vpack.c.b16 %v2642, %v2634
  %v4451 = vpack.c.b16 %v2643, %v2635
  %v4452 = vpack.c.b16 %v2644, %v2636
  %v4453 = vpack.c.b16 %v2645, %v2637
  %v4454 = vpack.c.b16 %v2646, %v2638
  %v4455 = vpack.c.b16 %v2647, %v2639
  %v4456 = vpack.c.b16 %v2656, %v2648
  %v4457 = vpack.c.b16 %v2657, %v2649
  %v4458 = vpack.c.b16 %v2658, %v2650
  %v4459 = vpack.c.b16 %v2659, %v2651
  %v4460 = vpack.c.b16 %v2660, %v2652
  %v4461 = vpack.c.b16 %v2661, %v2653
  %v4462 = vpack.c.b16 %v2662, %v2654
  %v4463 = vpack.c.b16 %v2663, %v2655
  %v4464 = vpack.c.b16 %v2672, %v2664
  %v4465 = vpack.c.b16 %v2673, %v2665
  %v4466 = vpack.c.b16 %v2674, %v2666
  %v4467 = vpack.c.b16 %v2675, %v2667
  %v4468 = vpack.c.b16 %v2676, %v2668
  %v4469 = vpack.c.b16 %v2677, %v2669
  %v4470 = vpack.c.b16 %v2678, %v2670
  %v4471 = vpack.c.b16 %v2679, %v2671
  %v4472 = vpack.c.b16 %v2688, %v2680
  %v4473 = vpack.c.b16 %v2689, %v2681
  %v4474 = vpack.c.b16 %v2690, %v2682
  %v4475 = vpack.c.b16 %v2691, %v2683
  %v4476 = vpack.c.b16 %v2692, %v2684
  %v4477 = vpack.c.b16 %v2693, %v2685
  %v4478 = vpack.c.b16 %v2694, %v2686
  %v4479 = vpack.c.b16 %v2695, %v2687
  %v4480 = vpack.c.b16 %v2704, %v2696
  %v4481 = vpack.c.b16 %v2705, %v2697
  %v4482 = vpack.c.b16 %v2706, %v2698
  %v4483 = vpack.c.b16 %v2707, %v2699
  %v4484 = vpack.c.b16 %v2708, %v2700
  %v4485 = vpack.c.b16 %v2709, %v2701
  %v4486 = vpack.c.b16 %v2710, %v2702
  %v4487 = vpack.c.b16 %v2711, %v2703
  %v4488 = vpack.c.b16 %v2720, %v2712
  %v4489 = vpack.c.b16 %v2721, %v2713
  %v4490 = vpack.c.b16 %v2722, %v2714
  %v4491 = vpack.c.b16 %v2723, %v2715
  %v4492 = vpack.c.b16 %v2724, %v2716
  %v4493 = vpack.c.b16 %v2725, %v2717
  %v4494 = vpack.c.b16 %v2726, %v2718
  %v4495 = vpack.c.b16 %v2727, %v2719
  %v4496 = vpack.c.b16 %v2736, %v2728
  %v4497 = vpack.c.b16 %v2737, %v2729
  %v4498 = vpack.c.b16 %v2738, %v2730
  %v4499 = vpack.c.b16 %v2739, %v2731
  %v4500 = vpack.c.b16 %v2740, %v2732
  %v4501 = vpack.c.b16 %v2741, %v2733
  %v4502 = vpack.c.b16 %v2742, %v2734
  %v4503 = vpack.c.b16 %v2743, %v2735
  %v4504 = vpack.c.b16 %v2752, %v2744
  %v4505 = vpack.c.b16 %v2753, %v2745
  %v4506 = vpack.c.b16 %v2754, %v2746
  %v4507 = vpack.c.b16 %v2755, %v2747
  %v4508 = vpack.c.b16 %v2756, %v2748
  %v4509 = vpack.c.b16 %v2757, %v2749
  %v4510 = vpack.c.b16 %v2758, %v2750
  %v4511 = vpack.c.b16 %v2759, %v2751
  %v4512 = vpack.c.b16 %v2768, %v2760
  %v4513 = vpack.c.b16 %v2769, %v2761
  %v4514 = vpack.c.b16 %v2770, %v2762
  %v4515 = vpack.c.b16 %v2771, %v2763
  %v4516 = vpack.c.b16 %v2772, %v2764
  %v4517 = vpack.c.b16 %v2773, %v2765
  %v4518 = vpack.c.b16 %v2774, %v2766
  %v4519 = vpack.c.b16 %v2775, %v2767
  %v4520 = vpack.c.b16 %v2784, %v2776
  %v4521 = vpack.c.b16 %v2785, %v2777
  %v4522 = vpack.c.b16 %v2786, %v2778
  %v4523 = vpack.c.b16 %v2787, %v2779
  %v4524 = vpack.c.b16 %v2788, %v2780
  %v4525 = vpack.c.b16 %v2789, %v2781
  %v4526 = vpack.c.b16 %v2790, %v2782
  %v4527 = vpack.c.b16 %v2791, %v2783
  %v4528 = vpack.c.b16 %v2800, %v2792
  %v4529 = vpack.c.b16 %v2801, %v2793
  %v4530 = vpack.c.b16 %v2802, %v2794
  %v4531 = vpack.c.b16 %v2803, %v2795
  %v4532 = vpack.c.b16 %v2804, %v2796
  %v4533 = vpack.c.b16 %v2805, %v2797
  %v4534 = vpack.c.b16 %v2806, %v2798
  %v4535 = vpack.c.b16 %v2807, %v2799
  %v4536 = vpack.c.b16 %v2816, %v2808
  %v4537 = vpack.c.b16 %v2817, %v2809
  %v4538 = vpack.c.b16 %v2818, %v2810
  %v4539 = vpack.c.b16 %v2819, %v2811
  %v4540 = vpack.c.b16 %v2820, %v2812
  %v4541 = vpack.c.b16 %v2821, %v2813
  %v4542 = vpack.c.b16 %v2822, %v2814
  %v4543 = vpack.c.b16 %v2823, %v2815
  %v4544 = vpack.c.b16 %v2832, %v2824
  %v4545 = vpack.c.b16 %v2833, %v2825
  %v4546 = vpack.c.b16 %v2834, %v2826
  %v4547 = vpack.c.b16 %v2835, %v2827
  %v4548 = vpack.c.b16 %v2836, %v2828
  %v4549 = vpack.c.b16 %v2837, %v2829
  %v4550 = vpack.c.b16 %v2838, %v2830
  %v4551 = vpack.c.b16 %v2839, %v2831
  %v4552 = vpack.c.b16 %v2848, %v2840
  %v4553 = vpack.c.b16 %v2849, %v2841
  %v4554 = vpack.c.b16 %v2850, %v2842
  %v4555 = vpack.c.b16 %v2851, %v2843
  %v4556 = vpack.c.b16 %v2852, %v2844
  %v4557 = vpack.c.b16 %v2853, %v2845
  %v4558 = vpack.c.b16 %v2854, %v2846
  %v4559 = vpack.c.b16 %v2855, %v2847
  %v4560 = vpack.c.b16 %v2864, %v2856
  %v4561 = vpack.c.b16 %v2865, %v2857
  %v4562 = vpack.c.b16 %v2866, %v2858
  %v4563 = vpack.c.b16 %v2867, %v2859
  %v4564 = vpack.c.b16 %v2868, %v2860
  %v4565 = vpack.c.b16 %v2869, %v2861
  %v4566 = vpack.c.b16 %v2870, %v2862
  %v4567 = vpack.c.b16 %v2871, %v2863
  %v4568 = vpack.c.b16 %v2880, %v2872
  %v4569 = vpack.c.b16 %v2881, %v2873
  %v4570 = vpack.c.b16 %v2882, %v2874
  %v4571 = vpack.c.b16 %v2883, %v2875
  %v4572 = vpack.c.b16 %v2884, %v2876
  %v4573 = vpack.c.b16 %v2885, %v2877
  %v4574 = vpack.c.b16 %v2886, %v2878
  %v4575 = vpack.c.b16 %v2887, %v2879
  %v4576 = vpack.c.b16 %v2896, %v2888
  %v4577 = vpack.c.b16 %v2897, %v2889
  %v4578 = vpack.c.b16 %v2898, %v2890
  %v4579 = vpack.c.b16 %v2899, %v2891
  %v4580 = vpack.c.b16 %v2900, %v2892
  %v4581 = vpack.c.b16 %v2901, %v2893
  %v4582 = vpack.c.b16 %v2902, %v2894
  %v4583 = vpack.c.b16 %v2903, %v2895
  %v4584 = vpack.c.b16 %v2912, %v2904
  %v4585 = vpack.c.b16 %v2913, %v2905
  %v4586 = vpack.c.b16 %v2914, %v2906
  %v4587 = vpack.c.b16 %v2915, %v2907
  %v4588 = vpack.c.b16 %v2916, %v2908
  %v4589 = vpack.c.b16 %v2917, %v2909
  %v4590 = vpack.c.b16 %v2918, %v2910
  %v4591 = vpack.c.b16 %v2919, %v2911
  %v4592 = vpack.c.b16 %v2928, %v2920
  %v4593 = vpack.c.b16 %v2929, %v2921
  %v4594 = vpack.c.b16 %v2930, %v2922
  %v4595 = vpack.c.b16 %v2931, %v2923
  %v4596 = vpack.c.b16 %v2932, %v2924
  %v4597 = vpack.c.b16 %v2933, %v2925
  %v4598 = vpack.c.b16 %v2934, %v2926
  %v4599 = vpack.c.b16 %v2935, %v2927
  %v4600 = vpack.c.b16 %v2944, %v2936
  %v4601 = vpack.c.b16 %v2945, %v2937
  %v4602 = vpack.c.b16 %v2946, %v2938
  %v4603 = vpack.c.b16 %v2947, %v2939
  %v4604 = vpack.c.b16 %v2948, %v2940
  %v4605 = vpack.c.b16 %v2949, %v2941
  %v4606 = vpack.c.b16 %v2950, %v2942
  %v4607 = vpack.c.b16 %v2951, %v2943
  %v4608 = vpack.c.b16 %v2960, %v2952
  %v4609 = vpack.c.b16 %v2961, %v2953
  %v4610 = vpack.c.b16 %v2962, %v2954
  %v4611 = vpack.c.b16 %v2963, %v2955
  %v4612 = vpack.c.b16 %v2964, %v2956
  %v4613 = vpack.c.b16 %v2965, %v2957
  %v4614 = vpack.c.b16 %v2966, %v2958
  %v4615 = vpack.c.b16 %v2967, %v2959
  %v4616 = vpack.c.b16 %v2976, %v2968
  %v4617 = vpack.c.b16 %v2977, %v2969
  %v4618 = vpack.c.b16 %v2978, %v2970
  %v4619 = vpack.c.b16 %v2979, %v2971
  %v4620 = vpack.c.b16 %v2980, %v2972
  %v4621 = vpack.c.b16 %v2981, %v2973
  %v4622 = vpack.c.b16 %v2982, %v2974
  %v4623 = vpack.c.b16 %v2983, %v2975
  %v4624 = vpack.c.b16 %v2992, %v2984
  %v4625 = vpack.c.b16 %v2993, %v2985
  %v4626 = vpack.c.b16 %v2994, %v2986
  %v4627 = vpack.c.b16 %v2995, %v2987
  %v4628 = vpack.c.b16 %v2996, %v2988
  %v4629 = vpack.c.b16 %v2997, %v2989
  %v4630 = vpack.c.b16 %v2998, %v2990
  %v4631 = vpack.c.b16 %v2999, %v2991
  %v4632 = vpack.c.b16 %v3008, %v3000
  %v4633 = vpack.c.b16 %v3009, %v3001
  %v4634 = vpack.c.b16 %v3010, %v3002
  %v4635 = vpack.c.b16 %v3011, %v3003
  %v4636 = vpack.c.b16 %v3012, %v3004
  %v4637 = vpack.c.b16 %v3013, %v3005
  %v4638 = vpack.c.b16 %v3014, %v3006
  %v4639 = vpack.c.b16 %v3015, %v3007
  %v4640 = vpack.c.b16 %v3024, %v3016
  %v4641 = vpack.c.b16 %v3025, %v3017
  %v4642 = vpack.c.b16 %v3026, %v3018
  %v4643 = vpack.c.b16 %v3027, %v3019
  %v4644 = vpack.c.b16 %v3028, %v3020
  %v4645 = vpack.c.b16 %v3029, %v3021
  %v4646 = vpack.c.b16 %v3030, %v3022
  %v4647 = vpack.c.b16 %v3031, %v3023
  %v4648 = vpack.c.b16 %v3040, %v3032
  %v4649 = vpack.c.b16 %v3041, %v3033
  %v4650 = vpack.c.b16 %v3042, %v3034
  %v4651 = vpack.c.b16 %v3043, %v3035
  %v4652 = vpack.c.b16 %v3044, %v3036
  %v4653 = vpack.c.b16 %v3045, %v3037
  %v4654 = vpack.c.b16 %v3046, %v3038
  %v4655 = vpack.c.b16 %v3047, %v3039
  %v4656 = vpack.c.b16 %v3056, %v3048
  %v4657 = vpack.c.b16 %v3057, %v3049
  %v4658 = vpack.c.b16 %v3058, %v3050
  %v4659 = vpack.c.b16 %v3059, %v3051
  %v4660 = vpack.c.b16 %v3060, %v3052
  %v4661 = vpack.c.b16 %v3061, %v3053
  %v4662 = vpack.c.b16 %v3062, %v3054
  %v4663 = vpack.c.b16 %v3063, %v3055
  %v4664 = vpack.c.b16 %v3072, %v3064
  %v4665 = vpack.c.b16 %v3073, %v3065
  %v4666 = vpack.c.b16 %v3074, %v3066
  %v4667 = vpack.c.b16 %v3075, %v3067
  %v4668 = vpack.c.b16 %v3076, %v3068
  %v4669 = vpack.c.b16 %v3077, %v3069
  %v4670 = vpack.c.b16 %v3078, %v3070
  %v4671 = vpack.c.b16 %v3079, %v3071
  %v4672 = vpack.c.b16 %v3088, %v3080
  %v4673 = vpack.c.b16 %v3089, %v3081
  %v4674 = vpack.c.b16 %v3090, %v3082
  %v4675 = vpack.c.b16 %v3091, %v3083
  %v4676 = vpack.c.b16 %v3092, %v3084
  %v4677 = vpack.c.b16 %v3093, %v3085
  %v4678 = vpack.c.b16 %v3094, %v3086
  %v4679 = vpack.c.b16 %v3095, %v3087
  %v4680 = vpack.c.b16 %v3104, %v3096
  %v4681 = vpack.c.b16 %v3105, %v3097
  %v4682 = vpack.c.b16 %v3106, %v3098
  %v4683 = vpack.c.b16 %v3107, %v3099
  %v4684 = vpack.c.b16 %v3108, %v3100
  %v4685 = vpack.c.b16 %v3109, %v3101
  %v4686 = vpack.c.b16 %v3110, %v3102
  %v4687 = vpack.c.b16 %v3111, %v3103
  %v4688 = vpack.c.b16 %v3120, %v3112
  %v4689 = vpack.c.b16 %v3121, %v3113
  %v4690 = vpack.c.b16 %v3122, %v3114
  %v4691 = vpack.c.b16 %v3123, %v3115
  %v4692 = vpack.c.b16 %v3124, %v3116
  %v4693 = vpack.c.b16 %v3125, %v3117
  %v4694 = vpack.c.b16 %v3126, %v3118
  %v4695 = vpack.c.b16 %v3127, %v3119
  %v4696 = vpack.c.b16 %v3136, %v3128
  %v4697 = vpack.c.b16 %v3137, %v3129
  %v4698 = vpack.c.b16 %v3138, %v3130
  %v4699 = vpack.c.b16 %v3139, %v3131
  %v4700 = vpack.c.b16 %v3140, %v3132
  %v4701 = vpack.c.b16 %v3141, %v3133
  %v4702 = vpack.c.b16 %v3142, %v3134
  %v4703 = vpack.c.b16 %v3143, %v3135
  %v4704 = vpack.c.b16 %v3152, %v3144
  %v4705 = vpack.c.b16 %v3153, %v3145
  %v4706 = vpack.c.b16 %v3154, %v3146
  %v4707 = vpack.c.b16 %v3155, %v3147
  %v4708 = vpack.c.b16 %v3156, %v3148
  %v4709 = vpack.c.b16 %v3157, %v3149
  %v4710 = vpack.c.b16 %v3158, %v3150
  %v4711 = vpack.c.b16 %v3159, %v3151
  %v4712 = vpack.c.b16 %v3168, %v3160
  %v4713 = vpack.c.b16 %v3169, %v3161
  %v4714 = vpack.c.b16 %v3170, %v3162
  %v4715 = vpack.c.b16 %v3171, %v3163
  %v4716 = vpack.c.b16 %v3172, %v3164
  %v4717 = vpack.c.b16 %v3173, %v3165
  %v4718 = vpack.c.b16 %v3174, %v3166
  %v4719 = vpack.c.b16 %v3175, %v3167
  %v4720 = vpack.c.b16 %v3184, %v3176
  %v4721 = vpack.c.b16 %v3185, %v3177
  %v4722 = vpack.c.b16 %v3186, %v3178
  %v4723 = vpack.c.b16 %v3187, %v3179
  %v4724 = vpack.c.b16 %v3188, %v3180
  %v4725 = vpack.c.b16 %v3189, %v3181
  %v4726 = vpack.c.b16 %v3190, %v3182
  %v4727 = vpack.c.b16 %v3191, %v3183
  %v4728 = vpack.c.b16 %v3200, %v3192
  %v4729 = vpack.c.b16 %v3201, %v3193
  %v4730 = vpack.c.b16 %v3202, %v3194
  %v4731 = vpack.c.b16 %v3203, %v3195
  %v4732 = vpack.c.b16 %v3204, %v3196
  %v4733 = vpack.c.b16 %v3205, %v3197
  %v4734 = vpack.c.b16 %v3206, %v3198
  %v4735 = vpack.c.b16 %v3207, %v3199
  %v4736 = vpack.c.b16 %v3216, %v3208
  %v4737 = vpack.c.b16 %v3217, %v3209
  %v4738 = vpack.c.b16 %v3218, %v3210
  %v4739 = vpack.c.b16 %v3219, %v3211
  %v4740 = vpack.c.b16 %v3220, %v3212
  %v4741 = vpack.c.b16 %v3221, %v3213
  %v4742 = vpack.c.b16 %v3222, %v3214
  %v4743 = vpack.c.b16 %v3223, %v3215
  %v4744 = vpack.c.b16 %v3232, %v3224
  %v4745 = vpack.c.b16 %v3233, %v3225
  %v4746 = vpack.c.b16 %v3234, %v3226
  %v4747 = vpack.c.b16 %v3235, %v3227
  %v4748 = vpack.c.b16 %v3236, %v3228
  %v4749 = vpack.c.b16 %v3237, %v3229
  %v4750 = vpack.c.b16 %v3238, %v3230
  %v4751 = vpack.c.b16 %v3239, %v3231
  %v4752 = vpack.c.b16 %v3248, %v3240
  %v4753 = vpack.c.b16 %v3249, %v3241
  %v4754 = vpack.c.b16 %v3250, %v3242
  %v4755 = vpack.c.b16 %v3251, %v3243
  %v4756 = vpack.c.b16 %v3252, %v3244
  %v4757 = vpack.c.b16 %v3253, %v3245
  %v4758 = vpack.c.b16 %v3254, %v3246
  %v4759 = vpack.c.b16 %v3255, %v3247
  %v4760 = vpack.c.b16 %v3264, %v3256
  %v4761 = vpack.c.b16 %v3265, %v3257
  %v4762 = vpack.c.b16 %v3266, %v3258
  %v4763 = vpack.c.b16 %v3267, %v3259
  %v4764 = vpack.c.b16 %v3268, %v3260
  %v4765 = vpack.c.b16 %v3269, %v3261
  %v4766 = vpack.c.b16 %v3270, %v3262
  %v4767 = vpack.c.b16 %v3271, %v3263
  %v4768 = vpack.c.b16 %v3280, %v3272
  %v4769 = vpack.c.b16 %v3281, %v3273
  %v4770 = vpack.c.b16 %v3282, %v3274
  %v4771 = vpack.c.b16 %v3283, %v3275
  %v4772 = vpack.c.b16 %v3284, %v3276
  %v4773 = vpack.c.b16 %v3285, %v3277
  %v4774 = vpack.c.b16 %v3286, %v3278
  %v4775 = vpack.c.b16 %v3287, %v3279
  %v4776 = vpack.c.b16 %v3296, %v3288
  %v4777 = vpack.c.b16 %v3297, %v3289
  %v4778 = vpack.c.b16 %v3298, %v3290
  %v4779 = vpack.c.b16 %v3299, %v3291
  %v4780 = vpack.c.b16 %v3300, %v3292
  %v4781 = vpack.c.b16 %v3301, %v3293
  %v4782 = vpack.c.b16 %v3302, %v3294
  %v4783 = vpack.c.b16 %v3303, %v3295
  %v4784 = vpack.c.b16 %v3312, %v3304
  %v4785 = vpack.c.b16 %v3313, %v3305
  %v4786 = vpack.c.b16 %v3314, %v3306
  %v4787 = vpack.c.b16 %v3315, %v3307
  %v4788 = vpack.c.b16 %v3316, %v3308
  %v4789 = vpack.c.b16 %v3317, %v3309
  %v4790 = vpack.c.b16 %v3318, %v3310
  %v4791 = vpack.c.b16 %v3319, %v3311
  %v4792 = vpack.c.b16 %v3328, %v3320
  %v4793 = vpack.c.b16 %v3329, %v3321
  %v4794 = vpack.c.b16 %v3330, %v3322
  %v4795 = vpack.c.b16 %v3331, %v3323
  %v4796 = vpack.c.b16 %v3332, %v3324
  %v4797 = vpack.c.b16 %v3333, %v3325
  %v4798 = vpack.c.b16 %v3334, %v3326
  %v4799 = vpack.c.b16 %v3335, %v3327
  %v4800 = vpack.c.b16 %v3344, %v3336
  %v4801 = vpack.c.b16 %v3345, %v3337
  %v4802 = vpack.c.b16 %v3346, %v3338
  %v4803 = vpack.c.b16 %v3347, %v3339
  %v4804 = vpack.c.b16 %v3348, %v3340
  %v4805 = vpack.c.b16 %v3349, %v3341
  %v4806 = vpack.c.b16 %v3350, %v3342
  %v4807 = vpack.c.b16 %v3351, %v3343
  %v4808 = vpack.c.b16 %v3360, %v3352
  %v4809 = vpack.c.b16 %v3361, %v3353
  %v4810 = vpack.c.b16 %v3362, %v3354
  %v4811 = vpack.c.b16 %v3363, %v3355
  %v4812 = vpack.c.b16 %v3364, %v3356
  %v4813 = vpack.c.b16 %v3365, %v3357
  %v4814 = vpack.c.b16 %v3366, %v3358
  %v4815 = vpack.c.b16 %v3367, %v3359
  %v4816 = vpack.c.b16 %v3376, %v3368
  %v4817 = vpack.c.b16 %v3377, %v3369
  %v4818 = vpack.c.b16 %v3378, %v3370
  %v4819 = vpack.c.b16 %v3379, %v3371
  %v4820 = vpack.c.b16 %v3380, %v3372
  %v4821 = vpack.c.b16 %v3381, %v3373
  %v4822 = vpack.c.b16 %v3382, %v3374
  %v4823 = vpack.c.b16 %v3383, %v3375
  %v4824 = vpack.c.b16 %v3392, %v3384
  %v4825 = vpack.c.b16 %v3393, %v3385
  %v4826 = vpack.c.b16 %v3394, %v3386
  %v4827 = vpack.c.b16 %v3395, %v3387
  %v4828 = vpack.c.b16 %v3396, %v3388
  %v4829 = vpack.c.b16 %v3397, %v3389
  %v4830 = vpack.c.b16 %v3398, %v3390
  %v4831 = vpack.c.b16 %v3399, %v3391
  %v4832 = vpack.c.b16 %v3408, %v3400
  %v4833 = vpack.c.b16 %v3409, %v3401
  %v4834 = vpack.c.b16 %v3410, %v3402
  %v4835 = vpack.c.b16 %v3411, %v3403
  %v4836 = vpack.c.b16 %v3412, %v3404
  %v4837 = vpack.c.b16 %v3413, %v3405
  %v4838 = vpack.c.b16 %v3414, %v3406
  %v4839 = vpack.c.b16 %v3415, %v3407
  %v4840 = vpack.c.b16 %v3424, %v3416
  %v4841 = vpack.c.b16 %v3425, %v3417
  %v4842 = vpack.c.b16 %v3426, %v3418
  %v4843 = vpack.c.b16 %v3427, %v3419
  %v4844 = vpack.c.b16 %v3428, %v3420
  %v4845 = vpack.c.b16 %v3429, %v3421
  %v4846 = vpack.c.b16 %v3430, %v3422
  %v4847 = vpack.c.b16 %v3431, %v3423
  %v4848 = vpack.c.b16 %v3440, %v3432
  %v4849 = vpack.c.b16 %v3441, %v3433
  %v4850 = vpack.c.b16 %v3442, %v3434
  %v4851 = vpack.c.b16 %v3443, %v3435
  %v4852 = vpack.c.b16 %v3444, %v3436
  %v4853 = vpack.c.b16 %v3445, %v3437
  %v4854 = vpack.c.b16 %v3446, %v3438
  %v4855 = vpack.c.b16 %v3447, %v3439
  %v4856 = vpack.c.b16 %v3456, %v3448
  %v4857 = vpack.c.b16 %v3457, %v3449
  %v4858 = vpack.c.b16 %v3458, %v3450
  %v4859 = vpack.c.b16 %v3459, %v3451
  %v4860 = vpack.c.b16 %v3460, %v3452
  %v4861 = vpack.c.b16 %v3461, %v3453
  %v4862 = vpack.c.b16 %v3462, %v3454
  %v4863 = vpack.c.b16 %v3463, %v3455
  %v4864 = vpack.c.b16 %v3472, %v3464
  %v4865 = vpack.c.b16 %v3473, %v3465
  %v4866 = vpack.c.b16 %v3474, %v3466
  %v4867 = vpack.c.b16 %v3475, %v3467
  %v4868 = vpack.c.b16 %v3476, %v3468
  %v4869 = vpack.c.b16 %v3477, %v3469
  %v4870 = vpack.c.b16 %v3478, %v3470
  %v4871 = vpack.c.b16 %v3479, %v3471
  %v4872 = vpack.c.b16 %v3488, %v3480
  %v4873 = vpack.c.b16 %v3489, %v3481
  %v4874 = vpack.c.b16 %v3490, %v3482
  %v4875 = vpack.c.b16 %v3491, %v3483
  %v4876 = vpack.c.b16 %v3492, %v3484
  %v4877 = vpack.c.b16 %v3493, %v3485
  %v4878 = vpack.c.b16 %v3494, %v3486
  %v4879 = vpack.c.b16 %v3495, %v3487
  %v4880 = vpack.c.b16 %v3504, %v3496
  %v4881 = vpack.c.b16 %v3505, %v3497
  %v4882 = vpack.c.b16 %v3506, %v3498
  %v4883 = vpack.c.b16 %v3507, %v3499
  %v4884 = vpack.c.b16 %v3508, %v3500
  %v4885 = vpack.c.b16 %v3509, %v3501
  %v4886 = vpack.c.b16 %v3510, %v3502
  %v4887 = vpack.c.b16 %v3511, %v3503
  %v4888 = vpack.c.b16 %v3520, %v3512
  %v4889 = vpack.c.b16 %v3521, %v3513
  %v4890 = vpack.c.b16 %v3522, %v3514
  %v4891 = vpack.c.b16 %v3523, %v3515
  %v4892 = vpack.c.b16 %v3524, %v3516
  %v4893 = vpack.c.b16 %v3525, %v3517
  %v4894 = vpack.c.b16 %v3526, %v3518
  %v4895 = vpack.c.b16 %v3527, %v3519
  %v4896 = vpack.c.b16 %v3536, %v3528
  %v4897 = vpack.c.b16 %v3537, %v3529
  %v4898 = vpack.c.b16 %v3538, %v3530
  %v4899 = vpack.c.b16 %v3539, %v3531
  %v4900 = vpack.c.b16 %v3540, %v3532
  %v4901 = vpack.c.b16 %v3541, %v3533
  %v4902 = vpack.c.b16 %v3542, %v3534
  %v4903 = vpack.c.b16 %v3543, %v3535
  %v4904 = vpack.c.b16 %v3552, %v3544
  %v4905 = vpack.c.b16 %v3553, %v3545
  %v4906 = vpack.c.b16 %v3554, %v3546
  %v4907 = vpack.c.b16 %v3555, %v3547
  %v4908 = vpack.c.b16 %v3556, %v3548
  %v4909 = vpack.c.b16 %v3557, %v3549
  %v4910 = vpack.c.b16 %v3558, %v3550
  %v4911 = vpack.c.b16 %v3559, %v3551
  %v4912 = vpack.c.b16 %v3568, %v3560
  %v4913 = vpack.c.b16 %v3569, %v3561
  %v4914 = vpack.c.b16 %v3570, %v3562
  %v4915 = vpack.c.b16 %v3571, %v3563
  %v4916 = vpack.c.b16 %v3572, %v3564
  %v4917 = vpack.c.b16 %v3573, %v3565
  %v4918 = vpack.c.b16 %v3574, %v3566
  %v4919 = vpack.c.b16 %v3575, %v3567
  %v4920 = vpack.c.b16 %v3584, %v3576
  %v4921 = vpack.c.b16 %v3585, %v3577
  %v4922 = vpack.c.b16 %v3586, %v3578
  %v4923 = vpack.c.b16 %v3587, %v3579
  %v4924 = vpack.c.b16 %v3588, %v3580
  %v4925 = vpack.c.b16 %v3589, %v3581
  %v4926 = vpack.c.b16 %v3590, %v3582
  %v4927 = vpack.c.b16 %v3591, %v3583
  %v4928 = vpack.c.b16 %v3600, %v3592
  %v4929 = vpack.c.b16 %v3601, %v3593
  %v4930 = vpack.c.b16 %v3602, %v3594
  %v4931 = vpack.c.b16 %v3603, %v3595
  %v4932 = vpack.c.b16 %v3604, %v3596
  %v4933 = vpack.c.b16 %v3605, %v3597
  %v4934 = vpack.c.b16 %v3606, %v3598
  %v4935 = vpack.c.b16 %v3607, %v3599
  %v4936 = vpack.c.b16 %v3616, %v3608
  %v4937 = vpack.c.b16 %v3617, %v3609
  %v4938 = vpack.c.b16 %v3618, %v3610
  %v4939 = vpack.c.b16 %v3619, %v3611
  %v4940 = vpack.c.b16 %v3620, %v3612
  %v4941 = vpack.c.b16 %v3621, %v3613
  %v4942 = vpack.c.b16 %v3622, %v3614
  %v4943 = vpack.c.b16 %v3623, %v3615
  %v4944 = vpack.c.b16 %v3632, %v3624
  %v4945 = vpack.c.b16 %v3633, %v3625
  %v4946 = vpack.c.b16 %v3634, %v3626
  %v4947 = vpack.c.b16 %v3635, %v3627
  %v4948 = vpack.c.b16 %v3636, %v3628
  %v4949 = vpack.c.b16 %v3637, %v3629
  %v4950 = vpack.c.b16 %v3638, %v3630
  %v4951 = vpack.c.b16 %v3639, %v3631
  %v4952 = vpack.c.b16 %v3648, %v3640
  %v4953 = vpack.c.b16 %v3649, %v3641
  %v4954 = vpack.c.b16 %v3650, %v3642
  %v4955 = vpack.c.b16 %v3651, %v3643
  %v4956 = vpack.c.b16 %v3652, %v3644
  %v4957 = vpack.c.b16 %v3653, %v3645
  %v4958 = vpack.c.b16 %v3654, %v3646
  %v4959 = vpack.c.b16 %v3655, %v3647
  %v4960 = vpack.c.b16 %v3664, %v3656
  %v4961 = vpack.c.b16 %v3665, %v3657
  %v4962 = vpack.c.b16 %v3666, %v3658
  %v4963 = vpack.c.b16 %v3667, %v3659
  %v4964 = vpack.c.b16 %v3668, %v3660
  %v4965 = vpack.c.b16 %v3669, %v3661
  %v4966 = vpack.c.b16 %v3670, %v3662
  %v4967 = vpack.c.b16 %v3671, %v3663
  %v4968 = vpack.c.b16 %v3680, %v3672
  %v4969 = vpack.c.b16 %v3681, %v3673
  %v4970 = vpack.c.b16 %v3682, %v3674
  %v4971 = vpack.c.b16 %v3683, %v3675
  %v4972 = vpack.c.b16 %v3684, %v3676
  %v4973 = vpack.c.b16 %v3685, %v3677
  %v4974 = vpack.c.b16 %v3686, %v3678
  %v4975 = vpack.c.b16 %v3687, %v3679
  %v4976 = vpack.c.b16 %v3696, %v3688
  %v4977 = vpack.c.b16 %v3697, %v3689
  %v4978 = vpack.c.b16 %v3698, %v3690
  %v4979 = vpack.c.b16 %v3699, %v3691
  %v4980 = vpack.c.b16 %v3700, %v3692
  %v4981 = vpack.c.b16 %v3701, %v3693
  %v4982 = vpack.c.b16 %v3702, %v3694
  %v4983 = vpack.c.b16 %v3703, %v3695
  %v4984 = vpack.c.b16 %v3712, %v3704
  %v4985 = vpack.c.b16 %v3713, %v3705
  %v4986 = vpack.c.b16 %v3714, %v3706
  %v4987 = vpack.c.b16 %v3715, %v3707
  %v4988 = vpack.c.b16 %v3716, %v3708
  %v4989 = vpack.c.b16 %v3717, %v3709
  %v4990 = vpack.c.b16 %v3718, %v3710
  %v4991 = vpack.c.b16 %v3719, %v3711
  %v4992 = vpack.c.b16 %v3728, %v3720
  %v4993 = vpack.c.b16 %v3729, %v3721
  %v4994 = vpack.c.b16 %v3730, %v3722
  %v4995 = vpack.c.b16 %v3731, %v3723
  %v4996 = vpack.c.b16 %v3732, %v3724
  %v4997 = vpack.c.b16 %v3733, %v3725
  %v4998 = vpack.c.b16 %v3734, %v3726
  %v4999 = vpack.c.b16 %v3735, %v3727
  %v5000 = vpack.c.b16 %v3744, %v3736
  %v5001 = vpack.c.b16 %v3745, %v3737
  %v5002 = vpack.c.b16 %v3746, %v3738
  %v5003 = vpack.c.b16 %v3747, %v3739
  %v5004 = vpack.c.b16 %v3748, %v3740
  %v5005 = vpack.c.b16 %v3749, %v3741
  %v5006 = vpack.c.b16 %v3750, %v3742
  %v5007 = vpack.c.b16 %v3751, %v3743
  %v5008 = vpack.c.b16 %v3760, %v3752
  %v5009 = vpack.c.b16 %v3761, %v3753
  %v5010 = vpack.c.b16 %v3762, %v3754
  %v5011 = vpack.c.b16 %v3763, %v3755
  %v5012 = vpack.c.b16 %v3764, %v3756
  %v5013 = vpack.c.b16 %v3765, %v3757
  %v5014 = vpack.c.b16 %v3766, %v3758
  %v5015 = vpack.c.b16 %v3767, %v3759
  %v5016 = vpack.c.b16 %v3776, %v3768
  %v5017 = vpack.c.b16 %v3777, %v3769
  %v5018 = vpack.c.b16 %v3778, %v3770
  %v5019 = vpack.c.b16 %v3779, %v3771
  %v5020 = vpack.c.b16 %v3780, %v3772
  %v5021 = vpack.c.b16 %v3781, %v3773
  %v5022 = vpack.c.b16 %v3782, %v3774
  %v5023 = vpack.c.b16 %v3783, %v3775
  %v5024 = vpack.c.b16 %v3792, %v3784
  %v5025 = vpack.c.b16 %v3793, %v3785
  %v5026 = vpack.c.b16 %v3794, %v3786
  %v5027 = vpack.c.b16 %v3795, %v3787
  %v5028 = vpack.c.b16 %v3796, %v3788
  %v5029 = vpack.c.b16 %v3797, %v3789
  %v5030 = vpack.c.b16 %v3798, %v3790
  %v5031 = vpack.c.b16 %v3799, %v3791
  %v5032 = vpack.c.b16 %v3808, %v3800
  %v5033 = vpack.c.b16 %v3809, %v3801
  %v5034 = vpack.c.b16 %v3810, %v3802
  %v5035 = vpack.c.b16 %v3811, %v3803
  %v5036 = vpack.c.b16 %v3812, %v3804
  %v5037 = vpack.c.b16 %v3813, %v3805
  %v5038 = vpack.c.b16 %v3814, %v3806
  %v5039 = vpack.c.b16 %v3815, %v3807
  %v5040 = vpack.c.b16 %v3824, %v3816
  %v5041 = vpack.c.b16 %v3825, %v3817
  %v5042 = vpack.c.b16 %v3826, %v3818
  %v5043 = vpack.c.b16 %v3827, %v3819
  %v5044 = vpack.c.b16 %v3828, %v3820
  %v5045 = vpack.c.b16 %v3829, %v3821
  %v5046 = vpack.c.b16 %v3830, %v3822
  %v5047 = vpack.c.b16 %v3831, %v3823
  %v5048 = vpack.c.b16 %v3840, %v3832
  %v5049 = vpack.c.b16 %v3841, %v3833
  %v5050 = vpack.c.b16 %v3842, %v3834
  %v5051 = vpack.c.b16 %v3843, %v3835
  %v5052 = vpack.c.b16 %v3844, %v3836
  %v5053 = vpack.c.b16 %v3845, %v3837
  %v5054 = vpack.c.b16 %v3846, %v3838
  %v5055 = vpack.c.b16 %v3847, %v3839
  %v5056 = vpack.c.b16 %v3856, %v3848
  %v5057 = vpack.c.b16 %v3857, %v3849
  %v5058 = vpack.c.b16 %v3858, %v3850
  %v5059 = vpack.c.b16 %v3859, %v3851
  %v5060 = vpack.c.b16 %v3860, %v3852
  %v5061 = vpack.c.b16 %v3861, %v3853
  %v5062 = vpack.c.b16 %v3862, %v3854
  %v5063 = vpack.c.b16 %v3863, %v3855
  %v5064 = vpack.c.b16 %v3872, %v3864
  %v5065 = vpack.c.b16 %v3873, %v3865
  %v5066 = vpack.c.b16 %v3874, %v3866
  %v5067 = vpack.c.b16 %v3875, %v3867
  %v5068 = vpack.c.b16 %v3876, %v3868
  %v5069 = vpack.c.b16 %v3877, %v3869
  %v5070 = vpack.c.b16 %v3878, %v3870
  %v5071 = vpack.c.b16 %v3879, %v3871
  %v5072 = vpack.c.b16 %v3888, %v3880
  %v5073 = vpack.c.b16 %v3889, %v3881
  %v5074 = vpack.c.b16 %v3890, %v3882
  %v5075 = vpack.c.b16 %v3891, %v3883
  %v5076 = vpack.c.b16 %v3892, %v3884
  %v5077 = vpack.c.b16 %v3893, %v3885
  %v5078 = vpack.c.b16 %v3894, %v3886
  %v5079 = vpack.c.b16 %v3895, %v3887
  %v5080 = vpack.c.b16 %v3904, %v3896
  %v5081 = vpack.c.b16 %v3905, %v3897
  %v5082 = vpack.c.b16 %v3906, %v3898
  %v5083 = vpack.c.b16 %v3907, %v3899
  %v5084 = vpack.c.b16 %v3908, %v3900
  %v5085 = vpack.c.b16 %v3909, %v3901
  %v5086 = vpack.c.b16 %v3910, %v3902
  %v5087 = vpack.c.b16 %v3911, %v3903
  %v5088 = vpack.c.b16 %v3920, %v3912
  %v5089 = vpack.c.b16 %v3921, %v3913
  %v5090 = vpack.c.b16 %v3922, %v3914
  %v5091 = vpack.c.b16 %v3923, %v3915
  %v5092 = vpack.c.b16 %v3924, %v3916
  %v5093 = vpack.c.b16 %v3925, %v3917
  %v5094 = vpack.c.b16 %v3926, %v3918
  %v5095 = vpack.c.b16 %v3927, %v3919
  %v5096 = vpack.c.b16 %v3936, %v3928
  %v5097 = vpack.c.b16 %v3937, %v3929
  %v5098 = vpack.c.b16 %v3938, %v3930
  %v5099 = vpack.c.b16 %v3939, %v3931
  %v5100 = vpack.c.b16 %v3940, %v3932
  %v5101 = vpack.c.b16 %v3941, %v3933
  %v5102 = vpack.c.b16 %v3942, %v3934
  %v5103 = vpack.c.b16 %v3943, %v3935
  %v5104 = vpack.c.b16 %v3952, %v3944
  %v5105 = vpack.c.b16 %v3953, %v3945
  %v5106 = vpack.c.b16 %v3954, %v3946
  %v5107 = vpack.c.b16 %v3955, %v3947
  %v5108 = vpack.c.b16 %v3956, %v3948
  %v5109 = vpack.c.b16 %v3957, %v3949
  %v5110 = vpack.c.b16 %v3958, %v3950
  %v5111 = vpack.c.b16 %v3959, %v3951
  %v5112 = vpack.c.b16 %v3968, %v3960
  %v5113 = vpack.c.b16 %v3969, %v3961
  %v5114 = vpack.c.b16 %v3970, %v3962
  %v5115 = vpack.c.b16 %v3971, %v3963
  %v5116 = vpack.c.b16 %v3972, %v3964
  %v5117 = vpack.c.b16 %v3973, %v3965
  %v5118 = vpack.c.b16 %v3974, %v3966
  %v5119 = vpack.c.b16 %v3975, %v3967
  %v5120 = vpack.c.b16 %v3984, %v3976
  %v5121 = vpack.c.b16 %v3985, %v3977
  %v5122 = vpack.c.b16 %v3986, %v3978
  %v5123 = vpack.c.b16 %v3987, %v3979
  %v5124 = vpack.c.b16 %v3988, %v3980
  %v5125 = vpack.c.b16 %v3989, %v3981
  %v5126 = vpack.c.b16 %v3990, %v3982
  %v5127 = vpack.c.b16 %v3991, %v3983
  %v5128 = vpack.c.b16 %v4000, %v3992
  %v5129 = vpack.c.b16 %v4001, %v3993
  %v5130 = vpack.c.b16 %v4002, %v3994
  %v5131 = vpack.c.b16 %v4003, %v3995
  %v5132 = vpack.c.b16 %v4004, %v3996
  %v5133 = vpack.c.b16 %v4005, %v3997
  %v5134 = vpack.c.b16 %v4006, %v3998
  %v5135 = vpack.c.b16 %v4007, %v3999
  %v5136 = vpack.c.b16 %v4016, %v4008
  %v5137 = vpack.c.b16 %v4017, %v4009
  %v5138 = vpack.c.b16 %v4018, %v4010
  %v5139 = vpack.c.b16 %v4019, %v4011
  %v5140 = vpack.c.b16 %v4020, %v4012
  %v5141 = vpack.c.b16 %v4021, %v4013
  %v5142 = vpack.c.b16 %v4022, %v4014
  %v5143 = vpack.c.b16 %v4023, %v4015
  %v5144 = vpack.c.b16 %v4032, %v4024
  %v5145 = vpack.c.b16 %v4033, %v4025
  %v5146 = vpack.c.b16 %v4034, %v4026
  %v5147 = vpack.c.b16 %v4035, %v4027
  %v5148 = vpack.c.b16 %v4036, %v4028
  %v5149 = vpack.c.b16 %v4037, %v4029
  %v5150 = vpack.c.b16 %v4038, %v4030
  %v5151 = vpack.c.b16 %v4039, %v4031
  %v5152 = vpack.c.b16 %v4048, %v4040
  %v5153 = vpack.c.b16 %v4049, %v4041
  %v5154 = vpack.c.b16 %v4050, %v4042
  %v5155 = vpack.c.b16 %v4051, %v4043
  %v5156 = vpack.c.b16 %v4052, %v4044
  %v5157 = vpack.c.b16 %v4053, %v4045
  %v5158 = vpack.c.b16 %v4054, %v4046
  %v5159 = vpack.c.b16 %v4055, %v4047
  %v5160 = vpack.c.b16 %v4064, %v4056
  %v5161 = vpack.c.b16 %v4065, %v4057
  %v5162 = vpack.c.b16 %v4066, %v4058
  %v5163 = vpack.c.b16 %v4067, %v4059
  %v5164 = vpack.c.b16 %v4068, %v4060
  %v5165 = vpack.c.b16 %v4069, %v4061
  %v5166 = vpack.c.b16 %v4070, %v4062
  %v5167 = vpack.c.b16 %v4071, %v4063
  %v5168 = vpack.c.b16 %v4080, %v4072
  %v5169 = vpack.c.b16 %v4081, %v4073
  %v5170 = vpack.c.b16 %v4082, %v4074
  %v5171 = vpack.c.b16 %v4083, %v4075
  %v5172 = vpack.c.b16 %v4084, %v4076
  %v5173 = vpack.c.b16 %v4085, %v4077
  %v5174 = vpack.c.b16 %v4086, %v4078
  %v5175 = vpack.c.b16 %v4087, %v4079
  %v5176 = vpack.c.b16 %v4096, %v4088
  %v5177 = vpack.c.b16 %v4097, %v4089
  %v5178 = vpack.c.b16 %v4098, %v4090
  %v5179 = vpack.c.b16 %v4099, %v4091
  %v5180 = vpack.c.b16 %v4100, %v4092
  %v5181 = vpack.c.b16 %v4101, %v4093
  %v5182 = vpack.c.b16 %v4102, %v4094
  %v5183 = vpack.c.b16 %v4103, %v4095
  %v5184 = vpack.c.b16 %v4112, %v4104
  %v5185 = vpack.c.b16 %v4113, %v4105
  %v5186 = vpack.c.b16 %v4114, %v4106
  %v5187 = vpack.c.b16 %v4115, %v4107
  %v5188 = vpack.c.b16 %v4116, %v4108
  %v5189 = vpack.c.b16 %v4117, %v4109
  %v5190 = vpack.c.b16 %v4118, %v4110
  %v5191 = vpack.c.b16 %v4119, %v4111
  %v5192 = vpack.c.b16 %v4128, %v4120
  %v5193 = vpack.c.b16 %v4129, %v4121
  %v5194 = vpack.c.b16 %v4130, %v4122
  %v5195 = vpack.c.b16 %v4131, %v4123
  %v5196 = vpack.c.b16 %v4132, %v4124
  %v5197 = vpack.c.b16 %v4133, %v4125
  %v5198 = vpack.c.b16 %v4134, %v4126
  %v5199 = vpack.c.b16 %v4135, %v4127
  %v5200 = vpack.c.b16 %v4144, %v4136
  %v5201 = vpack.c.b16 %v4145, %v4137
  %v5202 = vpack.c.b16 %v4146, %v4138
  %v5203 = vpack.c.b16 %v4147, %v4139
  %v5204 = vpack.c.b16 %v4148, %v4140
  %v5205 = vpack.c.b16 %v4149, %v4141
  %v5206 = vpack.c.b16 %v4150, %v4142
  %v5207 = vpack.c.b16 %v4151, %v4143
  %v5208 = vpack.c.b16 %v4160, %v4152
  %v5209 = vpack.c.b16 %v4161, %v4153
  %v5210 = vpack.c.b16 %v4162, %v4154
  %v5211 = vpack.c.b16 %v4163, %v4155
  %v5212 = vpack.c.b16 %v4164, %v4156
  %v5213 = vpack.c.b16 %v4165, %v4157
  %v5214 = vpack.c.b16 %v4166, %v4158
  %v5215 = vpack.c.b16 %v4167, %v4159
  %v5216 = vpack.c.b16 %v4176, %v4168
  %v5217 = vpack.c.b16 %v4177, %v4169
  %v5218 = vpack.c.b16 %v4178, %v4170
  %v5219 = vpack.c.b16 %v4179, %v4171
  %v5220 = vpack.c.b16 %v4180, %v4172
  %v5221 = vpack.c.b16 %v4181, %v4173
  %v5222 = vpack.c.b16 %v4182, %v4174
  %v5223 = vpack.c.b16 %v4183, %v4175
  %v5224 = vpack.c.b16 %v4192, %v4184
  %v5225 = vpack.c.b16 %v4193, %v4185
  %v5226 = vpack.c.b16 %v4194, %v4186
  %v5227 = vpack.c.b16 %v4195, %v4187
  %v5228 = vpack.c.b16 %v4196, %v4188
  %v5229 = vpack.c.b16 %v4197, %v4189
  %v5230 = vpack.c.b16 %v4198, %v4190
  %v5231 = vpack.c.b16 %v4199, %v4191
  %v5232 = vpack.c.b16 %v4208, %v4200
  %v5233 = vpack.c.b16 %v4209, %v4201
  %v5234 = vpack.c.b16 %v4210, %v4202
  %v5235 = vpack.c.b16 %v4211, %v4203
  %v5236 = vpack.c.b16 %v4212, %v4204
  %v5237 = vpack.c.b16 %v4213, %v4205
  %v5238 = vpack.c.b16 %v4214, %v4206
  %v5239 = vpack.c.b16 %v4215, %v4207
  %6264 = vmatprep.subr.bf16.mxu0 %v4273
  %6265 = vmatpush1.bf16.msra.mxu0 %v4272
  %6266 = vmatprep.subr.bf16.mxu0 %v4265
  %6267 = vmatpush1.bf16.msra.mxu0 %v4264
  %6268 = vmatprep.subr.bf16.mxu0 %v4257
  %6269 = vmatpush1.bf16.msra.mxu0 %v4256
  %6270 = vmatprep.subr.bf16.mxu0 %v4249
  %6271 = vmatpush1.bf16.msra.mxu0 %v4248
  %6272 = vmatprep.subr.bf16.mxu0 %v4241
  %6273 = vmatpush1.bf16.msra.mxu0 %v4240
  %6274 = vmatprep.subr.bf16.mxu0 %v4233
  %6275 = vmatpush1.bf16.msra.mxu0 %v4232
  %6276 = vmatprep.subr.bf16.mxu0 %v4225
  %6277 = vmatpush1.bf16.msra.mxu0 %v4224
  %6278 = vmatprep.subr.bf16.mxu0 %v4217
  %6279 = vmatpush1.bf16.msra.mxu0 %v4216
  %6280 = vmatprep.subr.bf16.mxu0 %v4337
  %6281 = vmatpush2.bf16.msra.mxu0 %v4336
  %6282 = vmatprep.subr.bf16.mxu0 %v4329
  %6283 = vmatpush2.bf16.msra.mxu0 %v4328
  %6284 = vmatprep.subr.bf16.mxu0 %v4321
  %6285 = vmatpush2.bf16.msra.mxu0 %v4320
  %6286 = vmatprep.subr.bf16.mxu0 %v4313
  %6287 = vmatpush2.bf16.msra.mxu0 %v4312
  %6288 = vmatprep.subr.bf16.mxu0 %v4305
  %6289 = vmatpush2.bf16.msra.mxu0 %v4304
  %6290 = vmatprep.subr.bf16.mxu0 %v4297
  %6291 = vmatpush2.bf16.msra.mxu0 %v4296
  %6292 = vmatprep.subr.bf16.mxu0 %v4289
  %6293 = vmatpush2.bf16.msra.mxu0 %v4288
  %6294 = vmatprep.subr.bf16.mxu0 %v4281
  %6295 = vmatpush2.bf16.msra.mxu0 %v4280
  %6296 = vmatprep.mubr.bf16.mxu0 %v1113
  %6297 = vmatmul.mubr.bf16.gmra.mxu0 %v1112
  %v6298 = vpop.f32.mrf.mxu0
  %v6299 = vadd.f32 %v1051, %v6298
  %v6300 = vpop.f32.mrf.mxu0
  %v6301 = vadd.f32 %v1055, %v6300
  %v6302 = vpop.f32.mrf.mxu0
  %v6303 = vpop.f32.mrf.mxu0
  %6304 = vdwg.mxu0
  %6305 = vmatprep.subr.bf16.mxu0 %v4401
  %6306 = vmatpush1.bf16.msra.mxu0 %v4400
  %6307 = vmatprep.subr.bf16.mxu0 %v4393
  %6308 = vmatpush1.bf16.msra.mxu0 %v4392
  %6309 = vmatprep.subr.bf16.mxu0 %v4385
  %6310 = vmatpush1.bf16.msra.mxu0 %v4384
  %6311 = vmatprep.subr.bf16.mxu0 %v4377
  %6312 = vmatpush1.bf16.msra.mxu0 %v4376
  %6313 = vmatprep.subr.bf16.mxu0 %v4369
  %6314 = vmatpush1.bf16.msra.mxu0 %v4368
  %6315 = vmatprep.subr.bf16.mxu0 %v4361
  %6316 = vmatpush1.bf16.msra.mxu0 %v4360
  %6317 = vmatprep.subr.bf16.mxu0 %v4353
  %6318 = vmatpush1.bf16.msra.mxu0 %v4352
  %6319 = vmatprep.subr.bf16.mxu0 %v4345
  %6320 = vmatpush1.bf16.msra.mxu0 %v4344
  %6321 = vmatprep.subr.bf16.mxu0 %v4465
  %6322 = vmatpush2.bf16.msra.mxu0 %v4464
  %6323 = vmatprep.subr.bf16.mxu0 %v4457
  %6324 = vmatpush2.bf16.msra.mxu0 %v4456
  %6325 = vmatprep.subr.bf16.mxu0 %v4449
  %6326 = vmatpush2.bf16.msra.mxu0 %v4448
  %6327 = vmatprep.subr.bf16.mxu0 %v4441
  %6328 = vmatpush2.bf16.msra.mxu0 %v4440
  %6329 = vmatprep.subr.bf16.mxu0 %v4433
  %6330 = vmatpush2.bf16.msra.mxu0 %v4432
  %6331 = vmatprep.subr.bf16.mxu0 %v4425
  %6332 = vmatpush2.bf16.msra.mxu0 %v4424
  %6333 = vmatprep.subr.bf16.mxu0 %v4417
  %6334 = vmatpush2.bf16.msra.mxu0 %v4416
  %6335 = vmatprep.subr.bf16.mxu0 %v4409
  %6336 = vmatpush2.bf16.msra.mxu0 %v4408
  %6337 = vmatprep.mubr.bf16.mxu0 %v1115
  %6338 = vmatmul.mubr.bf16.gmra.mxu0 %v1114
  %v6339 = vpop.f32.mrf.mxu0
  %v6340 = vadd.f32 %v6299, %v6339
  %v6341 = vpop.f32.mrf.mxu0
  %v6342 = vadd.f32 %v6301, %v6341
  %v6343 = vpop.f32.mrf.mxu0
  %v6344 = vpop.f32.mrf.mxu0
  %6345 = vdwg.mxu0
  %6346 = vmatprep.subr.bf16.mxu0 %v4529
  %6347 = vmatpush1.bf16.msra.mxu0 %v4528
  %6348 = vmatprep.subr.bf16.mxu0 %v4521
  %6349 = vmatpush1.bf16.msra.mxu0 %v4520
  %6350 = vmatprep.subr.bf16.mxu0 %v4513
  %6351 = vmatpush1.bf16.msra.mxu0 %v4512
  %6352 = vmatprep.subr.bf16.mxu0 %v4505
  %6353 = vmatpush1.bf16.msra.mxu0 %v4504
  %6354 = vmatprep.subr.bf16.mxu0 %v4497
  %6355 = vmatpush1.bf16.msra.mxu0 %v4496
  %6356 = vmatprep.subr.bf16.mxu0 %v4489
  %6357 = vmatpush1.bf16.msra.mxu0 %v4488
  %6358 = vmatprep.subr.bf16.mxu0 %v4481
  %6359 = vmatpush1.bf16.msra.mxu0 %v4480
  %6360 = vmatprep.subr.bf16.mxu0 %v4473
  %6361 = vmatpush1.bf16.msra.mxu0 %v4472
  %6362 = vmatprep.subr.bf16.mxu0 %v4593
  %6363 = vmatpush2.bf16.msra.mxu0 %v4592
  %6364 = vmatprep.subr.bf16.mxu0 %v4585
  %6365 = vmatpush2.bf16.msra.mxu0 %v4584
  %6366 = vmatprep.subr.bf16.mxu0 %v4577
  %6367 = vmatpush2.bf16.msra.mxu0 %v4576
  %6368 = vmatprep.subr.bf16.mxu0 %v4569
  %6369 = vmatpush2.bf16.msra.mxu0 %v4568
  %6370 = vmatprep.subr.bf16.mxu0 %v4561
  %6371 = vmatpush2.bf16.msra.mxu0 %v4560
  %6372 = vmatprep.subr.bf16.mxu0 %v4553
  %6373 = vmatpush2.bf16.msra.mxu0 %v4552
  %6374 = vmatprep.subr.bf16.mxu0 %v4545
  %6375 = vmatpush2.bf16.msra.mxu0 %v4544
  %6376 = vmatprep.subr.bf16.mxu0 %v4537
  %6377 = vmatpush2.bf16.msra.mxu0 %v4536
  %6378 = vmatprep.mubr.bf16.mxu0 %v1117
  %6379 = vmatmul.mubr.bf16.gmra.mxu0 %v1116
  %v6380 = vpop.f32.mrf.mxu0
  %v6381 = vadd.f32 %v6340, %v6380
  %v6382 = vpop.f32.mrf.mxu0
  %v6383 = vadd.f32 %v6342, %v6382
  %v6384 = vpop.f32.mrf.mxu0
  %v6385 = vpop.f32.mrf.mxu0
  %6386 = vdwg.mxu0
  %6387 = vmatprep.subr.bf16.mxu0 %v4657
  %6388 = vmatpush1.bf16.msra.mxu0 %v4656
  %6389 = vmatprep.subr.bf16.mxu0 %v4649
  %6390 = vmatpush1.bf16.msra.mxu0 %v4648
  %6391 = vmatprep.subr.bf16.mxu0 %v4641
  %6392 = vmatpush1.bf16.msra.mxu0 %v4640
  %6393 = vmatprep.subr.bf16.mxu0 %v4633
  %6394 = vmatpush1.bf16.msra.mxu0 %v4632
  %6395 = vmatprep.subr.bf16.mxu0 %v4625
  %6396 = vmatpush1.bf16.msra.mxu0 %v4624
  %6397 = vmatprep.subr.bf16.mxu0 %v4617
  %6398 = vmatpush1.bf16.msra.mxu0 %v4616
  %6399 = vmatprep.subr.bf16.mxu0 %v4609
  %6400 = vmatpush1.bf16.msra.mxu0 %v4608
  %6401 = vmatprep.subr.bf16.mxu0 %v4601
  %6402 = vmatpush1.bf16.msra.mxu0 %v4600
  %6403 = vmatprep.subr.bf16.mxu0 %v4721
  %6404 = vmatpush2.bf16.msra.mxu0 %v4720
  %6405 = vmatprep.subr.bf16.mxu0 %v4713
  %6406 = vmatpush2.bf16.msra.mxu0 %v4712
  %6407 = vmatprep.subr.bf16.mxu0 %v4705
  %6408 = vmatpush2.bf16.msra.mxu0 %v4704
  %6409 = vmatprep.subr.bf16.mxu0 %v4697
  %6410 = vmatpush2.bf16.msra.mxu0 %v4696
  %6411 = vmatprep.subr.bf16.mxu0 %v4689
  %6412 = vmatpush2.bf16.msra.mxu0 %v4688
  %6413 = vmatprep.subr.bf16.mxu0 %v4681
  %6414 = vmatpush2.bf16.msra.mxu0 %v4680
  %6415 = vmatprep.subr.bf16.mxu0 %v4673
  %6416 = vmatpush2.bf16.msra.mxu0 %v4672
  %6417 = vmatprep.subr.bf16.mxu0 %v4665
  %6418 = vmatpush2.bf16.msra.mxu0 %v4664
  %6419 = vmatprep.mubr.bf16.mxu0 %v1119
  %6420 = vmatmul.mubr.bf16.gmra.mxu0 %v1118
  %v6421 = vpop.f32.mrf.mxu0
  %v6422 = vadd.f32 %v6381, %v6421
  %v6423 = vpop.f32.mrf.mxu0
  %v6424 = vadd.f32 %v6383, %v6423
  %v6425 = vpop.f32.mrf.mxu0
  %v6426 = vpop.f32.mrf.mxu0
  %6427 = vdwg.mxu0
  %6428 = vmatprep.subr.bf16.mxu0 %v4785
  %6429 = vmatpush1.bf16.msra.mxu0 %v4784
  %6430 = vmatprep.subr.bf16.mxu0 %v4777
  %6431 = vmatpush1.bf16.msra.mxu0 %v4776
  %6432 = vmatprep.subr.bf16.mxu0 %v4769
  %6433 = vmatpush1.bf16.msra.mxu0 %v4768
  %6434 = vmatprep.subr.bf16.mxu0 %v4761
  %6435 = vmatpush1.bf16.msra.mxu0 %v4760
  %6436 = vmatprep.subr.bf16.mxu0 %v4753
  %6437 = vmatpush1.bf16.msra.mxu0 %v4752
  %6438 = vmatprep.subr.bf16.mxu0 %v4745
  %6439 = vmatpush1.bf16.msra.mxu0 %v4744
  %6440 = vmatprep.subr.bf16.mxu0 %v4737
  %6441 = vmatpush1.bf16.msra.mxu0 %v4736
  %6442 = vmatprep.subr.bf16.mxu0 %v4729
  %6443 = vmatpush1.bf16.msra.mxu0 %v4728
  %6444 = vmatprep.subr.bf16.mxu0 %v4849
  %6445 = vmatpush2.bf16.msra.mxu0 %v4848
  %6446 = vmatprep.subr.bf16.mxu0 %v4841
  %6447 = vmatpush2.bf16.msra.mxu0 %v4840
  %6448 = vmatprep.subr.bf16.mxu0 %v4833
  %6449 = vmatpush2.bf16.msra.mxu0 %v4832
  %6450 = vmatprep.subr.bf16.mxu0 %v4825
  %6451 = vmatpush2.bf16.msra.mxu0 %v4824
  %6452 = vmatprep.subr.bf16.mxu0 %v4817
  %6453 = vmatpush2.bf16.msra.mxu0 %v4816
  %6454 = vmatprep.subr.bf16.mxu0 %v4809
  %6455 = vmatpush2.bf16.msra.mxu0 %v4808
  %6456 = vmatprep.subr.bf16.mxu0 %v4801
  %6457 = vmatpush2.bf16.msra.mxu0 %v4800
  %6458 = vmatprep.subr.bf16.mxu0 %v4793
  %6459 = vmatpush2.bf16.msra.mxu0 %v4792
  %6460 = vmatprep.mubr.bf16.mxu0 %v1121
  %6461 = vmatmul.mubr.bf16.gmra.mxu0 %v1120
  %v6462 = vpop.f32.mrf.mxu0
  %v6463 = vadd.f32 %v6422, %v6462
  %v6464 = vpop.f32.mrf.mxu0
  %v6465 = vadd.f32 %v6424, %v6464
  %v6466 = vpop.f32.mrf.mxu0
  %v6467 = vpop.f32.mrf.mxu0
  %6468 = vdwg.mxu0
  %6469 = vmatprep.subr.bf16.mxu0 %v4913
  %6470 = vmatpush1.bf16.msra.mxu0 %v4912
  %6471 = vmatprep.subr.bf16.mxu0 %v4905
  %6472 = vmatpush1.bf16.msra.mxu0 %v4904
  %6473 = vmatprep.subr.bf16.mxu0 %v4897
  %6474 = vmatpush1.bf16.msra.mxu0 %v4896
  %6475 = vmatprep.subr.bf16.mxu0 %v4889
  %6476 = vmatpush1.bf16.msra.mxu0 %v4888
  %6477 = vmatprep.subr.bf16.mxu0 %v4881
  %6478 = vmatpush1.bf16.msra.mxu0 %v4880
  %6479 = vmatprep.subr.bf16.mxu0 %v4873
  %6480 = vmatpush1.bf16.msra.mxu0 %v4872
  %6481 = vmatprep.subr.bf16.mxu0 %v4865
  %6482 = vmatpush1.bf16.msra.mxu0 %v4864
  %6483 = vmatprep.subr.bf16.mxu0 %v4857
  %6484 = vmatpush1.bf16.msra.mxu0 %v4856
  %6485 = vmatprep.subr.bf16.mxu0 %v4977
  %6486 = vmatpush2.bf16.msra.mxu0 %v4976
  %6487 = vmatprep.subr.bf16.mxu0 %v4969
  %6488 = vmatpush2.bf16.msra.mxu0 %v4968
  %6489 = vmatprep.subr.bf16.mxu0 %v4961
  %6490 = vmatpush2.bf16.msra.mxu0 %v4960
  %6491 = vmatprep.subr.bf16.mxu0 %v4953
  %6492 = vmatpush2.bf16.msra.mxu0 %v4952
  %6493 = vmatprep.subr.bf16.mxu0 %v4945
  %6494 = vmatpush2.bf16.msra.mxu0 %v4944
  %6495 = vmatprep.subr.bf16.mxu0 %v4937
  %6496 = vmatpush2.bf16.msra.mxu0 %v4936
  %6497 = vmatprep.subr.bf16.mxu0 %v4929
  %6498 = vmatpush2.bf16.msra.mxu0 %v4928
  %6499 = vmatprep.subr.bf16.mxu0 %v4921
  %6500 = vmatpush2.bf16.msra.mxu0 %v4920
  %6501 = vmatprep.mubr.bf16.mxu0 %v1123
  %6502 = vmatmul.mubr.bf16.gmra.mxu0 %v1122
  %v6503 = vpop.f32.mrf.mxu0
  %v6504 = vadd.f32 %v6463, %v6503
  %v6505 = vpop.f32.mrf.mxu0
  %v6506 = vadd.f32 %v6465, %v6505
  %v6507 = vpop.f32.mrf.mxu0
  %v6508 = vpop.f32.mrf.mxu0
  %6509 = vdwg.mxu0
  %6510 = vmatprep.subr.bf16.mxu0 %v5041
  %6511 = vmatpush1.bf16.msra.mxu0 %v5040
  %6512 = vmatprep.subr.bf16.mxu0 %v5033
  %6513 = vmatpush1.bf16.msra.mxu0 %v5032
  %6514 = vmatprep.subr.bf16.mxu0 %v5025
  %6515 = vmatpush1.bf16.msra.mxu0 %v5024
  %6516 = vmatprep.subr.bf16.mxu0 %v5017
  %6517 = vmatpush1.bf16.msra.mxu0 %v5016
  %6518 = vmatprep.subr.bf16.mxu0 %v5009
  %6519 = vmatpush1.bf16.msra.mxu0 %v5008
  %6520 = vmatprep.subr.bf16.mxu0 %v5001
  %6521 = vmatpush1.bf16.msra.mxu0 %v5000
  %6522 = vmatprep.subr.bf16.mxu0 %v4993
  %6523 = vmatpush1.bf16.msra.mxu0 %v4992
  %6524 = vmatprep.subr.bf16.mxu0 %v4985
  %6525 = vmatpush1.bf16.msra.mxu0 %v4984
  %6526 = vmatprep.subr.bf16.mxu0 %v5105
  %6527 = vmatpush2.bf16.msra.mxu0 %v5104
  %6528 = vmatprep.subr.bf16.mxu0 %v5097
  %6529 = vmatpush2.bf16.msra.mxu0 %v5096
  %6530 = vmatprep.subr.bf16.mxu0 %v5089
  %6531 = vmatpush2.bf16.msra.mxu0 %v5088
  %6532 = vmatprep.subr.bf16.mxu0 %v5081
  %6533 = vmatpush2.bf16.msra.mxu0 %v5080
  %6534 = vmatprep.subr.bf16.mxu0 %v5073
  %6535 = vmatpush2.bf16.msra.mxu0 %v5072
  %6536 = vmatprep.subr.bf16.mxu0 %v5065
  %6537 = vmatpush2.bf16.msra.mxu0 %v5064
  %6538 = vmatprep.subr.bf16.mxu0 %v5057
  %6539 = vmatpush2.bf16.msra.mxu0 %v5056
  %6540 = vmatprep.subr.bf16.mxu0 %v5049
  %6541 = vmatpush2.bf16.msra.mxu0 %v5048
  %6542 = vmatprep.mubr.bf16.mxu0 %v1125
  %6543 = vmatmul.mubr.bf16.gmra.mxu0 %v1124
  %v6544 = vpop.f32.mrf.mxu0
  %v6545 = vadd.f32 %v6504, %v6544
  %v6546 = vpop.f32.mrf.mxu0
  %v6547 = vadd.f32 %v6506, %v6546
  %v6548 = vpop.f32.mrf.mxu0
  %v6549 = vpop.f32.mrf.mxu0
  %6550 = vdwg.mxu0
  %6551 = vmatprep.subr.bf16.mxu0 %v5169
  %6552 = vmatpush1.bf16.msra.mxu0 %v5168
  %6553 = vmatprep.subr.bf16.mxu0 %v5161
  %6554 = vmatpush1.bf16.msra.mxu0 %v5160
  %6555 = vmatprep.subr.bf16.mxu0 %v5153
  %6556 = vmatpush1.bf16.msra.mxu0 %v5152
  %6557 = vmatprep.subr.bf16.mxu0 %v5145
  %6558 = vmatpush1.bf16.msra.mxu0 %v5144
  %6559 = vmatprep.subr.bf16.mxu0 %v5137
  %6560 = vmatpush1.bf16.msra.mxu0 %v5136
  %6561 = vmatprep.subr.bf16.mxu0 %v5129
  %6562 = vmatpush1.bf16.msra.mxu0 %v5128
  %6563 = vmatprep.subr.bf16.mxu0 %v5121
  %6564 = vmatpush1.bf16.msra.mxu0 %v5120
  %6565 = vmatprep.subr.bf16.mxu0 %v5113
  %6566 = vmatpush1.bf16.msra.mxu0 %v5112
  %6567 = vmatprep.subr.bf16.mxu0 %v5233
  %6568 = vmatpush2.bf16.msra.mxu0 %v5232
  %6569 = vmatprep.subr.bf16.mxu0 %v5225
  %6570 = vmatpush2.bf16.msra.mxu0 %v5224
  %6571 = vmatprep.subr.bf16.mxu0 %v5217
  %6572 = vmatpush2.bf16.msra.mxu0 %v5216
  %6573 = vmatprep.subr.bf16.mxu0 %v5209
  %6574 = vmatpush2.bf16.msra.mxu0 %v5208
  %6575 = vmatprep.subr.bf16.mxu0 %v5201
  %6576 = vmatpush2.bf16.msra.mxu0 %v5200
  %6577 = vmatprep.subr.bf16.mxu0 %v5193
  %6578 = vmatpush2.bf16.msra.mxu0 %v5192
  %6579 = vmatprep.subr.bf16.mxu0 %v5185
  %6580 = vmatpush2.bf16.msra.mxu0 %v5184
  %6581 = vmatprep.subr.bf16.mxu0 %v5177
  %6582 = vmatpush2.bf16.msra.mxu0 %v5176
  %6583 = vmatprep.mubr.bf16.mxu0 %v1127
  %6584 = vmatmul.mubr.bf16.gmra.mxu0 %v1126
  %v6585 = vpop.f32.mrf.mxu0
  %v6586 = vadd.f32 %v6545, %v6585
  %v6587 = vpop.f32.mrf.mxu0
  %v6588 = vadd.f32 %v6547, %v6587
  %v6589 = vpop.f32.mrf.mxu0
  %v6590 = vpop.f32.mrf.mxu0
  %6591 = vdwg.mxu0
  %6592 = vmatprep.subr.bf16.mxu0 %v4275
  %6593 = vmatpush1.bf16.msra.mxu0 %v4274
  %6594 = vmatprep.subr.bf16.mxu0 %v4267
  %6595 = vmatpush1.bf16.msra.mxu0 %v4266
  %6596 = vmatprep.subr.bf16.mxu0 %v4259
  %6597 = vmatpush1.bf16.msra.mxu0 %v4258
  %6598 = vmatprep.subr.bf16.mxu0 %v4251
  %6599 = vmatpush1.bf16.msra.mxu0 %v4250
  %6600 = vmatprep.subr.bf16.mxu0 %v4243
  %6601 = vmatpush1.bf16.msra.mxu0 %v4242
  %6602 = vmatprep.subr.bf16.mxu0 %v4235
  %6603 = vmatpush1.bf16.msra.mxu0 %v4234
  %6604 = vmatprep.subr.bf16.mxu0 %v4227
  %6605 = vmatpush1.bf16.msra.mxu0 %v4226
  %6606 = vmatprep.subr.bf16.mxu0 %v4219
  %6607 = vmatpush1.bf16.msra.mxu0 %v4218
  %6608 = vmatprep.subr.bf16.mxu0 %v4339
  %6609 = vmatpush2.bf16.msra.mxu0 %v4338
  %6610 = vmatprep.subr.bf16.mxu0 %v4331
  %6611 = vmatpush2.bf16.msra.mxu0 %v4330
  %6612 = vmatprep.subr.bf16.mxu0 %v4323
  %6613 = vmatpush2.bf16.msra.mxu0 %v4322
  %6614 = vmatprep.subr.bf16.mxu0 %v4315
  %6615 = vmatpush2.bf16.msra.mxu0 %v4314
  %6616 = vmatprep.subr.bf16.mxu0 %v4307
  %6617 = vmatpush2.bf16.msra.mxu0 %v4306
  %6618 = vmatprep.subr.bf16.mxu0 %v4299
  %6619 = vmatpush2.bf16.msra.mxu0 %v4298
  %6620 = vmatprep.subr.bf16.mxu0 %v4291
  %6621 = vmatpush2.bf16.msra.mxu0 %v4290
  %6622 = vmatprep.subr.bf16.mxu0 %v4283
  %6623 = vmatpush2.bf16.msra.mxu0 %v4282
  %6624 = vmatprep.mubr.bf16.mxu0 %v1113
  %6625 = vmatmul.mubr.bf16.gmra.mxu0 %v1112
  %v6626 = vpop.f32.mrf.mxu0
  %v6627 = vadd.f32 %v1059, %v6626
  %v6628 = vpop.f32.mrf.mxu0
  %v6629 = vadd.f32 %v1063, %v6628
  %v6630 = vpop.f32.mrf.mxu0
  %v6631 = vpop.f32.mrf.mxu0
  %6632 = vdwg.mxu0
  %6633 = vmatprep.subr.bf16.mxu0 %v4403
  %6634 = vmatpush1.bf16.msra.mxu0 %v4402
  %6635 = vmatprep.subr.bf16.mxu0 %v4395
  %6636 = vmatpush1.bf16.msra.mxu0 %v4394
  %6637 = vmatprep.subr.bf16.mxu0 %v4387
  %6638 = vmatpush1.bf16.msra.mxu0 %v4386
  %6639 = vmatprep.subr.bf16.mxu0 %v4379
  %6640 = vmatpush1.bf16.msra.mxu0 %v4378
  %6641 = vmatprep.subr.bf16.mxu0 %v4371
  %6642 = vmatpush1.bf16.msra.mxu0 %v4370
  %6643 = vmatprep.subr.bf16.mxu0 %v4363
  %6644 = vmatpush1.bf16.msra.mxu0 %v4362
  %6645 = vmatprep.subr.bf16.mxu0 %v4355
  %6646 = vmatpush1.bf16.msra.mxu0 %v4354
  %6647 = vmatprep.subr.bf16.mxu0 %v4347
  %6648 = vmatpush1.bf16.msra.mxu0 %v4346
  %6649 = vmatprep.subr.bf16.mxu0 %v4467
  %6650 = vmatpush2.bf16.msra.mxu0 %v4466
  %6651 = vmatprep.subr.bf16.mxu0 %v4459
  %6652 = vmatpush2.bf16.msra.mxu0 %v4458
  %6653 = vmatprep.subr.bf16.mxu0 %v4451
  %6654 = vmatpush2.bf16.msra.mxu0 %v4450
  %6655 = vmatprep.subr.bf16.mxu0 %v4443
  %6656 = vmatpush2.bf16.msra.mxu0 %v4442
  %6657 = vmatprep.subr.bf16.mxu0 %v4435
  %6658 = vmatpush2.bf16.msra.mxu0 %v4434
  %6659 = vmatprep.subr.bf16.mxu0 %v4427
  %6660 = vmatpush2.bf16.msra.mxu0 %v4426
  %6661 = vmatprep.subr.bf16.mxu0 %v4419
  %6662 = vmatpush2.bf16.msra.mxu0 %v4418
  %6663 = vmatprep.subr.bf16.mxu0 %v4411
  %6664 = vmatpush2.bf16.msra.mxu0 %v4410
  %6665 = vmatprep.mubr.bf16.mxu0 %v1115
  %6666 = vmatmul.mubr.bf16.gmra.mxu0 %v1114
  %v6667 = vpop.f32.mrf.mxu0
  %v6668 = vadd.f32 %v6627, %v6667
  %v6669 = vpop.f32.mrf.mxu0
  %v6670 = vadd.f32 %v6629, %v6669
  %v6671 = vpop.f32.mrf.mxu0
  %v6672 = vpop.f32.mrf.mxu0
  %6673 = vdwg.mxu0
  %6674 = vmatprep.subr.bf16.mxu0 %v4531
  %6675 = vmatpush1.bf16.msra.mxu0 %v4530
  %6676 = vmatprep.subr.bf16.mxu0 %v4523
  %6677 = vmatpush1.bf16.msra.mxu0 %v4522
  %6678 = vmatprep.subr.bf16.mxu0 %v4515
  %6679 = vmatpush1.bf16.msra.mxu0 %v4514
  %6680 = vmatprep.subr.bf16.mxu0 %v4507
  %6681 = vmatpush1.bf16.msra.mxu0 %v4506
  %6682 = vmatprep.subr.bf16.mxu0 %v4499
  %6683 = vmatpush1.bf16.msra.mxu0 %v4498
  %6684 = vmatprep.subr.bf16.mxu0 %v4491
  %6685 = vmatpush1.bf16.msra.mxu0 %v4490
  %6686 = vmatprep.subr.bf16.mxu0 %v4483
  %6687 = vmatpush1.bf16.msra.mxu0 %v4482
  %6688 = vmatprep.subr.bf16.mxu0 %v4475
  %6689 = vmatpush1.bf16.msra.mxu0 %v4474
  %6690 = vmatprep.subr.bf16.mxu0 %v4595
  %6691 = vmatpush2.bf16.msra.mxu0 %v4594
  %6692 = vmatprep.subr.bf16.mxu0 %v4587
  %6693 = vmatpush2.bf16.msra.mxu0 %v4586
  %6694 = vmatprep.subr.bf16.mxu0 %v4579
  %6695 = vmatpush2.bf16.msra.mxu0 %v4578
  %6696 = vmatprep.subr.bf16.mxu0 %v4571
  %6697 = vmatpush2.bf16.msra.mxu0 %v4570
  %6698 = vmatprep.subr.bf16.mxu0 %v4563
  %6699 = vmatpush2.bf16.msra.mxu0 %v4562
  %6700 = vmatprep.subr.bf16.mxu0 %v4555
  %6701 = vmatpush2.bf16.msra.mxu0 %v4554
  %6702 = vmatprep.subr.bf16.mxu0 %v4547
  %6703 = vmatpush2.bf16.msra.mxu0 %v4546
  %6704 = vmatprep.subr.bf16.mxu0 %v4539
  %6705 = vmatpush2.bf16.msra.mxu0 %v4538
  %6706 = vmatprep.mubr.bf16.mxu0 %v1117
  %6707 = vmatmul.mubr.bf16.gmra.mxu0 %v1116
  %v6708 = vpop.f32.mrf.mxu0
  %v6709 = vadd.f32 %v6668, %v6708
  %v6710 = vpop.f32.mrf.mxu0
  %v6711 = vadd.f32 %v6670, %v6710
  %v6712 = vpop.f32.mrf.mxu0
  %v6713 = vpop.f32.mrf.mxu0
  %6714 = vdwg.mxu0
  %6715 = vmatprep.subr.bf16.mxu0 %v4659
  %6716 = vmatpush1.bf16.msra.mxu0 %v4658
  %6717 = vmatprep.subr.bf16.mxu0 %v4651
  %6718 = vmatpush1.bf16.msra.mxu0 %v4650
  %6719 = vmatprep.subr.bf16.mxu0 %v4643
  %6720 = vmatpush1.bf16.msra.mxu0 %v4642
  %6721 = vmatprep.subr.bf16.mxu0 %v4635
  %6722 = vmatpush1.bf16.msra.mxu0 %v4634
  %6723 = vmatprep.subr.bf16.mxu0 %v4627
  %6724 = vmatpush1.bf16.msra.mxu0 %v4626
  %6725 = vmatprep.subr.bf16.mxu0 %v4619
  %6726 = vmatpush1.bf16.msra.mxu0 %v4618
  %6727 = vmatprep.subr.bf16.mxu0 %v4611
  %6728 = vmatpush1.bf16.msra.mxu0 %v4610
  %6729 = vmatprep.subr.bf16.mxu0 %v4603
  %6730 = vmatpush1.bf16.msra.mxu0 %v4602
  %6731 = vmatprep.subr.bf16.mxu0 %v4723
  %6732 = vmatpush2.bf16.msra.mxu0 %v4722
  %6733 = vmatprep.subr.bf16.mxu0 %v4715
  %6734 = vmatpush2.bf16.msra.mxu0 %v4714
  %6735 = vmatprep.subr.bf16.mxu0 %v4707
  %6736 = vmatpush2.bf16.msra.mxu0 %v4706
  %6737 = vmatprep.subr.bf16.mxu0 %v4699
  %6738 = vmatpush2.bf16.msra.mxu0 %v4698
  %6739 = vmatprep.subr.bf16.mxu0 %v4691
  %6740 = vmatpush2.bf16.msra.mxu0 %v4690
  %6741 = vmatprep.subr.bf16.mxu0 %v4683
  %6742 = vmatpush2.bf16.msra.mxu0 %v4682
  %6743 = vmatprep.subr.bf16.mxu0 %v4675
  %6744 = vmatpush2.bf16.msra.mxu0 %v4674
  %6745 = vmatprep.subr.bf16.mxu0 %v4667
  %6746 = vmatpush2.bf16.msra.mxu0 %v4666
  %6747 = vmatprep.mubr.bf16.mxu0 %v1119
  %6748 = vmatmul.mubr.bf16.gmra.mxu0 %v1118
  %v6749 = vpop.f32.mrf.mxu0
  %v6750 = vadd.f32 %v6709, %v6749
  %v6751 = vpop.f32.mrf.mxu0
  %v6752 = vadd.f32 %v6711, %v6751
  %v6753 = vpop.f32.mrf.mxu0
  %v6754 = vpop.f32.mrf.mxu0
  %6755 = vdwg.mxu0
  %6756 = vmatprep.subr.bf16.mxu0 %v4787
  %6757 = vmatpush1.bf16.msra.mxu0 %v4786
  %6758 = vmatprep.subr.bf16.mxu0 %v4779
  %6759 = vmatpush1.bf16.msra.mxu0 %v4778
  %6760 = vmatprep.subr.bf16.mxu0 %v4771
  %6761 = vmatpush1.bf16.msra.mxu0 %v4770
  %6762 = vmatprep.subr.bf16.mxu0 %v4763
  %6763 = vmatpush1.bf16.msra.mxu0 %v4762
  %6764 = vmatprep.subr.bf16.mxu0 %v4755
  %6765 = vmatpush1.bf16.msra.mxu0 %v4754
  %6766 = vmatprep.subr.bf16.mxu0 %v4747
  %6767 = vmatpush1.bf16.msra.mxu0 %v4746
  %6768 = vmatprep.subr.bf16.mxu0 %v4739
  %6769 = vmatpush1.bf16.msra.mxu0 %v4738
  %6770 = vmatprep.subr.bf16.mxu0 %v4731
  %6771 = vmatpush1.bf16.msra.mxu0 %v4730
  %6772 = vmatprep.subr.bf16.mxu0 %v4851
  %6773 = vmatpush2.bf16.msra.mxu0 %v4850
  %6774 = vmatprep.subr.bf16.mxu0 %v4843
  %6775 = vmatpush2.bf16.msra.mxu0 %v4842
  %6776 = vmatprep.subr.bf16.mxu0 %v4835
  %6777 = vmatpush2.bf16.msra.mxu0 %v4834
  %6778 = vmatprep.subr.bf16.mxu0 %v4827
  %6779 = vmatpush2.bf16.msra.mxu0 %v4826
  %6780 = vmatprep.subr.bf16.mxu0 %v4819
  %6781 = vmatpush2.bf16.msra.mxu0 %v4818
  %6782 = vmatprep.subr.bf16.mxu0 %v4811
  %6783 = vmatpush2.bf16.msra.mxu0 %v4810
  %6784 = vmatprep.subr.bf16.mxu0 %v4803
  %6785 = vmatpush2.bf16.msra.mxu0 %v4802
  %6786 = vmatprep.subr.bf16.mxu0 %v4795
  %6787 = vmatpush2.bf16.msra.mxu0 %v4794
  %6788 = vmatprep.mubr.bf16.mxu0 %v1121
  %6789 = vmatmul.mubr.bf16.gmra.mxu0 %v1120
  %v6790 = vpop.f32.mrf.mxu0
  %v6791 = vadd.f32 %v6750, %v6790
  %v6792 = vpop.f32.mrf.mxu0
  %v6793 = vadd.f32 %v6752, %v6792
  %v6794 = vpop.f32.mrf.mxu0
  %v6795 = vpop.f32.mrf.mxu0
  %6796 = vdwg.mxu0
  %6797 = vmatprep.subr.bf16.mxu0 %v4915
  %6798 = vmatpush1.bf16.msra.mxu0 %v4914
  %6799 = vmatprep.subr.bf16.mxu0 %v4907
  %6800 = vmatpush1.bf16.msra.mxu0 %v4906
  %6801 = vmatprep.subr.bf16.mxu0 %v4899
  %6802 = vmatpush1.bf16.msra.mxu0 %v4898
  %6803 = vmatprep.subr.bf16.mxu0 %v4891
  %6804 = vmatpush1.bf16.msra.mxu0 %v4890
  %6805 = vmatprep.subr.bf16.mxu0 %v4883
  %6806 = vmatpush1.bf16.msra.mxu0 %v4882
  %6807 = vmatprep.subr.bf16.mxu0 %v4875
  %6808 = vmatpush1.bf16.msra.mxu0 %v4874
  %6809 = vmatprep.subr.bf16.mxu0 %v4867
  %6810 = vmatpush1.bf16.msra.mxu0 %v4866
  %6811 = vmatprep.subr.bf16.mxu0 %v4859
  %6812 = vmatpush1.bf16.msra.mxu0 %v4858
  %6813 = vmatprep.subr.bf16.mxu0 %v4979
  %6814 = vmatpush2.bf16.msra.mxu0 %v4978
  %6815 = vmatprep.subr.bf16.mxu0 %v4971
  %6816 = vmatpush2.bf16.msra.mxu0 %v4970
  %6817 = vmatprep.subr.bf16.mxu0 %v4963
  %6818 = vmatpush2.bf16.msra.mxu0 %v4962
  %6819 = vmatprep.subr.bf16.mxu0 %v4955
  %6820 = vmatpush2.bf16.msra.mxu0 %v4954
  %6821 = vmatprep.subr.bf16.mxu0 %v4947
  %6822 = vmatpush2.bf16.msra.mxu0 %v4946
  %6823 = vmatprep.subr.bf16.mxu0 %v4939
  %6824 = vmatpush2.bf16.msra.mxu0 %v4938
  %6825 = vmatprep.subr.bf16.mxu0 %v4931
  %6826 = vmatpush2.bf16.msra.mxu0 %v4930
  %6827 = vmatprep.subr.bf16.mxu0 %v4923
  %6828 = vmatpush2.bf16.msra.mxu0 %v4922
  %6829 = vmatprep.mubr.bf16.mxu0 %v1123
  %6830 = vmatmul.mubr.bf16.gmra.mxu0 %v1122
  %v6831 = vpop.f32.mrf.mxu0
  %v6832 = vadd.f32 %v6791, %v6831
  %v6833 = vpop.f32.mrf.mxu0
  %v6834 = vadd.f32 %v6793, %v6833
  %v6835 = vpop.f32.mrf.mxu0
  %v6836 = vpop.f32.mrf.mxu0
  %6837 = vdwg.mxu0
  %6838 = vmatprep.subr.bf16.mxu0 %v5043
  %6839 = vmatpush1.bf16.msra.mxu0 %v5042
  %6840 = vmatprep.subr.bf16.mxu0 %v5035
  %6841 = vmatpush1.bf16.msra.mxu0 %v5034
  %6842 = vmatprep.subr.bf16.mxu0 %v5027
  %6843 = vmatpush1.bf16.msra.mxu0 %v5026
  %6844 = vmatprep.subr.bf16.mxu0 %v5019
  %6845 = vmatpush1.bf16.msra.mxu0 %v5018
  %6846 = vmatprep.subr.bf16.mxu0 %v5011
  %6847 = vmatpush1.bf16.msra.mxu0 %v5010
  %6848 = vmatprep.subr.bf16.mxu0 %v5003
  %6849 = vmatpush1.bf16.msra.mxu0 %v5002
  %6850 = vmatprep.subr.bf16.mxu0 %v4995
  %6851 = vmatpush1.bf16.msra.mxu0 %v4994
  %6852 = vmatprep.subr.bf16.mxu0 %v4987
  %6853 = vmatpush1.bf16.msra.mxu0 %v4986
  %6854 = vmatprep.subr.bf16.mxu0 %v5107
  %6855 = vmatpush2.bf16.msra.mxu0 %v5106
  %6856 = vmatprep.subr.bf16.mxu0 %v5099
  %6857 = vmatpush2.bf16.msra.mxu0 %v5098
  %6858 = vmatprep.subr.bf16.mxu0 %v5091
  %6859 = vmatpush2.bf16.msra.mxu0 %v5090
  %6860 = vmatprep.subr.bf16.mxu0 %v5083
  %6861 = vmatpush2.bf16.msra.mxu0 %v5082
  %6862 = vmatprep.subr.bf16.mxu0 %v5075
  %6863 = vmatpush2.bf16.msra.mxu0 %v5074
  %6864 = vmatprep.subr.bf16.mxu0 %v5067
  %6865 = vmatpush2.bf16.msra.mxu0 %v5066
  %6866 = vmatprep.subr.bf16.mxu0 %v5059
  %6867 = vmatpush2.bf16.msra.mxu0 %v5058
  %6868 = vmatprep.subr.bf16.mxu0 %v5051
  %6869 = vmatpush2.bf16.msra.mxu0 %v5050
  %6870 = vmatprep.mubr.bf16.mxu0 %v1125
  %6871 = vmatmul.mubr.bf16.gmra.mxu0 %v1124
  %v6872 = vpop.f32.mrf.mxu0
  %v6873 = vadd.f32 %v6832, %v6872
  %v6874 = vpop.f32.mrf.mxu0
  %v6875 = vadd.f32 %v6834, %v6874
  %v6876 = vpop.f32.mrf.mxu0
  %v6877 = vpop.f32.mrf.mxu0
  %6878 = vdwg.mxu0
  %6879 = vmatprep.subr.bf16.mxu0 %v5171
  %6880 = vmatpush1.bf16.msra.mxu0 %v5170
  %6881 = vmatprep.subr.bf16.mxu0 %v5163
  %6882 = vmatpush1.bf16.msra.mxu0 %v5162
  %6883 = vmatprep.subr.bf16.mxu0 %v5155
  %6884 = vmatpush1.bf16.msra.mxu0 %v5154
  %6885 = vmatprep.subr.bf16.mxu0 %v5147
  %6886 = vmatpush1.bf16.msra.mxu0 %v5146
  %6887 = vmatprep.subr.bf16.mxu0 %v5139
  %6888 = vmatpush1.bf16.msra.mxu0 %v5138
  %6889 = vmatprep.subr.bf16.mxu0 %v5131
  %6890 = vmatpush1.bf16.msra.mxu0 %v5130
  %6891 = vmatprep.subr.bf16.mxu0 %v5123
  %6892 = vmatpush1.bf16.msra.mxu0 %v5122
  %6893 = vmatprep.subr.bf16.mxu0 %v5115
  %6894 = vmatpush1.bf16.msra.mxu0 %v5114
  %6895 = vmatprep.subr.bf16.mxu0 %v5235
  %6896 = vmatpush2.bf16.msra.mxu0 %v5234
  %6897 = vmatprep.subr.bf16.mxu0 %v5227
  %6898 = vmatpush2.bf16.msra.mxu0 %v5226
  %6899 = vmatprep.subr.bf16.mxu0 %v5219
  %6900 = vmatpush2.bf16.msra.mxu0 %v5218
  %6901 = vmatprep.subr.bf16.mxu0 %v5211
  %6902 = vmatpush2.bf16.msra.mxu0 %v5210
  %6903 = vmatprep.subr.bf16.mxu0 %v5203
  %6904 = vmatpush2.bf16.msra.mxu0 %v5202
  %6905 = vmatprep.subr.bf16.mxu0 %v5195
  %6906 = vmatpush2.bf16.msra.mxu0 %v5194
  %6907 = vmatprep.subr.bf16.mxu0 %v5187
  %6908 = vmatpush2.bf16.msra.mxu0 %v5186
  %6909 = vmatprep.subr.bf16.mxu0 %v5179
  %6910 = vmatpush2.bf16.msra.mxu0 %v5178
  %6911 = vmatprep.mubr.bf16.mxu0 %v1127
  %6912 = vmatmul.mubr.bf16.gmra.mxu0 %v1126
  %v6913 = vpop.f32.mrf.mxu0
  %v6914 = vadd.f32 %v6873, %v6913
  %v6915 = vpop.f32.mrf.mxu0
  %v6916 = vadd.f32 %v6875, %v6915
  %v6917 = vpop.f32.mrf.mxu0
  %v6918 = vpop.f32.mrf.mxu0
  %6919 = vdwg.mxu0
  %6920 = vmatprep.subr.bf16.mxu0 %v4277
  %6921 = vmatpush1.bf16.msra.mxu0 %v4276
  %6922 = vmatprep.subr.bf16.mxu0 %v4269
  %6923 = vmatpush1.bf16.msra.mxu0 %v4268
  %6924 = vmatprep.subr.bf16.mxu0 %v4261
  %6925 = vmatpush1.bf16.msra.mxu0 %v4260
  %6926 = vmatprep.subr.bf16.mxu0 %v4253
  %6927 = vmatpush1.bf16.msra.mxu0 %v4252
  %6928 = vmatprep.subr.bf16.mxu0 %v4245
  %6929 = vmatpush1.bf16.msra.mxu0 %v4244
  %6930 = vmatprep.subr.bf16.mxu0 %v4237
  %6931 = vmatpush1.bf16.msra.mxu0 %v4236
  %6932 = vmatprep.subr.bf16.mxu0 %v4229
  %6933 = vmatpush1.bf16.msra.mxu0 %v4228
  %6934 = vmatprep.subr.bf16.mxu0 %v4221
  %6935 = vmatpush1.bf16.msra.mxu0 %v4220
  %6936 = vmatprep.subr.bf16.mxu0 %v4341
  %6937 = vmatpush2.bf16.msra.mxu0 %v4340
  %6938 = vmatprep.subr.bf16.mxu0 %v4333
  %6939 = vmatpush2.bf16.msra.mxu0 %v4332
  %6940 = vmatprep.subr.bf16.mxu0 %v4325
  %6941 = vmatpush2.bf16.msra.mxu0 %v4324
  %6942 = vmatprep.subr.bf16.mxu0 %v4317
  %6943 = vmatpush2.bf16.msra.mxu0 %v4316
  %6944 = vmatprep.subr.bf16.mxu0 %v4309
  %6945 = vmatpush2.bf16.msra.mxu0 %v4308
  %6946 = vmatprep.subr.bf16.mxu0 %v4301
  %6947 = vmatpush2.bf16.msra.mxu0 %v4300
  %6948 = vmatprep.subr.bf16.mxu0 %v4293
  %6949 = vmatpush2.bf16.msra.mxu0 %v4292
  %6950 = vmatprep.subr.bf16.mxu0 %v4285
  %6951 = vmatpush2.bf16.msra.mxu0 %v4284
  %6952 = vmatprep.mubr.bf16.mxu0 %v1113
  %6953 = vmatmul.mubr.bf16.gmra.mxu0 %v1112
  %v6954 = vpop.f32.mrf.mxu0
  %v6955 = vadd.f32 %v1067, %v6954
  %v6956 = vpop.f32.mrf.mxu0
  %v6957 = vadd.f32 %v1071, %v6956
  %v6958 = vpop.f32.mrf.mxu0
  %v6959 = vpop.f32.mrf.mxu0
  %6960 = vdwg.mxu0
  %6961 = vmatprep.subr.bf16.mxu0 %v4405
  %6962 = vmatpush1.bf16.msra.mxu0 %v4404
  %6963 = vmatprep.subr.bf16.mxu0 %v4397
  %6964 = vmatpush1.bf16.msra.mxu0 %v4396
  %6965 = vmatprep.subr.bf16.mxu0 %v4389
  %6966 = vmatpush1.bf16.msra.mxu0 %v4388
  %6967 = vmatprep.subr.bf16.mxu0 %v4381
  %6968 = vmatpush1.bf16.msra.mxu0 %v4380
  %6969 = vmatprep.subr.bf16.mxu0 %v4373
  %6970 = vmatpush1.bf16.msra.mxu0 %v4372
  %6971 = vmatprep.subr.bf16.mxu0 %v4365
  %6972 = vmatpush1.bf16.msra.mxu0 %v4364
  %6973 = vmatprep.subr.bf16.mxu0 %v4357
  %6974 = vmatpush1.bf16.msra.mxu0 %v4356
  %6975 = vmatprep.subr.bf16.mxu0 %v4349
  %6976 = vmatpush1.bf16.msra.mxu0 %v4348
  %6977 = vmatprep.subr.bf16.mxu0 %v4469
  %6978 = vmatpush2.bf16.msra.mxu0 %v4468
  %6979 = vmatprep.subr.bf16.mxu0 %v4461
  %6980 = vmatpush2.bf16.msra.mxu0 %v4460
  %6981 = vmatprep.subr.bf16.mxu0 %v4453
  %6982 = vmatpush2.bf16.msra.mxu0 %v4452
  %6983 = vmatprep.subr.bf16.mxu0 %v4445
  %6984 = vmatpush2.bf16.msra.mxu0 %v4444
  %6985 = vmatprep.subr.bf16.mxu0 %v4437
  %6986 = vmatpush2.bf16.msra.mxu0 %v4436
  %6987 = vmatprep.subr.bf16.mxu0 %v4429
  %6988 = vmatpush2.bf16.msra.mxu0 %v4428
  %6989 = vmatprep.subr.bf16.mxu0 %v4421
  %6990 = vmatpush2.bf16.msra.mxu0 %v4420
  %6991 = vmatprep.subr.bf16.mxu0 %v4413
  %6992 = vmatpush2.bf16.msra.mxu0 %v4412
  %6993 = vmatprep.mubr.bf16.mxu0 %v1115
  %6994 = vmatmul.mubr.bf16.gmra.mxu0 %v1114
  %v6995 = vpop.f32.mrf.mxu0
  %v6996 = vadd.f32 %v6955, %v6995
  %v6997 = vpop.f32.mrf.mxu0
  %v6998 = vadd.f32 %v6957, %v6997
  %v6999 = vpop.f32.mrf.mxu0
  %v7000 = vpop.f32.mrf.mxu0
  %7001 = vdwg.mxu0
  %7002 = vmatprep.subr.bf16.mxu0 %v4533
  %7003 = vmatpush1.bf16.msra.mxu0 %v4532
  %7004 = vmatprep.subr.bf16.mxu0 %v4525
  %7005 = vmatpush1.bf16.msra.mxu0 %v4524
  %7006 = vmatprep.subr.bf16.mxu0 %v4517
  %7007 = vmatpush1.bf16.msra.mxu0 %v4516
  %7008 = vmatprep.subr.bf16.mxu0 %v4509
  %7009 = vmatpush1.bf16.msra.mxu0 %v4508
  %7010 = vmatprep.subr.bf16.mxu0 %v4501
  %7011 = vmatpush1.bf16.msra.mxu0 %v4500
  %7012 = vmatprep.subr.bf16.mxu0 %v4493
  %7013 = vmatpush1.bf16.msra.mxu0 %v4492
  %7014 = vmatprep.subr.bf16.mxu0 %v4485
  %7015 = vmatpush1.bf16.msra.mxu0 %v4484
  %7016 = vmatprep.subr.bf16.mxu0 %v4477
  %7017 = vmatpush1.bf16.msra.mxu0 %v4476
  %7018 = vmatprep.subr.bf16.mxu0 %v4597
  %7019 = vmatpush2.bf16.msra.mxu0 %v4596
  %7020 = vmatprep.subr.bf16.mxu0 %v4589
  %7021 = vmatpush2.bf16.msra.mxu0 %v4588
  %7022 = vmatprep.subr.bf16.mxu0 %v4581
  %7023 = vmatpush2.bf16.msra.mxu0 %v4580
  %7024 = vmatprep.subr.bf16.mxu0 %v4573
  %7025 = vmatpush2.bf16.msra.mxu0 %v4572
  %7026 = vmatprep.subr.bf16.mxu0 %v4565
  %7027 = vmatpush2.bf16.msra.mxu0 %v4564
  %7028 = vmatprep.subr.bf16.mxu0 %v4557
  %7029 = vmatpush2.bf16.msra.mxu0 %v4556
  %7030 = vmatprep.subr.bf16.mxu0 %v4549
  %7031 = vmatpush2.bf16.msra.mxu0 %v4548
  %7032 = vmatprep.subr.bf16.mxu0 %v4541
  %7033 = vmatpush2.bf16.msra.mxu0 %v4540
  %7034 = vmatprep.mubr.bf16.mxu0 %v1117
  %7035 = vmatmul.mubr.bf16.gmra.mxu0 %v1116
  %v7036 = vpop.f32.mrf.mxu0
  %v7037 = vadd.f32 %v6996, %v7036
  %v7038 = vpop.f32.mrf.mxu0
  %v7039 = vadd.f32 %v6998, %v7038
  %v7040 = vpop.f32.mrf.mxu0
  %v7041 = vpop.f32.mrf.mxu0
  %7042 = vdwg.mxu0
  %7043 = vmatprep.subr.bf16.mxu0 %v4661
  %7044 = vmatpush1.bf16.msra.mxu0 %v4660
  %7045 = vmatprep.subr.bf16.mxu0 %v4653
  %7046 = vmatpush1.bf16.msra.mxu0 %v4652
  %7047 = vmatprep.subr.bf16.mxu0 %v4645
  %7048 = vmatpush1.bf16.msra.mxu0 %v4644
  %7049 = vmatprep.subr.bf16.mxu0 %v4637
  %7050 = vmatpush1.bf16.msra.mxu0 %v4636
  %7051 = vmatprep.subr.bf16.mxu0 %v4629
  %7052 = vmatpush1.bf16.msra.mxu0 %v4628
  %7053 = vmatprep.subr.bf16.mxu0 %v4621
  %7054 = vmatpush1.bf16.msra.mxu0 %v4620
  %7055 = vmatprep.subr.bf16.mxu0 %v4613
  %7056 = vmatpush1.bf16.msra.mxu0 %v4612
  %7057 = vmatprep.subr.bf16.mxu0 %v4605
  %7058 = vmatpush1.bf16.msra.mxu0 %v4604
  %7059 = vmatprep.subr.bf16.mxu0 %v4725
  %7060 = vmatpush2.bf16.msra.mxu0 %v4724
  %7061 = vmatprep.subr.bf16.mxu0 %v4717
  %7062 = vmatpush2.bf16.msra.mxu0 %v4716
  %7063 = vmatprep.subr.bf16.mxu0 %v4709
  %7064 = vmatpush2.bf16.msra.mxu0 %v4708
  %7065 = vmatprep.subr.bf16.mxu0 %v4701
  %7066 = vmatpush2.bf16.msra.mxu0 %v4700
  %7067 = vmatprep.subr.bf16.mxu0 %v4693
  %7068 = vmatpush2.bf16.msra.mxu0 %v4692
  %7069 = vmatprep.subr.bf16.mxu0 %v4685
  %7070 = vmatpush2.bf16.msra.mxu0 %v4684
  %7071 = vmatprep.subr.bf16.mxu0 %v4677
  %7072 = vmatpush2.bf16.msra.mxu0 %v4676
  %7073 = vmatprep.subr.bf16.mxu0 %v4669
  %7074 = vmatpush2.bf16.msra.mxu0 %v4668
  %7075 = vmatprep.mubr.bf16.mxu0 %v1119
  %7076 = vmatmul.mubr.bf16.gmra.mxu0 %v1118
  %v7077 = vpop.f32.mrf.mxu0
  %v7078 = vadd.f32 %v7037, %v7077
  %v7079 = vpop.f32.mrf.mxu0
  %v7080 = vadd.f32 %v7039, %v7079
  %v7081 = vpop.f32.mrf.mxu0
  %v7082 = vpop.f32.mrf.mxu0
  %7083 = vdwg.mxu0
  %7084 = vmatprep.subr.bf16.mxu0 %v4789
  %7085 = vmatpush1.bf16.msra.mxu0 %v4788
  %7086 = vmatprep.subr.bf16.mxu0 %v4781
  %7087 = vmatpush1.bf16.msra.mxu0 %v4780
  %7088 = vmatprep.subr.bf16.mxu0 %v4773
  %7089 = vmatpush1.bf16.msra.mxu0 %v4772
  %7090 = vmatprep.subr.bf16.mxu0 %v4765
  %7091 = vmatpush1.bf16.msra.mxu0 %v4764
  %7092 = vmatprep.subr.bf16.mxu0 %v4757
  %7093 = vmatpush1.bf16.msra.mxu0 %v4756
  %7094 = vmatprep.subr.bf16.mxu0 %v4749
  %7095 = vmatpush1.bf16.msra.mxu0 %v4748
  %7096 = vmatprep.subr.bf16.mxu0 %v4741
  %7097 = vmatpush1.bf16.msra.mxu0 %v4740
  %7098 = vmatprep.subr.bf16.mxu0 %v4733
  %7099 = vmatpush1.bf16.msra.mxu0 %v4732
  %7100 = vmatprep.subr.bf16.mxu0 %v4853
  %7101 = vmatpush2.bf16.msra.mxu0 %v4852
  %7102 = vmatprep.subr.bf16.mxu0 %v4845
  %7103 = vmatpush2.bf16.msra.mxu0 %v4844
  %7104 = vmatprep.subr.bf16.mxu0 %v4837
  %7105 = vmatpush2.bf16.msra.mxu0 %v4836
  %7106 = vmatprep.subr.bf16.mxu0 %v4829
  %7107 = vmatpush2.bf16.msra.mxu0 %v4828
  %7108 = vmatprep.subr.bf16.mxu0 %v4821
  %7109 = vmatpush2.bf16.msra.mxu0 %v4820
  %7110 = vmatprep.subr.bf16.mxu0 %v4813
  %7111 = vmatpush2.bf16.msra.mxu0 %v4812
  %7112 = vmatprep.subr.bf16.mxu0 %v4805
  %7113 = vmatpush2.bf16.msra.mxu0 %v4804
  %7114 = vmatprep.subr.bf16.mxu0 %v4797
  %7115 = vmatpush2.bf16.msra.mxu0 %v4796
  %7116 = vmatprep.mubr.bf16.mxu0 %v1121
  %7117 = vmatmul.mubr.bf16.gmra.mxu0 %v1120
  %v7118 = vpop.f32.mrf.mxu0
  %v7119 = vadd.f32 %v7078, %v7118
  %v7120 = vpop.f32.mrf.mxu0
  %v7121 = vadd.f32 %v7080, %v7120
  %v7122 = vpop.f32.mrf.mxu0
  %v7123 = vpop.f32.mrf.mxu0
  %7124 = vdwg.mxu0
  %7125 = vmatprep.subr.bf16.mxu0 %v4917
  %7126 = vmatpush1.bf16.msra.mxu0 %v4916
  %7127 = vmatprep.subr.bf16.mxu0 %v4909
  %7128 = vmatpush1.bf16.msra.mxu0 %v4908
  %7129 = vmatprep.subr.bf16.mxu0 %v4901
  %7130 = vmatpush1.bf16.msra.mxu0 %v4900
  %7131 = vmatprep.subr.bf16.mxu0 %v4893
  %7132 = vmatpush1.bf16.msra.mxu0 %v4892
  %7133 = vmatprep.subr.bf16.mxu0 %v4885
  %7134 = vmatpush1.bf16.msra.mxu0 %v4884
  %7135 = vmatprep.subr.bf16.mxu0 %v4877
  %7136 = vmatpush1.bf16.msra.mxu0 %v4876
  %7137 = vmatprep.subr.bf16.mxu0 %v4869
  %7138 = vmatpush1.bf16.msra.mxu0 %v4868
  %7139 = vmatprep.subr.bf16.mxu0 %v4861
  %7140 = vmatpush1.bf16.msra.mxu0 %v4860
  %7141 = vmatprep.subr.bf16.mxu0 %v4981
  %7142 = vmatpush2.bf16.msra.mxu0 %v4980
  %7143 = vmatprep.subr.bf16.mxu0 %v4973
  %7144 = vmatpush2.bf16.msra.mxu0 %v4972
  %7145 = vmatprep.subr.bf16.mxu0 %v4965
  %7146 = vmatpush2.bf16.msra.mxu0 %v4964
  %7147 = vmatprep.subr.bf16.mxu0 %v4957
  %7148 = vmatpush2.bf16.msra.mxu0 %v4956
  %7149 = vmatprep.subr.bf16.mxu0 %v4949
  %7150 = vmatpush2.bf16.msra.mxu0 %v4948
  %7151 = vmatprep.subr.bf16.mxu0 %v4941
  %7152 = vmatpush2.bf16.msra.mxu0 %v4940
  %7153 = vmatprep.subr.bf16.mxu0 %v4933
  %7154 = vmatpush2.bf16.msra.mxu0 %v4932
  %7155 = vmatprep.subr.bf16.mxu0 %v4925
  %7156 = vmatpush2.bf16.msra.mxu0 %v4924
  %7157 = vmatprep.mubr.bf16.mxu0 %v1123
  %7158 = vmatmul.mubr.bf16.gmra.mxu0 %v1122
  %v7159 = vpop.f32.mrf.mxu0
  %v7160 = vadd.f32 %v7119, %v7159
  %v7161 = vpop.f32.mrf.mxu0
  %v7162 = vadd.f32 %v7121, %v7161
  %v7163 = vpop.f32.mrf.mxu0
  %v7164 = vpop.f32.mrf.mxu0
  %7165 = vdwg.mxu0
  %7166 = vmatprep.subr.bf16.mxu0 %v5045
  %7167 = vmatpush1.bf16.msra.mxu0 %v5044
  %7168 = vmatprep.subr.bf16.mxu0 %v5037
  %7169 = vmatpush1.bf16.msra.mxu0 %v5036
  %7170 = vmatprep.subr.bf16.mxu0 %v5029
  %7171 = vmatpush1.bf16.msra.mxu0 %v5028
  %7172 = vmatprep.subr.bf16.mxu0 %v5021
  %7173 = vmatpush1.bf16.msra.mxu0 %v5020
  %7174 = vmatprep.subr.bf16.mxu0 %v5013
  %7175 = vmatpush1.bf16.msra.mxu0 %v5012
  %7176 = vmatprep.subr.bf16.mxu0 %v5005
  %7177 = vmatpush1.bf16.msra.mxu0 %v5004
  %7178 = vmatprep.subr.bf16.mxu0 %v4997
  %7179 = vmatpush1.bf16.msra.mxu0 %v4996
  %7180 = vmatprep.subr.bf16.mxu0 %v4989
  %7181 = vmatpush1.bf16.msra.mxu0 %v4988
  %7182 = vmatprep.subr.bf16.mxu0 %v5109
  %7183 = vmatpush2.bf16.msra.mxu0 %v5108
  %7184 = vmatprep.subr.bf16.mxu0 %v5101
  %7185 = vmatpush2.bf16.msra.mxu0 %v5100
  %7186 = vmatprep.subr.bf16.mxu0 %v5093
  %7187 = vmatpush2.bf16.msra.mxu0 %v5092
  %7188 = vmatprep.subr.bf16.mxu0 %v5085
  %7189 = vmatpush2.bf16.msra.mxu0 %v5084
  %7190 = vmatprep.subr.bf16.mxu0 %v5077
  %7191 = vmatpush2.bf16.msra.mxu0 %v5076
  %7192 = vmatprep.subr.bf16.mxu0 %v5069
  %7193 = vmatpush2.bf16.msra.mxu0 %v5068
  %7194 = vmatprep.subr.bf16.mxu0 %v5061
  %7195 = vmatpush2.bf16.msra.mxu0 %v5060
  %7196 = vmatprep.subr.bf16.mxu0 %v5053
  %7197 = vmatpush2.bf16.msra.mxu0 %v5052
  %7198 = vmatprep.mubr.bf16.mxu0 %v1125
  %7199 = vmatmul.mubr.bf16.gmra.mxu0 %v1124
  %v7200 = vpop.f32.mrf.mxu0
  %v7201 = vadd.f32 %v7160, %v7200
  %v7202 = vpop.f32.mrf.mxu0
  %v7203 = vadd.f32 %v7162, %v7202
  %v7204 = vpop.f32.mrf.mxu0
  %v7205 = vpop.f32.mrf.mxu0
  %7206 = vdwg.mxu0
  %7207 = vmatprep.subr.bf16.mxu0 %v5173
  %7208 = vmatpush1.bf16.msra.mxu0 %v5172
  %7209 = vmatprep.subr.bf16.mxu0 %v5165
  %7210 = vmatpush1.bf16.msra.mxu0 %v5164
  %7211 = vmatprep.subr.bf16.mxu0 %v5157
  %7212 = vmatpush1.bf16.msra.mxu0 %v5156
  %7213 = vmatprep.subr.bf16.mxu0 %v5149
  %7214 = vmatpush1.bf16.msra.mxu0 %v5148
  %7215 = vmatprep.subr.bf16.mxu0 %v5141
  %7216 = vmatpush1.bf16.msra.mxu0 %v5140
  %7217 = vmatprep.subr.bf16.mxu0 %v5133
  %7218 = vmatpush1.bf16.msra.mxu0 %v5132
  %7219 = vmatprep.subr.bf16.mxu0 %v5125
  %7220 = vmatpush1.bf16.msra.mxu0 %v5124
  %7221 = vmatprep.subr.bf16.mxu0 %v5117
  %7222 = vmatpush1.bf16.msra.mxu0 %v5116
  %7223 = vmatprep.subr.bf16.mxu0 %v5237
  %7224 = vmatpush2.bf16.msra.mxu0 %v5236
  %7225 = vmatprep.subr.bf16.mxu0 %v5229
  %7226 = vmatpush2.bf16.msra.mxu0 %v5228
  %7227 = vmatprep.subr.bf16.mxu0 %v5221
  %7228 = vmatpush2.bf16.msra.mxu0 %v5220
  %7229 = vmatprep.subr.bf16.mxu0 %v5213
  %7230 = vmatpush2.bf16.msra.mxu0 %v5212
  %7231 = vmatprep.subr.bf16.mxu0 %v5205
  %7232 = vmatpush2.bf16.msra.mxu0 %v5204
  %7233 = vmatprep.subr.bf16.mxu0 %v5197
  %7234 = vmatpush2.bf16.msra.mxu0 %v5196
  %7235 = vmatprep.subr.bf16.mxu0 %v5189
  %7236 = vmatpush2.bf16.msra.mxu0 %v5188
  %7237 = vmatprep.subr.bf16.mxu0 %v5181
  %7238 = vmatpush2.bf16.msra.mxu0 %v5180
  %7239 = vmatprep.mubr.bf16.mxu0 %v1127
  %7240 = vmatmul.mubr.bf16.gmra.mxu0 %v1126
  %v7241 = vpop.f32.mrf.mxu0
  %v7242 = vadd.f32 %v7201, %v7241
  %v7243 = vpop.f32.mrf.mxu0
  %v7244 = vadd.f32 %v7203, %v7243
  %v7245 = vpop.f32.mrf.mxu0
  %v7246 = vpop.f32.mrf.mxu0
  %7247 = vdwg.mxu0
  %7248 = vmatprep.subr.bf16.mxu0 %v4279
  %7249 = vmatpush1.bf16.msra.mxu0 %v4278
  %7250 = vmatprep.subr.bf16.mxu0 %v4271
  %7251 = vmatpush1.bf16.msra.mxu0 %v4270
  %7252 = vmatprep.subr.bf16.mxu0 %v4263
  %7253 = vmatpush1.bf16.msra.mxu0 %v4262
  %7254 = vmatprep.subr.bf16.mxu0 %v4255
  %7255 = vmatpush1.bf16.msra.mxu0 %v4254
  %7256 = vmatprep.subr.bf16.mxu0 %v4247
  %7257 = vmatpush1.bf16.msra.mxu0 %v4246
  %7258 = vmatprep.subr.bf16.mxu0 %v4239
  %7259 = vmatpush1.bf16.msra.mxu0 %v4238
  %7260 = vmatprep.subr.bf16.mxu0 %v4231
  %7261 = vmatpush1.bf16.msra.mxu0 %v4230
  %7262 = vmatprep.subr.bf16.mxu0 %v4223
  %7263 = vmatpush1.bf16.msra.mxu0 %v4222
  %7264 = vmatprep.subr.bf16.mxu0 %v4343
  %7265 = vmatpush2.bf16.msra.mxu0 %v4342
  %7266 = vmatprep.subr.bf16.mxu0 %v4335
  %7267 = vmatpush2.bf16.msra.mxu0 %v4334
  %7268 = vmatprep.subr.bf16.mxu0 %v4327
  %7269 = vmatpush2.bf16.msra.mxu0 %v4326
  %7270 = vmatprep.subr.bf16.mxu0 %v4319
  %7271 = vmatpush2.bf16.msra.mxu0 %v4318
  %7272 = vmatprep.subr.bf16.mxu0 %v4311
  %7273 = vmatpush2.bf16.msra.mxu0 %v4310
  %7274 = vmatprep.subr.bf16.mxu0 %v4303
  %7275 = vmatpush2.bf16.msra.mxu0 %v4302
  %7276 = vmatprep.subr.bf16.mxu0 %v4295
  %7277 = vmatpush2.bf16.msra.mxu0 %v4294
  %7278 = vmatprep.subr.bf16.mxu0 %v4287
  %7279 = vmatpush2.bf16.msra.mxu0 %v4286
  %7280 = vmatprep.mubr.bf16.mxu0 %v1113
  %7281 = vmatmul.mubr.bf16.gmra.mxu0 %v1112
  %v7282 = vpop.f32.mrf.mxu0
  %v7283 = vadd.f32 %v1075, %v7282
  %v7284 = vpop.f32.mrf.mxu0
  %v7285 = vadd.f32 %v1079, %v7284
  %v7286 = vpop.f32.mrf.mxu0
  %v7287 = vpop.f32.mrf.mxu0
  %7288 = vdwg.mxu0
  %7289 = vmatprep.subr.bf16.mxu0 %v4407
  %7290 = vmatpush1.bf16.msra.mxu0 %v4406
  %7291 = vmatprep.subr.bf16.mxu0 %v4399
  %7292 = vmatpush1.bf16.msra.mxu0 %v4398
  %7293 = vmatprep.subr.bf16.mxu0 %v4391
  %7294 = vmatpush1.bf16.msra.mxu0 %v4390
  %7295 = vmatprep.subr.bf16.mxu0 %v4383
  %7296 = vmatpush1.bf16.msra.mxu0 %v4382
  %7297 = vmatprep.subr.bf16.mxu0 %v4375
  %7298 = vmatpush1.bf16.msra.mxu0 %v4374
  %7299 = vmatprep.subr.bf16.mxu0 %v4367
  %7300 = vmatpush1.bf16.msra.mxu0 %v4366
  %7301 = vmatprep.subr.bf16.mxu0 %v4359
  %7302 = vmatpush1.bf16.msra.mxu0 %v4358
  %7303 = vmatprep.subr.bf16.mxu0 %v4351
  %7304 = vmatpush1.bf16.msra.mxu0 %v4350
  %7305 = vmatprep.subr.bf16.mxu0 %v4471
  %7306 = vmatpush2.bf16.msra.mxu0 %v4470
  %7307 = vmatprep.subr.bf16.mxu0 %v4463
  %7308 = vmatpush2.bf16.msra.mxu0 %v4462
  %7309 = vmatprep.subr.bf16.mxu0 %v4455
  %7310 = vmatpush2.bf16.msra.mxu0 %v4454
  %7311 = vmatprep.subr.bf16.mxu0 %v4447
  %7312 = vmatpush2.bf16.msra.mxu0 %v4446
  %7313 = vmatprep.subr.bf16.mxu0 %v4439
  %7314 = vmatpush2.bf16.msra.mxu0 %v4438
  %7315 = vmatprep.subr.bf16.mxu0 %v4431
  %7316 = vmatpush2.bf16.msra.mxu0 %v4430
  %7317 = vmatprep.subr.bf16.mxu0 %v4423
  %7318 = vmatpush2.bf16.msra.mxu0 %v4422
  %7319 = vmatprep.subr.bf16.mxu0 %v4415
  %7320 = vmatpush2.bf16.msra.mxu0 %v4414
  %7321 = vmatprep.mubr.bf16.mxu0 %v1115
  %7322 = vmatmul.mubr.bf16.gmra.mxu0 %v1114
  %v7323 = vpop.f32.mrf.mxu0
  %v7324 = vadd.f32 %v7283, %v7323
  %v7325 = vpop.f32.mrf.mxu0
  %v7326 = vadd.f32 %v7285, %v7325
  %v7327 = vpop.f32.mrf.mxu0
  %v7328 = vpop.f32.mrf.mxu0
  %7329 = vdwg.mxu0
  %7330 = vmatprep.subr.bf16.mxu0 %v4535
  %7331 = vmatpush1.bf16.msra.mxu0 %v4534
  %7332 = vmatprep.subr.bf16.mxu0 %v4527
  %7333 = vmatpush1.bf16.msra.mxu0 %v4526
  %7334 = vmatprep.subr.bf16.mxu0 %v4519
  %7335 = vmatpush1.bf16.msra.mxu0 %v4518
  %7336 = vmatprep.subr.bf16.mxu0 %v4511
  %7337 = vmatpush1.bf16.msra.mxu0 %v4510
  %7338 = vmatprep.subr.bf16.mxu0 %v4503
  %7339 = vmatpush1.bf16.msra.mxu0 %v4502
  %7340 = vmatprep.subr.bf16.mxu0 %v4495
  %7341 = vmatpush1.bf16.msra.mxu0 %v4494
  %7342 = vmatprep.subr.bf16.mxu0 %v4487
  %7343 = vmatpush1.bf16.msra.mxu0 %v4486
  %7344 = vmatprep.subr.bf16.mxu0 %v4479
  %7345 = vmatpush1.bf16.msra.mxu0 %v4478
  %7346 = vmatprep.subr.bf16.mxu0 %v4599
  %7347 = vmatpush2.bf16.msra.mxu0 %v4598
  %7348 = vmatprep.subr.bf16.mxu0 %v4591
  %7349 = vmatpush2.bf16.msra.mxu0 %v4590
  %7350 = vmatprep.subr.bf16.mxu0 %v4583
  %7351 = vmatpush2.bf16.msra.mxu0 %v4582
  %7352 = vmatprep.subr.bf16.mxu0 %v4575
  %7353 = vmatpush2.bf16.msra.mxu0 %v4574
  %7354 = vmatprep.subr.bf16.mxu0 %v4567
  %7355 = vmatpush2.bf16.msra.mxu0 %v4566
  %7356 = vmatprep.subr.bf16.mxu0 %v4559
  %7357 = vmatpush2.bf16.msra.mxu0 %v4558
  %7358 = vmatprep.subr.bf16.mxu0 %v4551
  %7359 = vmatpush2.bf16.msra.mxu0 %v4550
  %7360 = vmatprep.subr.bf16.mxu0 %v4543
  %7361 = vmatpush2.bf16.msra.mxu0 %v4542
  %7362 = vmatprep.mubr.bf16.mxu0 %v1117
  %7363 = vmatmul.mubr.bf16.gmra.mxu0 %v1116
  %v7364 = vpop.f32.mrf.mxu0
  %v7365 = vadd.f32 %v7324, %v7364
  %v7366 = vpop.f32.mrf.mxu0
  %v7367 = vadd.f32 %v7326, %v7366
  %v7368 = vpop.f32.mrf.mxu0
  %v7369 = vpop.f32.mrf.mxu0
  %7370 = vdwg.mxu0
  %7371 = vmatprep.subr.bf16.mxu0 %v4663
  %7372 = vmatpush1.bf16.msra.mxu0 %v4662
  %7373 = vmatprep.subr.bf16.mxu0 %v4655
  %7374 = vmatpush1.bf16.msra.mxu0 %v4654
  %7375 = vmatprep.subr.bf16.mxu0 %v4647
  %7376 = vmatpush1.bf16.msra.mxu0 %v4646
  %7377 = vmatprep.subr.bf16.mxu0 %v4639
  %7378 = vmatpush1.bf16.msra.mxu0 %v4638
  %7379 = vmatprep.subr.bf16.mxu0 %v4631
  %7380 = vmatpush1.bf16.msra.mxu0 %v4630
  %7381 = vmatprep.subr.bf16.mxu0 %v4623
  %7382 = vmatpush1.bf16.msra.mxu0 %v4622
  %7383 = vmatprep.subr.bf16.mxu0 %v4615
  %7384 = vmatpush1.bf16.msra.mxu0 %v4614
  %7385 = vmatprep.subr.bf16.mxu0 %v4607
  %7386 = vmatpush1.bf16.msra.mxu0 %v4606
  %7387 = vmatprep.subr.bf16.mxu0 %v4727
  %7388 = vmatpush2.bf16.msra.mxu0 %v4726
  %7389 = vmatprep.subr.bf16.mxu0 %v4719
  %7390 = vmatpush2.bf16.msra.mxu0 %v4718
  %7391 = vmatprep.subr.bf16.mxu0 %v4711
  %7392 = vmatpush2.bf16.msra.mxu0 %v4710
  %7393 = vmatprep.subr.bf16.mxu0 %v4703
  %7394 = vmatpush2.bf16.msra.mxu0 %v4702
  %7395 = vmatprep.subr.bf16.mxu0 %v4695
  %7396 = vmatpush2.bf16.msra.mxu0 %v4694
  %7397 = vmatprep.subr.bf16.mxu0 %v4687
  %7398 = vmatpush2.bf16.msra.mxu0 %v4686
  %7399 = vmatprep.subr.bf16.mxu0 %v4679
  %7400 = vmatpush2.bf16.msra.mxu0 %v4678
  %7401 = vmatprep.subr.bf16.mxu0 %v4671
  %7402 = vmatpush2.bf16.msra.mxu0 %v4670
  %7403 = vmatprep.mubr.bf16.mxu0 %v1119
  %7404 = vmatmul.mubr.bf16.gmra.mxu0 %v1118
  %v7405 = vpop.f32.mrf.mxu0
  %v7406 = vadd.f32 %v7365, %v7405
  %v7407 = vpop.f32.mrf.mxu0
  %v7408 = vadd.f32 %v7367, %v7407
  %v7409 = vpop.f32.mrf.mxu0
  %v7410 = vpop.f32.mrf.mxu0
  %7411 = vdwg.mxu0
  %7412 = vmatprep.subr.bf16.mxu0 %v4791
  %7413 = vmatpush1.bf16.msra.mxu0 %v4790
  %7414 = vmatprep.subr.bf16.mxu0 %v4783
  %7415 = vmatpush1.bf16.msra.mxu0 %v4782
  %7416 = vmatprep.subr.bf16.mxu0 %v4775
  %7417 = vmatpush1.bf16.msra.mxu0 %v4774
  %7418 = vmatprep.subr.bf16.mxu0 %v4767
  %7419 = vmatpush1.bf16.msra.mxu0 %v4766
  %7420 = vmatprep.subr.bf16.mxu0 %v4759
  %7421 = vmatpush1.bf16.msra.mxu0 %v4758
  %7422 = vmatprep.subr.bf16.mxu0 %v4751
  %7423 = vmatpush1.bf16.msra.mxu0 %v4750
  %7424 = vmatprep.subr.bf16.mxu0 %v4743
  %7425 = vmatpush1.bf16.msra.mxu0 %v4742
  %7426 = vmatprep.subr.bf16.mxu0 %v4735
  %7427 = vmatpush1.bf16.msra.mxu0 %v4734
  %7428 = vmatprep.subr.bf16.mxu0 %v4855
  %7429 = vmatpush2.bf16.msra.mxu0 %v4854
  %7430 = vmatprep.subr.bf16.mxu0 %v4847
  %7431 = vmatpush2.bf16.msra.mxu0 %v4846
  %7432 = vmatprep.subr.bf16.mxu0 %v4839
  %7433 = vmatpush2.bf16.msra.mxu0 %v4838
  %7434 = vmatprep.subr.bf16.mxu0 %v4831
  %7435 = vmatpush2.bf16.msra.mxu0 %v4830
  %7436 = vmatprep.subr.bf16.mxu0 %v4823
  %7437 = vmatpush2.bf16.msra.mxu0 %v4822
  %7438 = vmatprep.subr.bf16.mxu0 %v4815
  %7439 = vmatpush2.bf16.msra.mxu0 %v4814
  %7440 = vmatprep.subr.bf16.mxu0 %v4807
  %7441 = vmatpush2.bf16.msra.mxu0 %v4806
  %7442 = vmatprep.subr.bf16.mxu0 %v4799
  %7443 = vmatpush2.bf16.msra.mxu0 %v4798
  %7444 = vmatprep.mubr.bf16.mxu0 %v1121
  %7445 = vmatmul.mubr.bf16.gmra.mxu0 %v1120
  %v7446 = vpop.f32.mrf.mxu0
  %v7447 = vadd.f32 %v7406, %v7446
  %v7448 = vpop.f32.mrf.mxu0
  %v7449 = vadd.f32 %v7408, %v7448
  %v7450 = vpop.f32.mrf.mxu0
  %v7451 = vpop.f32.mrf.mxu0
  %7452 = vdwg.mxu0
  %7453 = vmatprep.subr.bf16.mxu0 %v4919
  %7454 = vmatpush1.bf16.msra.mxu0 %v4918
  %7455 = vmatprep.subr.bf16.mxu0 %v4911
  %7456 = vmatpush1.bf16.msra.mxu0 %v4910
  %7457 = vmatprep.subr.bf16.mxu0 %v4903
  %7458 = vmatpush1.bf16.msra.mxu0 %v4902
  %7459 = vmatprep.subr.bf16.mxu0 %v4895
  %7460 = vmatpush1.bf16.msra.mxu0 %v4894
  %7461 = vmatprep.subr.bf16.mxu0 %v4887
  %7462 = vmatpush1.bf16.msra.mxu0 %v4886
  %7463 = vmatprep.subr.bf16.mxu0 %v4879
  %7464 = vmatpush1.bf16.msra.mxu0 %v4878
  %7465 = vmatprep.subr.bf16.mxu0 %v4871
  %7466 = vmatpush1.bf16.msra.mxu0 %v4870
  %7467 = vmatprep.subr.bf16.mxu0 %v4863
  %7468 = vmatpush1.bf16.msra.mxu0 %v4862
  %7469 = vmatprep.subr.bf16.mxu0 %v4983
  %7470 = vmatpush2.bf16.msra.mxu0 %v4982
  %7471 = vmatprep.subr.bf16.mxu0 %v4975
  %7472 = vmatpush2.bf16.msra.mxu0 %v4974
  %7473 = vmatprep.subr.bf16.mxu0 %v4967
  %7474 = vmatpush2.bf16.msra.mxu0 %v4966
  %7475 = vmatprep.subr.bf16.mxu0 %v4959
  %7476 = vmatpush2.bf16.msra.mxu0 %v4958
  %7477 = vmatprep.subr.bf16.mxu0 %v4951
  %7478 = vmatpush2.bf16.msra.mxu0 %v4950
  %7479 = vmatprep.subr.bf16.mxu0 %v4943
  %7480 = vmatpush2.bf16.msra.mxu0 %v4942
  %7481 = vmatprep.subr.bf16.mxu0 %v4935
  %7482 = vmatpush2.bf16.msra.mxu0 %v4934
  %7483 = vmatprep.subr.bf16.mxu0 %v4927
  %7484 = vmatpush2.bf16.msra.mxu0 %v4926
  %7485 = vmatprep.mubr.bf16.mxu0 %v1123
  %7486 = vmatmul.mubr.bf16.gmra.mxu0 %v1122
  %v7487 = vpop.f32.mrf.mxu0
  %v7488 = vadd.f32 %v7447, %v7487
  %v7489 = vpop.f32.mrf.mxu0
  %v7490 = vadd.f32 %v7449, %v7489
  %v7491 = vpop.f32.mrf.mxu0
  %v7492 = vpop.f32.mrf.mxu0
  %7493 = vdwg.mxu0
  %7494 = vmatprep.subr.bf16.mxu0 %v5047
  %7495 = vmatpush1.bf16.msra.mxu0 %v5046
  %7496 = vmatprep.subr.bf16.mxu0 %v5039
  %7497 = vmatpush1.bf16.msra.mxu0 %v5038
  %7498 = vmatprep.subr.bf16.mxu0 %v5031
  %7499 = vmatpush1.bf16.msra.mxu0 %v5030
  %7500 = vmatprep.subr.bf16.mxu0 %v5023
  %7501 = vmatpush1.bf16.msra.mxu0 %v5022
  %7502 = vmatprep.subr.bf16.mxu0 %v5015
  %7503 = vmatpush1.bf16.msra.mxu0 %v5014
  %7504 = vmatprep.subr.bf16.mxu0 %v5007
  %7505 = vmatpush1.bf16.msra.mxu0 %v5006
  %7506 = vmatprep.subr.bf16.mxu0 %v4999
  %7507 = vmatpush1.bf16.msra.mxu0 %v4998
  %7508 = vmatprep.subr.bf16.mxu0 %v4991
  %7509 = vmatpush1.bf16.msra.mxu0 %v4990
  %7510 = vmatprep.subr.bf16.mxu0 %v5111
  %7511 = vmatpush2.bf16.msra.mxu0 %v5110
  %7512 = vmatprep.subr.bf16.mxu0 %v5103
  %7513 = vmatpush2.bf16.msra.mxu0 %v5102
  %7514 = vmatprep.subr.bf16.mxu0 %v5095
  %7515 = vmatpush2.bf16.msra.mxu0 %v5094
  %7516 = vmatprep.subr.bf16.mxu0 %v5087
  %7517 = vmatpush2.bf16.msra.mxu0 %v5086
  %7518 = vmatprep.subr.bf16.mxu0 %v5079
  %7519 = vmatpush2.bf16.msra.mxu0 %v5078
  %7520 = vmatprep.subr.bf16.mxu0 %v5071
  %7521 = vmatpush2.bf16.msra.mxu0 %v5070
  %7522 = vmatprep.subr.bf16.mxu0 %v5063
  %7523 = vmatpush2.bf16.msra.mxu0 %v5062
  %7524 = vmatprep.subr.bf16.mxu0 %v5055
  %7525 = vmatpush2.bf16.msra.mxu0 %v5054
  %7526 = vmatprep.mubr.bf16.mxu0 %v1125
  %7527 = vmatmul.mubr.bf16.gmra.mxu0 %v1124
  %v7528 = vpop.f32.mrf.mxu0
  %v7529 = vadd.f32 %v7488, %v7528
  %v7530 = vpop.f32.mrf.mxu0
  %v7531 = vadd.f32 %v7490, %v7530
  %v7532 = vpop.f32.mrf.mxu0
  %v7533 = vpop.f32.mrf.mxu0
  %7534 = vdwg.mxu0
  %7535 = vmatprep.subr.bf16.mxu0 %v5175
  %7536 = vmatpush1.bf16.msra.mxu0 %v5174
  %7537 = vmatprep.subr.bf16.mxu0 %v5167
  %7538 = vmatpush1.bf16.msra.mxu0 %v5166
  %7539 = vmatprep.subr.bf16.mxu0 %v5159
  %7540 = vmatpush1.bf16.msra.mxu0 %v5158
  %7541 = vmatprep.subr.bf16.mxu0 %v5151
  %7542 = vmatpush1.bf16.msra.mxu0 %v5150
  %7543 = vmatprep.subr.bf16.mxu0 %v5143
  %7544 = vmatpush1.bf16.msra.mxu0 %v5142
  %7545 = vmatprep.subr.bf16.mxu0 %v5135
  %7546 = vmatpush1.bf16.msra.mxu0 %v5134
  %7547 = vmatprep.subr.bf16.mxu0 %v5127
  %7548 = vmatpush1.bf16.msra.mxu0 %v5126
  %7549 = vmatprep.subr.bf16.mxu0 %v5119
  %7550 = vmatpush1.bf16.msra.mxu0 %v5118
  %7551 = vmatprep.subr.bf16.mxu0 %v5239
  %7552 = vmatpush2.bf16.msra.mxu0 %v5238
  %7553 = vmatprep.subr.bf16.mxu0 %v5231
  %7554 = vmatpush2.bf16.msra.mxu0 %v5230
  %7555 = vmatprep.subr.bf16.mxu0 %v5223
  %7556 = vmatpush2.bf16.msra.mxu0 %v5222
  %7557 = vmatprep.subr.bf16.mxu0 %v5215
  %7558 = vmatpush2.bf16.msra.mxu0 %v5214
  %7559 = vmatprep.subr.bf16.mxu0 %v5207
  %7560 = vmatpush2.bf16.msra.mxu0 %v5206
  %7561 = vmatprep.subr.bf16.mxu0 %v5199
  %7562 = vmatpush2.bf16.msra.mxu0 %v5198
  %7563 = vmatprep.subr.bf16.mxu0 %v5191
  %7564 = vmatpush2.bf16.msra.mxu0 %v5190
  %7565 = vmatprep.subr.bf16.mxu0 %v5183
  %7566 = vmatpush2.bf16.msra.mxu0 %v5182
  %7567 = vmatprep.mubr.bf16.mxu0 %v1127
  %7568 = vmatmul.mubr.bf16.gmra.mxu0 %v1126
  %v7569 = vpop.f32.mrf.mxu0
  %v7570 = vadd.f32 %v7529, %v7569
  %v7571 = vpop.f32.mrf.mxu0
  %v7572 = vadd.f32 %v7531, %v7571
  %v7573 = vpop.f32.mrf.mxu0
  %v7574 = vpop.f32.mrf.mxu0
  %7575 = vdwg.mxu0
  %v7576 = vmax.f32 %v6586, 0.0
  %v7577 = vmax.f32 %v6588, 0.0
  %v7578 = vmax.f32 %v6914, 0.0
  %v7579 = vmax.f32 %v6916, 0.0
  %v7580 = vmax.f32 %v7242, 0.0
  %v7581 = vmax.f32 %v7244, 0.0
  %v7582 = vmax.f32 %v7570, 0.0
  %v7583 = vmax.f32 %v7572, 0.0
  %v7584 = vpack.c.bf16 %v7576, %v7576
  %v7585 = vpack.c.bf16 %v7577, %v7577
  %v7586 = vpack.c.bf16 %v7578, %v7578
  %v7587 = vpack.c.bf16 %v7579, %v7579
  %v7588 = vpack.c.bf16 %v7580, %v7580
  %v7589 = vpack.c.bf16 %v7581, %v7581
  %v7590 = vpack.c.bf16 %v7582, %v7582
  %v7591 = vpack.c.bf16 %v7583, %v7583
  %v7600 = vunpack.c.l.b16 %v7584
  %v7601 = vunpack.c.l.b16 %v7585
  %v7602 = vunpack.c.l.b16 %v7586
  %v7603 = vunpack.c.l.b16 %v7587
  %v7604 = vunpack.c.l.b16 %v7588
  %v7605 = vunpack.c.l.b16 %v7589
  %v7606 = vunpack.c.l.b16 %v7590
  %v7607 = vunpack.c.l.b16 %v7591
  %v7608 = vpack.c.b16 %v7601, %v7600
  %v7609 = vpack.c.b16 %v7603, %v7602
  %v7610 = vpack.c.b16 %v7605, %v7604
  %v7611 = vpack.c.b16 %v7607, %v7606
  %7616 = vst [vmem:[%s3] sm:$0xff] %v7608
  %7617 = vst [vmem:[%s3 + $0x8] sm:$0xff] %v7609
  %7618 = vst [vmem:[%s3 + $0x10] sm:$0xff] %v7610
  %7619 = vst [vmem:[%s3 + $0x18] sm:$0xff] %v7611
  // Predicated region
  $region14: #{conv_model_forward.6} parent=0 // pred_check
    _
  $region15: #{conv_model_forward.6} parent=0 // pred_check_branch
    %7621 = sbr.rel (0) target = $region17
  $region16: #{conv_model_forward.6} parent=0 // pred_region
    _
  $region17: #{conv_model_forward.6} parent=0 // pred_fallthru
    _
  // Predicated region
  $region18: #{conv_model_forward.6} parent=0 // pred_check
    _
  $region19: #{conv_model_forward.6} parent=0 // pred_check_branch
    %7623 = sbr.rel (0) target = $region21
  $region20: #{conv_model_forward.6} parent=0 // pred_region
    _
  $region21: #{conv_model_forward.6} parent=0 // pred_fallthru
    _

</llo_original>
